<compile_context>
chip_gen: v5e
topology: v5e:2x2
jax: 0.10.0
libtpu: 0.0.40
codegen_flags: <defaults>
</compile_context>

<pallas_src>
import functools
import math

import jax
import jax.numpy as jnp
from jax.experimental import pallas as pl
from jax.experimental.pallas import tpu as pltpu

_LANE = 128
_SUBLANE = 8
# Per-buffer weight-slab cap (Pallas double-buffers each input).  Keeps FC1 at
# tn=256 (4 parallel N tiles) -> safe on v7x's 64 MiB VMEM, fine on v5e/v6e.
_MAX_W_BLOCK_BYTES = 10 * 1024 * 1024
_VMEM_LIMIT = 48 * 1024 * 1024
_M_SPLIT_THRESHOLD = 512          # split M over 2 grid tiles above this


def _round_up(x, m):
    return ((x + m - 1) // m) * m


def _pad_axis(x, multiple, axis):
    size = x.shape[axis]
    pad = (-size) % multiple
    if pad == 0:
        return x
    widths = [(0, 0)] * x.ndim
    widths[axis] = (0, pad)
    return jnp.pad(x, widths)


def _pick_tn(Kp, Np, w_bytes):
    """Largest N tile (multiple of 128 dividing Np) whose weight slab fits the
    per-buffer cap, preferring >= 4 grid tiles (2 per v7x TensorCore)."""
    candidates = [t for t in range(_LANE, Np + 1, _LANE)
                  if Np % t == 0 and Kp * t * w_bytes <= _MAX_W_BLOCK_BYTES]
    if not candidates:
        return _LANE
    pref = [t for t in candidates if Np // t >= 4]
    return max(pref) if pref else max(candidates)


# ---------------------------------------------------------------------------
# Fused  y = act(x @ w + b)  kernel: full-K slab, one bf16 dot per grid step.
# ---------------------------------------------------------------------------
def _matmul_bias_act_kernel(x_ref, w_ref, b_ref, o_ref, *, activation):
    y = jnp.dot(x_ref[...].astype(jnp.bfloat16), w_ref[...],
                preferred_element_type=jnp.float32)
    y = y + b_ref[...]
    if activation == "tanh":
        y = jnp.tanh(y)
    o_ref[...] = y.astype(o_ref.dtype)


def linear_pallas(x, layer, *, activation=None):
    """act(x @ w + b) with pre-tiled bf16 weights.

    x:     [M, K] float32 (K zero-padded here to Kp, exact result).
    layer: (w_tiles [n_tiles, Kp, tn] bf16, bias [1, Np] f32).
    Returns [Mp, Np] float32; caller slices logical rows/columns.
    """
    w_tiles, bias = layer
    n_tiles, Kp, tn = w_tiles.shape
    Np = n_tiles * tn
    M, K = x.shape
    assert Kp == _round_up(K, _LANE), (K, Kp)

    xp = _pad_axis(x, _LANE, 1)                       # zero-pad K
    if M >= _M_SPLIT_THRESHOLD:                       # 2 M tiles -> both v7x TCs
        xp = _pad_axis(xp, 2 * _SUBLANE, 0)
        m_tiles = 2
    else:
        m_tiles = 1
    Mp = xp.shape[0]
    tm = Mp // m_tiles

    return pl.pallas_call(
        functools.partial(_matmul_bias_act_kernel, activation=activation),
        out_shape=jax.ShapeDtypeStruct((Mp, Np), jnp.float32),
        grid_spec=pltpu.PrefetchScalarGridSpec(
            num_scalar_prefetch=0,
            grid=(m_tiles, n_tiles),
            in_specs=[
                pl.BlockSpec((tm, Kp), lambda m, n: (m, 0)),          # activations
                pl.BlockSpec((None, Kp, tn), lambda m, n: (n, 0, 0)),  # contiguous weight slab
                pl.BlockSpec((1, tn), lambda m, n: (0, n)),           # bias tile
            ],
            out_specs=pl.BlockSpec((tm, tn), lambda m, n: (m, n)),
        ),
        compiler_params=pltpu.CompilerParams(
            dimension_semantics=("parallel", "parallel"),
            vmem_limit_bytes=_VMEM_LIMIT,
        ),
    )(xp, w_tiles, bias)


# ---------------------------------------------------------------------------
# Fused tail:  (tanh(x @ w2 + b2)) @ w3 + b3  in one pallas_call.
# ---------------------------------------------------------------------------
def _tail_kernel(x_ref, w2_ref, b2_ref, w3_ref, b3_ref, o_ref):
    t = jnp.tanh(jnp.dot(x_ref[...].astype(jnp.bfloat16), w2_ref[...],
                         preferred_element_type=jnp.float32) + b2_ref[...])
    y = jnp.dot(t.astype(jnp.bfloat16), w3_ref[...],
                preferred_element_type=jnp.float32) + b3_ref[...]
    o_ref[...] = y.astype(o_ref.dtype)


def tail_linears_pallas(x, tail):
    w2, b2, w3, b3 = tail
    M, K2 = x.shape
    assert w2.shape[0] == K2
    N2, N3 = w2.shape[1], w3.shape[1]
    return pl.pallas_call(
        _tail_kernel,
        out_shape=jax.ShapeDtypeStruct((M, N3), jnp.float32),
        grid_spec=pltpu.PrefetchScalarGridSpec(
            num_scalar_prefetch=0,
            grid=(1,),
            in_specs=[
                pl.BlockSpec((M, K2), lambda i: (0, 0)),
                pl.BlockSpec((K2, N2), lambda i: (0, 0)),
                pl.BlockSpec((1, N2), lambda i: (0, 0)),
                pl.BlockSpec((N2, N3), lambda i: (0, 0)),
                pl.BlockSpec((1, N3), lambda i: (0, 0)),
            ],
            out_specs=pl.BlockSpec((M, N3), lambda i: (0, 0)),
        ),
        compiler_params=pltpu.CompilerParams(
            dimension_semantics=("arbitrary",),
            vmem_limit_bytes=_VMEM_LIMIT,
        ),
    )(x, w2, b2, w3, b3)


# ---------------------------------------------------------------------------
# Conv / pool wrappers (NHWC data rearrangement in JAX, matmul in Pallas)
# ---------------------------------------------------------------------------
def conv2d_3x3_tanh_nhwc(x, layer, out_c):
    """Valid 3x3 conv, stride 1, + bias + tanh; NHWC in, NHWC out."""
    B, H, W, C = x.shape
    Ho, Wo = H - 2, W - 2
    cols = [x[:, i:i + Ho, j:j + Wo, :] for i in range(3) for j in range(3)]
    # K order = (kh, kw, C) -> matches weight.transpose(2, 3, 1, 0) layout.
    patches = jnp.stack(cols, axis=3).reshape(B * Ho * Wo, 9 * C)
    y = linear_pallas(patches, layer, activation="tanh")
    return y[:B * Ho * Wo, :out_c].reshape(B, Ho, Wo, out_c)


def maxpool2x2_nhwc(x):
    B, H, W, C = x.shape
    return x.reshape(B, H // 2, 2, W // 2, 2, C).max(axis=(2, 4))


# ---------------------------------------------------------------------------
# Parameters
# ---------------------------------------------------------------------------
def init_params(key, output_size):
    """Raw params in PyTorch layout, U(-1/sqrt(fan_in), 1/sqrt(fan_in))."""
    def uni(k, shape, fan_in):
        bound = 1.0 / math.sqrt(fan_in)
        return jax.random.uniform(k, shape, jnp.float32, -bound, bound)

    ks = jax.random.split(key, 10)
    return [
        (uni(ks[0], (32, 2, 3, 3), 2 * 9),    uni(ks[1], (32,), 2 * 9)),
        (uni(ks[2], (64, 32, 3, 3), 32 * 9),  uni(ks[3], (64,), 32 * 9)),
        (uni(ks[4], (1024, 9216), 9216),      uni(ks[5], (1024,), 9216)),
        (uni(ks[6], (128, 1024), 1024),       uni(ks[7], (128,), 1024)),
        (uni(ks[8], (output_size, 128), 128), uni(ks[9], (output_size,), 128)),
    ]


def _tile_weight(wmat, bias):
    """[K, N] f32 -> contiguous bf16 slabs [n_tiles, Kp, tn] + f32 bias [1, Np]."""
    wp = _pad_axis(_pad_axis(wmat, _LANE, 0), _LANE, 1)
    Kp, Np = wp.shape
    tn = _pick_tn(Kp, Np, w_bytes=2)
    w_tiles = wp.reshape(Kp, Np // tn, tn).transpose(1, 0, 2).astype(jnp.bfloat16)
    bp = _pad_axis(bias, _LANE, 0).reshape(1, -1).astype(jnp.float32)
    return w_tiles, bp


def prepare_params(raw):
    """One-time: transpose to K-major, permute to NHWC order, pad, tile, bf16."""
    (c1w, c1b), (c2w, c2b), (f1w, f1b), (f2w, f2b), (f3w, f3b) = raw

    def conv_mat(w):   # [O, I, kh, kw] -> [kh*kw*I, O] (matches NHWC im2col K order)
        return w.transpose(2, 3, 1, 0).reshape(-1, w.shape[0])

    conv1 = _tile_weight(conv_mat(c1w), c1b)
    conv2 = _tile_weight(conv_mat(c2w), c2b)

    # FC1 in-features permuted from torch's NCHW flatten (64,12,12) to the
    # NHWC flatten (12,12,64) produced by this implementation.
    f1w_nhwc = f1w.reshape(1024, 64, 12, 12).transpose(0, 2, 3, 1).reshape(1024, 9216)
    fc1 = _tile_weight(f1w_nhwc.T, f1b)

    # FC2 + FC3 fused tail: tiny, VMEM-resident, untiled.
    w2 = f2w.T.astype(jnp.bfloat16)                           # [1024, 128]
    b2 = f2b.reshape(1, -1).astype(jnp.float32)
    w3 = _pad_axis(f3w.T, _LANE, 1).astype(jnp.bfloat16)      # [128, 128]
    b3 = _pad_axis(f3b, _LANE, 0).reshape(1, -1).astype(jnp.float32)
    return conv1, conv2, fc1, (w2, b2, w3, b3)


# ---------------------------------------------------------------------------
# Forward pass (matches DQN_Conv.forward, inference semantics)
# ---------------------------------------------------------------------------
def dqn_conv_forward(params, x, *, output_size):
    conv1, conv2, fc1, tail = params
    h = x.transpose(0, 2, 3, 1)                   # NCHW -> NHWC once at entry
    h = conv2d_3x3_tanh_nhwc(h, conv1, 32)
    h = conv2d_3x3_tanh_nhwc(h, conv2, 64)
    h = maxpool2x2_nhwc(h)
    # Dropout(0.25) / Dropout(0.5): identity at inference.
    h = h.reshape(h.shape[0], -1)                 # NHWC flatten (FC1 rows permuted to match)
    h = linear_pallas(h, fc1, activation="tanh")  # [B, 1024]
    h = tail_linears_pallas(h, tail)              # fused FC2(tanh) + FC3
    return h[:, :output_size]


# ---------------------------------------------------------------------------
# Plain-JAX f32 reference for the correctness check
# ---------------------------------------------------------------------------
def reference_forward(raw, x):
    (c1w, c1b), (c2w, c2b), (f1w, f1b), (f2w, f2b), (f3w, f3b) = raw

    def conv(h, w, b):
        dn = jax.lax.conv_dimension_numbers(h.shape, w.shape,
                                            ("NCHW", "OIHW", "NCHW"))
        y = jax.lax.conv_general_dilated(h, w, (1, 1), "VALID",
                                         dimension_numbers=dn)
        return jnp.tanh(y + b[None, :, None, None])

    h = conv(x, c1w, c1b)
    h = conv(h, c2w, c2b)
    h = jax.lax.reduce_window(h, -jnp.inf, jax.lax.max,
                              (1, 1, 2, 2), (1, 1, 2, 2), "VALID")
    h = h.reshape(h.shape[0], -1)
    h = jnp.tanh(h @ f1w.T + f1b)
    h = jnp.tanh(h @ f2w.T + f2b)
    return h @ f3w.T + f3b


if __name__ == "__main__":
    output_size = 4
    key = jax.random.PRNGKey(0)
    pkey, xkey = jax.random.split(key)

    raw = init_params(pkey, output_size)
    params = prepare_params(raw)

    batch = 2
    # Shape dictated by the module: 2 input channels, 28x28 spatial.
    x = jax.random.normal(xkey, (batch, 2, 28, 28), dtype=jnp.float32)

    fwd = jax.jit(functools.partial(dqn_conv_forward, output_size=output_size))
    logits = fwd(params, x)
    jax.block_until_ready(logits)

    ref = reference_forward(raw, x)
    assert logits.shape == (batch, output_size)
    err = float(jnp.max(jnp.abs(logits - ref)))
    # Relaxed tolerance: weights/activations are rounded to bf16 (K=9216
    # reduction with fp32 accumulation) while the reference is pure f32.
    assert jnp.allclose(logits, ref, atol=2e-2, rtol=2e-2), err

    print("KERNEL_OK")
</pallas_src>

<mosaic_0001>
module attributes {stable_mosaic.version = 11 : i64} {
  func.func @_matmul_bias_act_kernel(%arg0: i32, %arg1: i32, %arg2: memref<680x128xf32, #tpu.memory_space<vmem>>, %arg3: memref<1x128x128xbf16, #tpu.memory_space<vmem>>, %arg4: memref<1x128xf32, #tpu.memory_space<vmem>>, %arg5: memref<680x128xf32, #tpu.memory_space<vmem>>) attributes {dimension_semantics = [#tpu.dimension_semantics<parallel>, #tpu.dimension_semantics<parallel>], iteration_bounds = array<i64: 2, 1>, scalar_prefetch = 0 : i64, scratch_operands = 0 : i64, tpu.core_type = #tpu.core_type<tc>, window_params = [{transform_indices = @transform_0, window_bounds = array<i64: 680, 128>}, {transform_indices = @transform_1, window_bounds = array<i64: 1, 128, 128>}, {transform_indices = @transform_2, window_bounds = array<i64: 1, 128>}, {transform_indices = @transform_3, window_bounds = array<i64: 680, 128>}]} {
    %c0 = arith.constant 0 : index
    %c0_0 = arith.constant 0 : index
    %0 = vector.load %arg2[%c0, %c0_0] : memref<680x128xf32, #tpu.memory_space<vmem>>, vector<680x128xf32>
    %1 = arith.truncf %0 : vector<680x128xf32> to vector<680x128xbf16>
    %c0_1 = arith.constant 0 : index
    %c0_2 = arith.constant 0 : index
    %c0_3 = arith.constant 0 : index
    %2 = vector.load %arg3[%c0_1, %c0_2, %c0_3] : memref<1x128x128xbf16, #tpu.memory_space<vmem>>, vector<1x128x128xbf16>
    %3 = vector.shape_cast %2 : vector<1x128x128xbf16> to vector<128x128xbf16>
    %cst = arith.constant dense<0.000000e+00> : vector<680x128xf32>
    %4 = tpu.matmul %1, %3, %cst {dimension_numbers = #tpu.dot_dimension_numbers<[1], [0], [0], [1], [0, 0, 1, 1], [], []>} : vector<680x128xbf16>, vector<128x128xbf16>, vector<680x128xf32> -> vector<680x128xf32>
    %c0_4 = arith.constant 0 : index
    %c0_5 = arith.constant 0 : index
    %5 = vector.load %arg4[%c0_4, %c0_5] : memref<1x128xf32, #tpu.memory_space<vmem>>, vector<1x128xf32>
    %6 = vector.broadcast %5 : vector<1x128xf32> to vector<680x128xf32>
    %7 = arith.addf %4, %6 : vector<680x128xf32>
    %8 = math.tanh %7 : vector<680x128xf32>
    %c0_6 = arith.constant 0 : index
    %c0_7 = arith.constant 0 : index
    %9 = vector.load %arg5[%c0_6, %c0_7] : memref<680x128xf32, #tpu.memory_space<vmem>>, vector<680x128xf32>
    tpu.vector_store %arg5[%c0_6, %c0_7], %8 {strides = array<i32>} : memref<680x128xf32, #tpu.memory_space<vmem>>, vector<680x128xf32>,
    return
  }
  func.func @transform_0(%arg0: i32, %arg1: i32) -> (i32, i32) {
    %c0_i32 = arith.constant 0 : i32
    %c0_i32_0 = arith.constant 0 : i32
    return %arg0, %c0_i32 : i32, i32
  }
  func.func @transform_1(%arg0: i32, %arg1: i32) -> (i32, i32, i32) {
    %c0_i32 = arith.constant 0 : i32
    %c0_i32_0 = arith.constant 0 : i32
    %c0_i32_1 = arith.constant 0 : i32
    return %arg1, %c0_i32, %c0_i32_0 : i32, i32, i32
  }
  func.func @transform_2(%arg0: i32, %arg1: i32) -> (i32, i32) {
    %c0_i32 = arith.constant 0 : i32
    %c0_i32_0 = arith.constant 0 : i32
    return %c0_i32, %arg1 : i32, i32
  }
  func.func @transform_3(%arg0: i32, %arg1: i32) -> (i32, i32) {
    %c0_i32 = arith.constant 0 : i32
    return %arg0, %arg1 : i32, i32
  }
}

module attributes {stable_mosaic.version = 11 : i64} {
  func.func @_matmul_bias_act_kernel(%arg0: i32, %arg1: i32, %arg2: memref<576x384xf32, #tpu.memory_space<vmem>>, %arg3: memref<1x384x128xbf16, #tpu.memory_space<vmem>>, %arg4: memref<1x128xf32, #tpu.memory_space<vmem>>, %arg5: memref<576x128xf32, #tpu.memory_space<vmem>>) attributes {dimension_semantics = [#tpu.dimension_semantics<parallel>, #tpu.dimension_semantics<parallel>], iteration_bounds = array<i64: 2, 1>, scalar_prefetch = 0 : i64, scratch_operands = 0 : i64, tpu.core_type = #tpu.core_type<tc>, window_params = [{transform_indices = @transform_0, window_bounds = array<i64: 576, 384>}, {transform_indices = @transform_1, window_bounds = array<i64: 1, 384, 128>}, {transform_indices = @transform_2, window_bounds = array<i64: 1, 128>}, {transform_indices = @transform_3, window_bounds = array<i64: 576, 128>}]} {
    %c0 = arith.constant 0 : index
    %c0_0 = arith.constant 0 : index
    %0 = vector.load %arg2[%c0, %c0_0] : memref<576x384xf32, #tpu.memory_space<vmem>>, vector<576x384xf32>
    %1 = arith.truncf %0 : vector<576x384xf32> to vector<576x384xbf16>
    %c0_1 = arith.constant 0 : index
    %c0_2 = arith.constant 0 : index
    %c0_3 = arith.constant 0 : index
    %2 = vector.load %arg3[%c0_1, %c0_2, %c0_3] : memref<1x384x128xbf16, #tpu.memory_space<vmem>>, vector<1x384x128xbf16>
    %3 = vector.shape_cast %2 : vector<1x384x128xbf16> to vector<384x128xbf16>
    %cst = arith.constant dense<0.000000e+00> : vector<576x128xf32>
    %4 = tpu.matmul %1, %3, %cst {dimension_numbers = #tpu.dot_dimension_numbers<[1], [0], [0], [1], [0, 0, 1, 1], [], []>} : vector<576x384xbf16>, vector<384x128xbf16>, vector<576x128xf32> -> vector<576x128xf32>
    %c0_4 = arith.constant 0 : index
    %c0_5 = arith.constant 0 : index
    %5 = vector.load %arg4[%c0_4, %c0_5] : memref<1x128xf32, #tpu.memory_space<vmem>>, vector<1x128xf32>
    %6 = vector.broadcast %5 : vector<1x128xf32> to vector<576x128xf32>
    %7 = arith.addf %4, %6 : vector<576x128xf32>
    %8 = math.tanh %7 : vector<576x128xf32>
    %c0_6 = arith.constant 0 : index
    %c0_7 = arith.constant 0 : index
    %9 = vector.load %arg5[%c0_6, %c0_7] : memref<576x128xf32, #tpu.memory_space<vmem>>, vector<576x128xf32>
    tpu.vector_store %arg5[%c0_6, %c0_7], %8 {strides = array<i32>} : memref<576x128xf32, #tpu.memory_space<vmem>>, vector<576x128xf32>,
    return
  }
  func.func @transform_0(%arg0: i32, %arg1: i32) -> (i32, i32) {
    %c0_i32 = arith.constant 0 : i32
    %c0_i32_0 = arith.constant 0 : i32
    return %arg0, %c0_i32 : i32, i32
  }
  func.func @transform_1(%arg0: i32, %arg1: i32) -> (i32, i32, i32) {
    %c0_i32 = arith.constant 0 : i32
    %c0_i32_0 = arith.constant 0 : i32
    %c0_i32_1 = arith.constant 0 : i32
    return %arg1, %c0_i32, %c0_i32_0 : i32, i32, i32
  }
  func.func @transform_2(%arg0: i32, %arg1: i32) -> (i32, i32) {
    %c0_i32 = arith.constant 0 : i32
    %c0_i32_0 = arith.constant 0 : i32
    return %c0_i32, %arg1 : i32, i32
  }
  func.func @transform_3(%arg0: i32, %arg1: i32) -> (i32, i32) {
    %c0_i32 = arith.constant 0 : i32
    return %arg0, %arg1 : i32, i32
  }
}

module attributes {stable_mosaic.version = 11 : i64} {
  func.func @_matmul_bias_act_kernel(%arg0: i32, %arg1: i32, %arg2: memref<2x9216xf32, #tpu.memory_space<vmem>>, %arg3: memref<1x9216x256xbf16, #tpu.memory_space<vmem>>, %arg4: memref<1x256xf32, #tpu.memory_space<vmem>>, %arg5: memref<2x256xf32, #tpu.memory_space<vmem>>) attributes {dimension_semantics = [#tpu.dimension_semantics<parallel>, #tpu.dimension_semantics<parallel>], iteration_bounds = array<i64: 1, 4>, scalar_prefetch = 0 : i64, scratch_operands = 0 : i64, tpu.core_type = #tpu.core_type<tc>, window_params = [{transform_indices = @transform_0, window_bounds = array<i64: 2, 9216>}, {transform_indices = @transform_1, window_bounds = array<i64: 1, 9216, 256>}, {transform_indices = @transform_2, window_bounds = array<i64: 1, 256>}, {transform_indices = @transform_3, window_bounds = array<i64: 2, 256>}]} {
    %c0 = arith.constant 0 : index
    %c0_0 = arith.constant 0 : index
    %0 = vector.load %arg2[%c0, %c0_0] : memref<2x9216xf32, #tpu.memory_space<vmem>>, vector<2x9216xf32>
    %1 = arith.truncf %0 : vector<2x9216xf32> to vector<2x9216xbf16>
    %c0_1 = arith.constant 0 : index
    %c0_2 = arith.constant 0 : index
    %c0_3 = arith.constant 0 : index
    %2 = vector.load %arg3[%c0_1, %c0_2, %c0_3] : memref<1x9216x256xbf16, #tpu.memory_space<vmem>>, vector<1x9216x256xbf16>
    %3 = vector.shape_cast %2 : vector<1x9216x256xbf16> to vector<9216x256xbf16>
    %cst = arith.constant dense<0.000000e+00> : vector<2x256xf32>
    %4 = tpu.matmul %1, %3, %cst {dimension_numbers = #tpu.dot_dimension_numbers<[1], [0], [0], [1], [0, 0, 1, 1], [], []>} : vector<2x9216xbf16>, vector<9216x256xbf16>, vector<2x256xf32> -> vector<2x256xf32>
    %c0_4 = arith.constant 0 : index
    %c0_5 = arith.constant 0 : index
    %5 = vector.load %arg4[%c0_4, %c0_5] : memref<1x256xf32, #tpu.memory_space<vmem>>, vector<1x256xf32>
    %6 = vector.broadcast %5 : vector<1x256xf32> to vector<2x256xf32>
    %7 = arith.addf %4, %6 : vector<2x256xf32>
    %8 = math.tanh %7 : vector<2x256xf32>
    %c0_6 = arith.constant 0 : index
    %c0_7 = arith.constant 0 : index
    %9 = vector.load %arg5[%c0_6, %c0_7] : memref<2x256xf32, #tpu.memory_space<vmem>>, vector<2x256xf32>
    tpu.vector_store %arg5[%c0_6, %c0_7], %8 {strides = array<i32>} : memref<2x256xf32, #tpu.memory_space<vmem>>, vector<2x256xf32>,
    return
  }
  func.func @transform_0(%arg0: i32, %arg1: i32) -> (i32, i32) {
    %c0_i32 = arith.constant 0 : i32
    %c0_i32_0 = arith.constant 0 : i32
    return %arg0, %c0_i32 : i32, i32
  }
  func.func @transform_1(%arg0: i32, %arg1: i32) -> (i32, i32, i32) {
    %c0_i32 = arith.constant 0 : i32
    %c0_i32_0 = arith.constant 0 : i32
    %c0_i32_1 = arith.constant 0 : i32
    return %arg1, %c0_i32, %c0_i32_0 : i32, i32, i32
  }
  func.func @transform_2(%arg0: i32, %arg1: i32) -> (i32, i32) {
    %c0_i32 = arith.constant 0 : i32
    %c0_i32_0 = arith.constant 0 : i32
    return %c0_i32, %arg1 : i32, i32
  }
  func.func @transform_3(%arg0: i32, %arg1: i32) -> (i32, i32) {
    %c0_i32 = arith.constant 0 : i32
    return %arg0, %arg1 : i32, i32
  }
}

module attributes {stable_mosaic.version = 11 : i64} {
  func.func @_tail_kernel(%arg0: i32, %arg1: memref<2x1024xf32, #tpu.memory_space<vmem>>, %arg2: memref<1024x128xbf16, #tpu.memory_space<vmem>>, %arg3: memref<1x128xf32, #tpu.memory_space<vmem>>, %arg4: memref<128x128xbf16, #tpu.memory_space<vmem>>, %arg5: memref<1x128xf32, #tpu.memory_space<vmem>>, %arg6: memref<2x128xf32, #tpu.memory_space<vmem>>) attributes {dimension_semantics = [#tpu.dimension_semantics<arbitrary>], iteration_bounds = array<i64: 1>, scalar_prefetch = 0 : i64, scratch_operands = 0 : i64, tpu.core_type = #tpu.core_type<tc>, window_params = [{pipeline_mode = #tpu.pipeline_mode<synchronous>, transform_indices = @transform_0, window_bounds = array<i64: 2, 1024>}, {pipeline_mode = #tpu.pipeline_mode<synchronous>, transform_indices = @transform_1, window_bounds = array<i64: 1024, 128>}, {pipeline_mode = #tpu.pipeline_mode<synchronous>, transform_indices = @transform_2, window_bounds = array<i64: 1, 128>}, {pipeline_mode = #tpu.pipeline_mode<synchronous>, transform_indices = @transform_3, window_bounds = array<i64: 128, 128>}, {pipeline_mode = #tpu.pipeline_mode<synchronous>, transform_indices = @transform_4, window_bounds = array<i64: 1, 128>}, {pipeline_mode = #tpu.pipeline_mode<synchronous>, transform_indices = @transform_5, window_bounds = array<i64: 2, 128>}]} {
    %c0 = arith.constant 0 : index
    %c0_0 = arith.constant 0 : index
    %0 = vector.load %arg1[%c0, %c0_0] : memref<2x1024xf32, #tpu.memory_space<vmem>>, vector<2x1024xf32>
    %1 = arith.truncf %0 : vector<2x1024xf32> to vector<2x1024xbf16>
    %c0_1 = arith.constant 0 : index
    %c0_2 = arith.constant 0 : index
    %2 = vector.load %arg2[%c0_1, %c0_2] : memref<1024x128xbf16, #tpu.memory_space<vmem>>, vector<1024x128xbf16>
    %cst = arith.constant dense<0.000000e+00> : vector<2x128xf32>
    %3 = tpu.matmul %1, %2, %cst {dimension_numbers = #tpu.dot_dimension_numbers<[1], [0], [0], [1], [0, 0, 1, 1], [], []>} : vector<2x1024xbf16>, vector<1024x128xbf16>, vector<2x128xf32> -> vector<2x128xf32>
    %c0_3 = arith.constant 0 : index
    %c0_4 = arith.constant 0 : index
    %4 = vector.load %arg3[%c0_3, %c0_4] : memref<1x128xf32, #tpu.memory_space<vmem>>, vector<1x128xf32>
    %5 = vector.broadcast %4 : vector<1x128xf32> to vector<2x128xf32>
    %6 = arith.addf %3, %5 : vector<2x128xf32>
    %7 = math.tanh %6 : vector<2x128xf32>
    %8 = arith.truncf %7 : vector<2x128xf32> to vector<2x128xbf16>
    %c0_5 = arith.constant 0 : index
    %c0_6 = arith.constant 0 : index
    %9 = vector.load %arg4[%c0_5, %c0_6] : memref<128x128xbf16, #tpu.memory_space<vmem>>, vector<128x128xbf16>
    %cst_7 = arith.constant dense<0.000000e+00> : vector<2x128xf32>
    %10 = tpu.matmul %8, %9, %cst_7 {dimension_numbers = #tpu.dot_dimension_numbers<[1], [0], [0], [1], [0, 0, 1, 1], [], []>} : vector<2x128xbf16>, vector<128x128xbf16>, vector<2x128xf32> -> vector<2x128xf32>
    %c0_8 = arith.constant 0 : index
    %c0_9 = arith.constant 0 : index
    %11 = vector.load %arg5[%c0_8, %c0_9] : memref<1x128xf32, #tpu.memory_space<vmem>>, vector<1x128xf32>
    %12 = vector.broadcast %11 : vector<1x128xf32> to vector<2x128xf32>
    %13 = arith.addf %10, %12 : vector<2x128xf32>
    %c0_10 = arith.constant 0 : index
    %c0_11 = arith.constant 0 : index
    %14 = vector.load %arg6[%c0_10, %c0_11] : memref<2x128xf32, #tpu.memory_space<vmem>>, vector<2x128xf32>
    tpu.vector_store %arg6[%c0_10, %c0_11], %13 {strides = array<i32>} : memref<2x128xf32, #tpu.memory_space<vmem>>, vector<2x128xf32>,
    return
  }
  func.func @transform_0(%arg0: i32) -> (i32, i32) {
    %c0_i32 = arith.constant 0 : i32
    %c0_i32_0 = arith.constant 0 : i32
    %c0_i32_1 = arith.constant 0 : i32
    return %c0_i32, %c0_i32_0 : i32, i32
  }
  func.func @transform_1(%arg0: i32) -> (i32, i32) {
    %c0_i32 = arith.constant 0 : i32
    %c0_i32_0 = arith.constant 0 : i32
    %c0_i32_1 = arith.constant 0 : i32
    return %c0_i32, %c0_i32_0 : i32, i32
  }
  func.func @transform_2(%arg0: i32) -> (i32, i32) {
    %c0_i32 = arith.constant 0 : i32
    %c0_i32_0 = arith.constant 0 : i32
    %c0_i32_1 = arith.constant 0 : i32
    return %c0_i32, %c0_i32_0 : i32, i32
  }
  func.func @transform_3(%arg0: i32) -> (i32, i32) {
    %c0_i32 = arith.constant 0 : i32
    %c0_i32_0 = arith.constant 0 : i32
    %c0_i32_1 = arith.constant 0 : i32
    return %c0_i32, %c0_i32_0 : i32, i32
  }
  func.func @transform_4(%arg0: i32) -> (i32, i32) {
    %c0_i32 = arith.constant 0 : i32
    %c0_i32_0 = arith.constant 0 : i32
    %c0_i32_1 = arith.constant 0 : i32
    return %c0_i32, %c0_i32_0 : i32, i32
  }
  func.func @transform_5(%arg0: i32) -> (i32, i32) {
    %c0_i32 = arith.constant 0 : i32
    %c0_i32_0 = arith.constant 0 : i32
    %c0_i32_1 = arith.constant 0 : i32
    return %c0_i32, %c0_i32_0 : i32, i32
  }
}

</mosaic_0001>

<llo_original>
// kernel: dqn_conv_forward.4
$region0: #{dqn_conv_forward.4}
  #allocation0 [shape = 'u32[]', space=smem, size = 0x4, offset = 0x4, fixed_abs, tag = 'smem constant byte address 0x4 - core index']
  #allocation1 [shape = 'u32[72,128]{1,0:T(1,128)}', space=vmem, size = 0x9000, scoped, tag = 'internal scratch']
  %s0 = inlined_call_operand.vmem [shape: f32[1360,128], index: 0, kind: input, shape index: {}]
  %s1 = inlined_call_operand.hbm [shape: bf16[1,128,128], index: 1, kind: input, shape index: {}]
  %s2 = inlined_call_operand.hbm [shape: f32[1,128], index: 2, kind: input, shape index: {}]
  %s3 = inlined_call_operand.vmem [shape: f32[1360,128], index: 3, kind: output, shape index: {}]
  %s4 = sld [smem:[#allocation0]]
  $region53: #{dqn_conv_forward.4} parent=0
    _
  %s6 = ssub.s32 1, %s4
  %s7 = scalar_select 0, %s6, %s4
  $region1: #{dqn_conv_forward.4} parent=0
    #allocation2 [shape = 'u8[32768]{0}', space=vmem, size = 0x8000, scoped, tag = 'input window, operand 1, single buffered']
    #allocation3 [shape = 's32[2]{0}', space=sflag, size = 0x8, scoped, tag = 'scoped memory for dqn_conv_forward.4']
    #allocation4 [shape = 'u8[512]{0}', space=vmem, size = 0x400, scoped, tag = 'input window, operand 2, single buffered']
    #allocation5 [shape = 's32[1]{0}', space=sflag, size = 0x4, scoped, tag = 'scoped memory for dqn_conv_forward.4']
    %8 = vsyncpa [#allocation3], 0
    %9 = vsyncpa [#allocation5], 0
    loop: start=0, step=1, limit=4
    $region2: #{dqn_conv_forward.4} parent=1 // loop_pre_header
      _
    $region3: #{dqn_conv_forward.4} parent=1 // loop_header
      %s11 = sphi 0, %s15
      %p12 = scmp.ge.s32.totalorder %s11, 4
      %s18 = sphi 0, %s30
      %s19 = sphi 0, %s26
      %s20 = sphi 0, %s18
      %s21 = sphi 0, %s19
      %s22 = sphi 0, %s20
      %s23 = sphi 0, %s21
      %s33 = sphi 0, %s35
      %s36 = sphi 0, %s33
      %s37 = sphi 0, %s36
      %s53 = sphi 0, %s37
      %s59 = sphi 0, %s61
      %s62 = sphi 0, %s59
      %s63 = sphi 0, %s62
      %s79 = sphi 0, %s63
      %s85 = sphi 0, %s87
      %s88 = sphi 0, %s85
      %s89 = sphi 0, %s88
      %s105 = sphi 0, %s89
      %s113 = sphi 0, %s115
      %s116 = sphi 0, %s113
      %s117 = sphi 0, %s116
      %s133 = sphi 0, %s117
    $region4: #{dqn_conv_forward.4} parent=1 // loop_header_branch
      %14 = sbr.rel (%p12) target = $region8
    $region5: #{dqn_conv_forward.4} parent=1 // loop_body
      %s16 = ssub.s32 %s11, 1
      %s17 = ssub.s32 %s11, 2
      %s24 = sadd.s32 1, %s19
      %p25 = scmp.ge.s32.totalorder %s24, 1
      %s26 = scalar_select %p25, 0, %s24
      %s27 = sadd.s32 1, %s18
      %s28 = scalar_select %p25, %s27, %s18
      %p29 = scmp.ge.s32.totalorder %s28, 2
      %s30 = scalar_select %p29, 0, %s28
      %s31 = ssub.s32 %s18, %s30
      %p32 = scmp.eq.s32.totalorder %s31, 0
      %s34 = sadd.s32 %s33, 1
      %s35 = scalar_select %p32, %s33, %s34
      %p38 = pneg %p32
      %p39 = scmp.eq.s32.totalorder %s11, 1
      %p40 = por %p38, %p39
      %p41 = scmp.ne.s32.totalorder %s33, %s36
      %p42 = scmp.eq.s32.totalorder %s11, 0
      %p43 = por %p41, %p42
      %p44 = scmp.ne.s32.totalorder %s33, %s36
      %p45 = scmp.eq.s32.totalorder %s16, 1
      %p46 = por %p44, %p45
      %p47 = scmp.ne.s32.totalorder %s36, %s37
      %p48 = scmp.eq.s32.totalorder %s16, 0
      %p49 = por %p47, %p48
      %p50 = scmp.ne.s32.totalorder %s36, %s37
      %p51 = scmp.eq.s32.totalorder %s17, 1
      %p52 = por %p50, %p51
      %p54 = scmp.ne.s32.totalorder %s37, %s53
      %p55 = scmp.eq.s32.totalorder %s17, 0
      %p56 = por %p54, %p55
      %s57 = ssub.s32 %s19, %s26
      %p58 = scmp.eq.s32.totalorder %s57, 0
      %s60 = sadd.s32 %s59, 1
      %s61 = scalar_select %p58, %s59, %s60
      %p64 = pneg %p58
      %p65 = scmp.eq.s32.totalorder %s11, 1
      %p66 = por %p64, %p65
      %p67 = scmp.ne.s32.totalorder %s59, %s62
      %p68 = scmp.eq.s32.totalorder %s11, 0
      %p69 = por %p67, %p68
      %p70 = scmp.ne.s32.totalorder %s59, %s62
      %p71 = scmp.eq.s32.totalorder %s16, 1
      %p72 = por %p70, %p71
      %p73 = scmp.ne.s32.totalorder %s62, %s63
      %p74 = scmp.eq.s32.totalorder %s16, 0
      %p75 = por %p73, %p74
      %p76 = scmp.ne.s32.totalorder %s62, %s63
      %p77 = scmp.eq.s32.totalorder %s17, 1
      %p78 = por %p76, %p77
      %p80 = scmp.ne.s32.totalorder %s63, %s79
      %p81 = scmp.eq.s32.totalorder %s17, 0
      %p82 = por %p80, %p81
      %s83 = ssub.s32 %s19, %s26
      %p84 = scmp.eq.s32.totalorder %s83, 0
      %s86 = sadd.s32 %s85, 1
      %s87 = scalar_select %p84, %s85, %s86
      %p90 = pneg %p84
      %p91 = scmp.eq.s32.totalorder %s11, 1
      %p92 = por %p90, %p91
      %p93 = scmp.ne.s32.totalorder %s85, %s88
      %p94 = scmp.eq.s32.totalorder %s11, 0
      %p95 = por %p93, %p94
      %p96 = scmp.ne.s32.totalorder %s85, %s88
      %p97 = scmp.eq.s32.totalorder %s16, 1
      %p98 = por %p96, %p97
      %p99 = scmp.ne.s32.totalorder %s88, %s89
      %p100 = scmp.eq.s32.totalorder %s16, 0
      %p101 = por %p99, %p100
      %p102 = scmp.ne.s32.totalorder %s88, %s89
      %p103 = scmp.eq.s32.totalorder %s17, 1
      %p104 = por %p102, %p103
      %p106 = scmp.ne.s32.totalorder %s89, %s105
      %p107 = scmp.eq.s32.totalorder %s17, 0
      %p108 = por %p106, %p107
      %s109 = ssub.s32 %s18, %s30
      %s110 = ssub.s32 %s19, %s26
      %s111 = sor.u32 %s109, %s110
      %p112 = scmp.eq.s32.totalorder %s111, 0
      %s114 = sadd.s32 %s113, 1
      %s115 = scalar_select %p112, %s113, %s114
      %p118 = pneg %p112
      %p119 = scmp.eq.s32.totalorder %s11, 1
      %p120 = por %p118, %p119
      %p121 = scmp.ne.s32.totalorder %s113, %s116
      %p122 = scmp.eq.s32.totalorder %s11, 0
      %p123 = por %p121, %p122
      %p124 = scmp.ne.s32.totalorder %s113, %s116
      %p125 = scmp.eq.s32.totalorder %s16, 1
      %p126 = por %p124, %p125
      %p127 = scmp.ne.s32.totalorder %s116, %s117
      %p128 = scmp.eq.s32.totalorder %s16, 0
      %p129 = por %p127, %p128
      %p130 = scmp.ne.s32.totalorder %s116, %s117
      %p131 = scmp.eq.s32.totalorder %s17, 1
      %p132 = por %p130, %p131
      %p134 = scmp.ne.s32.totalorder %s117, %s133
      %p135 = scmp.eq.s32.totalorder %s17, 0
      %p136 = por %p134, %p135
      %p137 = scmp.le.s32.totalorder 1, %s11
      %p138 = scmp.lt.s32.totalorder %s11, 3
      %p139 = pnand %p137, %p138
      %p140 = pneg %p139
      // Predicated region
      $region9: #{dqn_conv_forward.4} parent=5 // pred_check
        _
      $region10: #{dqn_conv_forward.4} parent=5 // pred_check_branch
        %142 = sbr.rel (%p139) target = $region12
      $region11: #{dqn_conv_forward.4} parent=5 // pred_region
        %s143 = ssub.s32 %s11, 1
        // Predicated region
        $region13: #{dqn_conv_forward.4} parent=11 // pred_check
          %p144 = pneg %p75
        $region14: #{dqn_conv_forward.4} parent=11 // pred_check_branch
          %146 = sbr.rel (%p144) target = $region16
        $region15: #{dqn_conv_forward.4} parent=11 // pred_region
          %148 = vsyncadd [#allocation3], 0
          %s149 = smul.addr %s21, 16
          %s150 = smul.addr %s149, 4
          %s151 = scalar_lea.hbm %s1, %s150
          %s152 = sshll.u32 %s151, 4
          %s153 = int_to_ptr.hbm [resolvable:$true] %s152
          %s154 = sshll.u32 [#allocation2], 4
          %s155 = int_to_ptr.vmem [resolvable:$true] %s154
          %160 = dma.hbm_to_vmem [thread:$0]  %s153, 1024, %s155, [#allocation3], 64, 64, 4
        $region16: #{dqn_conv_forward.4} parent=11 // pred_fallthru
          _
        // Predicated region
        $region17: #{dqn_conv_forward.4} parent=11 // pred_check
          %p161 = pneg %p101
        $region18: #{dqn_conv_forward.4} parent=11 // pred_check_branch
          %163 = sbr.rel (%p161) target = $region20
        $region19: #{dqn_conv_forward.4} parent=11 // pred_region
          %165 = vsyncadd [#allocation5], 0
          %s166 = scalar_lea.hbm %s2, %s21
          %s168 = sshll.u32 %s166, 4
          %s169 = int_to_ptr.hbm [resolvable:$true] %s168
          %s170 = sshll.u32 [#allocation4], 4
          %s171 = int_to_ptr.vmem [resolvable:$true] %s170
          %173 = dma.hbm_to_vmem [thread:$0]  %s169, 16, %s171, [#allocation5]
        $region20: #{dqn_conv_forward.4} parent=11 // pred_fallthru
          _
      $region12: #{dqn_conv_forward.4} parent=5 // pred_fallthru
        _
      %p174 = scmp.lt.s32.totalorder %s11, 2
      // Predicated region
      $region21: #{dqn_conv_forward.4} parent=5 // pred_check
        %p175 = pneg %p174
      $region22: #{dqn_conv_forward.4} parent=5 // pred_check_branch
        %177 = sbr.rel (%p175) target = $region24
      $region23: #{dqn_conv_forward.4} parent=5 // pred_region
        // Predicated region
        $region25: #{dqn_conv_forward.4} parent=23 // pred_check
          %p178 = pneg %p43
        $region26: #{dqn_conv_forward.4} parent=23 // pred_check_branch
          %180 = sbr.rel (%p178) target = $region28
        $region27: #{dqn_conv_forward.4} parent=23 // pred_region
          %s181 = smul.u32 85, %s18
          %p182 = scmp.lt.s32.totalorder %s181, 169
          %s183 = scalar_select %p182, %s181, 169
          %s184 = smul.addr %s183, 8
          %s185 = scalar_lea.vmem %s0, %s184
          %s186 = smul.u32 85, %s18
        $region28: #{dqn_conv_forward.4} parent=23 // pred_fallthru
          _
      $region24: #{dqn_conv_forward.4} parent=5 // pred_fallthru
        _
      %p187 = scmp.le.s32.totalorder 1, %s11
      %p188 = scmp.lt.s32.totalorder %s11, 3
      %p189 = pnand %p187, %p188
      %p190 = pneg %p189
      // Predicated region
      $region29: #{dqn_conv_forward.4} parent=5 // pred_check
        _
      $region30: #{dqn_conv_forward.4} parent=5 // pred_check_branch
        %192 = sbr.rel (%p189) target = $region32
      $region31: #{dqn_conv_forward.4} parent=5 // pred_region
        %s193 = ssub.s32 %s11, 1
        // Predicated region
        $region33: #{dqn_conv_forward.4} parent=31 // pred_check
          %p194 = pneg %p75
        $region34: #{dqn_conv_forward.4} parent=31 // pred_check_branch
          %196 = sbr.rel (%p194) target = $region36
        $region35: #{dqn_conv_forward.4} parent=31 // pred_region
          %198 = dma.done [#allocation3], 1024
        $region36: #{dqn_conv_forward.4} parent=31 // pred_fallthru
          _
        // Predicated region
        $region37: #{dqn_conv_forward.4} parent=31 // pred_check
          %p199 = pneg %p101
        $region38: #{dqn_conv_forward.4} parent=31 // pred_check_branch
          %201 = sbr.rel (%p199) target = $region40
        $region39: #{dqn_conv_forward.4} parent=31 // pred_region
          %203 = dma.done [#allocation5], 16
        $region40: #{dqn_conv_forward.4} parent=31 // pred_fallthru
          _
        %s204 = smul.u32 85, %s20
        %p205 = scmp.lt.s32.totalorder %s204, 169
        %s206 = scalar_select %p205, %s204, 169
        %s207 = smul.addr %s206, 8
        %s208 = scalar_lea.vmem %s0, %s207
        %p209 = pneg %p49
        %p210 = pneg %p46
        %p211 = pneg %p75
        %p212 = pneg %p72
        %p213 = pneg %p101
        %p214 = pneg %p98
        %p215 = pneg %p129
        %p216 = pneg %p126
        %s217 = smul.u32 85, %s20
        %p218 = scmp.lt.s32.totalorder %s217, 169
        %s219 = scalar_select %p218, %s217, 169
        %p220 = scmp.lt.s32.totalorder %s21, 0
        %s221 = scalar_select %p220, %s21, 0
        %s222 = sadd.s32 %s221, %s219
        %s223 = smul.addr %s222, 8
        %s224 = scalar_lea.vmem %s3, %s223
        %s225 = smul.u32 85, %s20
        %p226 = scmp.lt.s32.totalorder %s225, 169
        %s227 = scalar_select %p226, %s225, 169
        %s228 = smul.addr %s227, 8
        %s229 = scalar_lea.vmem %s0, %s228
        %s230 = smul.u32 85, %s20
        %s231 = smul.u32 85, %s20
        %p232 = scmp.lt.s32.totalorder %s231, 169
        %s233 = scalar_select %p232, %s231, 169
        %p234 = scmp.lt.s32.totalorder %s21, 0
        %s235 = scalar_select %p234, %s21, 0
        %s236 = sadd.s32 %s235, %s233
        %s237 = smul.addr %s236, 8
        %s238 = scalar_lea.vmem %s3, %s237
        %s239 = smul.u32 85, %s20
        %v240 = vld [vmem:[%s229] sm:$0xff]
        %v241 = vld [vmem:[%s229 + $0x8] sm:$0xff]
        %v242 = vld [vmem:[%s229 + $0x10] sm:$0xff]
        %v243 = vld [vmem:[%s229 + $0x18] sm:$0xff]
        %v244 = vld [vmem:[%s229 + $0x20] sm:$0xff]
        %v245 = vld [vmem:[%s229 + $0x28] sm:$0xff]
        %v246 = vld [vmem:[%s229 + $0x30] sm:$0xff]
        %v247 = vld [vmem:[%s229 + $0x38] sm:$0xff]
        %v248 = vld [vmem:[%s229 + $0x40] sm:$0xff]
        %v249 = vld [vmem:[%s229 + $0x48] sm:$0xff]
        %v250 = vld [vmem:[%s229 + $0x50] sm:$0xff]
        %v251 = vld [vmem:[%s229 + $0x58] sm:$0xff]
        %v252 = vld [vmem:[%s229 + $0x60] sm:$0xff]
        %v253 = vld [vmem:[%s229 + $0x68] sm:$0xff]
        %v254 = vld [vmem:[%s229 + $0x70] sm:$0xff]
        %v255 = vld [vmem:[%s229 + $0x78] sm:$0xff]
        %v256 = vld [vmem:[%s229 + $0x80] sm:$0xff]
        %v257 = vld [vmem:[%s229 + $0x88] sm:$0xff]
        %v258 = vld [vmem:[%s229 + $0x90] sm:$0xff]
        %v259 = vld [vmem:[%s229 + $0x98] sm:$0xff]
        %v260 = vld [vmem:[%s229 + $0xa0] sm:$0xff]
        %v261 = vld [vmem:[%s229 + $0xa8] sm:$0xff]
        %v262 = vld [vmem:[%s229 + $0xb0] sm:$0xff]
        %v263 = vld [vmem:[%s229 + $0xb8] sm:$0xff]
        %v264 = vld [vmem:[%s229 + $0xc0] sm:$0xff]
        %v265 = vld [vmem:[%s229 + $0xc8] sm:$0xff]
        %v266 = vld [vmem:[%s229 + $0xd0] sm:$0xff]
        %v267 = vld [vmem:[%s229 + $0xd8] sm:$0xff]
        %v268 = vld [vmem:[%s229 + $0xe0] sm:$0xff]
        %v269 = vld [vmem:[%s229 + $0xe8] sm:$0xff]
        %v270 = vld [vmem:[%s229 + $0xf0] sm:$0xff]
        %v271 = vld [vmem:[%s229 + $0xf8] sm:$0xff]
        %v272 = vld [vmem:[%s229 + $0x100] sm:$0xff]
        %v273 = vld [vmem:[%s229 + $0x108] sm:$0xff]
        %v274 = vld [vmem:[%s229 + $0x110] sm:$0xff]
        %v275 = vld [vmem:[%s229 + $0x118] sm:$0xff]
        %v276 = vld [vmem:[%s229 + $0x120] sm:$0xff]
        %v277 = vld [vmem:[%s229 + $0x128] sm:$0xff]
        %v278 = vld [vmem:[%s229 + $0x130] sm:$0xff]
        %v279 = vld [vmem:[%s229 + $0x138] sm:$0xff]
        %v280 = vld [vmem:[%s229 + $0x140] sm:$0xff]
        %v281 = vld [vmem:[%s229 + $0x148] sm:$0xff]
        %v282 = vld [vmem:[%s229 + $0x150] sm:$0xff]
        %v283 = vld [vmem:[%s229 + $0x158] sm:$0xff]
        %v284 = vld [vmem:[%s229 + $0x160] sm:$0xff]
        %v285 = vld [vmem:[%s229 + $0x168] sm:$0xff]
        %v286 = vld [vmem:[%s229 + $0x170] sm:$0xff]
        %v287 = vld [vmem:[%s229 + $0x178] sm:$0xff]
        %v288 = vld [vmem:[%s229 + $0x180] sm:$0xff]
        %v289 = vld [vmem:[%s229 + $0x188] sm:$0xff]
        %v290 = vld [vmem:[%s229 + $0x190] sm:$0xff]
        %v291 = vld [vmem:[%s229 + $0x198] sm:$0xff]
        %v292 = vld [vmem:[%s229 + $0x1a0] sm:$0xff]
        %v293 = vld [vmem:[%s229 + $0x1a8] sm:$0xff]
        %v294 = vld [vmem:[%s229 + $0x1b0] sm:$0xff]
        %v295 = vld [vmem:[%s229 + $0x1b8] sm:$0xff]
        %v296 = vld [vmem:[%s229 + $0x1c0] sm:$0xff]
        %v297 = vld [vmem:[%s229 + $0x1c8] sm:$0xff]
        %v298 = vld [vmem:[%s229 + $0x1d0] sm:$0xff]
        %v299 = vld [vmem:[%s229 + $0x1d8] sm:$0xff]
        %v300 = vld [vmem:[%s229 + $0x1e0] sm:$0xff]
        %v301 = vld [vmem:[%s229 + $0x1e8] sm:$0xff]
        %v302 = vld [vmem:[%s229 + $0x1f0] sm:$0xff]
        %v303 = vld [vmem:[%s229 + $0x1f8] sm:$0xff]
        %v304 = vld [vmem:[%s229 + $0x200] sm:$0xff]
        %v305 = vld [vmem:[%s229 + $0x208] sm:$0xff]
        %v306 = vld [vmem:[%s229 + $0x210] sm:$0xff]
        %v307 = vld [vmem:[%s229 + $0x218] sm:$0xff]
        %v308 = vld [vmem:[%s229 + $0x220] sm:$0xff]
        %v309 = vld [vmem:[%s229 + $0x228] sm:$0xff]
        %v310 = vld [vmem:[%s229 + $0x230] sm:$0xff]
        %v311 = vld [vmem:[%s229 + $0x238] sm:$0xff]
        %v312 = vld [vmem:[%s229 + $0x240] sm:$0xff]
        %v313 = vld [vmem:[%s229 + $0x248] sm:$0xff]
        %v314 = vld [vmem:[%s229 + $0x250] sm:$0xff]
        %v315 = vld [vmem:[%s229 + $0x258] sm:$0xff]
        %v316 = vld [vmem:[%s229 + $0x260] sm:$0xff]
        %v317 = vld [vmem:[%s229 + $0x268] sm:$0xff]
        %v318 = vld [vmem:[%s229 + $0x270] sm:$0xff]
        %v319 = vld [vmem:[%s229 + $0x278] sm:$0xff]
        %v320 = vld [vmem:[%s229 + $0x280] sm:$0xff]
        %v321 = vld [vmem:[%s229 + $0x288] sm:$0xff]
        %v322 = vld [vmem:[%s229 + $0x290] sm:$0xff]
        %v323 = vld [vmem:[%s229 + $0x298] sm:$0xff]
        %v324 = vld [vmem:[%s229 + $0x2a0] sm:$0xff]
        %v325 = vpack.c.bf16 %v241, %v240
        %v326 = vpack.c.bf16 %v243, %v242
        %v327 = vpack.c.bf16 %v245, %v244
        %v328 = vpack.c.bf16 %v247, %v246
        %v329 = vpack.c.bf16 %v249, %v248
        %v330 = vpack.c.bf16 %v251, %v250
        %v331 = vpack.c.bf16 %v253, %v252
        %v332 = vpack.c.bf16 %v255, %v254
        %v333 = vpack.c.bf16 %v257, %v256
        %v334 = vpack.c.bf16 %v259, %v258
        %v335 = vpack.c.bf16 %v261, %v260
        %v336 = vpack.c.bf16 %v263, %v262
        %v337 = vpack.c.bf16 %v265, %v264
        %v338 = vpack.c.bf16 %v267, %v266
        %v339 = vpack.c.bf16 %v269, %v268
        %v340 = vpack.c.bf16 %v271, %v270
        %v341 = vpack.c.bf16 %v273, %v272
        %v342 = vpack.c.bf16 %v275, %v274
        %v343 = vpack.c.bf16 %v277, %v276
        %v344 = vpack.c.bf16 %v279, %v278
        %v345 = vpack.c.bf16 %v281, %v280
        %v346 = vpack.c.bf16 %v283, %v282
        %v347 = vpack.c.bf16 %v285, %v284
        %v348 = vpack.c.bf16 %v287, %v286
        %v349 = vpack.c.bf16 %v289, %v288
        %v350 = vpack.c.bf16 %v291, %v290
        %v351 = vpack.c.bf16 %v293, %v292
        %v352 = vpack.c.bf16 %v295, %v294
        %v353 = vpack.c.bf16 %v297, %v296
        %v354 = vpack.c.bf16 %v299, %v298
        %v355 = vpack.c.bf16 %v301, %v300
        %v356 = vpack.c.bf16 %v303, %v302
        %v357 = vpack.c.bf16 %v305, %v304
        %v358 = vpack.c.bf16 %v307, %v306
        %v359 = vpack.c.bf16 %v309, %v308
        %v360 = vpack.c.bf16 %v311, %v310
        %v361 = vpack.c.bf16 %v313, %v312
        %v362 = vpack.c.bf16 %v315, %v314
        %v363 = vpack.c.bf16 %v317, %v316
        %v364 = vpack.c.bf16 %v319, %v318
        %v365 = vpack.c.bf16 %v321, %v320
        %v366 = vpack.c.bf16 %v323, %v322
        %v367 = vpack.c.bf16 %v324, %v324
        %v368 = vld [vmem:[#allocation2] sm:$0xf]
        %v369 = vld [vmem:[#allocation2 + $0x4] sm:$0xf]
        %v370 = vld [vmem:[#allocation2 + $0x8] sm:$0xf]
        %v371 = vld [vmem:[#allocation2 + $0xc] sm:$0xf]
        %v372 = vld [vmem:[#allocation2 + $0x10] sm:$0xf]
        %v373 = vld [vmem:[#allocation2 + $0x14] sm:$0xf]
        %v374 = vld [vmem:[#allocation2 + $0x18] sm:$0xf]
        %v375 = vld [vmem:[#allocation2 + $0x1c] sm:$0xf]
        %v376 = vld [vmem:[#allocation2 + $0x20] sm:$0xf]
        %v377 = vld [vmem:[#allocation2 + $0x24] sm:$0xf]
        %v378 = vld [vmem:[#allocation2 + $0x28] sm:$0xf]
        %v379 = vld [vmem:[#allocation2 + $0x2c] sm:$0xf]
        %v380 = vld [vmem:[#allocation2 + $0x30] sm:$0xf]
        %v381 = vld [vmem:[#allocation2 + $0x34] sm:$0xf]
        %v382 = vld [vmem:[#allocation2 + $0x38] sm:$0xf]
        %v383 = vld [vmem:[#allocation2 + $0x3c] sm:$0xf]
        %v384 = vld [vmem:[#allocation4] sm:$0x1]
        %v386 = vperm.slane %v384, 0
        %v404 = vunpack.c.l.b16 %v368
        %v405 = vunpack.c.l.b16 %v369
        %v406 = vunpack.c.l.b16 %v370
        %v407 = vunpack.c.l.b16 %v371
        %v408 = vunpack.c.l.b16 %v372
        %v409 = vunpack.c.l.b16 %v373
        %v410 = vunpack.c.l.b16 %v374
        %v411 = vunpack.c.l.b16 %v375
        %v412 = vunpack.c.l.b16 %v376
        %v413 = vunpack.c.l.b16 %v377
        %v414 = vunpack.c.l.b16 %v378
        %v415 = vunpack.c.l.b16 %v379
        %v416 = vunpack.c.l.b16 %v380
        %v417 = vunpack.c.l.b16 %v381
        %v418 = vunpack.c.l.b16 %v382
        %v419 = vunpack.c.l.b16 %v383
        %v420 = vpack.c.b16 %v405, %v404
        %v421 = vpack.c.b16 %v407, %v406
        %v422 = vpack.c.b16 %v409, %v408
        %v423 = vpack.c.b16 %v411, %v410
        %v424 = vpack.c.b16 %v413, %v412
        %v425 = vpack.c.b16 %v415, %v414
        %v426 = vpack.c.b16 %v417, %v416
        %v427 = vpack.c.b16 %v419, %v418
        %436 = vmatpush.bf16.msra.mxu0 %v427
        %437 = vmatpush.bf16.msra.mxu0 %v426
        %438 = vmatpush.bf16.msra.mxu0 %v425
        %439 = vmatpush.bf16.msra.mxu0 %v424
        %440 = vmatpush.bf16.msra.mxu0 %v423
        %441 = vmatpush.bf16.msra.mxu0 %v422
        %442 = vmatpush.bf16.msra.mxu0 %v421
        %443 = vmatpush.bf16.msra.mxu0 %v420
        %444 = vmatmul.bf16.gmra.mxu0 %v325
        %v445 = vpop.f32.mrf.mxu0
        %v446 = vadd.f32 %v386, %v445
        %v447 = vpop.f32.mrf.mxu0
        %v448 = vadd.f32 %v386, %v447
        %449 = vmatmul.bf16.gmra.mxu0 %v326
        %v450 = vpop.f32.mrf.mxu0
        %v451 = vadd.f32 %v386, %v450
        %v452 = vpop.f32.mrf.mxu0
        %v453 = vadd.f32 %v386, %v452
        %454 = vmatmul.bf16.gmra.mxu0 %v327
        %v455 = vpop.f32.mrf.mxu0
        %v456 = vadd.f32 %v386, %v455
        %v457 = vpop.f32.mrf.mxu0
        %v458 = vadd.f32 %v386, %v457
        %459 = vmatmul.bf16.gmra.mxu0 %v328
        %v460 = vpop.f32.mrf.mxu0
        %v461 = vadd.f32 %v386, %v460
        %v462 = vpop.f32.mrf.mxu0
        %v463 = vadd.f32 %v386, %v462
        %464 = vmatmul.bf16.gmra.mxu0 %v329
        %v465 = vpop.f32.mrf.mxu0
        %v466 = vadd.f32 %v386, %v465
        %v467 = vpop.f32.mrf.mxu0
        %v468 = vadd.f32 %v386, %v467
        %469 = vmatmul.bf16.gmra.mxu0 %v330
        %v470 = vpop.f32.mrf.mxu0
        %v471 = vadd.f32 %v386, %v470
        %v472 = vpop.f32.mrf.mxu0
        %v473 = vadd.f32 %v386, %v472
        %474 = vmatmul.bf16.gmra.mxu0 %v331
        %v475 = vpop.f32.mrf.mxu0
        %v476 = vadd.f32 %v386, %v475
        %v477 = vpop.f32.mrf.mxu0
        %v478 = vadd.f32 %v386, %v477
        %479 = vmatmul.bf16.gmra.mxu0 %v332
        %v480 = vpop.f32.mrf.mxu0
        %v481 = vadd.f32 %v386, %v480
        %v482 = vpop.f32.mrf.mxu0
        %v483 = vadd.f32 %v386, %v482
        %484 = vmatmul.bf16.gmra.mxu0 %v333
        %v485 = vpop.f32.mrf.mxu0
        %v486 = vadd.f32 %v386, %v485
        %v487 = vpop.f32.mrf.mxu0
        %v488 = vadd.f32 %v386, %v487
        %489 = vmatmul.bf16.gmra.mxu0 %v334
        %v490 = vpop.f32.mrf.mxu0
        %v491 = vadd.f32 %v386, %v490
        %v492 = vpop.f32.mrf.mxu0
        %v493 = vadd.f32 %v386, %v492
        %494 = vmatmul.bf16.gmra.mxu0 %v335
        %v495 = vpop.f32.mrf.mxu0
        %v496 = vadd.f32 %v386, %v495
        %v497 = vpop.f32.mrf.mxu0
        %v498 = vadd.f32 %v386, %v497
        %499 = vmatmul.bf16.gmra.mxu0 %v336
        %v500 = vpop.f32.mrf.mxu0
        %v501 = vadd.f32 %v386, %v500
        %v502 = vpop.f32.mrf.mxu0
        %v503 = vadd.f32 %v386, %v502
        %504 = vmatmul.bf16.gmra.mxu0 %v337
        %v505 = vpop.f32.mrf.mxu0
        %v506 = vadd.f32 %v386, %v505
        %v507 = vpop.f32.mrf.mxu0
        %v508 = vadd.f32 %v386, %v507
        %509 = vmatmul.bf16.gmra.mxu0 %v338
        %v510 = vpop.f32.mrf.mxu0
        %v511 = vadd.f32 %v386, %v510
        %v512 = vpop.f32.mrf.mxu0
        %v513 = vadd.f32 %v386, %v512
        %514 = vmatmul.bf16.gmra.mxu0 %v339
        %v515 = vpop.f32.mrf.mxu0
        %v516 = vadd.f32 %v386, %v515
        %v517 = vpop.f32.mrf.mxu0
        %v518 = vadd.f32 %v386, %v517
        %519 = vmatmul.bf16.gmra.mxu0 %v340
        %v520 = vpop.f32.mrf.mxu0
        %v521 = vadd.f32 %v386, %v520
        %v522 = vpop.f32.mrf.mxu0
        %v523 = vadd.f32 %v386, %v522
        %524 = vmatmul.bf16.gmra.mxu0 %v341
        %v525 = vpop.f32.mrf.mxu0
        %v526 = vadd.f32 %v386, %v525
        %v527 = vpop.f32.mrf.mxu0
        %v528 = vadd.f32 %v386, %v527
        %529 = vmatmul.bf16.gmra.mxu0 %v342
        %v530 = vpop.f32.mrf.mxu0
        %v531 = vadd.f32 %v386, %v530
        %v532 = vpop.f32.mrf.mxu0
        %v533 = vadd.f32 %v386, %v532
        %534 = vmatmul.bf16.gmra.mxu0 %v343
        %v535 = vpop.f32.mrf.mxu0
        %v536 = vadd.f32 %v386, %v535
        %v537 = vpop.f32.mrf.mxu0
        %v538 = vadd.f32 %v386, %v537
        %539 = vmatmul.bf16.gmra.mxu0 %v344
        %v540 = vpop.f32.mrf.mxu0
        %v541 = vadd.f32 %v386, %v540
        %v542 = vpop.f32.mrf.mxu0
        %v543 = vadd.f32 %v386, %v542
        %544 = vmatmul.bf16.gmra.mxu0 %v345
        %v545 = vpop.f32.mrf.mxu0
        %v546 = vadd.f32 %v386, %v545
        %v547 = vpop.f32.mrf.mxu0
        %v548 = vadd.f32 %v386, %v547
        %549 = vmatmul.bf16.gmra.mxu0 %v346
        %v550 = vpop.f32.mrf.mxu0
        %v551 = vadd.f32 %v386, %v550
        %v552 = vpop.f32.mrf.mxu0
        %v553 = vadd.f32 %v386, %v552
        %554 = vmatmul.bf16.gmra.mxu0 %v347
        %v555 = vpop.f32.mrf.mxu0
        %v556 = vadd.f32 %v386, %v555
        %v557 = vpop.f32.mrf.mxu0
        %v558 = vadd.f32 %v386, %v557
        %559 = vmatmul.bf16.gmra.mxu0 %v348
        %v560 = vpop.f32.mrf.mxu0
        %v561 = vadd.f32 %v386, %v560
        %v562 = vpop.f32.mrf.mxu0
        %v563 = vadd.f32 %v386, %v562
        %564 = vmatmul.bf16.gmra.mxu0 %v349
        %v565 = vpop.f32.mrf.mxu0
        %v566 = vadd.f32 %v386, %v565
        %v567 = vpop.f32.mrf.mxu0
        %v568 = vadd.f32 %v386, %v567
        %569 = vmatmul.bf16.gmra.mxu0 %v350
        %v570 = vpop.f32.mrf.mxu0
        %v571 = vadd.f32 %v386, %v570
        %v572 = vpop.f32.mrf.mxu0
        %v573 = vadd.f32 %v386, %v572
        %574 = vmatmul.bf16.gmra.mxu0 %v351
        %v575 = vpop.f32.mrf.mxu0
        %v576 = vadd.f32 %v386, %v575
        %v577 = vpop.f32.mrf.mxu0
        %v578 = vadd.f32 %v386, %v577
        %579 = vmatmul.bf16.gmra.mxu0 %v352
        %v580 = vpop.f32.mrf.mxu0
        %v581 = vadd.f32 %v386, %v580
        %v582 = vpop.f32.mrf.mxu0
        %v583 = vadd.f32 %v386, %v582
        %584 = vmatmul.bf16.gmra.mxu0 %v353
        %v585 = vpop.f32.mrf.mxu0
        %v586 = vadd.f32 %v386, %v585
        %v587 = vpop.f32.mrf.mxu0
        %v588 = vadd.f32 %v386, %v587
        %589 = vmatmul.bf16.gmra.mxu0 %v354
        %v590 = vpop.f32.mrf.mxu0
        %v591 = vadd.f32 %v386, %v590
        %v592 = vpop.f32.mrf.mxu0
        %v593 = vadd.f32 %v386, %v592
        %594 = vmatmul.bf16.gmra.mxu0 %v355
        %v595 = vpop.f32.mrf.mxu0
        %v596 = vadd.f32 %v386, %v595
        %v597 = vpop.f32.mrf.mxu0
        %v598 = vadd.f32 %v386, %v597
        %599 = vmatmul.bf16.gmra.mxu0 %v356
        %v600 = vpop.f32.mrf.mxu0
        %v601 = vadd.f32 %v386, %v600
        %v602 = vpop.f32.mrf.mxu0
        %v603 = vadd.f32 %v386, %v602
        %604 = vmatmul.bf16.gmra.mxu0 %v357
        %v605 = vpop.f32.mrf.mxu0
        %v606 = vadd.f32 %v386, %v605
        %v607 = vpop.f32.mrf.mxu0
        %v608 = vadd.f32 %v386, %v607
        %609 = vmatmul.bf16.gmra.mxu0 %v358
        %v610 = vpop.f32.mrf.mxu0
        %v611 = vadd.f32 %v386, %v610
        %v612 = vpop.f32.mrf.mxu0
        %v613 = vadd.f32 %v386, %v612
        %614 = vmatmul.bf16.gmra.mxu0 %v359
        %v615 = vpop.f32.mrf.mxu0
        %v616 = vadd.f32 %v386, %v615
        %v617 = vpop.f32.mrf.mxu0
        %v618 = vadd.f32 %v386, %v617
        %619 = vmatmul.bf16.gmra.mxu0 %v360
        %v620 = vpop.f32.mrf.mxu0
        %v621 = vadd.f32 %v386, %v620
        %v622 = vpop.f32.mrf.mxu0
        %v623 = vadd.f32 %v386, %v622
        %624 = vmatmul.bf16.gmra.mxu0 %v361
        %v625 = vpop.f32.mrf.mxu0
        %v626 = vadd.f32 %v386, %v625
        %v627 = vpop.f32.mrf.mxu0
        %v628 = vadd.f32 %v386, %v627
        %629 = vmatmul.bf16.gmra.mxu0 %v362
        %v630 = vpop.f32.mrf.mxu0
        %v631 = vadd.f32 %v386, %v630
        %v632 = vpop.f32.mrf.mxu0
        %v633 = vadd.f32 %v386, %v632
        %634 = vmatmul.bf16.gmra.mxu0 %v363
        %v635 = vpop.f32.mrf.mxu0
        %v636 = vadd.f32 %v386, %v635
        %v637 = vpop.f32.mrf.mxu0
        %v638 = vadd.f32 %v386, %v637
        %639 = vmatmul.bf16.gmra.mxu0 %v364
        %v640 = vpop.f32.mrf.mxu0
        %v641 = vadd.f32 %v386, %v640
        %v642 = vpop.f32.mrf.mxu0
        %v643 = vadd.f32 %v386, %v642
        %644 = vmatmul.bf16.gmra.mxu0 %v365
        %v645 = vpop.f32.mrf.mxu0
        %v646 = vadd.f32 %v386, %v645
        %v647 = vpop.f32.mrf.mxu0
        %v648 = vadd.f32 %v386, %v647
        %649 = vmatmul.bf16.gmra.mxu0 %v366
        %v650 = vpop.f32.mrf.mxu0
        %v651 = vadd.f32 %v386, %v650
        %v652 = vpop.f32.mrf.mxu0
        %v653 = vadd.f32 %v386, %v652
        %654 = vmatmul.bf16.gmra.mxu0 %v367
        %v655 = vpop.f32.mrf.mxu0
        %v656 = vadd.f32 %v386, %v655
        %v657 = vpop.f32.mrf.mxu0
        %658 = vdwg.mxu0
        %v659 = vtanh.pop %v446
        %v660 = vtanh.pop %v448
        %v661 = vtanh.pop %v451
        %v662 = vtanh.pop %v453
        %v663 = vtanh.pop %v456
        %v664 = vtanh.pop %v458
        %v665 = vtanh.pop %v461
        %v666 = vtanh.pop %v463
        %v667 = vtanh.pop %v466
        %v668 = vtanh.pop %v468
        %v669 = vtanh.pop %v471
        %v670 = vtanh.pop %v473
        %v671 = vtanh.pop %v476
        %v672 = vtanh.pop %v478
        %v673 = vtanh.pop %v481
        %v674 = vtanh.pop %v483
        %v675 = vtanh.pop %v486
        %v676 = vtanh.pop %v488
        %v677 = vtanh.pop %v491
        %v678 = vtanh.pop %v493
        %v679 = vtanh.pop %v496
        %v680 = vtanh.pop %v498
        %v681 = vtanh.pop %v501
        %v682 = vtanh.pop %v503
        %v683 = vtanh.pop %v506
        %v684 = vtanh.pop %v508
        %v685 = vtanh.pop %v511
        %v686 = vtanh.pop %v513
        %v687 = vtanh.pop %v516
        %v688 = vtanh.pop %v518
        %v689 = vtanh.pop %v521
        %v690 = vtanh.pop %v523
        %v691 = vtanh.pop %v526
        %v692 = vtanh.pop %v528
        %v693 = vtanh.pop %v531
        %v694 = vtanh.pop %v533
        %v695 = vtanh.pop %v536
        %v696 = vtanh.pop %v538
        %v697 = vtanh.pop %v541
        %v698 = vtanh.pop %v543
        %v699 = vtanh.pop %v546
        %v700 = vtanh.pop %v548
        %v701 = vtanh.pop %v551
        %v702 = vtanh.pop %v553
        %v703 = vtanh.pop %v556
        %v704 = vtanh.pop %v558
        %v705 = vtanh.pop %v561
        %v706 = vtanh.pop %v563
        %v707 = vtanh.pop %v566
        %v708 = vtanh.pop %v568
        %v709 = vtanh.pop %v571
        %v710 = vtanh.pop %v573
        %v711 = vtanh.pop %v576
        %v712 = vtanh.pop %v578
        %v713 = vtanh.pop %v581
        %v714 = vtanh.pop %v583
        %v715 = vtanh.pop %v586
        %v716 = vtanh.pop %v588
        %v717 = vtanh.pop %v591
        %v718 = vtanh.pop %v593
        %v719 = vtanh.pop %v596
        %v720 = vtanh.pop %v598
        %v721 = vtanh.pop %v601
        %v722 = vtanh.pop %v603
        %v723 = vtanh.pop %v606
        %v724 = vtanh.pop %v608
        %v725 = vtanh.pop %v611
        %v726 = vtanh.pop %v613
        %v727 = vtanh.pop %v616
        %v728 = vtanh.pop %v618
        %v729 = vtanh.pop %v621
        %v730 = vtanh.pop %v623
        %v731 = vtanh.pop %v626
        %v732 = vtanh.pop %v628
        %v733 = vtanh.pop %v631
        %v734 = vtanh.pop %v633
        %v735 = vtanh.pop %v636
        %v736 = vtanh.pop %v638
        %v737 = vtanh.pop %v641
        %v738 = vtanh.pop %v643
        %v739 = vtanh.pop %v646
        %v740 = vtanh.pop %v648
        %v741 = vtanh.pop %v651
        %v742 = vtanh.pop %v653
        %v743 = vtanh.pop %v656
        %744 = vst [vmem:[%s238] sm:$0xff] %v659
        %745 = vst [vmem:[%s238 + $0x8] sm:$0xff] %v660
        %746 = vst [vmem:[%s238 + $0x10] sm:$0xff] %v661
        %747 = vst [vmem:[%s238 + $0x18] sm:$0xff] %v662
        %748 = vst [vmem:[%s238 + $0x20] sm:$0xff] %v663
        %749 = vst [vmem:[%s238 + $0x28] sm:$0xff] %v664
        %750 = vst [vmem:[%s238 + $0x30] sm:$0xff] %v665
        %751 = vst [vmem:[%s238 + $0x38] sm:$0xff] %v666
        %752 = vst [vmem:[%s238 + $0x40] sm:$0xff] %v667
        %753 = vst [vmem:[%s238 + $0x48] sm:$0xff] %v668
        %754 = vst [vmem:[%s238 + $0x50] sm:$0xff] %v669
        %755 = vst [vmem:[%s238 + $0x58] sm:$0xff] %v670
        %756 = vst [vmem:[%s238 + $0x60] sm:$0xff] %v671
        %757 = vst [vmem:[%s238 + $0x68] sm:$0xff] %v672
        %758 = vst [vmem:[%s238 + $0x70] sm:$0xff] %v673
        %759 = vst [vmem:[%s238 + $0x78] sm:$0xff] %v674
        %760 = vst [vmem:[%s238 + $0x80] sm:$0xff] %v675
        %761 = vst [vmem:[%s238 + $0x88] sm:$0xff] %v676
        %762 = vst [vmem:[%s238 + $0x90] sm:$0xff] %v677
        %763 = vst [vmem:[%s238 + $0x98] sm:$0xff] %v678
        %764 = vst [vmem:[%s238 + $0xa0] sm:$0xff] %v679
        %765 = vst [vmem:[%s238 + $0xa8] sm:$0xff] %v680
        %766 = vst [vmem:[%s238 + $0xb0] sm:$0xff] %v681
        %767 = vst [vmem:[%s238 + $0xb8] sm:$0xff] %v682
        %768 = vst [vmem:[%s238 + $0xc0] sm:$0xff] %v683
        %769 = vst [vmem:[%s238 + $0xc8] sm:$0xff] %v684
        %770 = vst [vmem:[%s238 + $0xd0] sm:$0xff] %v685
        %771 = vst [vmem:[%s238 + $0xd8] sm:$0xff] %v686
        %772 = vst [vmem:[%s238 + $0xe0] sm:$0xff] %v687
        %773 = vst [vmem:[%s238 + $0xe8] sm:$0xff] %v688
        %774 = vst [vmem:[%s238 + $0xf0] sm:$0xff] %v689
        %775 = vst [vmem:[%s238 + $0xf8] sm:$0xff] %v690
        %776 = vst [vmem:[%s238 + $0x100] sm:$0xff] %v691
        %777 = vst [vmem:[%s238 + $0x108] sm:$0xff] %v692
        %778 = vst [vmem:[%s238 + $0x110] sm:$0xff] %v693
        %779 = vst [vmem:[%s238 + $0x118] sm:$0xff] %v694
        %780 = vst [vmem:[%s238 + $0x120] sm:$0xff] %v695
        %781 = vst [vmem:[%s238 + $0x128] sm:$0xff] %v696
        %782 = vst [vmem:[%s238 + $0x130] sm:$0xff] %v697
        %783 = vst [vmem:[%s238 + $0x138] sm:$0xff] %v698
        %784 = vst [vmem:[%s238 + $0x140] sm:$0xff] %v699
        %785 = vst [vmem:[%s238 + $0x148] sm:$0xff] %v700
        %786 = vst [vmem:[%s238 + $0x150] sm:$0xff] %v701
        %787 = vst [vmem:[%s238 + $0x158] sm:$0xff] %v702
        %788 = vst [vmem:[%s238 + $0x160] sm:$0xff] %v703
        %789 = vst [vmem:[%s238 + $0x168] sm:$0xff] %v704
        %790 = vst [vmem:[%s238 + $0x170] sm:$0xff] %v705
        %791 = vst [vmem:[%s238 + $0x178] sm:$0xff] %v706
        %792 = vst [vmem:[%s238 + $0x180] sm:$0xff] %v707
        %793 = vst [vmem:[%s238 + $0x188] sm:$0xff] %v708
        %794 = vst [vmem:[%s238 + $0x190] sm:$0xff] %v709
        %795 = vst [vmem:[%s238 + $0x198] sm:$0xff] %v710
        %796 = vst [vmem:[%s238 + $0x1a0] sm:$0xff] %v711
        %797 = vst [vmem:[%s238 + $0x1a8] sm:$0xff] %v712
        %798 = vst [vmem:[%s238 + $0x1b0] sm:$0xff] %v713
        %799 = vst [vmem:[%s238 + $0x1b8] sm:$0xff] %v714
        %800 = vst [vmem:[%s238 + $0x1c0] sm:$0xff] %v715
        %801 = vst [vmem:[%s238 + $0x1c8] sm:$0xff] %v716
        %802 = vst [vmem:[%s238 + $0x1d0] sm:$0xff] %v717
        %803 = vst [vmem:[%s238 + $0x1d8] sm:$0xff] %v718
        %804 = vst [vmem:[%s238 + $0x1e0] sm:$0xff] %v719
        %805 = vst [vmem:[%s238 + $0x1e8] sm:$0xff] %v720
        %806 = vst [vmem:[%s238 + $0x1f0] sm:$0xff] %v721
        %807 = vst [vmem:[%s238 + $0x1f8] sm:$0xff] %v722
        %808 = vst [vmem:[%s238 + $0x200] sm:$0xff] %v723
        %809 = vst [vmem:[%s238 + $0x208] sm:$0xff] %v724
        %810 = vst [vmem:[%s238 + $0x210] sm:$0xff] %v725
        %811 = vst [vmem:[%s238 + $0x218] sm:$0xff] %v726
        %812 = vst [vmem:[%s238 + $0x220] sm:$0xff] %v727
        %813 = vst [vmem:[%s238 + $0x228] sm:$0xff] %v728
        %814 = vst [vmem:[%s238 + $0x230] sm:$0xff] %v729
        %815 = vst [vmem:[%s238 + $0x238] sm:$0xff] %v730
        %816 = vst [vmem:[%s238 + $0x240] sm:$0xff] %v731
        %817 = vst [vmem:[%s238 + $0x248] sm:$0xff] %v732
        %818 = vst [vmem:[%s238 + $0x250] sm:$0xff] %v733
        %819 = vst [vmem:[%s238 + $0x258] sm:$0xff] %v734
        %820 = vst [vmem:[%s238 + $0x260] sm:$0xff] %v735
        %821 = vst [vmem:[%s238 + $0x268] sm:$0xff] %v736
        %822 = vst [vmem:[%s238 + $0x270] sm:$0xff] %v737
        %823 = vst [vmem:[%s238 + $0x278] sm:$0xff] %v738
        %824 = vst [vmem:[%s238 + $0x280] sm:$0xff] %v739
        %825 = vst [vmem:[%s238 + $0x288] sm:$0xff] %v740
        %826 = vst [vmem:[%s238 + $0x290] sm:$0xff] %v741
        %827 = vst [vmem:[%s238 + $0x298] sm:$0xff] %v742
        %828 = vst [vmem:[%s238 + $0x2a0] sm:$0xff] %v743
        %s829 = smul.u32 85, %s20
        %p830 = scmp.lt.s32.totalorder %s829, 169
        %s831 = scalar_select %p830, %s829, 169
        %p832 = scmp.lt.s32.totalorder %s21, 0
        %s833 = scalar_select %p832, %s21, 0
        %s834 = sadd.s32 %s833, %s831
        %s835 = smul.addr %s834, 8
        %s836 = scalar_lea.vmem %s3, %s835
        // Predicated region
        $region41: #{dqn_conv_forward.4} parent=31 // pred_check
          %p837 = pneg %p126
        $region42: #{dqn_conv_forward.4} parent=31 // pred_check_branch
          %839 = sbr.rel (%p837) target = $region44
        $region43: #{dqn_conv_forward.4} parent=31 // pred_region
          %s840 = smul.u32 85, %s20
        $region44: #{dqn_conv_forward.4} parent=31 // pred_fallthru
          _
      $region32: #{dqn_conv_forward.4} parent=5 // pred_fallthru
        _
      %p841 = scmp.le.s32.totalorder 2, %s11
      // Predicated region
      $region45: #{dqn_conv_forward.4} parent=5 // pred_check
        %p842 = pneg %p841
      $region46: #{dqn_conv_forward.4} parent=5 // pred_check_branch
        %844 = sbr.rel (%p842) target = $region48
      $region47: #{dqn_conv_forward.4} parent=5 // pred_region
        %s845 = ssub.s32 %s11, 2
        // Predicated region
        $region49: #{dqn_conv_forward.4} parent=47 // pred_check
          %p846 = pneg %p132
        $region50: #{dqn_conv_forward.4} parent=47 // pred_check_branch
          %848 = sbr.rel (%p846) target = $region52
        $region51: #{dqn_conv_forward.4} parent=47 // pred_region
          %s849 = smul.u32 85, %s22
          %p850 = scmp.lt.s32.totalorder %s849, 169
          %s851 = scalar_select %p850, %s849, 169
          %p852 = scmp.lt.s32.totalorder %s23, 0
          %s853 = scalar_select %p852, %s23, 0
          %s854 = sadd.s32 %s853, %s851
          %s855 = smul.addr %s854, 8
          %s856 = scalar_lea.vmem %s3, %s855
        $region52: #{dqn_conv_forward.4} parent=47 // pred_fallthru
          _
      $region48: #{dqn_conv_forward.4} parent=5 // pred_fallthru
        _
    $region6: #{dqn_conv_forward.4} parent=1 // loop_footer
      %s15 = sadd.s32 1, %s11
    $region7: #{dqn_conv_forward.4} parent=1 // loop_footer_branch
      %10 = sbr.rel target = $region3
    $region8: #{dqn_conv_forward.4} parent=1 // loop_exit
      _
    %857 = vsyncpa [#allocation3], 1
    %s858 = scalar_lea.sflag [#allocation3], 1
    %859 = vsyncpa %s858, 1
    %860 = vsyncpa [#allocation5], 1

// kernel: dqn_conv_forward.5
$region0: #{dqn_conv_forward.5}
  #allocation0 [shape = 'u32[]', space=smem, size = 0x4, offset = 0x4, fixed_abs, tag = 'smem constant byte address 0x4 - core index']
  #allocation1 [shape = 'u32[72,128]{1,0:T(1,128)}', space=vmem, size = 0x9000, scoped, tag = 'internal scratch']
  %s0 = inlined_call_operand.vmem [shape: f32[1152,384], index: 0, kind: input, shape index: {}]
  %s1 = inlined_call_operand.vmem [shape: bf16[1,384,128], index: 1, kind: input, shape index: {}]
  %s2 = inlined_call_operand.vmem [shape: f32[1,128], index: 2, kind: input, shape index: {}]
  %s3 = inlined_call_operand.vmem [shape: f32[1152,128], index: 3, kind: output, shape index: {}]
  %s4 = sld [smem:[#allocation0]]
  $region45: #{dqn_conv_forward.5} parent=0
    _
  %s6 = ssub.s32 1, %s4
  %s7 = scalar_select 0, %s6, %s4
  loop: start=0, step=1, limit=4
  $region2: #{dqn_conv_forward.5} parent=0 // loop_pre_header
    _
  $region3: #{dqn_conv_forward.5} parent=0 // loop_header
    %s9 = sphi 0, %s13
    %p10 = scmp.ge.s32.totalorder %s9, 4
    %s16 = sphi 0, %s28
    %s17 = sphi 0, %s24
    %s18 = sphi 0, %s16
    %s19 = sphi 0, %s17
    %s20 = sphi 0, %s18
    %s21 = sphi 0, %s19
    %s31 = sphi 0, %s33
    %s34 = sphi 0, %s31
    %s35 = sphi 0, %s34
    %s51 = sphi 0, %s35
    %s57 = sphi 0, %s59
    %s60 = sphi 0, %s57
    %s61 = sphi 0, %s60
    %s77 = sphi 0, %s61
    %s83 = sphi 0, %s85
    %s86 = sphi 0, %s83
    %s87 = sphi 0, %s86
    %s103 = sphi 0, %s87
    %s111 = sphi 0, %s113
    %s114 = sphi 0, %s111
    %s115 = sphi 0, %s114
    %s131 = sphi 0, %s115
  $region4: #{dqn_conv_forward.5} parent=0 // loop_header_branch
    %12 = sbr.rel (%p10) target = $region8
  $region5: #{dqn_conv_forward.5} parent=0 // loop_body
    %s14 = ssub.s32 %s9, 1
    %s15 = ssub.s32 %s9, 2
    %s22 = sadd.s32 1, %s17
    %p23 = scmp.ge.s32.totalorder %s22, 1
    %s24 = scalar_select %p23, 0, %s22
    %s25 = sadd.s32 1, %s16
    %s26 = scalar_select %p23, %s25, %s16
    %p27 = scmp.ge.s32.totalorder %s26, 2
    %s28 = scalar_select %p27, 0, %s26
    %s29 = ssub.s32 %s16, %s28
    %p30 = scmp.eq.s32.totalorder %s29, 0
    %s32 = sadd.s32 %s31, 1
    %s33 = scalar_select %p30, %s31, %s32
    %p36 = pneg %p30
    %p37 = scmp.eq.s32.totalorder %s9, 1
    %p38 = por %p36, %p37
    %p39 = scmp.ne.s32.totalorder %s31, %s34
    %p40 = scmp.eq.s32.totalorder %s9, 0
    %p41 = por %p39, %p40
    %p42 = scmp.ne.s32.totalorder %s31, %s34
    %p43 = scmp.eq.s32.totalorder %s14, 1
    %p44 = por %p42, %p43
    %p45 = scmp.ne.s32.totalorder %s34, %s35
    %p46 = scmp.eq.s32.totalorder %s14, 0
    %p47 = por %p45, %p46
    %p48 = scmp.ne.s32.totalorder %s34, %s35
    %p49 = scmp.eq.s32.totalorder %s15, 1
    %p50 = por %p48, %p49
    %p52 = scmp.ne.s32.totalorder %s35, %s51
    %p53 = scmp.eq.s32.totalorder %s15, 0
    %p54 = por %p52, %p53
    %s55 = ssub.s32 %s17, %s24
    %p56 = scmp.eq.s32.totalorder %s55, 0
    %s58 = sadd.s32 %s57, 1
    %s59 = scalar_select %p56, %s57, %s58
    %p62 = pneg %p56
    %p63 = scmp.eq.s32.totalorder %s9, 1
    %p64 = por %p62, %p63
    %p65 = scmp.ne.s32.totalorder %s57, %s60
    %p66 = scmp.eq.s32.totalorder %s9, 0
    %p67 = por %p65, %p66
    %p68 = scmp.ne.s32.totalorder %s57, %s60
    %p69 = scmp.eq.s32.totalorder %s14, 1
    %p70 = por %p68, %p69
    %p71 = scmp.ne.s32.totalorder %s60, %s61
    %p72 = scmp.eq.s32.totalorder %s14, 0
    %p73 = por %p71, %p72
    %p74 = scmp.ne.s32.totalorder %s60, %s61
    %p75 = scmp.eq.s32.totalorder %s15, 1
    %p76 = por %p74, %p75
    %p78 = scmp.ne.s32.totalorder %s61, %s77
    %p79 = scmp.eq.s32.totalorder %s15, 0
    %p80 = por %p78, %p79
    %s81 = ssub.s32 %s17, %s24
    %p82 = scmp.eq.s32.totalorder %s81, 0
    %s84 = sadd.s32 %s83, 1
    %s85 = scalar_select %p82, %s83, %s84
    %p88 = pneg %p82
    %p89 = scmp.eq.s32.totalorder %s9, 1
    %p90 = por %p88, %p89
    %p91 = scmp.ne.s32.totalorder %s83, %s86
    %p92 = scmp.eq.s32.totalorder %s9, 0
    %p93 = por %p91, %p92
    %p94 = scmp.ne.s32.totalorder %s83, %s86
    %p95 = scmp.eq.s32.totalorder %s14, 1
    %p96 = por %p94, %p95
    %p97 = scmp.ne.s32.totalorder %s86, %s87
    %p98 = scmp.eq.s32.totalorder %s14, 0
    %p99 = por %p97, %p98
    %p100 = scmp.ne.s32.totalorder %s86, %s87
    %p101 = scmp.eq.s32.totalorder %s15, 1
    %p102 = por %p100, %p101
    %p104 = scmp.ne.s32.totalorder %s87, %s103
    %p105 = scmp.eq.s32.totalorder %s15, 0
    %p106 = por %p104, %p105
    %s107 = ssub.s32 %s16, %s28
    %s108 = ssub.s32 %s17, %s24
    %s109 = sor.u32 %s107, %s108
    %p110 = scmp.eq.s32.totalorder %s109, 0
    %s112 = sadd.s32 %s111, 1
    %s113 = scalar_select %p110, %s111, %s112
    %p116 = pneg %p110
    %p117 = scmp.eq.s32.totalorder %s9, 1
    %p118 = por %p116, %p117
    %p119 = scmp.ne.s32.totalorder %s111, %s114
    %p120 = scmp.eq.s32.totalorder %s9, 0
    %p121 = por %p119, %p120
    %p122 = scmp.ne.s32.totalorder %s111, %s114
    %p123 = scmp.eq.s32.totalorder %s14, 1
    %p124 = por %p122, %p123
    %p125 = scmp.ne.s32.totalorder %s114, %s115
    %p126 = scmp.eq.s32.totalorder %s14, 0
    %p127 = por %p125, %p126
    %p128 = scmp.ne.s32.totalorder %s114, %s115
    %p129 = scmp.eq.s32.totalorder %s15, 1
    %p130 = por %p128, %p129
    %p132 = scmp.ne.s32.totalorder %s115, %s131
    %p133 = scmp.eq.s32.totalorder %s15, 0
    %p134 = por %p132, %p133
    %p135 = scmp.le.s32.totalorder 1, %s9
    %p136 = scmp.lt.s32.totalorder %s9, 3
    %p137 = pnand %p135, %p136
    %p138 = pneg %p137
    // Predicated region
    $region9: #{dqn_conv_forward.5} parent=5 // pred_check
      _
    $region10: #{dqn_conv_forward.5} parent=5 // pred_check_branch
      %140 = sbr.rel (%p137) target = $region12
    $region11: #{dqn_conv_forward.5} parent=5 // pred_region
      %s141 = ssub.s32 %s9, 1
      // Predicated region
      $region13: #{dqn_conv_forward.5} parent=11 // pred_check
        %p142 = pneg %p73
      $region14: #{dqn_conv_forward.5} parent=11 // pred_check_branch
        %144 = sbr.rel (%p142) target = $region16
      $region15: #{dqn_conv_forward.5} parent=11 // pred_region
        %p145 = scmp.lt.s32.totalorder %s19, 0
        %s146 = scalar_select %p145, %s19, 0
        %s147 = smul.addr %s146, 48
        %s148 = smul.addr %s147, 4
        %s149 = scalar_lea.vmem %s1, %s148
      $region16: #{dqn_conv_forward.5} parent=11 // pred_fallthru
        _
      // Predicated region
      $region17: #{dqn_conv_forward.5} parent=11 // pred_check
        %p150 = pneg %p99
      $region18: #{dqn_conv_forward.5} parent=11 // pred_check_branch
        %152 = sbr.rel (%p150) target = $region20
      $region19: #{dqn_conv_forward.5} parent=11 // pred_region
        %p153 = scmp.lt.s32.totalorder %s19, 0
        %s154 = scalar_select %p153, %s19, 0
        %s155 = scalar_lea.vmem %s2, %s154
      $region20: #{dqn_conv_forward.5} parent=11 // pred_fallthru
        _
    $region12: #{dqn_conv_forward.5} parent=5 // pred_fallthru
      _
    %p156 = scmp.lt.s32.totalorder %s9, 2
    // Predicated region
    $region21: #{dqn_conv_forward.5} parent=5 // pred_check
      %p157 = pneg %p156
    $region22: #{dqn_conv_forward.5} parent=5 // pred_check_branch
      %159 = sbr.rel (%p157) target = $region24
    $region23: #{dqn_conv_forward.5} parent=5 // pred_region
      // Predicated region
      $region25: #{dqn_conv_forward.5} parent=23 // pred_check
        %p160 = pneg %p41
      $region26: #{dqn_conv_forward.5} parent=23 // pred_check_branch
        %162 = sbr.rel (%p160) target = $region28
      $region27: #{dqn_conv_forward.5} parent=23 // pred_region
        %s163 = smul.u32 72, %s16
        %p164 = scmp.lt.s32.totalorder %s163, 143
        %s165 = scalar_select %p164, %s163, 143
        %s166 = smul.addr %s165, 3
        %s167 = smul.addr %s166, 8
        %s168 = scalar_lea.vmem %s0, %s167
        %s169 = smul.u32 72, %s16
      $region28: #{dqn_conv_forward.5} parent=23 // pred_fallthru
        _
    $region24: #{dqn_conv_forward.5} parent=5 // pred_fallthru
      _
    %p170 = scmp.le.s32.totalorder 1, %s9
    %p171 = scmp.lt.s32.totalorder %s9, 3
    %p172 = pnand %p170, %p171
    %p173 = pneg %p172
    // Predicated region
    $region29: #{dqn_conv_forward.5} parent=5 // pred_check
      _
    $region30: #{dqn_conv_forward.5} parent=5 // pred_check_branch
      %175 = sbr.rel (%p172) target = $region32
    $region31: #{dqn_conv_forward.5} parent=5 // pred_region
      %s176 = ssub.s32 %s9, 1
      %s177 = smul.u32 72, %s18
      %p178 = scmp.lt.s32.totalorder %s177, 143
      %s179 = scalar_select %p178, %s177, 143
      %s180 = smul.addr %s179, 3
      %s181 = smul.addr %s180, 8
      %s182 = scalar_lea.vmem %s0, %s181
      %p183 = pneg %p47
      %p184 = pneg %p44
      %p185 = scmp.lt.s32.totalorder %s19, 0
      %s186 = scalar_select %p185, %s19, 0
      %s187 = smul.addr %s186, 48
      %s188 = smul.addr %s187, 4
      %s189 = scalar_lea.vmem %s1, %s188
      %p190 = pneg %p73
      %p191 = pneg %p70
      %p192 = scmp.lt.s32.totalorder %s19, 0
      %s193 = scalar_select %p192, %s19, 0
      %s194 = scalar_lea.vmem %s2, %s193
      %p195 = pneg %p99
      %p196 = pneg %p96
      %p197 = pneg %p127
      %p198 = pneg %p124
      %s199 = smul.u32 72, %s18
      %p200 = scmp.lt.s32.totalorder %s199, 143
      %s201 = scalar_select %p200, %s199, 143
      %p202 = scmp.lt.s32.totalorder %s19, 0
      %s203 = scalar_select %p202, %s19, 0
      %s204 = sadd.s32 %s203, %s201
      %s205 = smul.addr %s204, 8
      %s206 = scalar_lea.vmem %s3, %s205
      %s207 = smul.u32 72, %s18
      %p208 = scmp.lt.s32.totalorder %s207, 143
      %s209 = scalar_select %p208, %s207, 143
      %s210 = smul.addr %s209, 3
      %s211 = smul.addr %s210, 8
      %s212 = scalar_lea.vmem %s0, %s211
      %s213 = smul.u32 72, %s18
      %p214 = scmp.lt.s32.totalorder %s19, 0
      %s215 = scalar_select %p214, %s19, 0
      %s216 = smul.addr %s215, 48
      %s217 = smul.addr %s216, 4
      %s218 = scalar_lea.vmem %s1, %s217
      %p219 = scmp.lt.s32.totalorder %s19, 0
      %s220 = scalar_select %p219, %s19, 0
      %s221 = scalar_lea.vmem %s2, %s220
      %s222 = smul.u32 72, %s18
      %p223 = scmp.lt.s32.totalorder %s222, 143
      %s224 = scalar_select %p223, %s222, 143
      %p225 = scmp.lt.s32.totalorder %s19, 0
      %s226 = scalar_select %p225, %s19, 0
      %s227 = sadd.s32 %s226, %s224
      %s228 = smul.addr %s227, 8
      %s229 = scalar_lea.vmem %s3, %s228
      %s230 = smul.u32 72, %s18
      %v231 = vld [vmem:[%s212] sm:$0xff]
      %v232 = vld [vmem:[%s212 + $0x8] sm:$0xff]
      %v233 = vld [vmem:[%s212 + $0x10] sm:$0xff]
      %v234 = vld [vmem:[%s212 + $0x18] sm:$0xff]
      %v235 = vld [vmem:[%s212 + $0x20] sm:$0xff]
      %v236 = vld [vmem:[%s212 + $0x28] sm:$0xff]
      %v237 = vld [vmem:[%s212 + $0x30] sm:$0xff]
      %v238 = vld [vmem:[%s212 + $0x38] sm:$0xff]
      %v239 = vld [vmem:[%s212 + $0x40] sm:$0xff]
      %v240 = vld [vmem:[%s212 + $0x48] sm:$0xff]
      %v241 = vld [vmem:[%s212 + $0x50] sm:$0xff]
      %v242 = vld [vmem:[%s212 + $0x58] sm:$0xff]
      %v243 = vld [vmem:[%s212 + $0x60] sm:$0xff]
      %v244 = vld [vmem:[%s212 + $0x68] sm:$0xff]
      %v245 = vld [vmem:[%s212 + $0x70] sm:$0xff]
      %v246 = vld [vmem:[%s212 + $0x78] sm:$0xff]
      %v247 = vld [vmem:[%s212 + $0x80] sm:$0xff]
      %v248 = vld [vmem:[%s212 + $0x88] sm:$0xff]
      %v249 = vld [vmem:[%s212 + $0x90] sm:$0xff]
      %v250 = vld [vmem:[%s212 + $0x98] sm:$0xff]
      %v251 = vld [vmem:[%s212 + $0xa0] sm:$0xff]
      %v252 = vld [vmem:[%s212 + $0xa8] sm:$0xff]
      %v253 = vld [vmem:[%s212 + $0xb0] sm:$0xff]
      %v254 = vld [vmem:[%s212 + $0xb8] sm:$0xff]
      %v255 = vld [vmem:[%s212 + $0xc0] sm:$0xff]
      %v256 = vld [vmem:[%s212 + $0xc8] sm:$0xff]
      %v257 = vld [vmem:[%s212 + $0xd0] sm:$0xff]
      %v258 = vld [vmem:[%s212 + $0xd8] sm:$0xff]
      %v259 = vld [vmem:[%s212 + $0xe0] sm:$0xff]
      %v260 = vld [vmem:[%s212 + $0xe8] sm:$0xff]
      %v261 = vld [vmem:[%s212 + $0xf0] sm:$0xff]
      %v262 = vld [vmem:[%s212 + $0xf8] sm:$0xff]
      %v263 = vld [vmem:[%s212 + $0x100] sm:$0xff]
      %v264 = vld [vmem:[%s212 + $0x108] sm:$0xff]
      %v265 = vld [vmem:[%s212 + $0x110] sm:$0xff]
      %v266 = vld [vmem:[%s212 + $0x118] sm:$0xff]
      %v267 = vld [vmem:[%s212 + $0x120] sm:$0xff]
      %v268 = vld [vmem:[%s212 + $0x128] sm:$0xff]
      %v269 = vld [vmem:[%s212 + $0x130] sm:$0xff]
      %v270 = vld [vmem:[%s212 + $0x138] sm:$0xff]
      %v271 = vld [vmem:[%s212 + $0x140] sm:$0xff]
      %v272 = vld [vmem:[%s212 + $0x148] sm:$0xff]
      %v273 = vld [vmem:[%s212 + $0x150] sm:$0xff]
      %v274 = vld [vmem:[%s212 + $0x158] sm:$0xff]
      %v275 = vld [vmem:[%s212 + $0x160] sm:$0xff]
      %v276 = vld [vmem:[%s212 + $0x168] sm:$0xff]
      %v277 = vld [vmem:[%s212 + $0x170] sm:$0xff]
      %v278 = vld [vmem:[%s212 + $0x178] sm:$0xff]
      %v279 = vld [vmem:[%s212 + $0x180] sm:$0xff]
      %v280 = vld [vmem:[%s212 + $0x188] sm:$0xff]
      %v281 = vld [vmem:[%s212 + $0x190] sm:$0xff]
      %v282 = vld [vmem:[%s212 + $0x198] sm:$0xff]
      %v283 = vld [vmem:[%s212 + $0x1a0] sm:$0xff]
      %v284 = vld [vmem:[%s212 + $0x1a8] sm:$0xff]
      %v285 = vld [vmem:[%s212 + $0x1b0] sm:$0xff]
      %v286 = vld [vmem:[%s212 + $0x1b8] sm:$0xff]
      %v287 = vld [vmem:[%s212 + $0x1c0] sm:$0xff]
      %v288 = vld [vmem:[%s212 + $0x1c8] sm:$0xff]
      %v289 = vld [vmem:[%s212 + $0x1d0] sm:$0xff]
      %v290 = vld [vmem:[%s212 + $0x1d8] sm:$0xff]
      %v291 = vld [vmem:[%s212 + $0x1e0] sm:$0xff]
      %v292 = vld [vmem:[%s212 + $0x1e8] sm:$0xff]
      %v293 = vld [vmem:[%s212 + $0x1f0] sm:$0xff]
      %v294 = vld [vmem:[%s212 + $0x1f8] sm:$0xff]
      %v295 = vld [vmem:[%s212 + $0x200] sm:$0xff]
      %v296 = vld [vmem:[%s212 + $0x208] sm:$0xff]
      %v297 = vld [vmem:[%s212 + $0x210] sm:$0xff]
      %v298 = vld [vmem:[%s212 + $0x218] sm:$0xff]
      %v299 = vld [vmem:[%s212 + $0x220] sm:$0xff]
      %v300 = vld [vmem:[%s212 + $0x228] sm:$0xff]
      %v301 = vld [vmem:[%s212 + $0x230] sm:$0xff]
      %v302 = vld [vmem:[%s212 + $0x238] sm:$0xff]
      %v303 = vld [vmem:[%s212 + $0x240] sm:$0xff]
      %v304 = vld [vmem:[%s212 + $0x248] sm:$0xff]
      %v305 = vld [vmem:[%s212 + $0x250] sm:$0xff]
      %v306 = vld [vmem:[%s212 + $0x258] sm:$0xff]
      %v307 = vld [vmem:[%s212 + $0x260] sm:$0xff]
      %v308 = vld [vmem:[%s212 + $0x268] sm:$0xff]
      %v309 = vld [vmem:[%s212 + $0x270] sm:$0xff]
      %v310 = vld [vmem:[%s212 + $0x278] sm:$0xff]
      %v311 = vld [vmem:[%s212 + $0x280] sm:$0xff]
      %v312 = vld [vmem:[%s212 + $0x288] sm:$0xff]
      %v313 = vld [vmem:[%s212 + $0x290] sm:$0xff]
      %v314 = vld [vmem:[%s212 + $0x298] sm:$0xff]
      %v315 = vld [vmem:[%s212 + $0x2a0] sm:$0xff]
      %v316 = vld [vmem:[%s212 + $0x2a8] sm:$0xff]
      %v317 = vld [vmem:[%s212 + $0x2b0] sm:$0xff]
      %v318 = vld [vmem:[%s212 + $0x2b8] sm:$0xff]
      %v319 = vld [vmem:[%s212 + $0x2c0] sm:$0xff]
      %v320 = vld [vmem:[%s212 + $0x2c8] sm:$0xff]
      %v321 = vld [vmem:[%s212 + $0x2d0] sm:$0xff]
      %v322 = vld [vmem:[%s212 + $0x2d8] sm:$0xff]
      %v323 = vld [vmem:[%s212 + $0x2e0] sm:$0xff]
      %v324 = vld [vmem:[%s212 + $0x2e8] sm:$0xff]
      %v325 = vld [vmem:[%s212 + $0x2f0] sm:$0xff]
      %v326 = vld [vmem:[%s212 + $0x2f8] sm:$0xff]
      %v327 = vld [vmem:[%s212 + $0x300] sm:$0xff]
      %v328 = vld [vmem:[%s212 + $0x308] sm:$0xff]
      %v329 = vld [vmem:[%s212 + $0x310] sm:$0xff]
      %v330 = vld [vmem:[%s212 + $0x318] sm:$0xff]
      %v331 = vld [vmem:[%s212 + $0x320] sm:$0xff]
      %v332 = vld [vmem:[%s212 + $0x328] sm:$0xff]
      %v333 = vld [vmem:[%s212 + $0x330] sm:$0xff]
      %v334 = vld [vmem:[%s212 + $0x338] sm:$0xff]
      %v335 = vld [vmem:[%s212 + $0x340] sm:$0xff]
      %v336 = vld [vmem:[%s212 + $0x348] sm:$0xff]
      %v337 = vld [vmem:[%s212 + $0x350] sm:$0xff]
      %v338 = vld [vmem:[%s212 + $0x358] sm:$0xff]
      %v339 = vld [vmem:[%s212 + $0x360] sm:$0xff]
      %v340 = vld [vmem:[%s212 + $0x368] sm:$0xff]
      %v341 = vld [vmem:[%s212 + $0x370] sm:$0xff]
      %v342 = vld [vmem:[%s212 + $0x378] sm:$0xff]
      %v343 = vld [vmem:[%s212 + $0x380] sm:$0xff]
      %v344 = vld [vmem:[%s212 + $0x388] sm:$0xff]
      %v345 = vld [vmem:[%s212 + $0x390] sm:$0xff]
      %v346 = vld [vmem:[%s212 + $0x398] sm:$0xff]
      %v347 = vld [vmem:[%s212 + $0x3a0] sm:$0xff]
      %v348 = vld [vmem:[%s212 + $0x3a8] sm:$0xff]
      %v349 = vld [vmem:[%s212 + $0x3b0] sm:$0xff]
      %v350 = vld [vmem:[%s212 + $0x3b8] sm:$0xff]
      %v351 = vld [vmem:[%s212 + $0x3c0] sm:$0xff]
      %v352 = vld [vmem:[%s212 + $0x3c8] sm:$0xff]
      %v353 = vld [vmem:[%s212 + $0x3d0] sm:$0xff]
      %v354 = vld [vmem:[%s212 + $0x3d8] sm:$0xff]
      %v355 = vld [vmem:[%s212 + $0x3e0] sm:$0xff]
      %v356 = vld [vmem:[%s212 + $0x3e8] sm:$0xff]
      %v357 = vld [vmem:[%s212 + $0x3f0] sm:$0xff]
      %v358 = vld [vmem:[%s212 + $0x3f8] sm:$0xff]
      %v359 = vld [vmem:[%s212 + $0x400] sm:$0xff]
      %v360 = vld [vmem:[%s212 + $0x408] sm:$0xff]
      %v361 = vld [vmem:[%s212 + $0x410] sm:$0xff]
      %v362 = vld [vmem:[%s212 + $0x418] sm:$0xff]
      %v363 = vld [vmem:[%s212 + $0x420] sm:$0xff]
      %v364 = vld [vmem:[%s212 + $0x428] sm:$0xff]
      %v365 = vld [vmem:[%s212 + $0x430] sm:$0xff]
      %v366 = vld [vmem:[%s212 + $0x438] sm:$0xff]
      %v367 = vld [vmem:[%s212 + $0x440] sm:$0xff]
      %v368 = vld [vmem:[%s212 + $0x448] sm:$0xff]
      %v369 = vld [vmem:[%s212 + $0x450] sm:$0xff]
      %v370 = vld [vmem:[%s212 + $0x458] sm:$0xff]
      %v371 = vld [vmem:[%s212 + $0x460] sm:$0xff]
      %v372 = vld [vmem:[%s212 + $0x468] sm:$0xff]
      %v373 = vld [vmem:[%s212 + $0x470] sm:$0xff]
      %v374 = vld [vmem:[%s212 + $0x478] sm:$0xff]
      %v375 = vld [vmem:[%s212 + $0x480] sm:$0xff]
      %v376 = vld [vmem:[%s212 + $0x488] sm:$0xff]
      %v377 = vld [vmem:[%s212 + $0x490] sm:$0xff]
      %v378 = vld [vmem:[%s212 + $0x498] sm:$0xff]
      %v379 = vld [vmem:[%s212 + $0x4a0] sm:$0xff]
      %v380 = vld [vmem:[%s212 + $0x4a8] sm:$0xff]
      %v381 = vld [vmem:[%s212 + $0x4b0] sm:$0xff]
      %v382 = vld [vmem:[%s212 + $0x4b8] sm:$0xff]
      %v383 = vld [vmem:[%s212 + $0x4c0] sm:$0xff]
      %v384 = vld [vmem:[%s212 + $0x4c8] sm:$0xff]
      %v385 = vld [vmem:[%s212 + $0x4d0] sm:$0xff]
      %v386 = vld [vmem:[%s212 + $0x4d8] sm:$0xff]
      %v387 = vld [vmem:[%s212 + $0x4e0] sm:$0xff]
      %v388 = vld [vmem:[%s212 + $0x4e8] sm:$0xff]
      %v389 = vld [vmem:[%s212 + $0x4f0] sm:$0xff]
      %v390 = vld [vmem:[%s212 + $0x4f8] sm:$0xff]
      %v391 = vld [vmem:[%s212 + $0x500] sm:$0xff]
      %v392 = vld [vmem:[%s212 + $0x508] sm:$0xff]
      %v393 = vld [vmem:[%s212 + $0x510] sm:$0xff]
      %v394 = vld [vmem:[%s212 + $0x518] sm:$0xff]
      %v395 = vld [vmem:[%s212 + $0x520] sm:$0xff]
      %v396 = vld [vmem:[%s212 + $0x528] sm:$0xff]
      %v397 = vld [vmem:[%s212 + $0x530] sm:$0xff]
      %v398 = vld [vmem:[%s212 + $0x538] sm:$0xff]
      %v399 = vld [vmem:[%s212 + $0x540] sm:$0xff]
      %v400 = vld [vmem:[%s212 + $0x548] sm:$0xff]
      %v401 = vld [vmem:[%s212 + $0x550] sm:$0xff]
      %v402 = vld [vmem:[%s212 + $0x558] sm:$0xff]
      %v403 = vld [vmem:[%s212 + $0x560] sm:$0xff]
      %v404 = vld [vmem:[%s212 + $0x568] sm:$0xff]
      %v405 = vld [vmem:[%s212 + $0x570] sm:$0xff]
      %v406 = vld [vmem:[%s212 + $0x578] sm:$0xff]
      %v407 = vld [vmem:[%s212 + $0x580] sm:$0xff]
      %v408 = vld [vmem:[%s212 + $0x588] sm:$0xff]
      %v409 = vld [vmem:[%s212 + $0x590] sm:$0xff]
      %v410 = vld [vmem:[%s212 + $0x598] sm:$0xff]
      %v411 = vld [vmem:[%s212 + $0x5a0] sm:$0xff]
      %v412 = vld [vmem:[%s212 + $0x5a8] sm:$0xff]
      %v413 = vld [vmem:[%s212 + $0x5b0] sm:$0xff]
      %v414 = vld [vmem:[%s212 + $0x5b8] sm:$0xff]
      %v415 = vld [vmem:[%s212 + $0x5c0] sm:$0xff]
      %v416 = vld [vmem:[%s212 + $0x5c8] sm:$0xff]
      %v417 = vld [vmem:[%s212 + $0x5d0] sm:$0xff]
      %v418 = vld [vmem:[%s212 + $0x5d8] sm:$0xff]
      %v419 = vld [vmem:[%s212 + $0x5e0] sm:$0xff]
      %v420 = vld [vmem:[%s212 + $0x5e8] sm:$0xff]
      %v421 = vld [vmem:[%s212 + $0x5f0] sm:$0xff]
      %v422 = vld [vmem:[%s212 + $0x5f8] sm:$0xff]
      %v423 = vld [vmem:[%s212 + $0x600] sm:$0xff]
      %v424 = vld [vmem:[%s212 + $0x608] sm:$0xff]
      %v425 = vld [vmem:[%s212 + $0x610] sm:$0xff]
      %v426 = vld [vmem:[%s212 + $0x618] sm:$0xff]
      %v427 = vld [vmem:[%s212 + $0x620] sm:$0xff]
      %v428 = vld [vmem:[%s212 + $0x628] sm:$0xff]
      %v429 = vld [vmem:[%s212 + $0x630] sm:$0xff]
      %v430 = vld [vmem:[%s212 + $0x638] sm:$0xff]
      %v431 = vld [vmem:[%s212 + $0x640] sm:$0xff]
      %v432 = vld [vmem:[%s212 + $0x648] sm:$0xff]
      %v433 = vld [vmem:[%s212 + $0x650] sm:$0xff]
      %v434 = vld [vmem:[%s212 + $0x658] sm:$0xff]
      %v435 = vld [vmem:[%s212 + $0x660] sm:$0xff]
      %v436 = vld [vmem:[%s212 + $0x668] sm:$0xff]
      %v437 = vld [vmem:[%s212 + $0x670] sm:$0xff]
      %v438 = vld [vmem:[%s212 + $0x678] sm:$0xff]
      %v439 = vld [vmem:[%s212 + $0x680] sm:$0xff]
      %v440 = vld [vmem:[%s212 + $0x688] sm:$0xff]
      %v441 = vld [vmem:[%s212 + $0x690] sm:$0xff]
      %v442 = vld [vmem:[%s212 + $0x698] sm:$0xff]
      %v443 = vld [vmem:[%s212 + $0x6a0] sm:$0xff]
      %v444 = vld [vmem:[%s212 + $0x6a8] sm:$0xff]
      %v445 = vld [vmem:[%s212 + $0x6b0] sm:$0xff]
      %v446 = vld [vmem:[%s212 + $0x6b8] sm:$0xff]
      %v447 = vpack.c.bf16 %v234, %v231
      %v448 = vpack.c.bf16 %v235, %v232
      %v449 = vpack.c.bf16 %v236, %v233
      %v450 = vpack.c.bf16 %v240, %v237
      %v451 = vpack.c.bf16 %v241, %v238
      %v452 = vpack.c.bf16 %v242, %v239
      %v453 = vpack.c.bf16 %v246, %v243
      %v454 = vpack.c.bf16 %v247, %v244
      %v455 = vpack.c.bf16 %v248, %v245
      %v456 = vpack.c.bf16 %v252, %v249
      %v457 = vpack.c.bf16 %v253, %v250
      %v458 = vpack.c.bf16 %v254, %v251
      %v459 = vpack.c.bf16 %v258, %v255
      %v460 = vpack.c.bf16 %v259, %v256
      %v461 = vpack.c.bf16 %v260, %v257
      %v462 = vpack.c.bf16 %v264, %v261
      %v463 = vpack.c.bf16 %v265, %v262
      %v464 = vpack.c.bf16 %v266, %v263
      %v465 = vpack.c.bf16 %v270, %v267
      %v466 = vpack.c.bf16 %v271, %v268
      %v467 = vpack.c.bf16 %v272, %v269
      %v468 = vpack.c.bf16 %v276, %v273
      %v469 = vpack.c.bf16 %v277, %v274
      %v470 = vpack.c.bf16 %v278, %v275
      %v471 = vpack.c.bf16 %v282, %v279
      %v472 = vpack.c.bf16 %v283, %v280
      %v473 = vpack.c.bf16 %v284, %v281
      %v474 = vpack.c.bf16 %v288, %v285
      %v475 = vpack.c.bf16 %v289, %v286
      %v476 = vpack.c.bf16 %v290, %v287
      %v477 = vpack.c.bf16 %v294, %v291
      %v478 = vpack.c.bf16 %v295, %v292
      %v479 = vpack.c.bf16 %v296, %v293
      %v480 = vpack.c.bf16 %v300, %v297
      %v481 = vpack.c.bf16 %v301, %v298
      %v482 = vpack.c.bf16 %v302, %v299
      %v483 = vpack.c.bf16 %v306, %v303
      %v484 = vpack.c.bf16 %v307, %v304
      %v485 = vpack.c.bf16 %v308, %v305
      %v486 = vpack.c.bf16 %v312, %v309
      %v487 = vpack.c.bf16 %v313, %v310
      %v488 = vpack.c.bf16 %v314, %v311
      %v489 = vpack.c.bf16 %v318, %v315
      %v490 = vpack.c.bf16 %v319, %v316
      %v491 = vpack.c.bf16 %v320, %v317
      %v492 = vpack.c.bf16 %v324, %v321
      %v493 = vpack.c.bf16 %v325, %v322
      %v494 = vpack.c.bf16 %v326, %v323
      %v495 = vpack.c.bf16 %v330, %v327
      %v496 = vpack.c.bf16 %v331, %v328
      %v497 = vpack.c.bf16 %v332, %v329
      %v498 = vpack.c.bf16 %v336, %v333
      %v499 = vpack.c.bf16 %v337, %v334
      %v500 = vpack.c.bf16 %v338, %v335
      %v501 = vpack.c.bf16 %v342, %v339
      %v502 = vpack.c.bf16 %v343, %v340
      %v503 = vpack.c.bf16 %v344, %v341
      %v504 = vpack.c.bf16 %v348, %v345
      %v505 = vpack.c.bf16 %v349, %v346
      %v506 = vpack.c.bf16 %v350, %v347
      %v507 = vpack.c.bf16 %v354, %v351
      %v508 = vpack.c.bf16 %v355, %v352
      %v509 = vpack.c.bf16 %v356, %v353
      %v510 = vpack.c.bf16 %v360, %v357
      %v511 = vpack.c.bf16 %v361, %v358
      %v512 = vpack.c.bf16 %v362, %v359
      %v513 = vpack.c.bf16 %v366, %v363
      %v514 = vpack.c.bf16 %v367, %v364
      %v515 = vpack.c.bf16 %v368, %v365
      %v516 = vpack.c.bf16 %v372, %v369
      %v517 = vpack.c.bf16 %v373, %v370
      %v518 = vpack.c.bf16 %v374, %v371
      %v519 = vpack.c.bf16 %v378, %v375
      %v520 = vpack.c.bf16 %v379, %v376
      %v521 = vpack.c.bf16 %v380, %v377
      %v522 = vpack.c.bf16 %v384, %v381
      %v523 = vpack.c.bf16 %v385, %v382
      %v524 = vpack.c.bf16 %v386, %v383
      %v525 = vpack.c.bf16 %v390, %v387
      %v526 = vpack.c.bf16 %v391, %v388
      %v527 = vpack.c.bf16 %v392, %v389
      %v528 = vpack.c.bf16 %v396, %v393
      %v529 = vpack.c.bf16 %v397, %v394
      %v530 = vpack.c.bf16 %v398, %v395
      %v531 = vpack.c.bf16 %v402, %v399
      %v532 = vpack.c.bf16 %v403, %v400
      %v533 = vpack.c.bf16 %v404, %v401
      %v534 = vpack.c.bf16 %v408, %v405
      %v535 = vpack.c.bf16 %v409, %v406
      %v536 = vpack.c.bf16 %v410, %v407
      %v537 = vpack.c.bf16 %v414, %v411
      %v538 = vpack.c.bf16 %v415, %v412
      %v539 = vpack.c.bf16 %v416, %v413
      %v540 = vpack.c.bf16 %v420, %v417
      %v541 = vpack.c.bf16 %v421, %v418
      %v542 = vpack.c.bf16 %v422, %v419
      %v543 = vpack.c.bf16 %v426, %v423
      %v544 = vpack.c.bf16 %v427, %v424
      %v545 = vpack.c.bf16 %v428, %v425
      %v546 = vpack.c.bf16 %v432, %v429
      %v547 = vpack.c.bf16 %v433, %v430
      %v548 = vpack.c.bf16 %v434, %v431
      %v549 = vpack.c.bf16 %v438, %v435
      %v550 = vpack.c.bf16 %v439, %v436
      %v551 = vpack.c.bf16 %v440, %v437
      %v552 = vpack.c.bf16 %v444, %v441
      %v553 = vpack.c.bf16 %v445, %v442
      %v554 = vpack.c.bf16 %v446, %v443
      %v555 = vld [vmem:[%s218] sm:$0xf]
      %v556 = vld [vmem:[%s218 + $0x4] sm:$0xf]
      %v557 = vld [vmem:[%s218 + $0x8] sm:$0xf]
      %v558 = vld [vmem:[%s218 + $0xc] sm:$0xf]
      %v559 = vld [vmem:[%s218 + $0x10] sm:$0xf]
      %v560 = vld [vmem:[%s218 + $0x14] sm:$0xf]
      %v561 = vld [vmem:[%s218 + $0x18] sm:$0xf]
      %v562 = vld [vmem:[%s218 + $0x1c] sm:$0xf]
      %v563 = vld [vmem:[%s218 + $0x20] sm:$0xf]
      %v564 = vld [vmem:[%s218 + $0x24] sm:$0xf]
      %v565 = vld [vmem:[%s218 + $0x28] sm:$0xf]
      %v566 = vld [vmem:[%s218 + $0x2c] sm:$0xf]
      %v567 = vld [vmem:[%s218 + $0x30] sm:$0xf]
      %v568 = vld [vmem:[%s218 + $0x34] sm:$0xf]
      %v569 = vld [vmem:[%s218 + $0x38] sm:$0xf]
      %v570 = vld [vmem:[%s218 + $0x3c] sm:$0xf]
      %v571 = vld [vmem:[%s218 + $0x40] sm:$0xf]
      %v572 = vld [vmem:[%s218 + $0x44] sm:$0xf]
      %v573 = vld [vmem:[%s218 + $0x48] sm:$0xf]
      %v574 = vld [vmem:[%s218 + $0x4c] sm:$0xf]
      %v575 = vld [vmem:[%s218 + $0x50] sm:$0xf]
      %v576 = vld [vmem:[%s218 + $0x54] sm:$0xf]
      %v577 = vld [vmem:[%s218 + $0x58] sm:$0xf]
      %v578 = vld [vmem:[%s218 + $0x5c] sm:$0xf]
      %v579 = vld [vmem:[%s218 + $0x60] sm:$0xf]
      %v580 = vld [vmem:[%s218 + $0x64] sm:$0xf]
      %v581 = vld [vmem:[%s218 + $0x68] sm:$0xf]
      %v582 = vld [vmem:[%s218 + $0x6c] sm:$0xf]
      %v583 = vld [vmem:[%s218 + $0x70] sm:$0xf]
      %v584 = vld [vmem:[%s218 + $0x74] sm:$0xf]
      %v585 = vld [vmem:[%s218 + $0x78] sm:$0xf]
      %v586 = vld [vmem:[%s218 + $0x7c] sm:$0xf]
      %v587 = vld [vmem:[%s218 + $0x80] sm:$0xf]
      %v588 = vld [vmem:[%s218 + $0x84] sm:$0xf]
      %v589 = vld [vmem:[%s218 + $0x88] sm:$0xf]
      %v590 = vld [vmem:[%s218 + $0x8c] sm:$0xf]
      %v591 = vld [vmem:[%s218 + $0x90] sm:$0xf]
      %v592 = vld [vmem:[%s218 + $0x94] sm:$0xf]
      %v593 = vld [vmem:[%s218 + $0x98] sm:$0xf]
      %v594 = vld [vmem:[%s218 + $0x9c] sm:$0xf]
      %v595 = vld [vmem:[%s218 + $0xa0] sm:$0xf]
      %v596 = vld [vmem:[%s218 + $0xa4] sm:$0xf]
      %v597 = vld [vmem:[%s218 + $0xa8] sm:$0xf]
      %v598 = vld [vmem:[%s218 + $0xac] sm:$0xf]
      %v599 = vld [vmem:[%s218 + $0xb0] sm:$0xf]
      %v600 = vld [vmem:[%s218 + $0xb4] sm:$0xf]
      %v601 = vld [vmem:[%s218 + $0xb8] sm:$0xf]
      %v602 = vld [vmem:[%s218 + $0xbc] sm:$0xf]
      %v603 = vld [vmem:[%s221] sm:$0x1]
      %v605 = vperm.slane %v603, 0
      %v655 = vunpack.c.l.b16 %v555
      %v656 = vunpack.c.l.b16 %v556
      %v657 = vunpack.c.l.b16 %v557
      %v658 = vunpack.c.l.b16 %v558
      %v659 = vunpack.c.l.b16 %v559
      %v660 = vunpack.c.l.b16 %v560
      %v661 = vunpack.c.l.b16 %v561
      %v662 = vunpack.c.l.b16 %v562
      %v663 = vunpack.c.l.b16 %v563
      %v664 = vunpack.c.l.b16 %v564
      %v665 = vunpack.c.l.b16 %v565
      %v666 = vunpack.c.l.b16 %v566
      %v667 = vunpack.c.l.b16 %v567
      %v668 = vunpack.c.l.b16 %v568
      %v669 = vunpack.c.l.b16 %v569
      %v670 = vunpack.c.l.b16 %v570
      %v671 = vunpack.c.l.b16 %v571
      %v672 = vunpack.c.l.b16 %v572
      %v673 = vunpack.c.l.b16 %v573
      %v674 = vunpack.c.l.b16 %v574
      %v675 = vunpack.c.l.b16 %v575
      %v676 = vunpack.c.l.b16 %v576
      %v677 = vunpack.c.l.b16 %v577
      %v678 = vunpack.c.l.b16 %v578
      %v679 = vunpack.c.l.b16 %v579
      %v680 = vunpack.c.l.b16 %v580
      %v681 = vunpack.c.l.b16 %v581
      %v682 = vunpack.c.l.b16 %v582
      %v683 = vunpack.c.l.b16 %v583
      %v684 = vunpack.c.l.b16 %v584
      %v685 = vunpack.c.l.b16 %v585
      %v686 = vunpack.c.l.b16 %v586
      %v687 = vunpack.c.l.b16 %v587
      %v688 = vunpack.c.l.b16 %v588
      %v689 = vunpack.c.l.b16 %v589
      %v690 = vunpack.c.l.b16 %v590
      %v691 = vunpack.c.l.b16 %v591
      %v692 = vunpack.c.l.b16 %v592
      %v693 = vunpack.c.l.b16 %v593
      %v694 = vunpack.c.l.b16 %v594
      %v695 = vunpack.c.l.b16 %v595
      %v696 = vunpack.c.l.b16 %v596
      %v697 = vunpack.c.l.b16 %v597
      %v698 = vunpack.c.l.b16 %v598
      %v699 = vunpack.c.l.b16 %v599
      %v700 = vunpack.c.l.b16 %v600
      %v701 = vunpack.c.l.b16 %v601
      %v702 = vunpack.c.l.b16 %v602
      %v703 = vpack.c.b16 %v656, %v655
      %v704 = vpack.c.b16 %v658, %v657
      %v705 = vpack.c.b16 %v660, %v659
      %v706 = vpack.c.b16 %v662, %v661
      %v707 = vpack.c.b16 %v664, %v663
      %v708 = vpack.c.b16 %v666, %v665
      %v709 = vpack.c.b16 %v668, %v667
      %v710 = vpack.c.b16 %v670, %v669
      %v711 = vpack.c.b16 %v672, %v671
      %v712 = vpack.c.b16 %v674, %v673
      %v713 = vpack.c.b16 %v676, %v675
      %v714 = vpack.c.b16 %v678, %v677
      %v715 = vpack.c.b16 %v680, %v679
      %v716 = vpack.c.b16 %v682, %v681
      %v717 = vpack.c.b16 %v684, %v683
      %v718 = vpack.c.b16 %v686, %v685
      %v719 = vpack.c.b16 %v688, %v687
      %v720 = vpack.c.b16 %v690, %v689
      %v721 = vpack.c.b16 %v692, %v691
      %v722 = vpack.c.b16 %v694, %v693
      %v723 = vpack.c.b16 %v696, %v695
      %v724 = vpack.c.b16 %v698, %v697
      %v725 = vpack.c.b16 %v700, %v699
      %v726 = vpack.c.b16 %v702, %v701
      %751 = vmatpush.bf16.msra.mxu0 %v710
      %752 = vmatpush.bf16.msra.mxu0 %v709
      %753 = vmatpush.bf16.msra.mxu0 %v708
      %754 = vmatpush.bf16.msra.mxu0 %v707
      %755 = vmatpush.bf16.msra.mxu0 %v706
      %756 = vmatpush.bf16.msra.mxu0 %v705
      %757 = vmatpush.bf16.msra.mxu0 %v704
      %758 = vmatpush.bf16.msra.mxu0 %v703
      %759 = vmatmul.bf16.gmra.mxu0 %v447
      %v760 = vpop.f32.mrf.mxu0
      %v761 = vadd.f32 %v605, %v760
      %v762 = vpop.f32.mrf.mxu0
      %v763 = vadd.f32 %v605, %v762
      %764 = vmatmul.bf16.gmra.mxu0 %v450
      %v765 = vpop.f32.mrf.mxu0
      %v766 = vadd.f32 %v605, %v765
      %v767 = vpop.f32.mrf.mxu0
      %v768 = vadd.f32 %v605, %v767
      %769 = vmatmul.bf16.gmra.mxu0 %v453
      %v770 = vpop.f32.mrf.mxu0
      %v771 = vadd.f32 %v605, %v770
      %v772 = vpop.f32.mrf.mxu0
      %v773 = vadd.f32 %v605, %v772
      %774 = vmatmul.bf16.gmra.mxu0 %v456
      %v775 = vpop.f32.mrf.mxu0
      %v776 = vadd.f32 %v605, %v775
      %v777 = vpop.f32.mrf.mxu0
      %v778 = vadd.f32 %v605, %v777
      %779 = vmatmul.bf16.gmra.mxu0 %v459
      %v780 = vpop.f32.mrf.mxu0
      %v781 = vadd.f32 %v605, %v780
      %v782 = vpop.f32.mrf.mxu0
      %v783 = vadd.f32 %v605, %v782
      %784 = vmatmul.bf16.gmra.mxu0 %v462
      %v785 = vpop.f32.mrf.mxu0
      %v786 = vadd.f32 %v605, %v785
      %v787 = vpop.f32.mrf.mxu0
      %v788 = vadd.f32 %v605, %v787
      %789 = vmatmul.bf16.gmra.mxu0 %v465
      %v790 = vpop.f32.mrf.mxu0
      %v791 = vadd.f32 %v605, %v790
      %v792 = vpop.f32.mrf.mxu0
      %v793 = vadd.f32 %v605, %v792
      %794 = vmatmul.bf16.gmra.mxu0 %v468
      %v795 = vpop.f32.mrf.mxu0
      %v796 = vadd.f32 %v605, %v795
      %v797 = vpop.f32.mrf.mxu0
      %v798 = vadd.f32 %v605, %v797
      %799 = vmatmul.bf16.gmra.mxu0 %v471
      %v800 = vpop.f32.mrf.mxu0
      %v801 = vadd.f32 %v605, %v800
      %v802 = vpop.f32.mrf.mxu0
      %v803 = vadd.f32 %v605, %v802
      %804 = vmatmul.bf16.gmra.mxu0 %v474
      %v805 = vpop.f32.mrf.mxu0
      %v806 = vadd.f32 %v605, %v805
      %v807 = vpop.f32.mrf.mxu0
      %v808 = vadd.f32 %v605, %v807
      %809 = vmatmul.bf16.gmra.mxu0 %v477
      %v810 = vpop.f32.mrf.mxu0
      %v811 = vadd.f32 %v605, %v810
      %v812 = vpop.f32.mrf.mxu0
      %v813 = vadd.f32 %v605, %v812
      %814 = vmatmul.bf16.gmra.mxu0 %v480
      %v815 = vpop.f32.mrf.mxu0
      %v816 = vadd.f32 %v605, %v815
      %v817 = vpop.f32.mrf.mxu0
      %v818 = vadd.f32 %v605, %v817
      %819 = vmatmul.bf16.gmra.mxu0 %v483
      %v820 = vpop.f32.mrf.mxu0
      %v821 = vadd.f32 %v605, %v820
      %v822 = vpop.f32.mrf.mxu0
      %v823 = vadd.f32 %v605, %v822
      %824 = vmatmul.bf16.gmra.mxu0 %v486
      %v825 = vpop.f32.mrf.mxu0
      %v826 = vadd.f32 %v605, %v825
      %v827 = vpop.f32.mrf.mxu0
      %v828 = vadd.f32 %v605, %v827
      %829 = vmatmul.bf16.gmra.mxu0 %v489
      %v830 = vpop.f32.mrf.mxu0
      %v831 = vadd.f32 %v605, %v830
      %v832 = vpop.f32.mrf.mxu0
      %v833 = vadd.f32 %v605, %v832
      %834 = vmatmul.bf16.gmra.mxu0 %v492
      %v835 = vpop.f32.mrf.mxu0
      %v836 = vadd.f32 %v605, %v835
      %v837 = vpop.f32.mrf.mxu0
      %v838 = vadd.f32 %v605, %v837
      %839 = vmatmul.bf16.gmra.mxu0 %v495
      %v840 = vpop.f32.mrf.mxu0
      %v841 = vadd.f32 %v605, %v840
      %v842 = vpop.f32.mrf.mxu0
      %v843 = vadd.f32 %v605, %v842
      %844 = vmatmul.bf16.gmra.mxu0 %v498
      %v845 = vpop.f32.mrf.mxu0
      %v846 = vadd.f32 %v605, %v845
      %v847 = vpop.f32.mrf.mxu0
      %v848 = vadd.f32 %v605, %v847
      %849 = vmatmul.bf16.gmra.mxu0 %v501
      %v850 = vpop.f32.mrf.mxu0
      %v851 = vadd.f32 %v605, %v850
      %v852 = vpop.f32.mrf.mxu0
      %v853 = vadd.f32 %v605, %v852
      %854 = vmatmul.bf16.gmra.mxu0 %v504
      %v855 = vpop.f32.mrf.mxu0
      %v856 = vadd.f32 %v605, %v855
      %v857 = vpop.f32.mrf.mxu0
      %v858 = vadd.f32 %v605, %v857
      %859 = vmatmul.bf16.gmra.mxu0 %v507
      %v860 = vpop.f32.mrf.mxu0
      %v861 = vadd.f32 %v605, %v860
      %v862 = vpop.f32.mrf.mxu0
      %v863 = vadd.f32 %v605, %v862
      %864 = vmatmul.bf16.gmra.mxu0 %v510
      %v865 = vpop.f32.mrf.mxu0
      %v866 = vadd.f32 %v605, %v865
      %v867 = vpop.f32.mrf.mxu0
      %v868 = vadd.f32 %v605, %v867
      %869 = vmatmul.bf16.gmra.mxu0 %v513
      %v870 = vpop.f32.mrf.mxu0
      %v871 = vadd.f32 %v605, %v870
      %v872 = vpop.f32.mrf.mxu0
      %v873 = vadd.f32 %v605, %v872
      %874 = vmatmul.bf16.gmra.mxu0 %v516
      %v875 = vpop.f32.mrf.mxu0
      %v876 = vadd.f32 %v605, %v875
      %v877 = vpop.f32.mrf.mxu0
      %v878 = vadd.f32 %v605, %v877
      %879 = vmatmul.bf16.gmra.mxu0 %v519
      %v880 = vpop.f32.mrf.mxu0
      %v881 = vadd.f32 %v605, %v880
      %v882 = vpop.f32.mrf.mxu0
      %v883 = vadd.f32 %v605, %v882
      %884 = vmatmul.bf16.gmra.mxu0 %v522
      %v885 = vpop.f32.mrf.mxu0
      %v886 = vadd.f32 %v605, %v885
      %v887 = vpop.f32.mrf.mxu0
      %v888 = vadd.f32 %v605, %v887
      %889 = vmatmul.bf16.gmra.mxu0 %v525
      %v890 = vpop.f32.mrf.mxu0
      %v891 = vadd.f32 %v605, %v890
      %v892 = vpop.f32.mrf.mxu0
      %v893 = vadd.f32 %v605, %v892
      %894 = vmatmul.bf16.gmra.mxu0 %v528
      %v895 = vpop.f32.mrf.mxu0
      %v896 = vadd.f32 %v605, %v895
      %v897 = vpop.f32.mrf.mxu0
      %v898 = vadd.f32 %v605, %v897
      %899 = vmatmul.bf16.gmra.mxu0 %v531
      %v900 = vpop.f32.mrf.mxu0
      %v901 = vadd.f32 %v605, %v900
      %v902 = vpop.f32.mrf.mxu0
      %v903 = vadd.f32 %v605, %v902
      %904 = vmatmul.bf16.gmra.mxu0 %v534
      %v905 = vpop.f32.mrf.mxu0
      %v906 = vadd.f32 %v605, %v905
      %v907 = vpop.f32.mrf.mxu0
      %v908 = vadd.f32 %v605, %v907
      %909 = vmatmul.bf16.gmra.mxu0 %v537
      %v910 = vpop.f32.mrf.mxu0
      %v911 = vadd.f32 %v605, %v910
      %v912 = vpop.f32.mrf.mxu0
      %v913 = vadd.f32 %v605, %v912
      %914 = vmatmul.bf16.gmra.mxu0 %v540
      %v915 = vpop.f32.mrf.mxu0
      %v916 = vadd.f32 %v605, %v915
      %v917 = vpop.f32.mrf.mxu0
      %v918 = vadd.f32 %v605, %v917
      %919 = vmatmul.bf16.gmra.mxu0 %v543
      %v920 = vpop.f32.mrf.mxu0
      %v921 = vadd.f32 %v605, %v920
      %v922 = vpop.f32.mrf.mxu0
      %v923 = vadd.f32 %v605, %v922
      %924 = vmatmul.bf16.gmra.mxu0 %v546
      %v925 = vpop.f32.mrf.mxu0
      %v926 = vadd.f32 %v605, %v925
      %v927 = vpop.f32.mrf.mxu0
      %v928 = vadd.f32 %v605, %v927
      %929 = vmatmul.bf16.gmra.mxu0 %v549
      %v930 = vpop.f32.mrf.mxu0
      %v931 = vadd.f32 %v605, %v930
      %v932 = vpop.f32.mrf.mxu0
      %v933 = vadd.f32 %v605, %v932
      %934 = vmatmul.bf16.gmra.mxu0 %v552
      %v935 = vpop.f32.mrf.mxu0
      %v936 = vadd.f32 %v605, %v935
      %v937 = vpop.f32.mrf.mxu0
      %v938 = vadd.f32 %v605, %v937
      %939 = vdwg.mxu0
      %940 = vmatpush.bf16.msra.mxu0 %v718
      %941 = vmatpush.bf16.msra.mxu0 %v717
      %942 = vmatpush.bf16.msra.mxu0 %v716
      %943 = vmatpush.bf16.msra.mxu0 %v715
      %944 = vmatpush.bf16.msra.mxu0 %v714
      %945 = vmatpush.bf16.msra.mxu0 %v713
      %946 = vmatpush.bf16.msra.mxu0 %v712
      %947 = vmatpush.bf16.msra.mxu0 %v711
      %948 = vmatmul.bf16.gmra.mxu0 %v448
      %v949 = vpop.f32.mrf.mxu0
      %v950 = vadd.f32 %v761, %v949
      %v951 = vpop.f32.mrf.mxu0
      %v952 = vadd.f32 %v763, %v951
      %953 = vmatmul.bf16.gmra.mxu0 %v451
      %v954 = vpop.f32.mrf.mxu0
      %v955 = vadd.f32 %v766, %v954
      %v956 = vpop.f32.mrf.mxu0
      %v957 = vadd.f32 %v768, %v956
      %958 = vmatmul.bf16.gmra.mxu0 %v454
      %v959 = vpop.f32.mrf.mxu0
      %v960 = vadd.f32 %v771, %v959
      %v961 = vpop.f32.mrf.mxu0
      %v962 = vadd.f32 %v773, %v961
      %963 = vmatmul.bf16.gmra.mxu0 %v457
      %v964 = vpop.f32.mrf.mxu0
      %v965 = vadd.f32 %v776, %v964
      %v966 = vpop.f32.mrf.mxu0
      %v967 = vadd.f32 %v778, %v966
      %968 = vmatmul.bf16.gmra.mxu0 %v460
      %v969 = vpop.f32.mrf.mxu0
      %v970 = vadd.f32 %v781, %v969
      %v971 = vpop.f32.mrf.mxu0
      %v972 = vadd.f32 %v783, %v971
      %973 = vmatmul.bf16.gmra.mxu0 %v463
      %v974 = vpop.f32.mrf.mxu0
      %v975 = vadd.f32 %v786, %v974
      %v976 = vpop.f32.mrf.mxu0
      %v977 = vadd.f32 %v788, %v976
      %978 = vmatmul.bf16.gmra.mxu0 %v466
      %v979 = vpop.f32.mrf.mxu0
      %v980 = vadd.f32 %v791, %v979
      %v981 = vpop.f32.mrf.mxu0
      %v982 = vadd.f32 %v793, %v981
      %983 = vmatmul.bf16.gmra.mxu0 %v469
      %v984 = vpop.f32.mrf.mxu0
      %v985 = vadd.f32 %v796, %v984
      %v986 = vpop.f32.mrf.mxu0
      %v987 = vadd.f32 %v798, %v986
      %988 = vmatmul.bf16.gmra.mxu0 %v472
      %v989 = vpop.f32.mrf.mxu0
      %v990 = vadd.f32 %v801, %v989
      %v991 = vpop.f32.mrf.mxu0
      %v992 = vadd.f32 %v803, %v991
      %993 = vmatmul.bf16.gmra.mxu0 %v475
      %v994 = vpop.f32.mrf.mxu0
      %v995 = vadd.f32 %v806, %v994
      %v996 = vpop.f32.mrf.mxu0
      %v997 = vadd.f32 %v808, %v996
      %998 = vmatmul.bf16.gmra.mxu0 %v478
      %v999 = vpop.f32.mrf.mxu0
      %v1000 = vadd.f32 %v811, %v999
      %v1001 = vpop.f32.mrf.mxu0
      %v1002 = vadd.f32 %v813, %v1001
      %1003 = vmatmul.bf16.gmra.mxu0 %v481
      %v1004 = vpop.f32.mrf.mxu0
      %v1005 = vadd.f32 %v816, %v1004
      %v1006 = vpop.f32.mrf.mxu0
      %v1007 = vadd.f32 %v818, %v1006
      %1008 = vmatmul.bf16.gmra.mxu0 %v484
      %v1009 = vpop.f32.mrf.mxu0
      %v1010 = vadd.f32 %v821, %v1009
      %v1011 = vpop.f32.mrf.mxu0
      %v1012 = vadd.f32 %v823, %v1011
      %1013 = vmatmul.bf16.gmra.mxu0 %v487
      %v1014 = vpop.f32.mrf.mxu0
      %v1015 = vadd.f32 %v826, %v1014
      %v1016 = vpop.f32.mrf.mxu0
      %v1017 = vadd.f32 %v828, %v1016
      %1018 = vmatmul.bf16.gmra.mxu0 %v490
      %v1019 = vpop.f32.mrf.mxu0
      %v1020 = vadd.f32 %v831, %v1019
      %v1021 = vpop.f32.mrf.mxu0
      %v1022 = vadd.f32 %v833, %v1021
      %1023 = vmatmul.bf16.gmra.mxu0 %v493
      %v1024 = vpop.f32.mrf.mxu0
      %v1025 = vadd.f32 %v836, %v1024
      %v1026 = vpop.f32.mrf.mxu0
      %v1027 = vadd.f32 %v838, %v1026
      %1028 = vmatmul.bf16.gmra.mxu0 %v496
      %v1029 = vpop.f32.mrf.mxu0
      %v1030 = vadd.f32 %v841, %v1029
      %v1031 = vpop.f32.mrf.mxu0
      %v1032 = vadd.f32 %v843, %v1031
      %1033 = vmatmul.bf16.gmra.mxu0 %v499
      %v1034 = vpop.f32.mrf.mxu0
      %v1035 = vadd.f32 %v846, %v1034
      %v1036 = vpop.f32.mrf.mxu0
      %v1037 = vadd.f32 %v848, %v1036
      %1038 = vmatmul.bf16.gmra.mxu0 %v502
      %v1039 = vpop.f32.mrf.mxu0
      %v1040 = vadd.f32 %v851, %v1039
      %v1041 = vpop.f32.mrf.mxu0
      %v1042 = vadd.f32 %v853, %v1041
      %1043 = vmatmul.bf16.gmra.mxu0 %v505
      %v1044 = vpop.f32.mrf.mxu0
      %v1045 = vadd.f32 %v856, %v1044
      %v1046 = vpop.f32.mrf.mxu0
      %v1047 = vadd.f32 %v858, %v1046
      %1048 = vmatmul.bf16.gmra.mxu0 %v508
      %v1049 = vpop.f32.mrf.mxu0
      %v1050 = vadd.f32 %v861, %v1049
      %v1051 = vpop.f32.mrf.mxu0
      %v1052 = vadd.f32 %v863, %v1051
      %1053 = vmatmul.bf16.gmra.mxu0 %v511
      %v1054 = vpop.f32.mrf.mxu0
      %v1055 = vadd.f32 %v866, %v1054
      %v1056 = vpop.f32.mrf.mxu0
      %v1057 = vadd.f32 %v868, %v1056
      %1058 = vmatmul.bf16.gmra.mxu0 %v514
      %v1059 = vpop.f32.mrf.mxu0
      %v1060 = vadd.f32 %v871, %v1059
      %v1061 = vpop.f32.mrf.mxu0
      %v1062 = vadd.f32 %v873, %v1061
      %1063 = vmatmul.bf16.gmra.mxu0 %v517
      %v1064 = vpop.f32.mrf.mxu0
      %v1065 = vadd.f32 %v876, %v1064
      %v1066 = vpop.f32.mrf.mxu0
      %v1067 = vadd.f32 %v878, %v1066
      %1068 = vmatmul.bf16.gmra.mxu0 %v520
      %v1069 = vpop.f32.mrf.mxu0
      %v1070 = vadd.f32 %v881, %v1069
      %v1071 = vpop.f32.mrf.mxu0
      %v1072 = vadd.f32 %v883, %v1071
      %1073 = vmatmul.bf16.gmra.mxu0 %v523
      %v1074 = vpop.f32.mrf.mxu0
      %v1075 = vadd.f32 %v886, %v1074
      %v1076 = vpop.f32.mrf.mxu0
      %v1077 = vadd.f32 %v888, %v1076
      %1078 = vmatmul.bf16.gmra.mxu0 %v526
      %v1079 = vpop.f32.mrf.mxu0
      %v1080 = vadd.f32 %v891, %v1079
      %v1081 = vpop.f32.mrf.mxu0
      %v1082 = vadd.f32 %v893, %v1081
      %1083 = vmatmul.bf16.gmra.mxu0 %v529
      %v1084 = vpop.f32.mrf.mxu0
      %v1085 = vadd.f32 %v896, %v1084
      %v1086 = vpop.f32.mrf.mxu0
      %v1087 = vadd.f32 %v898, %v1086
      %1088 = vmatmul.bf16.gmra.mxu0 %v532
      %v1089 = vpop.f32.mrf.mxu0
      %v1090 = vadd.f32 %v901, %v1089
      %v1091 = vpop.f32.mrf.mxu0
      %v1092 = vadd.f32 %v903, %v1091
      %1093 = vmatmul.bf16.gmra.mxu0 %v535
      %v1094 = vpop.f32.mrf.mxu0
      %v1095 = vadd.f32 %v906, %v1094
      %v1096 = vpop.f32.mrf.mxu0
      %v1097 = vadd.f32 %v908, %v1096
      %1098 = vmatmul.bf16.gmra.mxu0 %v538
      %v1099 = vpop.f32.mrf.mxu0
      %v1100 = vadd.f32 %v911, %v1099
      %v1101 = vpop.f32.mrf.mxu0
      %v1102 = vadd.f32 %v913, %v1101
      %1103 = vmatmul.bf16.gmra.mxu0 %v541
      %v1104 = vpop.f32.mrf.mxu0
      %v1105 = vadd.f32 %v916, %v1104
      %v1106 = vpop.f32.mrf.mxu0
      %v1107 = vadd.f32 %v918, %v1106
      %1108 = vmatmul.bf16.gmra.mxu0 %v544
      %v1109 = vpop.f32.mrf.mxu0
      %v1110 = vadd.f32 %v921, %v1109
      %v1111 = vpop.f32.mrf.mxu0
      %v1112 = vadd.f32 %v923, %v1111
      %1113 = vmatmul.bf16.gmra.mxu0 %v547
      %v1114 = vpop.f32.mrf.mxu0
      %v1115 = vadd.f32 %v926, %v1114
      %v1116 = vpop.f32.mrf.mxu0
      %v1117 = vadd.f32 %v928, %v1116
      %1118 = vmatmul.bf16.gmra.mxu0 %v550
      %v1119 = vpop.f32.mrf.mxu0
      %v1120 = vadd.f32 %v931, %v1119
      %v1121 = vpop.f32.mrf.mxu0
      %v1122 = vadd.f32 %v933, %v1121
      %1123 = vmatmul.bf16.gmra.mxu0 %v553
      %v1124 = vpop.f32.mrf.mxu0
      %v1125 = vadd.f32 %v936, %v1124
      %v1126 = vpop.f32.mrf.mxu0
      %v1127 = vadd.f32 %v938, %v1126
      %1128 = vdwg.mxu0
      %1129 = vmatpush.bf16.msra.mxu0 %v726
      %1130 = vmatpush.bf16.msra.mxu0 %v725
      %1131 = vmatpush.bf16.msra.mxu0 %v724
      %1132 = vmatpush.bf16.msra.mxu0 %v723
      %1133 = vmatpush.bf16.msra.mxu0 %v722
      %1134 = vmatpush.bf16.msra.mxu0 %v721
      %1135 = vmatpush.bf16.msra.mxu0 %v720
      %1136 = vmatpush.bf16.msra.mxu0 %v719
      %1137 = vmatmul.bf16.gmra.mxu0 %v449
      %v1138 = vpop.f32.mrf.mxu0
      %v1139 = vadd.f32 %v950, %v1138
      %v1140 = vpop.f32.mrf.mxu0
      %v1141 = vadd.f32 %v952, %v1140
      %1142 = vmatmul.bf16.gmra.mxu0 %v452
      %v1143 = vpop.f32.mrf.mxu0
      %v1144 = vadd.f32 %v955, %v1143
      %v1145 = vpop.f32.mrf.mxu0
      %v1146 = vadd.f32 %v957, %v1145
      %1147 = vmatmul.bf16.gmra.mxu0 %v455
      %v1148 = vpop.f32.mrf.mxu0
      %v1149 = vadd.f32 %v960, %v1148
      %v1150 = vpop.f32.mrf.mxu0
      %v1151 = vadd.f32 %v962, %v1150
      %1152 = vmatmul.bf16.gmra.mxu0 %v458
      %v1153 = vpop.f32.mrf.mxu0
      %v1154 = vadd.f32 %v965, %v1153
      %v1155 = vpop.f32.mrf.mxu0
      %v1156 = vadd.f32 %v967, %v1155
      %1157 = vmatmul.bf16.gmra.mxu0 %v461
      %v1158 = vpop.f32.mrf.mxu0
      %v1159 = vadd.f32 %v970, %v1158
      %v1160 = vpop.f32.mrf.mxu0
      %v1161 = vadd.f32 %v972, %v1160
      %1162 = vmatmul.bf16.gmra.mxu0 %v464
      %v1163 = vpop.f32.mrf.mxu0
      %v1164 = vadd.f32 %v975, %v1163
      %v1165 = vpop.f32.mrf.mxu0
      %v1166 = vadd.f32 %v977, %v1165
      %1167 = vmatmul.bf16.gmra.mxu0 %v467
      %v1168 = vpop.f32.mrf.mxu0
      %v1169 = vadd.f32 %v980, %v1168
      %v1170 = vpop.f32.mrf.mxu0
      %v1171 = vadd.f32 %v982, %v1170
      %1172 = vmatmul.bf16.gmra.mxu0 %v470
      %v1173 = vpop.f32.mrf.mxu0
      %v1174 = vadd.f32 %v985, %v1173
      %v1175 = vpop.f32.mrf.mxu0
      %v1176 = vadd.f32 %v987, %v1175
      %1177 = vmatmul.bf16.gmra.mxu0 %v473
      %v1178 = vpop.f32.mrf.mxu0
      %v1179 = vadd.f32 %v990, %v1178
      %v1180 = vpop.f32.mrf.mxu0
      %v1181 = vadd.f32 %v992, %v1180
      %1182 = vmatmul.bf16.gmra.mxu0 %v476
      %v1183 = vpop.f32.mrf.mxu0
      %v1184 = vadd.f32 %v995, %v1183
      %v1185 = vpop.f32.mrf.mxu0
      %v1186 = vadd.f32 %v997, %v1185
      %1187 = vmatmul.bf16.gmra.mxu0 %v479
      %v1188 = vpop.f32.mrf.mxu0
      %v1189 = vadd.f32 %v1000, %v1188
      %v1190 = vpop.f32.mrf.mxu0
      %v1191 = vadd.f32 %v1002, %v1190
      %1192 = vmatmul.bf16.gmra.mxu0 %v482
      %v1193 = vpop.f32.mrf.mxu0
      %v1194 = vadd.f32 %v1005, %v1193
      %v1195 = vpop.f32.mrf.mxu0
      %v1196 = vadd.f32 %v1007, %v1195
      %1197 = vmatmul.bf16.gmra.mxu0 %v485
      %v1198 = vpop.f32.mrf.mxu0
      %v1199 = vadd.f32 %v1010, %v1198
      %v1200 = vpop.f32.mrf.mxu0
      %v1201 = vadd.f32 %v1012, %v1200
      %1202 = vmatmul.bf16.gmra.mxu0 %v488
      %v1203 = vpop.f32.mrf.mxu0
      %v1204 = vadd.f32 %v1015, %v1203
      %v1205 = vpop.f32.mrf.mxu0
      %v1206 = vadd.f32 %v1017, %v1205
      %1207 = vmatmul.bf16.gmra.mxu0 %v491
      %v1208 = vpop.f32.mrf.mxu0
      %v1209 = vadd.f32 %v1020, %v1208
      %v1210 = vpop.f32.mrf.mxu0
      %v1211 = vadd.f32 %v1022, %v1210
      %1212 = vmatmul.bf16.gmra.mxu0 %v494
      %v1213 = vpop.f32.mrf.mxu0
      %v1214 = vadd.f32 %v1025, %v1213
      %v1215 = vpop.f32.mrf.mxu0
      %v1216 = vadd.f32 %v1027, %v1215
      %1217 = vmatmul.bf16.gmra.mxu0 %v497
      %v1218 = vpop.f32.mrf.mxu0
      %v1219 = vadd.f32 %v1030, %v1218
      %v1220 = vpop.f32.mrf.mxu0
      %v1221 = vadd.f32 %v1032, %v1220
      %1222 = vmatmul.bf16.gmra.mxu0 %v500
      %v1223 = vpop.f32.mrf.mxu0
      %v1224 = vadd.f32 %v1035, %v1223
      %v1225 = vpop.f32.mrf.mxu0
      %v1226 = vadd.f32 %v1037, %v1225
      %1227 = vmatmul.bf16.gmra.mxu0 %v503
      %v1228 = vpop.f32.mrf.mxu0
      %v1229 = vadd.f32 %v1040, %v1228
      %v1230 = vpop.f32.mrf.mxu0
      %v1231 = vadd.f32 %v1042, %v1230
      %1232 = vmatmul.bf16.gmra.mxu0 %v506
      %v1233 = vpop.f32.mrf.mxu0
      %v1234 = vadd.f32 %v1045, %v1233
      %v1235 = vpop.f32.mrf.mxu0
      %v1236 = vadd.f32 %v1047, %v1235
      %1237 = vmatmul.bf16.gmra.mxu0 %v509
      %v1238 = vpop.f32.mrf.mxu0
      %v1239 = vadd.f32 %v1050, %v1238
      %v1240 = vpop.f32.mrf.mxu0
      %v1241 = vadd.f32 %v1052, %v1240
      %1242 = vmatmul.bf16.gmra.mxu0 %v512
      %v1243 = vpop.f32.mrf.mxu0
      %v1244 = vadd.f32 %v1055, %v1243
      %v1245 = vpop.f32.mrf.mxu0
      %v1246 = vadd.f32 %v1057, %v1245
      %1247 = vmatmul.bf16.gmra.mxu0 %v515
      %v1248 = vpop.f32.mrf.mxu0
      %v1249 = vadd.f32 %v1060, %v1248
      %v1250 = vpop.f32.mrf.mxu0
      %v1251 = vadd.f32 %v1062, %v1250
      %1252 = vmatmul.bf16.gmra.mxu0 %v518
      %v1253 = vpop.f32.mrf.mxu0
      %v1254 = vadd.f32 %v1065, %v1253
      %v1255 = vpop.f32.mrf.mxu0
      %v1256 = vadd.f32 %v1067, %v1255
      %1257 = vmatmul.bf16.gmra.mxu0 %v521
      %v1258 = vpop.f32.mrf.mxu0
      %v1259 = vadd.f32 %v1070, %v1258
      %v1260 = vpop.f32.mrf.mxu0
      %v1261 = vadd.f32 %v1072, %v1260
      %1262 = vmatmul.bf16.gmra.mxu0 %v524
      %v1263 = vpop.f32.mrf.mxu0
      %v1264 = vadd.f32 %v1075, %v1263
      %v1265 = vpop.f32.mrf.mxu0
      %v1266 = vadd.f32 %v1077, %v1265
      %1267 = vmatmul.bf16.gmra.mxu0 %v527
      %v1268 = vpop.f32.mrf.mxu0
      %v1269 = vadd.f32 %v1080, %v1268
      %v1270 = vpop.f32.mrf.mxu0
      %v1271 = vadd.f32 %v1082, %v1270
      %1272 = vmatmul.bf16.gmra.mxu0 %v530
      %v1273 = vpop.f32.mrf.mxu0
      %v1274 = vadd.f32 %v1085, %v1273
      %v1275 = vpop.f32.mrf.mxu0
      %v1276 = vadd.f32 %v1087, %v1275
      %1277 = vmatmul.bf16.gmra.mxu0 %v533
      %v1278 = vpop.f32.mrf.mxu0
      %v1279 = vadd.f32 %v1090, %v1278
      %v1280 = vpop.f32.mrf.mxu0
      %v1281 = vadd.f32 %v1092, %v1280
      %1282 = vmatmul.bf16.gmra.mxu0 %v536
      %v1283 = vpop.f32.mrf.mxu0
      %v1284 = vadd.f32 %v1095, %v1283
      %v1285 = vpop.f32.mrf.mxu0
      %v1286 = vadd.f32 %v1097, %v1285
      %1287 = vmatmul.bf16.gmra.mxu0 %v539
      %v1288 = vpop.f32.mrf.mxu0
      %v1289 = vadd.f32 %v1100, %v1288
      %v1290 = vpop.f32.mrf.mxu0
      %v1291 = vadd.f32 %v1102, %v1290
      %1292 = vmatmul.bf16.gmra.mxu0 %v542
      %v1293 = vpop.f32.mrf.mxu0
      %v1294 = vadd.f32 %v1105, %v1293
      %v1295 = vpop.f32.mrf.mxu0
      %v1296 = vadd.f32 %v1107, %v1295
      %1297 = vmatmul.bf16.gmra.mxu0 %v545
      %v1298 = vpop.f32.mrf.mxu0
      %v1299 = vadd.f32 %v1110, %v1298
      %v1300 = vpop.f32.mrf.mxu0
      %v1301 = vadd.f32 %v1112, %v1300
      %1302 = vmatmul.bf16.gmra.mxu0 %v548
      %v1303 = vpop.f32.mrf.mxu0
      %v1304 = vadd.f32 %v1115, %v1303
      %v1305 = vpop.f32.mrf.mxu0
      %v1306 = vadd.f32 %v1117, %v1305
      %1307 = vmatmul.bf16.gmra.mxu0 %v551
      %v1308 = vpop.f32.mrf.mxu0
      %v1309 = vadd.f32 %v1120, %v1308
      %v1310 = vpop.f32.mrf.mxu0
      %v1311 = vadd.f32 %v1122, %v1310
      %1312 = vmatmul.bf16.gmra.mxu0 %v554
      %v1313 = vpop.f32.mrf.mxu0
      %v1314 = vadd.f32 %v1125, %v1313
      %v1315 = vpop.f32.mrf.mxu0
      %v1316 = vadd.f32 %v1127, %v1315
      %1317 = vdwg.mxu0
      %v1318 = vtanh.pop %v1139
      %v1319 = vtanh.pop %v1141
      %v1320 = vtanh.pop %v1144
      %v1321 = vtanh.pop %v1146
      %v1322 = vtanh.pop %v1149
      %v1323 = vtanh.pop %v1151
      %v1324 = vtanh.pop %v1154
      %v1325 = vtanh.pop %v1156
      %v1326 = vtanh.pop %v1159
      %v1327 = vtanh.pop %v1161
      %v1328 = vtanh.pop %v1164
      %v1329 = vtanh.pop %v1166
      %v1330 = vtanh.pop %v1169
      %v1331 = vtanh.pop %v1171
      %v1332 = vtanh.pop %v1174
      %v1333 = vtanh.pop %v1176
      %v1334 = vtanh.pop %v1179
      %v1335 = vtanh.pop %v1181
      %v1336 = vtanh.pop %v1184
      %v1337 = vtanh.pop %v1186
      %v1338 = vtanh.pop %v1189
      %v1339 = vtanh.pop %v1191
      %v1340 = vtanh.pop %v1194
      %v1341 = vtanh.pop %v1196
      %v1342 = vtanh.pop %v1199
      %v1343 = vtanh.pop %v1201
      %v1344 = vtanh.pop %v1204
      %v1345 = vtanh.pop %v1206
      %v1346 = vtanh.pop %v1209
      %v1347 = vtanh.pop %v1211
      %v1348 = vtanh.pop %v1214
      %v1349 = vtanh.pop %v1216
      %v1350 = vtanh.pop %v1219
      %v1351 = vtanh.pop %v1221
      %v1352 = vtanh.pop %v1224
      %v1353 = vtanh.pop %v1226
      %v1354 = vtanh.pop %v1229
      %v1355 = vtanh.pop %v1231
      %v1356 = vtanh.pop %v1234
      %v1357 = vtanh.pop %v1236
      %v1358 = vtanh.pop %v1239
      %v1359 = vtanh.pop %v1241
      %v1360 = vtanh.pop %v1244
      %v1361 = vtanh.pop %v1246
      %v1362 = vtanh.pop %v1249
      %v1363 = vtanh.pop %v1251
      %v1364 = vtanh.pop %v1254
      %v1365 = vtanh.pop %v1256
      %v1366 = vtanh.pop %v1259
      %v1367 = vtanh.pop %v1261
      %v1368 = vtanh.pop %v1264
      %v1369 = vtanh.pop %v1266
      %v1370 = vtanh.pop %v1269
      %v1371 = vtanh.pop %v1271
      %v1372 = vtanh.pop %v1274
      %v1373 = vtanh.pop %v1276
      %v1374 = vtanh.pop %v1279
      %v1375 = vtanh.pop %v1281
      %v1376 = vtanh.pop %v1284
      %v1377 = vtanh.pop %v1286
      %v1378 = vtanh.pop %v1289
      %v1379 = vtanh.pop %v1291
      %v1380 = vtanh.pop %v1294
      %v1381 = vtanh.pop %v1296
      %v1382 = vtanh.pop %v1299
      %v1383 = vtanh.pop %v1301
      %v1384 = vtanh.pop %v1304
      %v1385 = vtanh.pop %v1306
      %v1386 = vtanh.pop %v1309
      %v1387 = vtanh.pop %v1311
      %v1388 = vtanh.pop %v1314
      %v1389 = vtanh.pop %v1316
      %1390 = vst [vmem:[%s229] sm:$0xff] %v1318
      %1391 = vst [vmem:[%s229 + $0x8] sm:$0xff] %v1319
      %1392 = vst [vmem:[%s229 + $0x10] sm:$0xff] %v1320
      %1393 = vst [vmem:[%s229 + $0x18] sm:$0xff] %v1321
      %1394 = vst [vmem:[%s229 + $0x20] sm:$0xff] %v1322
      %1395 = vst [vmem:[%s229 + $0x28] sm:$0xff] %v1323
      %1396 = vst [vmem:[%s229 + $0x30] sm:$0xff] %v1324
      %1397 = vst [vmem:[%s229 + $0x38] sm:$0xff] %v1325
      %1398 = vst [vmem:[%s229 + $0x40] sm:$0xff] %v1326
      %1399 = vst [vmem:[%s229 + $0x48] sm:$0xff] %v1327
      %1400 = vst [vmem:[%s229 + $0x50] sm:$0xff] %v1328
      %1401 = vst [vmem:[%s229 + $0x58] sm:$0xff] %v1329
      %1402 = vst [vmem:[%s229 + $0x60] sm:$0xff] %v1330
      %1403 = vst [vmem:[%s229 + $0x68] sm:$0xff] %v1331
      %1404 = vst [vmem:[%s229 + $0x70] sm:$0xff] %v1332
      %1405 = vst [vmem:[%s229 + $0x78] sm:$0xff] %v1333
      %1406 = vst [vmem:[%s229 + $0x80] sm:$0xff] %v1334
      %1407 = vst [vmem:[%s229 + $0x88] sm:$0xff] %v1335
      %1408 = vst [vmem:[%s229 + $0x90] sm:$0xff] %v1336
      %1409 = vst [vmem:[%s229 + $0x98] sm:$0xff] %v1337
      %1410 = vst [vmem:[%s229 + $0xa0] sm:$0xff] %v1338
      %1411 = vst [vmem:[%s229 + $0xa8] sm:$0xff] %v1339
      %1412 = vst [vmem:[%s229 + $0xb0] sm:$0xff] %v1340
      %1413 = vst [vmem:[%s229 + $0xb8] sm:$0xff] %v1341
      %1414 = vst [vmem:[%s229 + $0xc0] sm:$0xff] %v1342
      %1415 = vst [vmem:[%s229 + $0xc8] sm:$0xff] %v1343
      %1416 = vst [vmem:[%s229 + $0xd0] sm:$0xff] %v1344
      %1417 = vst [vmem:[%s229 + $0xd8] sm:$0xff] %v1345
      %1418 = vst [vmem:[%s229 + $0xe0] sm:$0xff] %v1346
      %1419 = vst [vmem:[%s229 + $0xe8] sm:$0xff] %v1347
      %1420 = vst [vmem:[%s229 + $0xf0] sm:$0xff] %v1348
      %1421 = vst [vmem:[%s229 + $0xf8] sm:$0xff] %v1349
      %1422 = vst [vmem:[%s229 + $0x100] sm:$0xff] %v1350
      %1423 = vst [vmem:[%s229 + $0x108] sm:$0xff] %v1351
      %1424 = vst [vmem:[%s229 + $0x110] sm:$0xff] %v1352
      %1425 = vst [vmem:[%s229 + $0x118] sm:$0xff] %v1353
      %1426 = vst [vmem:[%s229 + $0x120] sm:$0xff] %v1354
      %1427 = vst [vmem:[%s229 + $0x128] sm:$0xff] %v1355
      %1428 = vst [vmem:[%s229 + $0x130] sm:$0xff] %v1356
      %1429 = vst [vmem:[%s229 + $0x138] sm:$0xff] %v1357
      %1430 = vst [vmem:[%s229 + $0x140] sm:$0xff] %v1358
      %1431 = vst [vmem:[%s229 + $0x148] sm:$0xff] %v1359
      %1432 = vst [vmem:[%s229 + $0x150] sm:$0xff] %v1360
      %1433 = vst [vmem:[%s229 + $0x158] sm:$0xff] %v1361
      %1434 = vst [vmem:[%s229 + $0x160] sm:$0xff] %v1362
      %1435 = vst [vmem:[%s229 + $0x168] sm:$0xff] %v1363
      %1436 = vst [vmem:[%s229 + $0x170] sm:$0xff] %v1364
      %1437 = vst [vmem:[%s229 + $0x178] sm:$0xff] %v1365
      %1438 = vst [vmem:[%s229 + $0x180] sm:$0xff] %v1366
      %1439 = vst [vmem:[%s229 + $0x188] sm:$0xff] %v1367
      %1440 = vst [vmem:[%s229 + $0x190] sm:$0xff] %v1368
      %1441 = vst [vmem:[%s229 + $0x198] sm:$0xff] %v1369
      %1442 = vst [vmem:[%s229 + $0x1a0] sm:$0xff] %v1370
      %1443 = vst [vmem:[%s229 + $0x1a8] sm:$0xff] %v1371
      %1444 = vst [vmem:[%s229 + $0x1b0] sm:$0xff] %v1372
      %1445 = vst [vmem:[%s229 + $0x1b8] sm:$0xff] %v1373
      %1446 = vst [vmem:[%s229 + $0x1c0] sm:$0xff] %v1374
      %1447 = vst [vmem:[%s229 + $0x1c8] sm:$0xff] %v1375
      %1448 = vst [vmem:[%s229 + $0x1d0] sm:$0xff] %v1376
      %1449 = vst [vmem:[%s229 + $0x1d8] sm:$0xff] %v1377
      %1450 = vst [vmem:[%s229 + $0x1e0] sm:$0xff] %v1378
      %1451 = vst [vmem:[%s229 + $0x1e8] sm:$0xff] %v1379
      %1452 = vst [vmem:[%s229 + $0x1f0] sm:$0xff] %v1380
      %1453 = vst [vmem:[%s229 + $0x1f8] sm:$0xff] %v1381
      %1454 = vst [vmem:[%s229 + $0x200] sm:$0xff] %v1382
      %1455 = vst [vmem:[%s229 + $0x208] sm:$0xff] %v1383
      %1456 = vst [vmem:[%s229 + $0x210] sm:$0xff] %v1384
      %1457 = vst [vmem:[%s229 + $0x218] sm:$0xff] %v1385
      %1458 = vst [vmem:[%s229 + $0x220] sm:$0xff] %v1386
      %1459 = vst [vmem:[%s229 + $0x228] sm:$0xff] %v1387
      %1460 = vst [vmem:[%s229 + $0x230] sm:$0xff] %v1388
      %1461 = vst [vmem:[%s229 + $0x238] sm:$0xff] %v1389
      %s1462 = smul.u32 72, %s18
      %p1463 = scmp.lt.s32.totalorder %s1462, 143
      %s1464 = scalar_select %p1463, %s1462, 143
      %p1465 = scmp.lt.s32.totalorder %s19, 0
      %s1466 = scalar_select %p1465, %s19, 0
      %s1467 = sadd.s32 %s1466, %s1464
      %s1468 = smul.addr %s1467, 8
      %s1469 = scalar_lea.vmem %s3, %s1468
      // Predicated region
      $region33: #{dqn_conv_forward.5} parent=31 // pred_check
        %p1470 = pneg %p124
      $region34: #{dqn_conv_forward.5} parent=31 // pred_check_branch
        %1472 = sbr.rel (%p1470) target = $region36
      $region35: #{dqn_conv_forward.5} parent=31 // pred_region
        %s1473 = smul.u32 72, %s18
      $region36: #{dqn_conv_forward.5} parent=31 // pred_fallthru
        _
    $region32: #{dqn_conv_forward.5} parent=5 // pred_fallthru
      _
    %p1474 = scmp.le.s32.totalorder 2, %s9
    // Predicated region
    $region37: #{dqn_conv_forward.5} parent=5 // pred_check
      %p1475 = pneg %p1474
    $region38: #{dqn_conv_forward.5} parent=5 // pred_check_branch
      %1477 = sbr.rel (%p1475) target = $region40
    $region39: #{dqn_conv_forward.5} parent=5 // pred_region
      %s1478 = ssub.s32 %s9, 2
      // Predicated region
      $region41: #{dqn_conv_forward.5} parent=39 // pred_check
        %p1479 = pneg %p130
      $region42: #{dqn_conv_forward.5} parent=39 // pred_check_branch
        %1481 = sbr.rel (%p1479) target = $region44
      $region43: #{dqn_conv_forward.5} parent=39 // pred_region
        %s1482 = smul.u32 72, %s20
        %p1483 = scmp.lt.s32.totalorder %s1482, 143
        %s1484 = scalar_select %p1483, %s1482, 143
        %p1485 = scmp.lt.s32.totalorder %s21, 0
        %s1486 = scalar_select %p1485, %s21, 0
        %s1487 = sadd.s32 %s1486, %s1484
        %s1488 = smul.addr %s1487, 8
        %s1489 = scalar_lea.vmem %s3, %s1488
      $region44: #{dqn_conv_forward.5} parent=39 // pred_fallthru
        _
    $region40: #{dqn_conv_forward.5} parent=5 // pred_fallthru
      _
  $region6: #{dqn_conv_forward.5} parent=0 // loop_footer
    %s13 = sadd.s32 1, %s9
  $region7: #{dqn_conv_forward.5} parent=0 // loop_footer_branch
    %8 = sbr.rel target = $region3
  $region8: #{dqn_conv_forward.5} parent=0 // loop_exit
    _

// kernel: dqn_conv_forward.7
$region0: #{dqn_conv_forward.7}
  #allocation0 [shape = 'u32[]', space=smem, size = 0x4, offset = 0x4, fixed_abs, tag = 'smem constant byte address 0x4 - core index']
  #allocation1 [shape = 'u32[72,128]{1,0:T(1,128)}', space=vmem, size = 0x9000, scoped, tag = 'internal scratch']
  %s0 = inlined_call_operand.vmem [shape: f32[2,1024], index: 0, kind: input, shape index: {}]
  %s1 = inlined_call_operand.vmem [shape: bf16[1024,128], index: 1, kind: input, shape index: {}]
  %s2 = inlined_call_operand.vmem [shape: f32[1,128], index: 2, kind: input, shape index: {}]
  %s3 = inlined_call_operand.vmem [shape: bf16[128,128], index: 3, kind: input, shape index: {}]
  %s4 = inlined_call_operand.vmem [shape: f32[1,128], index: 4, kind: input, shape index: {}]
  %s5 = inlined_call_operand.hbm [shape: f32[2,128], index: 5, kind: output, shape index: {}]
  %s6 = sld [smem:[#allocation0]]
  $region30: #{dqn_conv_forward.7} parent=0
    _
  %s8 = ssub.s32 1, %s6
  %s9 = scalar_select 0, %s8, %s6
  $region1: #{dqn_conv_forward.7} parent=0
    #allocation2 [shape = 'u8[1024]{0}', space=vmem, size = 0x400, scoped, tag = 'output window, operand 0, single buffered']
    #allocation3 [shape = 's32[1]{0}', space=sflag, size = 0x4, scoped, tag = 'scoped memory for dqn_conv_forward.7']
    %10 = vsyncpa [#allocation3], 0
    // Predicated region
    $region2: #{dqn_conv_forward.7} parent=1 // pred_check
      _
    $region3: #{dqn_conv_forward.7} parent=1 // pred_check_branch
      %12 = sbr.rel (0) target = $region5
    $region4: #{dqn_conv_forward.7} parent=1 // pred_region
      _
    $region5: #{dqn_conv_forward.7} parent=1 // pred_fallthru
      _
    // Predicated region
    $region6: #{dqn_conv_forward.7} parent=1 // pred_check
      _
    $region7: #{dqn_conv_forward.7} parent=1 // pred_check_branch
      %14 = sbr.rel (0) target = $region9
    $region8: #{dqn_conv_forward.7} parent=1 // pred_region
      _
    $region9: #{dqn_conv_forward.7} parent=1 // pred_fallthru
      _
    // Predicated region
    $region10: #{dqn_conv_forward.7} parent=1 // pred_check
      _
    $region11: #{dqn_conv_forward.7} parent=1 // pred_check_branch
      %16 = sbr.rel (0) target = $region13
    $region12: #{dqn_conv_forward.7} parent=1 // pred_region
      _
    $region13: #{dqn_conv_forward.7} parent=1 // pred_fallthru
      _
    // Predicated region
    $region14: #{dqn_conv_forward.7} parent=1 // pred_check
      _
    $region15: #{dqn_conv_forward.7} parent=1 // pred_check_branch
      %18 = sbr.rel (0) target = $region17
    $region16: #{dqn_conv_forward.7} parent=1 // pred_region
      _
    $region17: #{dqn_conv_forward.7} parent=1 // pred_fallthru
      _
    // Predicated region
    $region18: #{dqn_conv_forward.7} parent=1 // pred_check
      _
    $region19: #{dqn_conv_forward.7} parent=1 // pred_check_branch
      %20 = sbr.rel (0) target = $region21
    $region20: #{dqn_conv_forward.7} parent=1 // pred_region
      _
    $region21: #{dqn_conv_forward.7} parent=1 // pred_fallthru
      _
    %v21 = vld [vmem:[%s0] sm:$0xff]
    %v22 = vld [vmem:[%s0 + $0x8] sm:$0xff]
    %25 = vst [vmem:[#allocation1] ss:$4 sm:$0xff] %v21
    %s26 = scalar_lea.vmem [#allocation1], 32
    %27 = vst [vmem:[%s26] ss:$4 sm:$0xff] %v22
    %v28 = vld.sshfl [vmem:[#allocation1] sm:$0xff pattern:$0x73625140]
    %v29 = vld.sshfl [vmem:[#allocation1 + $0x8] sm:$0xff pattern:$0x73625140]
    %v30 = vld.sshfl [vmem:[#allocation1 + $0x10] sm:$0xff pattern:$0x73625140]
    %v31 = vld.sshfl [vmem:[#allocation1 + $0x18] sm:$0xff pattern:$0x73625140]
    %v32 = vld.sshfl [vmem:[#allocation1 + $0x20] sm:$0xff pattern:$0x73625140]
    %v33 = vld.sshfl [vmem:[#allocation1 + $0x28] sm:$0xff pattern:$0x73625140]
    %v34 = vld.sshfl [vmem:[#allocation1 + $0x30] sm:$0xff pattern:$0x73625140]
    %v35 = vld.sshfl [vmem:[#allocation1 + $0x38] sm:$0xff pattern:$0x73625140]
    %v44 = vpack.c.bf16 %v28, %v28
    %v45 = vpack.c.bf16 %v29, %v29
    %v46 = vpack.c.bf16 %v30, %v30
    %v47 = vpack.c.bf16 %v31, %v31
    %v48 = vpack.c.bf16 %v32, %v32
    %v49 = vpack.c.bf16 %v33, %v33
    %v50 = vpack.c.bf16 %v34, %v34
    %v51 = vpack.c.bf16 %v35, %v35
    %v52 = vld [vmem:[%s1] sm:$0xf]
    %v53 = vld [vmem:[%s1 + $0x4] sm:$0xf]
    %v54 = vld [vmem:[%s1 + $0x8] sm:$0xf]
    %v55 = vld [vmem:[%s1 + $0xc] sm:$0xf]
    %v56 = vld [vmem:[%s1 + $0x10] sm:$0xf]
    %v57 = vld [vmem:[%s1 + $0x14] sm:$0xf]
    %v58 = vld [vmem:[%s1 + $0x18] sm:$0xf]
    %v59 = vld [vmem:[%s1 + $0x1c] sm:$0xf]
    %v60 = vld [vmem:[%s1 + $0x20] sm:$0xf]
    %v61 = vld [vmem:[%s1 + $0x24] sm:$0xf]
    %v62 = vld [vmem:[%s1 + $0x28] sm:$0xf]
    %v63 = vld [vmem:[%s1 + $0x2c] sm:$0xf]
    %v64 = vld [vmem:[%s1 + $0x30] sm:$0xf]
    %v65 = vld [vmem:[%s1 + $0x34] sm:$0xf]
    %v66 = vld [vmem:[%s1 + $0x38] sm:$0xf]
    %v67 = vld [vmem:[%s1 + $0x3c] sm:$0xf]
    %v68 = vld [vmem:[%s1 + $0x40] sm:$0xf]
    %v69 = vld [vmem:[%s1 + $0x44] sm:$0xf]
    %v70 = vld [vmem:[%s1 + $0x48] sm:$0xf]
    %v71 = vld [vmem:[%s1 + $0x4c] sm:$0xf]
    %v72 = vld [vmem:[%s1 + $0x50] sm:$0xf]
    %v73 = vld [vmem:[%s1 + $0x54] sm:$0xf]
    %v74 = vld [vmem:[%s1 + $0x58] sm:$0xf]
    %v75 = vld [vmem:[%s1 + $0x5c] sm:$0xf]
    %v76 = vld [vmem:[%s1 + $0x60] sm:$0xf]
    %v77 = vld [vmem:[%s1 + $0x64] sm:$0xf]
    %v78 = vld [vmem:[%s1 + $0x68] sm:$0xf]
    %v79 = vld [vmem:[%s1 + $0x6c] sm:$0xf]
    %v80 = vld [vmem:[%s1 + $0x70] sm:$0xf]
    %v81 = vld [vmem:[%s1 + $0x74] sm:$0xf]
    %v82 = vld [vmem:[%s1 + $0x78] sm:$0xf]
    %v83 = vld [vmem:[%s1 + $0x7c] sm:$0xf]
    %v84 = vld [vmem:[%s1 + $0x80] sm:$0xf]
    %v85 = vld [vmem:[%s1 + $0x84] sm:$0xf]
    %v86 = vld [vmem:[%s1 + $0x88] sm:$0xf]
    %v87 = vld [vmem:[%s1 + $0x8c] sm:$0xf]
    %v88 = vld [vmem:[%s1 + $0x90] sm:$0xf]
    %v89 = vld [vmem:[%s1 + $0x94] sm:$0xf]
    %v90 = vld [vmem:[%s1 + $0x98] sm:$0xf]
    %v91 = vld [vmem:[%s1 + $0x9c] sm:$0xf]
    %v92 = vld [vmem:[%s1 + $0xa0] sm:$0xf]
    %v93 = vld [vmem:[%s1 + $0xa4] sm:$0xf]
    %v94 = vld [vmem:[%s1 + $0xa8] sm:$0xf]
    %v95 = vld [vmem:[%s1 + $0xac] sm:$0xf]
    %v96 = vld [vmem:[%s1 + $0xb0] sm:$0xf]
    %v97 = vld [vmem:[%s1 + $0xb4] sm:$0xf]
    %v98 = vld [vmem:[%s1 + $0xb8] sm:$0xf]
    %v99 = vld [vmem:[%s1 + $0xbc] sm:$0xf]
    %v100 = vld [vmem:[%s1 + $0xc0] sm:$0xf]
    %v101 = vld [vmem:[%s1 + $0xc4] sm:$0xf]
    %v102 = vld [vmem:[%s1 + $0xc8] sm:$0xf]
    %v103 = vld [vmem:[%s1 + $0xcc] sm:$0xf]
    %v104 = vld [vmem:[%s1 + $0xd0] sm:$0xf]
    %v105 = vld [vmem:[%s1 + $0xd4] sm:$0xf]
    %v106 = vld [vmem:[%s1 + $0xd8] sm:$0xf]
    %v107 = vld [vmem:[%s1 + $0xdc] sm:$0xf]
    %v108 = vld [vmem:[%s1 + $0xe0] sm:$0xf]
    %v109 = vld [vmem:[%s1 + $0xe4] sm:$0xf]
    %v110 = vld [vmem:[%s1 + $0xe8] sm:$0xf]
    %v111 = vld [vmem:[%s1 + $0xec] sm:$0xf]
    %v112 = vld [vmem:[%s1 + $0xf0] sm:$0xf]
    %v113 = vld [vmem:[%s1 + $0xf4] sm:$0xf]
    %v114 = vld [vmem:[%s1 + $0xf8] sm:$0xf]
    %v115 = vld [vmem:[%s1 + $0xfc] sm:$0xf]
    %v116 = vld [vmem:[%s1 + $0x100] sm:$0xf]
    %v117 = vld [vmem:[%s1 + $0x104] sm:$0xf]
    %v118 = vld [vmem:[%s1 + $0x108] sm:$0xf]
    %v119 = vld [vmem:[%s1 + $0x10c] sm:$0xf]
    %v120 = vld [vmem:[%s1 + $0x110] sm:$0xf]
    %v121 = vld [vmem:[%s1 + $0x114] sm:$0xf]
    %v122 = vld [vmem:[%s1 + $0x118] sm:$0xf]
    %v123 = vld [vmem:[%s1 + $0x11c] sm:$0xf]
    %v124 = vld [vmem:[%s1 + $0x120] sm:$0xf]
    %v125 = vld [vmem:[%s1 + $0x124] sm:$0xf]
    %v126 = vld [vmem:[%s1 + $0x128] sm:$0xf]
    %v127 = vld [vmem:[%s1 + $0x12c] sm:$0xf]
    %v128 = vld [vmem:[%s1 + $0x130] sm:$0xf]
    %v129 = vld [vmem:[%s1 + $0x134] sm:$0xf]
    %v130 = vld [vmem:[%s1 + $0x138] sm:$0xf]
    %v131 = vld [vmem:[%s1 + $0x13c] sm:$0xf]
    %v132 = vld [vmem:[%s1 + $0x140] sm:$0xf]
    %v133 = vld [vmem:[%s1 + $0x144] sm:$0xf]
    %v134 = vld [vmem:[%s1 + $0x148] sm:$0xf]
    %v135 = vld [vmem:[%s1 + $0x14c] sm:$0xf]
    %v136 = vld [vmem:[%s1 + $0x150] sm:$0xf]
    %v137 = vld [vmem:[%s1 + $0x154] sm:$0xf]
    %v138 = vld [vmem:[%s1 + $0x158] sm:$0xf]
    %v139 = vld [vmem:[%s1 + $0x15c] sm:$0xf]
    %v140 = vld [vmem:[%s1 + $0x160] sm:$0xf]
    %v141 = vld [vmem:[%s1 + $0x164] sm:$0xf]
    %v142 = vld [vmem:[%s1 + $0x168] sm:$0xf]
    %v143 = vld [vmem:[%s1 + $0x16c] sm:$0xf]
    %v144 = vld [vmem:[%s1 + $0x170] sm:$0xf]
    %v145 = vld [vmem:[%s1 + $0x174] sm:$0xf]
    %v146 = vld [vmem:[%s1 + $0x178] sm:$0xf]
    %v147 = vld [vmem:[%s1 + $0x17c] sm:$0xf]
    %v148 = vld [vmem:[%s1 + $0x180] sm:$0xf]
    %v149 = vld [vmem:[%s1 + $0x184] sm:$0xf]
    %v150 = vld [vmem:[%s1 + $0x188] sm:$0xf]
    %v151 = vld [vmem:[%s1 + $0x18c] sm:$0xf]
    %v152 = vld [vmem:[%s1 + $0x190] sm:$0xf]
    %v153 = vld [vmem:[%s1 + $0x194] sm:$0xf]
    %v154 = vld [vmem:[%s1 + $0x198] sm:$0xf]
    %v155 = vld [vmem:[%s1 + $0x19c] sm:$0xf]
    %v156 = vld [vmem:[%s1 + $0x1a0] sm:$0xf]
    %v157 = vld [vmem:[%s1 + $0x1a4] sm:$0xf]
    %v158 = vld [vmem:[%s1 + $0x1a8] sm:$0xf]
    %v159 = vld [vmem:[%s1 + $0x1ac] sm:$0xf]
    %v160 = vld [vmem:[%s1 + $0x1b0] sm:$0xf]
    %v161 = vld [vmem:[%s1 + $0x1b4] sm:$0xf]
    %v162 = vld [vmem:[%s1 + $0x1b8] sm:$0xf]
    %v163 = vld [vmem:[%s1 + $0x1bc] sm:$0xf]
    %v164 = vld [vmem:[%s1 + $0x1c0] sm:$0xf]
    %v165 = vld [vmem:[%s1 + $0x1c4] sm:$0xf]
    %v166 = vld [vmem:[%s1 + $0x1c8] sm:$0xf]
    %v167 = vld [vmem:[%s1 + $0x1cc] sm:$0xf]
    %v168 = vld [vmem:[%s1 + $0x1d0] sm:$0xf]
    %v169 = vld [vmem:[%s1 + $0x1d4] sm:$0xf]
    %v170 = vld [vmem:[%s1 + $0x1d8] sm:$0xf]
    %v171 = vld [vmem:[%s1 + $0x1dc] sm:$0xf]
    %v172 = vld [vmem:[%s1 + $0x1e0] sm:$0xf]
    %v173 = vld [vmem:[%s1 + $0x1e4] sm:$0xf]
    %v174 = vld [vmem:[%s1 + $0x1e8] sm:$0xf]
    %v175 = vld [vmem:[%s1 + $0x1ec] sm:$0xf]
    %v176 = vld [vmem:[%s1 + $0x1f0] sm:$0xf]
    %v177 = vld [vmem:[%s1 + $0x1f4] sm:$0xf]
    %v178 = vld [vmem:[%s1 + $0x1f8] sm:$0xf]
    %v179 = vld [vmem:[%s1 + $0x1fc] sm:$0xf]
    %v180 = vld [vmem:[%s2] sm:$0x1]
    %v182 = vperm.slane %v180, 0
    %v312 = vunpack.c.l.b16 %v52
    %v313 = vunpack.c.l.b16 %v53
    %v314 = vunpack.c.l.b16 %v54
    %v315 = vunpack.c.l.b16 %v55
    %v316 = vunpack.c.l.b16 %v56
    %v317 = vunpack.c.l.b16 %v57
    %v318 = vunpack.c.l.b16 %v58
    %v319 = vunpack.c.l.b16 %v59
    %v320 = vunpack.c.l.b16 %v60
    %v321 = vunpack.c.l.b16 %v61
    %v322 = vunpack.c.l.b16 %v62
    %v323 = vunpack.c.l.b16 %v63
    %v324 = vunpack.c.l.b16 %v64
    %v325 = vunpack.c.l.b16 %v65
    %v326 = vunpack.c.l.b16 %v66
    %v327 = vunpack.c.l.b16 %v67
    %v328 = vunpack.c.l.b16 %v68
    %v329 = vunpack.c.l.b16 %v69
    %v330 = vunpack.c.l.b16 %v70
    %v331 = vunpack.c.l.b16 %v71
    %v332 = vunpack.c.l.b16 %v72
    %v333 = vunpack.c.l.b16 %v73
    %v334 = vunpack.c.l.b16 %v74
    %v335 = vunpack.c.l.b16 %v75
    %v336 = vunpack.c.l.b16 %v76
    %v337 = vunpack.c.l.b16 %v77
    %v338 = vunpack.c.l.b16 %v78
    %v339 = vunpack.c.l.b16 %v79
    %v340 = vunpack.c.l.b16 %v80
    %v341 = vunpack.c.l.b16 %v81
    %v342 = vunpack.c.l.b16 %v82
    %v343 = vunpack.c.l.b16 %v83
    %v344 = vunpack.c.l.b16 %v84
    %v345 = vunpack.c.l.b16 %v85
    %v346 = vunpack.c.l.b16 %v86
    %v347 = vunpack.c.l.b16 %v87
    %v348 = vunpack.c.l.b16 %v88
    %v349 = vunpack.c.l.b16 %v89
    %v350 = vunpack.c.l.b16 %v90
    %v351 = vunpack.c.l.b16 %v91
    %v352 = vunpack.c.l.b16 %v92
    %v353 = vunpack.c.l.b16 %v93
    %v354 = vunpack.c.l.b16 %v94
    %v355 = vunpack.c.l.b16 %v95
    %v356 = vunpack.c.l.b16 %v96
    %v357 = vunpack.c.l.b16 %v97
    %v358 = vunpack.c.l.b16 %v98
    %v359 = vunpack.c.l.b16 %v99
    %v360 = vunpack.c.l.b16 %v100
    %v361 = vunpack.c.l.b16 %v101
    %v362 = vunpack.c.l.b16 %v102
    %v363 = vunpack.c.l.b16 %v103
    %v364 = vunpack.c.l.b16 %v104
    %v365 = vunpack.c.l.b16 %v105
    %v366 = vunpack.c.l.b16 %v106
    %v367 = vunpack.c.l.b16 %v107
    %v368 = vunpack.c.l.b16 %v108
    %v369 = vunpack.c.l.b16 %v109
    %v370 = vunpack.c.l.b16 %v110
    %v371 = vunpack.c.l.b16 %v111
    %v372 = vunpack.c.l.b16 %v112
    %v373 = vunpack.c.l.b16 %v113
    %v374 = vunpack.c.l.b16 %v114
    %v375 = vunpack.c.l.b16 %v115
    %v376 = vunpack.c.l.b16 %v116
    %v377 = vunpack.c.l.b16 %v117
    %v378 = vunpack.c.l.b16 %v118
    %v379 = vunpack.c.l.b16 %v119
    %v380 = vunpack.c.l.b16 %v120
    %v381 = vunpack.c.l.b16 %v121
    %v382 = vunpack.c.l.b16 %v122
    %v383 = vunpack.c.l.b16 %v123
    %v384 = vunpack.c.l.b16 %v124
    %v385 = vunpack.c.l.b16 %v125
    %v386 = vunpack.c.l.b16 %v126
    %v387 = vunpack.c.l.b16 %v127
    %v388 = vunpack.c.l.b16 %v128
    %v389 = vunpack.c.l.b16 %v129
    %v390 = vunpack.c.l.b16 %v130
    %v391 = vunpack.c.l.b16 %v131
    %v392 = vunpack.c.l.b16 %v132
    %v393 = vunpack.c.l.b16 %v133
    %v394 = vunpack.c.l.b16 %v134
    %v395 = vunpack.c.l.b16 %v135
    %v396 = vunpack.c.l.b16 %v136
    %v397 = vunpack.c.l.b16 %v137
    %v398 = vunpack.c.l.b16 %v138
    %v399 = vunpack.c.l.b16 %v139
    %v400 = vunpack.c.l.b16 %v140
    %v401 = vunpack.c.l.b16 %v141
    %v402 = vunpack.c.l.b16 %v142
    %v403 = vunpack.c.l.b16 %v143
    %v404 = vunpack.c.l.b16 %v144
    %v405 = vunpack.c.l.b16 %v145
    %v406 = vunpack.c.l.b16 %v146
    %v407 = vunpack.c.l.b16 %v147
    %v408 = vunpack.c.l.b16 %v148
    %v409 = vunpack.c.l.b16 %v149
    %v410 = vunpack.c.l.b16 %v150
    %v411 = vunpack.c.l.b16 %v151
    %v412 = vunpack.c.l.b16 %v152
    %v413 = vunpack.c.l.b16 %v153
    %v414 = vunpack.c.l.b16 %v154
    %v415 = vunpack.c.l.b16 %v155
    %v416 = vunpack.c.l.b16 %v156
    %v417 = vunpack.c.l.b16 %v157
    %v418 = vunpack.c.l.b16 %v158
    %v419 = vunpack.c.l.b16 %v159
    %v420 = vunpack.c.l.b16 %v160
    %v421 = vunpack.c.l.b16 %v161
    %v422 = vunpack.c.l.b16 %v162
    %v423 = vunpack.c.l.b16 %v163
    %v424 = vunpack.c.l.b16 %v164
    %v425 = vunpack.c.l.b16 %v165
    %v426 = vunpack.c.l.b16 %v166
    %v427 = vunpack.c.l.b16 %v167
    %v428 = vunpack.c.l.b16 %v168
    %v429 = vunpack.c.l.b16 %v169
    %v430 = vunpack.c.l.b16 %v170
    %v431 = vunpack.c.l.b16 %v171
    %v432 = vunpack.c.l.b16 %v172
    %v433 = vunpack.c.l.b16 %v173
    %v434 = vunpack.c.l.b16 %v174
    %v435 = vunpack.c.l.b16 %v175
    %v436 = vunpack.c.l.b16 %v176
    %v437 = vunpack.c.l.b16 %v177
    %v438 = vunpack.c.l.b16 %v178
    %v439 = vunpack.c.l.b16 %v179
    %v440 = vpack.c.b16 %v313, %v312
    %v441 = vpack.c.b16 %v315, %v314
    %v442 = vpack.c.b16 %v317, %v316
    %v443 = vpack.c.b16 %v319, %v318
    %v444 = vpack.c.b16 %v321, %v320
    %v445 = vpack.c.b16 %v323, %v322
    %v446 = vpack.c.b16 %v325, %v324
    %v447 = vpack.c.b16 %v327, %v326
    %v448 = vpack.c.b16 %v329, %v328
    %v449 = vpack.c.b16 %v331, %v330
    %v450 = vpack.c.b16 %v333, %v332
    %v451 = vpack.c.b16 %v335, %v334
    %v452 = vpack.c.b16 %v337, %v336
    %v453 = vpack.c.b16 %v339, %v338
    %v454 = vpack.c.b16 %v341, %v340
    %v455 = vpack.c.b16 %v343, %v342
    %v456 = vpack.c.b16 %v345, %v344
    %v457 = vpack.c.b16 %v347, %v346
    %v458 = vpack.c.b16 %v349, %v348
    %v459 = vpack.c.b16 %v351, %v350
    %v460 = vpack.c.b16 %v353, %v352
    %v461 = vpack.c.b16 %v355, %v354
    %v462 = vpack.c.b16 %v357, %v356
    %v463 = vpack.c.b16 %v359, %v358
    %v464 = vpack.c.b16 %v361, %v360
    %v465 = vpack.c.b16 %v363, %v362
    %v466 = vpack.c.b16 %v365, %v364
    %v467 = vpack.c.b16 %v367, %v366
    %v468 = vpack.c.b16 %v369, %v368
    %v469 = vpack.c.b16 %v371, %v370
    %v470 = vpack.c.b16 %v373, %v372
    %v471 = vpack.c.b16 %v375, %v374
    %v472 = vpack.c.b16 %v377, %v376
    %v473 = vpack.c.b16 %v379, %v378
    %v474 = vpack.c.b16 %v381, %v380
    %v475 = vpack.c.b16 %v383, %v382
    %v476 = vpack.c.b16 %v385, %v384
    %v477 = vpack.c.b16 %v387, %v386
    %v478 = vpack.c.b16 %v389, %v388
    %v479 = vpack.c.b16 %v391, %v390
    %v480 = vpack.c.b16 %v393, %v392
    %v481 = vpack.c.b16 %v395, %v394
    %v482 = vpack.c.b16 %v397, %v396
    %v483 = vpack.c.b16 %v399, %v398
    %v484 = vpack.c.b16 %v401, %v400
    %v485 = vpack.c.b16 %v403, %v402
    %v486 = vpack.c.b16 %v405, %v404
    %v487 = vpack.c.b16 %v407, %v406
    %v488 = vpack.c.b16 %v409, %v408
    %v489 = vpack.c.b16 %v411, %v410
    %v490 = vpack.c.b16 %v413, %v412
    %v491 = vpack.c.b16 %v415, %v414
    %v492 = vpack.c.b16 %v417, %v416
    %v493 = vpack.c.b16 %v419, %v418
    %v494 = vpack.c.b16 %v421, %v420
    %v495 = vpack.c.b16 %v423, %v422
    %v496 = vpack.c.b16 %v425, %v424
    %v497 = vpack.c.b16 %v427, %v426
    %v498 = vpack.c.b16 %v429, %v428
    %v499 = vpack.c.b16 %v431, %v430
    %v500 = vpack.c.b16 %v433, %v432
    %v501 = vpack.c.b16 %v435, %v434
    %v502 = vpack.c.b16 %v437, %v436
    %v503 = vpack.c.b16 %v439, %v438
    %568 = vmatpush.bf16.msra.mxu0 %v447
    %569 = vmatpush.bf16.msra.mxu0 %v446
    %570 = vmatpush.bf16.msra.mxu0 %v445
    %571 = vmatpush.bf16.msra.mxu0 %v444
    %572 = vmatpush.bf16.msra.mxu0 %v443
    %573 = vmatpush.bf16.msra.mxu0 %v442
    %574 = vmatpush.bf16.msra.mxu0 %v441
    %575 = vmatpush.bf16.msra.mxu0 %v440
    %576 = vmatmul.bf16.gmra.mxu0 %v44
    %v577 = vpop.f32.mrf.mxu0
    %v578 = vadd.f32 %v182, %v577
    %v579 = vpop.f32.mrf.mxu0
    %580 = vdwg.mxu0
    %581 = vmatpush.bf16.msra.mxu0 %v455
    %582 = vmatpush.bf16.msra.mxu0 %v454
    %583 = vmatpush.bf16.msra.mxu0 %v453
    %584 = vmatpush.bf16.msra.mxu0 %v452
    %585 = vmatpush.bf16.msra.mxu0 %v451
    %586 = vmatpush.bf16.msra.mxu0 %v450
    %587 = vmatpush.bf16.msra.mxu0 %v449
    %588 = vmatpush.bf16.msra.mxu0 %v448
    %589 = vmatmul.bf16.gmra.mxu0 %v45
    %v590 = vpop.f32.mrf.mxu0
    %v591 = vadd.f32 %v578, %v590
    %v592 = vpop.f32.mrf.mxu0
    %593 = vdwg.mxu0
    %594 = vmatpush.bf16.msra.mxu0 %v463
    %595 = vmatpush.bf16.msra.mxu0 %v462
    %596 = vmatpush.bf16.msra.mxu0 %v461
    %597 = vmatpush.bf16.msra.mxu0 %v460
    %598 = vmatpush.bf16.msra.mxu0 %v459
    %599 = vmatpush.bf16.msra.mxu0 %v458
    %600 = vmatpush.bf16.msra.mxu0 %v457
    %601 = vmatpush.bf16.msra.mxu0 %v456
    %602 = vmatmul.bf16.gmra.mxu0 %v46
    %v603 = vpop.f32.mrf.mxu0
    %v604 = vadd.f32 %v591, %v603
    %v605 = vpop.f32.mrf.mxu0
    %606 = vdwg.mxu0
    %607 = vmatpush.bf16.msra.mxu0 %v471
    %608 = vmatpush.bf16.msra.mxu0 %v470
    %609 = vmatpush.bf16.msra.mxu0 %v469
    %610 = vmatpush.bf16.msra.mxu0 %v468
    %611 = vmatpush.bf16.msra.mxu0 %v467
    %612 = vmatpush.bf16.msra.mxu0 %v466
    %613 = vmatpush.bf16.msra.mxu0 %v465
    %614 = vmatpush.bf16.msra.mxu0 %v464
    %615 = vmatmul.bf16.gmra.mxu0 %v47
    %v616 = vpop.f32.mrf.mxu0
    %v617 = vadd.f32 %v604, %v616
    %v618 = vpop.f32.mrf.mxu0
    %619 = vdwg.mxu0
    %620 = vmatpush.bf16.msra.mxu0 %v479
    %621 = vmatpush.bf16.msra.mxu0 %v478
    %622 = vmatpush.bf16.msra.mxu0 %v477
    %623 = vmatpush.bf16.msra.mxu0 %v476
    %624 = vmatpush.bf16.msra.mxu0 %v475
    %625 = vmatpush.bf16.msra.mxu0 %v474
    %626 = vmatpush.bf16.msra.mxu0 %v473
    %627 = vmatpush.bf16.msra.mxu0 %v472
    %628 = vmatmul.bf16.gmra.mxu0 %v48
    %v629 = vpop.f32.mrf.mxu0
    %v630 = vadd.f32 %v617, %v629
    %v631 = vpop.f32.mrf.mxu0
    %632 = vdwg.mxu0
    %633 = vmatpush.bf16.msra.mxu0 %v487
    %634 = vmatpush.bf16.msra.mxu0 %v486
    %635 = vmatpush.bf16.msra.mxu0 %v485
    %636 = vmatpush.bf16.msra.mxu0 %v484
    %637 = vmatpush.bf16.msra.mxu0 %v483
    %638 = vmatpush.bf16.msra.mxu0 %v482
    %639 = vmatpush.bf16.msra.mxu0 %v481
    %640 = vmatpush.bf16.msra.mxu0 %v480
    %641 = vmatmul.bf16.gmra.mxu0 %v49
    %v642 = vpop.f32.mrf.mxu0
    %v643 = vadd.f32 %v630, %v642
    %v644 = vpop.f32.mrf.mxu0
    %645 = vdwg.mxu0
    %646 = vmatpush.bf16.msra.mxu0 %v495
    %647 = vmatpush.bf16.msra.mxu0 %v494
    %648 = vmatpush.bf16.msra.mxu0 %v493
    %649 = vmatpush.bf16.msra.mxu0 %v492
    %650 = vmatpush.bf16.msra.mxu0 %v491
    %651 = vmatpush.bf16.msra.mxu0 %v490
    %652 = vmatpush.bf16.msra.mxu0 %v489
    %653 = vmatpush.bf16.msra.mxu0 %v488
    %654 = vmatmul.bf16.gmra.mxu0 %v50
    %v655 = vpop.f32.mrf.mxu0
    %v656 = vadd.f32 %v643, %v655
    %v657 = vpop.f32.mrf.mxu0
    %658 = vdwg.mxu0
    %659 = vmatpush.bf16.msra.mxu0 %v503
    %660 = vmatpush.bf16.msra.mxu0 %v502
    %661 = vmatpush.bf16.msra.mxu0 %v501
    %662 = vmatpush.bf16.msra.mxu0 %v500
    %663 = vmatpush.bf16.msra.mxu0 %v499
    %664 = vmatpush.bf16.msra.mxu0 %v498
    %665 = vmatpush.bf16.msra.mxu0 %v497
    %666 = vmatpush.bf16.msra.mxu0 %v496
    %667 = vmatmul.bf16.gmra.mxu0 %v51
    %v668 = vpop.f32.mrf.mxu0
    %v669 = vadd.f32 %v656, %v668
    %v670 = vpop.f32.mrf.mxu0
    %671 = vdwg.mxu0
    %v672 = vtanh.pop %v669
    %v673 = vpack.c.bf16 %v672, %v672
    %v674 = vld [vmem:[%s3] sm:$0xf]
    %v675 = vld [vmem:[%s3 + $0x4] sm:$0xf]
    %v676 = vld [vmem:[%s3 + $0x8] sm:$0xf]
    %v677 = vld [vmem:[%s3 + $0xc] sm:$0xf]
    %v678 = vld [vmem:[%s3 + $0x10] sm:$0xf]
    %v679 = vld [vmem:[%s3 + $0x14] sm:$0xf]
    %v680 = vld [vmem:[%s3 + $0x18] sm:$0xf]
    %v681 = vld [vmem:[%s3 + $0x1c] sm:$0xf]
    %v682 = vld [vmem:[%s3 + $0x20] sm:$0xf]
    %v683 = vld [vmem:[%s3 + $0x24] sm:$0xf]
    %v684 = vld [vmem:[%s3 + $0x28] sm:$0xf]
    %v685 = vld [vmem:[%s3 + $0x2c] sm:$0xf]
    %v686 = vld [vmem:[%s3 + $0x30] sm:$0xf]
    %v687 = vld [vmem:[%s3 + $0x34] sm:$0xf]
    %v688 = vld [vmem:[%s3 + $0x38] sm:$0xf]
    %v689 = vld [vmem:[%s3 + $0x3c] sm:$0xf]
    %v690 = vld [vmem:[%s4] sm:$0x1]
    %v692 = vperm.slane %v690, 0
    %v710 = vunpack.c.l.b16 %v674
    %v711 = vunpack.c.l.b16 %v675
    %v712 = vunpack.c.l.b16 %v676
    %v713 = vunpack.c.l.b16 %v677
    %v714 = vunpack.c.l.b16 %v678
    %v715 = vunpack.c.l.b16 %v679
    %v716 = vunpack.c.l.b16 %v680
    %v717 = vunpack.c.l.b16 %v681
    %v718 = vunpack.c.l.b16 %v682
    %v719 = vunpack.c.l.b16 %v683
    %v720 = vunpack.c.l.b16 %v684
    %v721 = vunpack.c.l.b16 %v685
    %v722 = vunpack.c.l.b16 %v686
    %v723 = vunpack.c.l.b16 %v687
    %v724 = vunpack.c.l.b16 %v688
    %v725 = vunpack.c.l.b16 %v689
    %v726 = vpack.c.b16 %v711, %v710
    %v727 = vpack.c.b16 %v713, %v712
    %v728 = vpack.c.b16 %v715, %v714
    %v729 = vpack.c.b16 %v717, %v716
    %v730 = vpack.c.b16 %v719, %v718
    %v731 = vpack.c.b16 %v721, %v720
    %v732 = vpack.c.b16 %v723, %v722
    %v733 = vpack.c.b16 %v725, %v724
    %742 = vmatpush.bf16.msra.mxu0 %v733
    %743 = vmatpush.bf16.msra.mxu0 %v732
    %744 = vmatpush.bf16.msra.mxu0 %v731
    %745 = vmatpush.bf16.msra.mxu0 %v730
    %746 = vmatpush.bf16.msra.mxu0 %v729
    %747 = vmatpush.bf16.msra.mxu0 %v728
    %748 = vmatpush.bf16.msra.mxu0 %v727
    %749 = vmatpush.bf16.msra.mxu0 %v726
    %750 = vmatmul.bf16.gmra.mxu0 %v673
    %v751 = vpop.f32.mrf.mxu0
    %v752 = vadd.f32 %v692, %v751
    %v753 = vpop.f32.mrf.mxu0
    %754 = vdwg.mxu0
    %755 = vst [vmem:[#allocation2] sm:$0x3] %v752
    // Predicated region
    $region22: #{dqn_conv_forward.7} parent=1 // pred_check
      _
    $region23: #{dqn_conv_forward.7} parent=1 // pred_check_branch
      %757 = sbr.rel (0) target = $region25
    $region24: #{dqn_conv_forward.7} parent=1 // pred_region
      %759 = vsyncadd [#allocation3], 0
      %s761 = sshll.u32 [#allocation2], 4
      %s762 = int_to_ptr.vmem [resolvable:$true] %s761
      %s763 = sshll.u32 %s5, 4
      %s764 = int_to_ptr.hbm [resolvable:$true] %s763
      %766 = dma.vmem_to_hbm [thread:$0]  %s762, 32, %s764, [#allocation3]
    $region25: #{dqn_conv_forward.7} parent=1 // pred_fallthru
      _
    // Predicated region
    $region26: #{dqn_conv_forward.7} parent=1 // pred_check
      _
    $region27: #{dqn_conv_forward.7} parent=1 // pred_check_branch
      %768 = sbr.rel (0) target = $region29
    $region28: #{dqn_conv_forward.7} parent=1 // pred_region
      %770 = dma.done [#allocation3], 32
    $region29: #{dqn_conv_forward.7} parent=1 // pred_fallthru
      _
    %771 = vsyncpa [#allocation3], 1

// kernel: dqn_conv_forward.6
$region0: #{dqn_conv_forward.6}
  #allocation0 [shape = 'u32[]', space=smem, size = 0x4, offset = 0x4, fixed_abs, tag = 'smem constant byte address 0x4 - core index']
  #allocation1 [shape = 'u32[72,128]{1,0:T(1,128)}', space=vmem, size = 0x9000, scoped, tag = 'internal scratch']
  %s0 = inlined_call_operand.vmem [shape: f32[2,9216], index: 0, kind: input, shape index: {}]
  %s1 = inlined_call_operand.vmem [shape: bf16[4,9216,256], index: 1, kind: input, shape index: {}]
  %s2 = inlined_call_operand.vmem [shape: f32[1,1024], index: 2, kind: input, shape index: {}]
  %s3 = inlined_call_operand.vmem [shape: f32[2,1024], index: 3, kind: output, shape index: {}]
  %s4 = sld [smem:[#allocation0]]
  $region45: #{dqn_conv_forward.6} parent=0
    _
  %s6 = ssub.s32 1, %s4
  %s7 = scalar_select 0, %s6, %s4
  loop: start=0, step=1, limit=6
  $region2: #{dqn_conv_forward.6} parent=0 // loop_pre_header
    _
  $region3: #{dqn_conv_forward.6} parent=0 // loop_header
    %s9 = sphi 0, %s13
    %p10 = scmp.ge.s32.totalorder %s9, 6
    %s16 = sphi 0, %s28
    %s17 = sphi 0, %s24
    %s18 = sphi 0, %s16
    %s19 = sphi 0, %s17
    %s20 = sphi 0, %s18
    %s21 = sphi 0, %s19
    %s31 = sphi 0, %s33
    %s34 = sphi 0, %s31
    %s35 = sphi 0, %s34
    %s51 = sphi 0, %s35
    %s57 = sphi 0, %s59
    %s60 = sphi 0, %s57
    %s61 = sphi 0, %s60
    %s77 = sphi 0, %s61
    %s83 = sphi 0, %s85
    %s86 = sphi 0, %s83
    %s87 = sphi 0, %s86
    %s103 = sphi 0, %s87
    %s111 = sphi 0, %s113
    %s114 = sphi 0, %s111
    %s115 = sphi 0, %s114
    %s131 = sphi 0, %s115
  $region4: #{dqn_conv_forward.6} parent=0 // loop_header_branch
    %12 = sbr.rel (%p10) target = $region8
  $region5: #{dqn_conv_forward.6} parent=0 // loop_body
    %s14 = ssub.s32 %s9, 1
    %s15 = ssub.s32 %s9, 2
    %s22 = sadd.s32 1, %s17
    %p23 = scmp.ge.s32.totalorder %s22, 4
    %s24 = scalar_select %p23, 0, %s22
    %s25 = sadd.s32 1, %s16
    %s26 = scalar_select %p23, %s25, %s16
    %p27 = scmp.ge.s32.totalorder %s26, 1
    %s28 = scalar_select %p27, 0, %s26
    %s29 = ssub.s32 %s16, %s28
    %p30 = scmp.eq.s32.totalorder %s29, 0
    %s32 = sadd.s32 %s31, 1
    %s33 = scalar_select %p30, %s31, %s32
    %p36 = pneg %p30
    %p37 = scmp.eq.s32.totalorder %s9, 3
    %p38 = por %p36, %p37
    %p39 = scmp.ne.s32.totalorder %s31, %s34
    %p40 = scmp.eq.s32.totalorder %s9, 0
    %p41 = por %p39, %p40
    %p42 = scmp.ne.s32.totalorder %s31, %s34
    %p43 = scmp.eq.s32.totalorder %s14, 3
    %p44 = por %p42, %p43
    %p45 = scmp.ne.s32.totalorder %s34, %s35
    %p46 = scmp.eq.s32.totalorder %s14, 0
    %p47 = por %p45, %p46
    %p48 = scmp.ne.s32.totalorder %s34, %s35
    %p49 = scmp.eq.s32.totalorder %s15, 3
    %p50 = por %p48, %p49
    %p52 = scmp.ne.s32.totalorder %s35, %s51
    %p53 = scmp.eq.s32.totalorder %s15, 0
    %p54 = por %p52, %p53
    %s55 = ssub.s32 %s17, %s24
    %p56 = scmp.eq.s32.totalorder %s55, 0
    %s58 = sadd.s32 %s57, 1
    %s59 = scalar_select %p56, %s57, %s58
    %p62 = pneg %p56
    %p63 = scmp.eq.s32.totalorder %s9, 3
    %p64 = por %p62, %p63
    %p65 = scmp.ne.s32.totalorder %s57, %s60
    %p66 = scmp.eq.s32.totalorder %s9, 0
    %p67 = por %p65, %p66
    %p68 = scmp.ne.s32.totalorder %s57, %s60
    %p69 = scmp.eq.s32.totalorder %s14, 3
    %p70 = por %p68, %p69
    %p71 = scmp.ne.s32.totalorder %s60, %s61
    %p72 = scmp.eq.s32.totalorder %s14, 0
    %p73 = por %p71, %p72
    %p74 = scmp.ne.s32.totalorder %s60, %s61
    %p75 = scmp.eq.s32.totalorder %s15, 3
    %p76 = por %p74, %p75
    %p78 = scmp.ne.s32.totalorder %s61, %s77
    %p79 = scmp.eq.s32.totalorder %s15, 0
    %p80 = por %p78, %p79
    %s81 = ssub.s32 %s17, %s24
    %p82 = scmp.eq.s32.totalorder %s81, 0
    %s84 = sadd.s32 %s83, 1
    %s85 = scalar_select %p82, %s83, %s84
    %p88 = pneg %p82
    %p89 = scmp.eq.s32.totalorder %s9, 3
    %p90 = por %p88, %p89
    %p91 = scmp.ne.s32.totalorder %s83, %s86
    %p92 = scmp.eq.s32.totalorder %s9, 0
    %p93 = por %p91, %p92
    %p94 = scmp.ne.s32.totalorder %s83, %s86
    %p95 = scmp.eq.s32.totalorder %s14, 3
    %p96 = por %p94, %p95
    %p97 = scmp.ne.s32.totalorder %s86, %s87
    %p98 = scmp.eq.s32.totalorder %s14, 0
    %p99 = por %p97, %p98
    %p100 = scmp.ne.s32.totalorder %s86, %s87
    %p101 = scmp.eq.s32.totalorder %s15, 3
    %p102 = por %p100, %p101
    %p104 = scmp.ne.s32.totalorder %s87, %s103
    %p105 = scmp.eq.s32.totalorder %s15, 0
    %p106 = por %p104, %p105
    %s107 = ssub.s32 %s16, %s28
    %s108 = ssub.s32 %s17, %s24
    %s109 = sor.u32 %s107, %s108
    %p110 = scmp.eq.s32.totalorder %s109, 0
    %s112 = sadd.s32 %s111, 1
    %s113 = scalar_select %p110, %s111, %s112
    %p116 = pneg %p110
    %p117 = scmp.eq.s32.totalorder %s9, 3
    %p118 = por %p116, %p117
    %p119 = scmp.ne.s32.totalorder %s111, %s114
    %p120 = scmp.eq.s32.totalorder %s9, 0
    %p121 = por %p119, %p120
    %p122 = scmp.ne.s32.totalorder %s111, %s114
    %p123 = scmp.eq.s32.totalorder %s14, 3
    %p124 = por %p122, %p123
    %p125 = scmp.ne.s32.totalorder %s114, %s115
    %p126 = scmp.eq.s32.totalorder %s14, 0
    %p127 = por %p125, %p126
    %p128 = scmp.ne.s32.totalorder %s114, %s115
    %p129 = scmp.eq.s32.totalorder %s15, 3
    %p130 = por %p128, %p129
    %p132 = scmp.ne.s32.totalorder %s115, %s131
    %p133 = scmp.eq.s32.totalorder %s15, 0
    %p134 = por %p132, %p133
    %p135 = scmp.le.s32.totalorder 1, %s9
    %p136 = scmp.lt.s32.totalorder %s9, 5
    %p137 = pnand %p135, %p136
    %p138 = pneg %p137
    // Predicated region
    $region9: #{dqn_conv_forward.6} parent=5 // pred_check
      _
    $region10: #{dqn_conv_forward.6} parent=5 // pred_check_branch
      %140 = sbr.rel (%p137) target = $region12
    $region11: #{dqn_conv_forward.6} parent=5 // pred_region
      %s141 = ssub.s32 %s9, 1
      // Predicated region
      $region13: #{dqn_conv_forward.6} parent=11 // pred_check
        %p142 = pneg %p47
      $region14: #{dqn_conv_forward.6} parent=11 // pred_check_branch
        %144 = sbr.rel (%p142) target = $region16
      $region15: #{dqn_conv_forward.6} parent=11 // pred_region
        %p145 = scmp.lt.s32.totalorder %s18, 0
        %s146 = scalar_select %p145, %s18, 0
        %s147 = smul.addr %s146, 72
        %s148 = smul.addr %s147, 2
        %s149 = scalar_lea.vmem %s0, %s148
      $region16: #{dqn_conv_forward.6} parent=11 // pred_fallthru
        _
    $region12: #{dqn_conv_forward.6} parent=5 // pred_fallthru
      _
    %p150 = scmp.lt.s32.totalorder %s9, 4
    // Predicated region
    $region17: #{dqn_conv_forward.6} parent=5 // pred_check
      %p151 = pneg %p150
    $region18: #{dqn_conv_forward.6} parent=5 // pred_check_branch
      %153 = sbr.rel (%p151) target = $region20
    $region19: #{dqn_conv_forward.6} parent=5 // pred_region
      // Predicated region
      $region21: #{dqn_conv_forward.6} parent=19 // pred_check
        %p154 = pneg %p67
      $region22: #{dqn_conv_forward.6} parent=19 // pred_check_branch
        %156 = sbr.rel (%p154) target = $region24
      $region23: #{dqn_conv_forward.6} parent=19 // pred_region
        %p157 = scmp.lt.s32.totalorder %s17, 3
        %s158 = scalar_select %p157, %s17, 3
        %s159 = smul.addr %s158, 2304
        %s160 = smul.addr %s159, 4
        %s161 = scalar_lea.vmem %s1, %s160
      $region24: #{dqn_conv_forward.6} parent=19 // pred_fallthru
        _
      // Predicated region
      $region25: #{dqn_conv_forward.6} parent=19 // pred_check
        %p162 = pneg %p93
      $region26: #{dqn_conv_forward.6} parent=19 // pred_check_branch
        %164 = sbr.rel (%p162) target = $region28
      $region27: #{dqn_conv_forward.6} parent=19 // pred_region
        %s165 = smul.u32 2, %s17
        %p166 = scmp.lt.s32.totalorder %s165, 7
        %s167 = scalar_select %p166, %s165, 7
        %s168 = scalar_lea.vmem %s2, %s167
        %s169 = smul.u32 2, %s17
      $region28: #{dqn_conv_forward.6} parent=19 // pred_fallthru
        _
    $region20: #{dqn_conv_forward.6} parent=5 // pred_fallthru
      _
    %p170 = scmp.le.s32.totalorder 1, %s9
    %p171 = scmp.lt.s32.totalorder %s9, 5
    %p172 = pnand %p170, %p171
    %p173 = pneg %p172
    // Predicated region
    $region29: #{dqn_conv_forward.6} parent=5 // pred_check
      _
    $region30: #{dqn_conv_forward.6} parent=5 // pred_check_branch
      %175 = sbr.rel (%p172) target = $region32
    $region31: #{dqn_conv_forward.6} parent=5 // pred_region
      %s176 = ssub.s32 %s9, 1
      %p177 = scmp.lt.s32.totalorder %s18, 0
      %s178 = scalar_select %p177, %s18, 0
      %s179 = smul.addr %s178, 72
      %s180 = smul.addr %s179, 2
      %s181 = scalar_lea.vmem %s0, %s180
      %p182 = pneg %p47
      %p183 = pneg %p44
      %p184 = scmp.lt.s32.totalorder %s19, 3
      %s185 = scalar_select %p184, %s19, 3
      %s186 = smul.addr %s185, 2304
      %s187 = smul.addr %s186, 4
      %s188 = scalar_lea.vmem %s1, %s187
      %p189 = pneg %p73
      %p190 = pneg %p70
      %s191 = smul.u32 2, %s19
      %p192 = scmp.lt.s32.totalorder %s191, 7
      %s193 = scalar_select %p192, %s191, 7
      %s194 = scalar_lea.vmem %s2, %s193
      %p195 = pneg %p99
      %p196 = pneg %p96
      %p197 = pneg %p127
      %p198 = pneg %p124
      %s199 = smul.u32 2, %s19
      %p200 = scmp.lt.s32.totalorder %s18, 0
      %s201 = scalar_select %p200, %s18, 0
      %p202 = scmp.lt.s32.totalorder %s199, 7
      %s203 = scalar_select %p202, %s199, 7
      %s204 = smul.addr %s201, 8
      %s205 = sadd.s32 %s203, %s204
      %s206 = smul.addr %s205, 2
      %s207 = scalar_lea.vmem %s3, %s206
      %p208 = scmp.lt.s32.totalorder %s18, 0
      %s209 = scalar_select %p208, %s18, 0
      %s210 = smul.addr %s209, 72
      %s211 = smul.addr %s210, 2
      %s212 = scalar_lea.vmem %s0, %s211
      %p213 = scmp.lt.s32.totalorder %s19, 3
      %s214 = scalar_select %p213, %s19, 3
      %s215 = smul.addr %s214, 2304
      %s216 = smul.addr %s215, 4
      %s217 = scalar_lea.vmem %s1, %s216
      %s218 = smul.u32 2, %s19
      %p219 = scmp.lt.s32.totalorder %s218, 7
      %s220 = scalar_select %p219, %s218, 7
      %s221 = scalar_lea.vmem %s2, %s220
      %s222 = smul.u32 2, %s19
      %s223 = smul.u32 2, %s19
      %p224 = scmp.lt.s32.totalorder %s18, 0
      %s225 = scalar_select %p224, %s18, 0
      %p226 = scmp.lt.s32.totalorder %s223, 7
      %s227 = scalar_select %p226, %s223, 7
      %s228 = smul.addr %s225, 8
      %s229 = sadd.s32 %s227, %s228
      %s230 = smul.addr %s229, 2
      %s231 = scalar_lea.vmem %s3, %s230
      %s232 = smul.u32 2, %s19
      %v233 = vld [vmem:[%s212] sm:$0xff]
      %v234 = vld [vmem:[%s212 + $0x8] sm:$0xff]
      %v235 = vld [vmem:[%s212 + $0x10] sm:$0xff]
      %v236 = vld [vmem:[%s212 + $0x18] sm:$0xff]
      %v237 = vld [vmem:[%s212 + $0x20] sm:$0xff]
      %v238 = vld [vmem:[%s212 + $0x28] sm:$0xff]
      %v239 = vld [vmem:[%s212 + $0x30] sm:$0xff]
      %v240 = vld [vmem:[%s212 + $0x38] sm:$0xff]
      %v241 = vld [vmem:[%s212 + $0x40] sm:$0xff]
      %v242 = vld [vmem:[%s212 + $0x48] sm:$0xff]
      %v243 = vld [vmem:[%s212 + $0x50] sm:$0xff]
      %v244 = vld [vmem:[%s212 + $0x58] sm:$0xff]
      %v245 = vld [vmem:[%s212 + $0x60] sm:$0xff]
      %v246 = vld [vmem:[%s212 + $0x68] sm:$0xff]
      %v247 = vld [vmem:[%s212 + $0x70] sm:$0xff]
      %v248 = vld [vmem:[%s212 + $0x78] sm:$0xff]
      %v249 = vld [vmem:[%s212 + $0x80] sm:$0xff]
      %v250 = vld [vmem:[%s212 + $0x88] sm:$0xff]
      %269 = vst [vmem:[#allocation1] ss:$4 sm:$0xff] %v233
      %s270 = scalar_lea.vmem [#allocation1], 32
      %271 = vst [vmem:[%s270] ss:$4 sm:$0xff] %v234
      %v272 = vld.sshfl [vmem:[#allocation1] sm:$0xff pattern:$0x73625140]
      %v273 = vld.sshfl [vmem:[#allocation1 + $0x8] sm:$0xff pattern:$0x73625140]
      %v274 = vld.sshfl [vmem:[#allocation1 + $0x10] sm:$0xff pattern:$0x73625140]
      %v275 = vld.sshfl [vmem:[#allocation1 + $0x18] sm:$0xff pattern:$0x73625140]
      %v276 = vld.sshfl [vmem:[#allocation1 + $0x20] sm:$0xff pattern:$0x73625140]
      %v277 = vld.sshfl [vmem:[#allocation1 + $0x28] sm:$0xff pattern:$0x73625140]
      %v278 = vld.sshfl [vmem:[#allocation1 + $0x30] sm:$0xff pattern:$0x73625140]
      %v279 = vld.sshfl [vmem:[#allocation1 + $0x38] sm:$0xff pattern:$0x73625140]
      %280 = vst [vmem:[#allocation1] ss:$4 sm:$0xff] %v235
      %281 = vst [vmem:[%s270] ss:$4 sm:$0xff] %v236
      %v282 = vld.sshfl [vmem:[#allocation1] sm:$0xff pattern:$0x73625140]
      %v283 = vld.sshfl [vmem:[#allocation1 + $0x8] sm:$0xff pattern:$0x73625140]
      %v284 = vld.sshfl [vmem:[#allocation1 + $0x10] sm:$0xff pattern:$0x73625140]
      %v285 = vld.sshfl [vmem:[#allocation1 + $0x18] sm:$0xff pattern:$0x73625140]
      %v286 = vld.sshfl [vmem:[#allocation1 + $0x20] sm:$0xff pattern:$0x73625140]
      %v287 = vld.sshfl [vmem:[#allocation1 + $0x28] sm:$0xff pattern:$0x73625140]
      %v288 = vld.sshfl [vmem:[#allocation1 + $0x30] sm:$0xff pattern:$0x73625140]
      %v289 = vld.sshfl [vmem:[#allocation1 + $0x38] sm:$0xff pattern:$0x73625140]
      %290 = vst [vmem:[#allocation1] ss:$4 sm:$0xff] %v237
      %291 = vst [vmem:[%s270] ss:$4 sm:$0xff] %v238
      %v292 = vld.sshfl [vmem:[#allocation1] sm:$0xff pattern:$0x73625140]
      %v293 = vld.sshfl [vmem:[#allocation1 + $0x8] sm:$0xff pattern:$0x73625140]
      %v294 = vld.sshfl [vmem:[#allocation1 + $0x10] sm:$0xff pattern:$0x73625140]
      %v295 = vld.sshfl [vmem:[#allocation1 + $0x18] sm:$0xff pattern:$0x73625140]
      %v296 = vld.sshfl [vmem:[#allocation1 + $0x20] sm:$0xff pattern:$0x73625140]
      %v297 = vld.sshfl [vmem:[#allocation1 + $0x28] sm:$0xff pattern:$0x73625140]
      %v298 = vld.sshfl [vmem:[#allocation1 + $0x30] sm:$0xff pattern:$0x73625140]
      %v299 = vld.sshfl [vmem:[#allocation1 + $0x38] sm:$0xff pattern:$0x73625140]
      %300 = vst [vmem:[#allocation1] ss:$4 sm:$0xff] %v239
      %301 = vst [vmem:[%s270] ss:$4 sm:$0xff] %v240
      %v302 = vld.sshfl [vmem:[#allocation1] sm:$0xff pattern:$0x73625140]
      %v303 = vld.sshfl [vmem:[#allocation1 + $0x8] sm:$0xff pattern:$0x73625140]
      %v304 = vld.sshfl [vmem:[#allocation1 + $0x10] sm:$0xff pattern:$0x73625140]
      %v305 = vld.sshfl [vmem:[#allocation1 + $0x18] sm:$0xff pattern:$0x73625140]
      %v306 = vld.sshfl [vmem:[#allocation1 + $0x20] sm:$0xff pattern:$0x73625140]
      %v307 = vld.sshfl [vmem:[#allocation1 + $0x28] sm:$0xff pattern:$0x73625140]
      %v308 = vld.sshfl [vmem:[#allocation1 + $0x30] sm:$0xff pattern:$0x73625140]
      %v309 = vld.sshfl [vmem:[#allocation1 + $0x38] sm:$0xff pattern:$0x73625140]
      %310 = vst [vmem:[#allocation1] ss:$4 sm:$0xff] %v241
      %311 = vst [vmem:[%s270] ss:$4 sm:$0xff] %v242
      %v312 = vld.sshfl [vmem:[#allocation1] sm:$0xff pattern:$0x73625140]
      %v313 = vld.sshfl [vmem:[#allocation1 + $0x8] sm:$0xff pattern:$0x73625140]
      %v314 = vld.sshfl [vmem:[#allocation1 + $0x10] sm:$0xff pattern:$0x73625140]
      %v315 = vld.sshfl [vmem:[#allocation1 + $0x18] sm:$0xff pattern:$0x73625140]
      %v316 = vld.sshfl [vmem:[#allocation1 + $0x20] sm:$0xff pattern:$0x73625140]
      %v317 = vld.sshfl [vmem:[#allocation1 + $0x28] sm:$0xff pattern:$0x73625140]
      %v318 = vld.sshfl [vmem:[#allocation1 + $0x30] sm:$0xff pattern:$0x73625140]
      %v319 = vld.sshfl [vmem:[#allocation1 + $0x38] sm:$0xff pattern:$0x73625140]
      %320 = vst [vmem:[#allocation1] ss:$4 sm:$0xff] %v243
      %321 = vst [vmem:[%s270] ss:$4 sm:$0xff] %v244
      %v322 = vld.sshfl [vmem:[#allocation1] sm:$0xff pattern:$0x73625140]
      %v323 = vld.sshfl [vmem:[#allocation1 + $0x8] sm:$0xff pattern:$0x73625140]
      %v324 = vld.sshfl [vmem:[#allocation1 + $0x10] sm:$0xff pattern:$0x73625140]
      %v325 = vld.sshfl [vmem:[#allocation1 + $0x18] sm:$0xff pattern:$0x73625140]
      %v326 = vld.sshfl [vmem:[#allocation1 + $0x20] sm:$0xff pattern:$0x73625140]
      %v327 = vld.sshfl [vmem:[#allocation1 + $0x28] sm:$0xff pattern:$0x73625140]
      %v328 = vld.sshfl [vmem:[#allocation1 + $0x30] sm:$0xff pattern:$0x73625140]
      %v329 = vld.sshfl [vmem:[#allocation1 + $0x38] sm:$0xff pattern:$0x73625140]
      %330 = vst [vmem:[#allocation1] ss:$4 sm:$0xff] %v245
      %331 = vst [vmem:[%s270] ss:$4 sm:$0xff] %v246
      %v332 = vld.sshfl [vmem:[#allocation1] sm:$0xff pattern:$0x73625140]
      %v333 = vld.sshfl [vmem:[#allocation1 + $0x8] sm:$0xff pattern:$0x73625140]
      %v334 = vld.sshfl [vmem:[#allocation1 + $0x10] sm:$0xff pattern:$0x73625140]
      %v335 = vld.sshfl [vmem:[#allocation1 + $0x18] sm:$0xff pattern:$0x73625140]
      %v336 = vld.sshfl [vmem:[#allocation1 + $0x20] sm:$0xff pattern:$0x73625140]
      %v337 = vld.sshfl [vmem:[#allocation1 + $0x28] sm:$0xff pattern:$0x73625140]
      %v338 = vld.sshfl [vmem:[#allocation1 + $0x30] sm:$0xff pattern:$0x73625140]
      %v339 = vld.sshfl [vmem:[#allocation1 + $0x38] sm:$0xff pattern:$0x73625140]
      %340 = vst [vmem:[#allocation1] ss:$4 sm:$0xff] %v247
      %341 = vst [vmem:[%s270] ss:$4 sm:$0xff] %v248
      %v342 = vld.sshfl [vmem:[#allocation1] sm:$0xff pattern:$0x73625140]
      %v343 = vld.sshfl [vmem:[#allocation1 + $0x8] sm:$0xff pattern:$0x73625140]
      %v344 = vld.sshfl [vmem:[#allocation1 + $0x10] sm:$0xff pattern:$0x73625140]
      %v345 = vld.sshfl [vmem:[#allocation1 + $0x18] sm:$0xff pattern:$0x73625140]
      %v346 = vld.sshfl [vmem:[#allocation1 + $0x20] sm:$0xff pattern:$0x73625140]
      %v347 = vld.sshfl [vmem:[#allocation1 + $0x28] sm:$0xff pattern:$0x73625140]
      %v348 = vld.sshfl [vmem:[#allocation1 + $0x30] sm:$0xff pattern:$0x73625140]
      %v349 = vld.sshfl [vmem:[#allocation1 + $0x38] sm:$0xff pattern:$0x73625140]
      %350 = vst [vmem:[#allocation1] ss:$4 sm:$0xff] %v249
      %351 = vst [vmem:[%s270] ss:$4 sm:$0xff] %v250
      %v352 = vld.sshfl [vmem:[#allocation1] sm:$0xff pattern:$0x73625140]
      %v353 = vld.sshfl [vmem:[#allocation1 + $0x8] sm:$0xff pattern:$0x73625140]
      %v354 = vld.sshfl [vmem:[#allocation1 + $0x10] sm:$0xff pattern:$0x73625140]
      %v355 = vld.sshfl [vmem:[#allocation1 + $0x18] sm:$0xff pattern:$0x73625140]
      %v356 = vld.sshfl [vmem:[#allocation1 + $0x20] sm:$0xff pattern:$0x73625140]
      %v357 = vld.sshfl [vmem:[#allocation1 + $0x28] sm:$0xff pattern:$0x73625140]
      %v358 = vld.sshfl [vmem:[#allocation1 + $0x30] sm:$0xff pattern:$0x73625140]
      %v359 = vld.sshfl [vmem:[#allocation1 + $0x38] sm:$0xff pattern:$0x73625140]
      %v432 = vpack.c.bf16 %v272, %v272
      %v433 = vpack.c.bf16 %v273, %v273
      %v434 = vpack.c.bf16 %v274, %v274
      %v435 = vpack.c.bf16 %v275, %v275
      %v436 = vpack.c.bf16 %v276, %v276
      %v437 = vpack.c.bf16 %v277, %v277
      %v438 = vpack.c.bf16 %v278, %v278
      %v439 = vpack.c.bf16 %v279, %v279
      %v440 = vpack.c.bf16 %v282, %v282
      %v441 = vpack.c.bf16 %v283, %v283
      %v442 = vpack.c.bf16 %v284, %v284
      %v443 = vpack.c.bf16 %v285, %v285
      %v444 = vpack.c.bf16 %v286, %v286
      %v445 = vpack.c.bf16 %v287, %v287
      %v446 = vpack.c.bf16 %v288, %v288
      %v447 = vpack.c.bf16 %v289, %v289
      %v448 = vpack.c.bf16 %v292, %v292
      %v449 = vpack.c.bf16 %v293, %v293
      %v450 = vpack.c.bf16 %v294, %v294
      %v451 = vpack.c.bf16 %v295, %v295
      %v452 = vpack.c.bf16 %v296, %v296
      %v453 = vpack.c.bf16 %v297, %v297
      %v454 = vpack.c.bf16 %v298, %v298
      %v455 = vpack.c.bf16 %v299, %v299
      %v456 = vpack.c.bf16 %v302, %v302
      %v457 = vpack.c.bf16 %v303, %v303
      %v458 = vpack.c.bf16 %v304, %v304
      %v459 = vpack.c.bf16 %v305, %v305
      %v460 = vpack.c.bf16 %v306, %v306
      %v461 = vpack.c.bf16 %v307, %v307
      %v462 = vpack.c.bf16 %v308, %v308
      %v463 = vpack.c.bf16 %v309, %v309
      %v464 = vpack.c.bf16 %v312, %v312
      %v465 = vpack.c.bf16 %v313, %v313
      %v466 = vpack.c.bf16 %v314, %v314
      %v467 = vpack.c.bf16 %v315, %v315
      %v468 = vpack.c.bf16 %v316, %v316
      %v469 = vpack.c.bf16 %v317, %v317
      %v470 = vpack.c.bf16 %v318, %v318
      %v471 = vpack.c.bf16 %v319, %v319
      %v472 = vpack.c.bf16 %v322, %v322
      %v473 = vpack.c.bf16 %v323, %v323
      %v474 = vpack.c.bf16 %v324, %v324
      %v475 = vpack.c.bf16 %v325, %v325
      %v476 = vpack.c.bf16 %v326, %v326
      %v477 = vpack.c.bf16 %v327, %v327
      %v478 = vpack.c.bf16 %v328, %v328
      %v479 = vpack.c.bf16 %v329, %v329
      %v480 = vpack.c.bf16 %v332, %v332
      %v481 = vpack.c.bf16 %v333, %v333
      %v482 = vpack.c.bf16 %v334, %v334
      %v483 = vpack.c.bf16 %v335, %v335
      %v484 = vpack.c.bf16 %v336, %v336
      %v485 = vpack.c.bf16 %v337, %v337
      %v486 = vpack.c.bf16 %v338, %v338
      %v487 = vpack.c.bf16 %v339, %v339
      %v488 = vpack.c.bf16 %v342, %v342
      %v489 = vpack.c.bf16 %v343, %v343
      %v490 = vpack.c.bf16 %v344, %v344
      %v491 = vpack.c.bf16 %v345, %v345
      %v492 = vpack.c.bf16 %v346, %v346
      %v493 = vpack.c.bf16 %v347, %v347
      %v494 = vpack.c.bf16 %v348, %v348
      %v495 = vpack.c.bf16 %v349, %v349
      %v496 = vpack.c.bf16 %v352, %v352
      %v497 = vpack.c.bf16 %v353, %v353
      %v498 = vpack.c.bf16 %v354, %v354
      %v499 = vpack.c.bf16 %v355, %v355
      %v500 = vpack.c.bf16 %v356, %v356
      %v501 = vpack.c.bf16 %v357, %v357
      %v502 = vpack.c.bf16 %v358, %v358
      %v503 = vpack.c.bf16 %v359, %v359
      %v504 = vld [vmem:[%s217] sm:$0xff]
      %v505 = vld [vmem:[%s217 + $0x8] sm:$0xff]
      %v506 = vld [vmem:[%s217 + $0x10] sm:$0xff]
      %v507 = vld [vmem:[%s217 + $0x18] sm:$0xff]
      %v508 = vld [vmem:[%s217 + $0x20] sm:$0xff]
      %v509 = vld [vmem:[%s217 + $0x28] sm:$0xff]
      %v510 = vld [vmem:[%s217 + $0x30] sm:$0xff]
      %v511 = vld [vmem:[%s217 + $0x38] sm:$0xff]
      %v512 = vld [vmem:[%s217 + $0x40] sm:$0xff]
      %v513 = vld [vmem:[%s217 + $0x48] sm:$0xff]
      %v514 = vld [vmem:[%s217 + $0x50] sm:$0xff]
      %v515 = vld [vmem:[%s217 + $0x58] sm:$0xff]
      %v516 = vld [vmem:[%s217 + $0x60] sm:$0xff]
      %v517 = vld [vmem:[%s217 + $0x68] sm:$0xff]
      %v518 = vld [vmem:[%s217 + $0x70] sm:$0xff]
      %v519 = vld [vmem:[%s217 + $0x78] sm:$0xff]
      %v520 = vld [vmem:[%s217 + $0x80] sm:$0xff]
      %v521 = vld [vmem:[%s217 + $0x88] sm:$0xff]
      %v522 = vld [vmem:[%s217 + $0x90] sm:$0xff]
      %v523 = vld [vmem:[%s217 + $0x98] sm:$0xff]
      %v524 = vld [vmem:[%s217 + $0xa0] sm:$0xff]
      %v525 = vld [vmem:[%s217 + $0xa8] sm:$0xff]
      %v526 = vld [vmem:[%s217 + $0xb0] sm:$0xff]
      %v527 = vld [vmem:[%s217 + $0xb8] sm:$0xff]
      %v528 = vld [vmem:[%s217 + $0xc0] sm:$0xff]
      %v529 = vld [vmem:[%s217 + $0xc8] sm:$0xff]
      %v530 = vld [vmem:[%s217 + $0xd0] sm:$0xff]
      %v531 = vld [vmem:[%s217 + $0xd8] sm:$0xff]
      %v532 = vld [vmem:[%s217 + $0xe0] sm:$0xff]
      %v533 = vld [vmem:[%s217 + $0xe8] sm:$0xff]
      %v534 = vld [vmem:[%s217 + $0xf0] sm:$0xff]
      %v535 = vld [vmem:[%s217 + $0xf8] sm:$0xff]
      %v536 = vld [vmem:[%s217 + $0x100] sm:$0xff]
      %v537 = vld [vmem:[%s217 + $0x108] sm:$0xff]
      %v538 = vld [vmem:[%s217 + $0x110] sm:$0xff]
      %v539 = vld [vmem:[%s217 + $0x118] sm:$0xff]
      %v540 = vld [vmem:[%s217 + $0x120] sm:$0xff]
      %v541 = vld [vmem:[%s217 + $0x128] sm:$0xff]
      %v542 = vld [vmem:[%s217 + $0x130] sm:$0xff]
      %v543 = vld [vmem:[%s217 + $0x138] sm:$0xff]
      %v544 = vld [vmem:[%s217 + $0x140] sm:$0xff]
      %v545 = vld [vmem:[%s217 + $0x148] sm:$0xff]
      %v546 = vld [vmem:[%s217 + $0x150] sm:$0xff]
      %v547 = vld [vmem:[%s217 + $0x158] sm:$0xff]
      %v548 = vld [vmem:[%s217 + $0x160] sm:$0xff]
      %v549 = vld [vmem:[%s217 + $0x168] sm:$0xff]
      %v550 = vld [vmem:[%s217 + $0x170] sm:$0xff]
      %v551 = vld [vmem:[%s217 + $0x178] sm:$0xff]
      %v552 = vld [vmem:[%s217 + $0x180] sm:$0xff]
      %v553 = vld [vmem:[%s217 + $0x188] sm:$0xff]
      %v554 = vld [vmem:[%s217 + $0x190] sm:$0xff]
      %v555 = vld [vmem:[%s217 + $0x198] sm:$0xff]
      %v556 = vld [vmem:[%s217 + $0x1a0] sm:$0xff]
      %v557 = vld [vmem:[%s217 + $0x1a8] sm:$0xff]
      %v558 = vld [vmem:[%s217 + $0x1b0] sm:$0xff]
      %v559 = vld [vmem:[%s217 + $0x1b8] sm:$0xff]
      %v560 = vld [vmem:[%s217 + $0x1c0] sm:$0xff]
      %v561 = vld [vmem:[%s217 + $0x1c8] sm:$0xff]
      %v562 = vld [vmem:[%s217 + $0x1d0] sm:$0xff]
      %v563 = vld [vmem:[%s217 + $0x1d8] sm:$0xff]
      %v564 = vld [vmem:[%s217 + $0x1e0] sm:$0xff]
      %v565 = vld [vmem:[%s217 + $0x1e8] sm:$0xff]
      %v566 = vld [vmem:[%s217 + $0x1f0] sm:$0xff]
      %v567 = vld [vmem:[%s217 + $0x1f8] sm:$0xff]
      %v568 = vld [vmem:[%s217 + $0x200] sm:$0xff]
      %v569 = vld [vmem:[%s217 + $0x208] sm:$0xff]
      %v570 = vld [vmem:[%s217 + $0x210] sm:$0xff]
      %v571 = vld [vmem:[%s217 + $0x218] sm:$0xff]
      %v572 = vld [vmem:[%s217 + $0x220] sm:$0xff]
      %v573 = vld [vmem:[%s217 + $0x228] sm:$0xff]
      %v574 = vld [vmem:[%s217 + $0x230] sm:$0xff]
      %v575 = vld [vmem:[%s217 + $0x238] sm:$0xff]
      %v576 = vld [vmem:[%s217 + $0x240] sm:$0xff]
      %v577 = vld [vmem:[%s217 + $0x248] sm:$0xff]
      %v578 = vld [vmem:[%s217 + $0x250] sm:$0xff]
      %v579 = vld [vmem:[%s217 + $0x258] sm:$0xff]
      %v580 = vld [vmem:[%s217 + $0x260] sm:$0xff]
      %v581 = vld [vmem:[%s217 + $0x268] sm:$0xff]
      %v582 = vld [vmem:[%s217 + $0x270] sm:$0xff]
      %v583 = vld [vmem:[%s217 + $0x278] sm:$0xff]
      %v584 = vld [vmem:[%s217 + $0x280] sm:$0xff]
      %v585 = vld [vmem:[%s217 + $0x288] sm:$0xff]
      %v586 = vld [vmem:[%s217 + $0x290] sm:$0xff]
      %v587 = vld [vmem:[%s217 + $0x298] sm:$0xff]
      %v588 = vld [vmem:[%s217 + $0x2a0] sm:$0xff]
      %v589 = vld [vmem:[%s217 + $0x2a8] sm:$0xff]
      %v590 = vld [vmem:[%s217 + $0x2b0] sm:$0xff]
      %v591 = vld [vmem:[%s217 + $0x2b8] sm:$0xff]
      %v592 = vld [vmem:[%s217 + $0x2c0] sm:$0xff]
      %v593 = vld [vmem:[%s217 + $0x2c8] sm:$0xff]
      %v594 = vld [vmem:[%s217 + $0x2d0] sm:$0xff]
      %v595 = vld [vmem:[%s217 + $0x2d8] sm:$0xff]
      %v596 = vld [vmem:[%s217 + $0x2e0] sm:$0xff]
      %v597 = vld [vmem:[%s217 + $0x2e8] sm:$0xff]
      %v598 = vld [vmem:[%s217 + $0x2f0] sm:$0xff]
      %v599 = vld [vmem:[%s217 + $0x2f8] sm:$0xff]
      %v600 = vld [vmem:[%s217 + $0x300] sm:$0xff]
      %v601 = vld [vmem:[%s217 + $0x308] sm:$0xff]
      %v602 = vld [vmem:[%s217 + $0x310] sm:$0xff]
      %v603 = vld [vmem:[%s217 + $0x318] sm:$0xff]
      %v604 = vld [vmem:[%s217 + $0x320] sm:$0xff]
      %v605 = vld [vmem:[%s217 + $0x328] sm:$0xff]
      %v606 = vld [vmem:[%s217 + $0x330] sm:$0xff]
      %v607 = vld [vmem:[%s217 + $0x338] sm:$0xff]
      %v608 = vld [vmem:[%s217 + $0x340] sm:$0xff]
      %v609 = vld [vmem:[%s217 + $0x348] sm:$0xff]
      %v610 = vld [vmem:[%s217 + $0x350] sm:$0xff]
      %v611 = vld [vmem:[%s217 + $0x358] sm:$0xff]
      %v612 = vld [vmem:[%s217 + $0x360] sm:$0xff]
      %v613 = vld [vmem:[%s217 + $0x368] sm:$0xff]
      %v614 = vld [vmem:[%s217 + $0x370] sm:$0xff]
      %v615 = vld [vmem:[%s217 + $0x378] sm:$0xff]
      %v616 = vld [vmem:[%s217 + $0x380] sm:$0xff]
      %v617 = vld [vmem:[%s217 + $0x388] sm:$0xff]
      %v618 = vld [vmem:[%s217 + $0x390] sm:$0xff]
      %v619 = vld [vmem:[%s217 + $0x398] sm:$0xff]
      %v620 = vld [vmem:[%s217 + $0x3a0] sm:$0xff]
      %v621 = vld [vmem:[%s217 + $0x3a8] sm:$0xff]
      %v622 = vld [vmem:[%s217 + $0x3b0] sm:$0xff]
      %v623 = vld [vmem:[%s217 + $0x3b8] sm:$0xff]
      %v624 = vld [vmem:[%s217 + $0x3c0] sm:$0xff]
      %v625 = vld [vmem:[%s217 + $0x3c8] sm:$0xff]
      %v626 = vld [vmem:[%s217 + $0x3d0] sm:$0xff]
      %v627 = vld [vmem:[%s217 + $0x3d8] sm:$0xff]
      %v628 = vld [vmem:[%s217 + $0x3e0] sm:$0xff]
      %v629 = vld [vmem:[%s217 + $0x3e8] sm:$0xff]
      %v630 = vld [vmem:[%s217 + $0x3f0] sm:$0xff]
      %v631 = vld [vmem:[%s217 + $0x3f8] sm:$0xff]
      %v632 = vld [vmem:[%s217 + $0x400] sm:$0xff]
      %v633 = vld [vmem:[%s217 + $0x408] sm:$0xff]
      %v634 = vld [vmem:[%s217 + $0x410] sm:$0xff]
      %v635 = vld [vmem:[%s217 + $0x418] sm:$0xff]
      %v636 = vld [vmem:[%s217 + $0x420] sm:$0xff]
      %v637 = vld [vmem:[%s217 + $0x428] sm:$0xff]
      %v638 = vld [vmem:[%s217 + $0x430] sm:$0xff]
      %v639 = vld [vmem:[%s217 + $0x438] sm:$0xff]
      %v640 = vld [vmem:[%s217 + $0x440] sm:$0xff]
      %v641 = vld [vmem:[%s217 + $0x448] sm:$0xff]
      %v642 = vld [vmem:[%s217 + $0x450] sm:$0xff]
      %v643 = vld [vmem:[%s217 + $0x458] sm:$0xff]
      %v644 = vld [vmem:[%s217 + $0x460] sm:$0xff]
      %v645 = vld [vmem:[%s217 + $0x468] sm:$0xff]
      %v646 = vld [vmem:[%s217 + $0x470] sm:$0xff]
      %v647 = vld [vmem:[%s217 + $0x478] sm:$0xff]
      %v648 = vld [vmem:[%s217 + $0x480] sm:$0xff]
      %v649 = vld [vmem:[%s217 + $0x488] sm:$0xff]
      %v650 = vld [vmem:[%s217 + $0x490] sm:$0xff]
      %v651 = vld [vmem:[%s217 + $0x498] sm:$0xff]
      %v652 = vld [vmem:[%s217 + $0x4a0] sm:$0xff]
      %v653 = vld [vmem:[%s217 + $0x4a8] sm:$0xff]
      %v654 = vld [vmem:[%s217 + $0x4b0] sm:$0xff]
      %v655 = vld [vmem:[%s217 + $0x4b8] sm:$0xff]
      %v656 = vld [vmem:[%s217 + $0x4c0] sm:$0xff]
      %v657 = vld [vmem:[%s217 + $0x4c8] sm:$0xff]
      %v658 = vld [vmem:[%s217 + $0x4d0] sm:$0xff]
      %v659 = vld [vmem:[%s217 + $0x4d8] sm:$0xff]
      %v660 = vld [vmem:[%s217 + $0x4e0] sm:$0xff]
      %v661 = vld [vmem:[%s217 + $0x4e8] sm:$0xff]
      %v662 = vld [vmem:[%s217 + $0x4f0] sm:$0xff]
      %v663 = vld [vmem:[%s217 + $0x4f8] sm:$0xff]
      %v664 = vld [vmem:[%s217 + $0x500] sm:$0xff]
      %v665 = vld [vmem:[%s217 + $0x508] sm:$0xff]
      %v666 = vld [vmem:[%s217 + $0x510] sm:$0xff]
      %v667 = vld [vmem:[%s217 + $0x518] sm:$0xff]
      %v668 = vld [vmem:[%s217 + $0x520] sm:$0xff]
      %v669 = vld [vmem:[%s217 + $0x528] sm:$0xff]
      %v670 = vld [vmem:[%s217 + $0x530] sm:$0xff]
      %v671 = vld [vmem:[%s217 + $0x538] sm:$0xff]
      %v672 = vld [vmem:[%s217 + $0x540] sm:$0xff]
      %v673 = vld [vmem:[%s217 + $0x548] sm:$0xff]
      %v674 = vld [vmem:[%s217 + $0x550] sm:$0xff]
      %v675 = vld [vmem:[%s217 + $0x558] sm:$0xff]
      %v676 = vld [vmem:[%s217 + $0x560] sm:$0xff]
      %v677 = vld [vmem:[%s217 + $0x568] sm:$0xff]
      %v678 = vld [vmem:[%s217 + $0x570] sm:$0xff]
      %v679 = vld [vmem:[%s217 + $0x578] sm:$0xff]
      %v680 = vld [vmem:[%s217 + $0x580] sm:$0xff]
      %v681 = vld [vmem:[%s217 + $0x588] sm:$0xff]
      %v682 = vld [vmem:[%s217 + $0x590] sm:$0xff]
      %v683 = vld [vmem:[%s217 + $0x598] sm:$0xff]
      %v684 = vld [vmem:[%s217 + $0x5a0] sm:$0xff]
      %v685 = vld [vmem:[%s217 + $0x5a8] sm:$0xff]
      %v686 = vld [vmem:[%s217 + $0x5b0] sm:$0xff]
      %v687 = vld [vmem:[%s217 + $0x5b8] sm:$0xff]
      %v688 = vld [vmem:[%s217 + $0x5c0] sm:$0xff]
      %v689 = vld [vmem:[%s217 + $0x5c8] sm:$0xff]
      %v690 = vld [vmem:[%s217 + $0x5d0] sm:$0xff]
      %v691 = vld [vmem:[%s217 + $0x5d8] sm:$0xff]
      %v692 = vld [vmem:[%s217 + $0x5e0] sm:$0xff]
      %v693 = vld [vmem:[%s217 + $0x5e8] sm:$0xff]
      %v694 = vld [vmem:[%s217 + $0x5f0] sm:$0xff]
      %v695 = vld [vmem:[%s217 + $0x5f8] sm:$0xff]
      %v696 = vld [vmem:[%s217 + $0x600] sm:$0xff]
      %v697 = vld [vmem:[%s217 + $0x608] sm:$0xff]
      %v698 = vld [vmem:[%s217 + $0x610] sm:$0xff]
      %v699 = vld [vmem:[%s217 + $0x618] sm:$0xff]
      %v700 = vld [vmem:[%s217 + $0x620] sm:$0xff]
      %v701 = vld [vmem:[%s217 + $0x628] sm:$0xff]
      %v702 = vld [vmem:[%s217 + $0x630] sm:$0xff]
      %v703 = vld [vmem:[%s217 + $0x638] sm:$0xff]
      %v704 = vld [vmem:[%s217 + $0x640] sm:$0xff]
      %v705 = vld [vmem:[%s217 + $0x648] sm:$0xff]
      %v706 = vld [vmem:[%s217 + $0x650] sm:$0xff]
      %v707 = vld [vmem:[%s217 + $0x658] sm:$0xff]
      %v708 = vld [vmem:[%s217 + $0x660] sm:$0xff]
      %v709 = vld [vmem:[%s217 + $0x668] sm:$0xff]
      %v710 = vld [vmem:[%s217 + $0x670] sm:$0xff]
      %v711 = vld [vmem:[%s217 + $0x678] sm:$0xff]
      %v712 = vld [vmem:[%s217 + $0x680] sm:$0xff]
      %v713 = vld [vmem:[%s217 + $0x688] sm:$0xff]
      %v714 = vld [vmem:[%s217 + $0x690] sm:$0xff]
      %v715 = vld [vmem:[%s217 + $0x698] sm:$0xff]
      %v716 = vld [vmem:[%s217 + $0x6a0] sm:$0xff]
      %v717 = vld [vmem:[%s217 + $0x6a8] sm:$0xff]
      %v718 = vld [vmem:[%s217 + $0x6b0] sm:$0xff]
      %v719 = vld [vmem:[%s217 + $0x6b8] sm:$0xff]
      %v720 = vld [vmem:[%s217 + $0x6c0] sm:$0xff]
      %v721 = vld [vmem:[%s217 + $0x6c8] sm:$0xff]
      %v722 = vld [vmem:[%s217 + $0x6d0] sm:$0xff]
      %v723 = vld [vmem:[%s217 + $0x6d8] sm:$0xff]
      %v724 = vld [vmem:[%s217 + $0x6e0] sm:$0xff]
      %v725 = vld [vmem:[%s217 + $0x6e8] sm:$0xff]
      %v726 = vld [vmem:[%s217 + $0x6f0] sm:$0xff]
      %v727 = vld [vmem:[%s217 + $0x6f8] sm:$0xff]
      %v728 = vld [vmem:[%s217 + $0x700] sm:$0xff]
      %v729 = vld [vmem:[%s217 + $0x708] sm:$0xff]
      %v730 = vld [vmem:[%s217 + $0x710] sm:$0xff]
      %v731 = vld [vmem:[%s217 + $0x718] sm:$0xff]
      %v732 = vld [vmem:[%s217 + $0x720] sm:$0xff]
      %v733 = vld [vmem:[%s217 + $0x728] sm:$0xff]
      %v734 = vld [vmem:[%s217 + $0x730] sm:$0xff]
      %v735 = vld [vmem:[%s217 + $0x738] sm:$0xff]
      %v736 = vld [vmem:[%s217 + $0x740] sm:$0xff]
      %v737 = vld [vmem:[%s217 + $0x748] sm:$0xff]
      %v738 = vld [vmem:[%s217 + $0x750] sm:$0xff]
      %v739 = vld [vmem:[%s217 + $0x758] sm:$0xff]
      %v740 = vld [vmem:[%s217 + $0x760] sm:$0xff]
      %v741 = vld [vmem:[%s217 + $0x768] sm:$0xff]
      %v742 = vld [vmem:[%s217 + $0x770] sm:$0xff]
      %v743 = vld [vmem:[%s217 + $0x778] sm:$0xff]
      %v744 = vld [vmem:[%s217 + $0x780] sm:$0xff]
      %v745 = vld [vmem:[%s217 + $0x788] sm:$0xff]
      %v746 = vld [vmem:[%s217 + $0x790] sm:$0xff]
      %v747 = vld [vmem:[%s217 + $0x798] sm:$0xff]
      %v748 = vld [vmem:[%s217 + $0x7a0] sm:$0xff]
      %v749 = vld [vmem:[%s217 + $0x7a8] sm:$0xff]
      %v750 = vld [vmem:[%s217 + $0x7b0] sm:$0xff]
      %v751 = vld [vmem:[%s217 + $0x7b8] sm:$0xff]
      %v752 = vld [vmem:[%s217 + $0x7c0] sm:$0xff]
      %v753 = vld [vmem:[%s217 + $0x7c8] sm:$0xff]
      %v754 = vld [vmem:[%s217 + $0x7d0] sm:$0xff]
      %v755 = vld [vmem:[%s217 + $0x7d8] sm:$0xff]
      %v756 = vld [vmem:[%s217 + $0x7e0] sm:$0xff]
      %v757 = vld [vmem:[%s217 + $0x7e8] sm:$0xff]
      %v758 = vld [vmem:[%s217 + $0x7f0] sm:$0xff]
      %v759 = vld [vmem:[%s217 + $0x7f8] sm:$0xff]
      %v760 = vld [vmem:[%s217 + $0x800] sm:$0xff]
      %v761 = vld [vmem:[%s217 + $0x808] sm:$0xff]
      %v762 = vld [vmem:[%s217 + $0x810] sm:$0xff]
      %v763 = vld [vmem:[%s217 + $0x818] sm:$0xff]
      %v764 = vld [vmem:[%s217 + $0x820] sm:$0xff]
      %v765 = vld [vmem:[%s217 + $0x828] sm:$0xff]
      %v766 = vld [vmem:[%s217 + $0x830] sm:$0xff]
      %v767 = vld [vmem:[%s217 + $0x838] sm:$0xff]
      %v768 = vld [vmem:[%s217 + $0x840] sm:$0xff]
      %v769 = vld [vmem:[%s217 + $0x848] sm:$0xff]
      %v770 = vld [vmem:[%s217 + $0x850] sm:$0xff]
      %v771 = vld [vmem:[%s217 + $0x858] sm:$0xff]
      %v772 = vld [vmem:[%s217 + $0x860] sm:$0xff]
      %v773 = vld [vmem:[%s217 + $0x868] sm:$0xff]
      %v774 = vld [vmem:[%s217 + $0x870] sm:$0xff]
      %v775 = vld [vmem:[%s217 + $0x878] sm:$0xff]
      %v776 = vld [vmem:[%s217 + $0x880] sm:$0xff]
      %v777 = vld [vmem:[%s217 + $0x888] sm:$0xff]
      %v778 = vld [vmem:[%s217 + $0x890] sm:$0xff]
      %v779 = vld [vmem:[%s217 + $0x898] sm:$0xff]
      %v780 = vld [vmem:[%s217 + $0x8a0] sm:$0xff]
      %v781 = vld [vmem:[%s217 + $0x8a8] sm:$0xff]
      %v782 = vld [vmem:[%s217 + $0x8b0] sm:$0xff]
      %v783 = vld [vmem:[%s217 + $0x8b8] sm:$0xff]
      %v784 = vld [vmem:[%s217 + $0x8c0] sm:$0xff]
      %v785 = vld [vmem:[%s217 + $0x8c8] sm:$0xff]
      %v786 = vld [vmem:[%s217 + $0x8d0] sm:$0xff]
      %v787 = vld [vmem:[%s217 + $0x8d8] sm:$0xff]
      %v788 = vld [vmem:[%s217 + $0x8e0] sm:$0xff]
      %v789 = vld [vmem:[%s217 + $0x8e8] sm:$0xff]
      %v790 = vld [vmem:[%s217 + $0x8f0] sm:$0xff]
      %v791 = vld [vmem:[%s217 + $0x8f8] sm:$0xff]
      %v792 = vld [vmem:[%s217 + $0x900] sm:$0xff]
      %v793 = vld [vmem:[%s217 + $0x908] sm:$0xff]
      %v794 = vld [vmem:[%s217 + $0x910] sm:$0xff]
      %v795 = vld [vmem:[%s217 + $0x918] sm:$0xff]
      %v796 = vld [vmem:[%s217 + $0x920] sm:$0xff]
      %v797 = vld [vmem:[%s217 + $0x928] sm:$0xff]
      %v798 = vld [vmem:[%s217 + $0x930] sm:$0xff]
      %v799 = vld [vmem:[%s217 + $0x938] sm:$0xff]
      %v800 = vld [vmem:[%s217 + $0x940] sm:$0xff]
      %v801 = vld [vmem:[%s217 + $0x948] sm:$0xff]
      %v802 = vld [vmem:[%s217 + $0x950] sm:$0xff]
      %v803 = vld [vmem:[%s217 + $0x958] sm:$0xff]
      %v804 = vld [vmem:[%s217 + $0x960] sm:$0xff]
      %v805 = vld [vmem:[%s217 + $0x968] sm:$0xff]
      %v806 = vld [vmem:[%s217 + $0x970] sm:$0xff]
      %v807 = vld [vmem:[%s217 + $0x978] sm:$0xff]
      %v808 = vld [vmem:[%s217 + $0x980] sm:$0xff]
      %v809 = vld [vmem:[%s217 + $0x988] sm:$0xff]
      %v810 = vld [vmem:[%s217 + $0x990] sm:$0xff]
      %v811 = vld [vmem:[%s217 + $0x998] sm:$0xff]
      %v812 = vld [vmem:[%s217 + $0x9a0] sm:$0xff]
      %v813 = vld [vmem:[%s217 + $0x9a8] sm:$0xff]
      %v814 = vld [vmem:[%s217 + $0x9b0] sm:$0xff]
      %v815 = vld [vmem:[%s217 + $0x9b8] sm:$0xff]
      %v816 = vld [vmem:[%s217 + $0x9c0] sm:$0xff]
      %v817 = vld [vmem:[%s217 + $0x9c8] sm:$0xff]
      %v818 = vld [vmem:[%s217 + $0x9d0] sm:$0xff]
      %v819 = vld [vmem:[%s217 + $0x9d8] sm:$0xff]
      %v820 = vld [vmem:[%s217 + $0x9e0] sm:$0xff]
      %v821 = vld [vmem:[%s217 + $0x9e8] sm:$0xff]
      %v822 = vld [vmem:[%s217 + $0x9f0] sm:$0xff]
      %v823 = vld [vmem:[%s217 + $0x9f8] sm:$0xff]
      %v824 = vld [vmem:[%s217 + $0xa00] sm:$0xff]
      %v825 = vld [vmem:[%s217 + $0xa08] sm:$0xff]
      %v826 = vld [vmem:[%s217 + $0xa10] sm:$0xff]
      %v827 = vld [vmem:[%s217 + $0xa18] sm:$0xff]
      %v828 = vld [vmem:[%s217 + $0xa20] sm:$0xff]
      %v829 = vld [vmem:[%s217 + $0xa28] sm:$0xff]
      %v830 = vld [vmem:[%s217 + $0xa30] sm:$0xff]
      %v831 = vld [vmem:[%s217 + $0xa38] sm:$0xff]
      %v832 = vld [vmem:[%s217 + $0xa40] sm:$0xff]
      %v833 = vld [vmem:[%s217 + $0xa48] sm:$0xff]
      %v834 = vld [vmem:[%s217 + $0xa50] sm:$0xff]
      %v835 = vld [vmem:[%s217 + $0xa58] sm:$0xff]
      %v836 = vld [vmem:[%s217 + $0xa60] sm:$0xff]
      %v837 = vld [vmem:[%s217 + $0xa68] sm:$0xff]
      %v838 = vld [vmem:[%s217 + $0xa70] sm:$0xff]
      %v839 = vld [vmem:[%s217 + $0xa78] sm:$0xff]
      %v840 = vld [vmem:[%s217 + $0xa80] sm:$0xff]
      %v841 = vld [vmem:[%s217 + $0xa88] sm:$0xff]
      %v842 = vld [vmem:[%s217 + $0xa90] sm:$0xff]
      %v843 = vld [vmem:[%s217 + $0xa98] sm:$0xff]
      %v844 = vld [vmem:[%s217 + $0xaa0] sm:$0xff]
      %v845 = vld [vmem:[%s217 + $0xaa8] sm:$0xff]
      %v846 = vld [vmem:[%s217 + $0xab0] sm:$0xff]
      %v847 = vld [vmem:[%s217 + $0xab8] sm:$0xff]
      %v848 = vld [vmem:[%s217 + $0xac0] sm:$0xff]
      %v849 = vld [vmem:[%s217 + $0xac8] sm:$0xff]
      %v850 = vld [vmem:[%s217 + $0xad0] sm:$0xff]
      %v851 = vld [vmem:[%s217 + $0xad8] sm:$0xff]
      %v852 = vld [vmem:[%s217 + $0xae0] sm:$0xff]
      %v853 = vld [vmem:[%s217 + $0xae8] sm:$0xff]
      %v854 = vld [vmem:[%s217 + $0xaf0] sm:$0xff]
      %v855 = vld [vmem:[%s217 + $0xaf8] sm:$0xff]
      %v856 = vld [vmem:[%s217 + $0xb00] sm:$0xff]
      %v857 = vld [vmem:[%s217 + $0xb08] sm:$0xff]
      %v858 = vld [vmem:[%s217 + $0xb10] sm:$0xff]
      %v859 = vld [vmem:[%s217 + $0xb18] sm:$0xff]
      %v860 = vld [vmem:[%s217 + $0xb20] sm:$0xff]
      %v861 = vld [vmem:[%s217 + $0xb28] sm:$0xff]
      %v862 = vld [vmem:[%s217 + $0xb30] sm:$0xff]
      %v863 = vld [vmem:[%s217 + $0xb38] sm:$0xff]
      %v864 = vld [vmem:[%s217 + $0xb40] sm:$0xff]
      %v865 = vld [vmem:[%s217 + $0xb48] sm:$0xff]
      %v866 = vld [vmem:[%s217 + $0xb50] sm:$0xff]
      %v867 = vld [vmem:[%s217 + $0xb58] sm:$0xff]
      %v868 = vld [vmem:[%s217 + $0xb60] sm:$0xff]
      %v869 = vld [vmem:[%s217 + $0xb68] sm:$0xff]
      %v870 = vld [vmem:[%s217 + $0xb70] sm:$0xff]
      %v871 = vld [vmem:[%s217 + $0xb78] sm:$0xff]
      %v872 = vld [vmem:[%s217 + $0xb80] sm:$0xff]
      %v873 = vld [vmem:[%s217 + $0xb88] sm:$0xff]
      %v874 = vld [vmem:[%s217 + $0xb90] sm:$0xff]
      %v875 = vld [vmem:[%s217 + $0xb98] sm:$0xff]
      %v876 = vld [vmem:[%s217 + $0xba0] sm:$0xff]
      %v877 = vld [vmem:[%s217 + $0xba8] sm:$0xff]
      %v878 = vld [vmem:[%s217 + $0xbb0] sm:$0xff]
      %v879 = vld [vmem:[%s217 + $0xbb8] sm:$0xff]
      %v880 = vld [vmem:[%s217 + $0xbc0] sm:$0xff]
      %v881 = vld [vmem:[%s217 + $0xbc8] sm:$0xff]
      %v882 = vld [vmem:[%s217 + $0xbd0] sm:$0xff]
      %v883 = vld [vmem:[%s217 + $0xbd8] sm:$0xff]
      %v884 = vld [vmem:[%s217 + $0xbe0] sm:$0xff]
      %v885 = vld [vmem:[%s217 + $0xbe8] sm:$0xff]
      %v886 = vld [vmem:[%s217 + $0xbf0] sm:$0xff]
      %v887 = vld [vmem:[%s217 + $0xbf8] sm:$0xff]
      %v888 = vld [vmem:[%s217 + $0xc00] sm:$0xff]
      %v889 = vld [vmem:[%s217 + $0xc08] sm:$0xff]
      %v890 = vld [vmem:[%s217 + $0xc10] sm:$0xff]
      %v891 = vld [vmem:[%s217 + $0xc18] sm:$0xff]
      %v892 = vld [vmem:[%s217 + $0xc20] sm:$0xff]
      %v893 = vld [vmem:[%s217 + $0xc28] sm:$0xff]
      %v894 = vld [vmem:[%s217 + $0xc30] sm:$0xff]
      %v895 = vld [vmem:[%s217 + $0xc38] sm:$0xff]
      %v896 = vld [vmem:[%s217 + $0xc40] sm:$0xff]
      %v897 = vld [vmem:[%s217 + $0xc48] sm:$0xff]
      %v898 = vld [vmem:[%s217 + $0xc50] sm:$0xff]
      %v899 = vld [vmem:[%s217 + $0xc58] sm:$0xff]
      %v900 = vld [vmem:[%s217 + $0xc60] sm:$0xff]
      %v901 = vld [vmem:[%s217 + $0xc68] sm:$0xff]
      %v902 = vld [vmem:[%s217 + $0xc70] sm:$0xff]
      %v903 = vld [vmem:[%s217 + $0xc78] sm:$0xff]
      %v904 = vld [vmem:[%s217 + $0xc80] sm:$0xff]
      %v905 = vld [vmem:[%s217 + $0xc88] sm:$0xff]
      %v906 = vld [vmem:[%s217 + $0xc90] sm:$0xff]
      %v907 = vld [vmem:[%s217 + $0xc98] sm:$0xff]
      %v908 = vld [vmem:[%s217 + $0xca0] sm:$0xff]
      %v909 = vld [vmem:[%s217 + $0xca8] sm:$0xff]
      %v910 = vld [vmem:[%s217 + $0xcb0] sm:$0xff]
      %v911 = vld [vmem:[%s217 + $0xcb8] sm:$0xff]
      %v912 = vld [vmem:[%s217 + $0xcc0] sm:$0xff]
      %v913 = vld [vmem:[%s217 + $0xcc8] sm:$0xff]
      %v914 = vld [vmem:[%s217 + $0xcd0] sm:$0xff]
      %v915 = vld [vmem:[%s217 + $0xcd8] sm:$0xff]
      %v916 = vld [vmem:[%s217 + $0xce0] sm:$0xff]
      %v917 = vld [vmem:[%s217 + $0xce8] sm:$0xff]
      %v918 = vld [vmem:[%s217 + $0xcf0] sm:$0xff]
      %v919 = vld [vmem:[%s217 + $0xcf8] sm:$0xff]
      %v920 = vld [vmem:[%s217 + $0xd00] sm:$0xff]
      %v921 = vld [vmem:[%s217 + $0xd08] sm:$0xff]
      %v922 = vld [vmem:[%s217 + $0xd10] sm:$0xff]
      %v923 = vld [vmem:[%s217 + $0xd18] sm:$0xff]
      %v924 = vld [vmem:[%s217 + $0xd20] sm:$0xff]
      %v925 = vld [vmem:[%s217 + $0xd28] sm:$0xff]
      %v926 = vld [vmem:[%s217 + $0xd30] sm:$0xff]
      %v927 = vld [vmem:[%s217 + $0xd38] sm:$0xff]
      %v928 = vld [vmem:[%s217 + $0xd40] sm:$0xff]
      %v929 = vld [vmem:[%s217 + $0xd48] sm:$0xff]
      %v930 = vld [vmem:[%s217 + $0xd50] sm:$0xff]
      %v931 = vld [vmem:[%s217 + $0xd58] sm:$0xff]
      %v932 = vld [vmem:[%s217 + $0xd60] sm:$0xff]
      %v933 = vld [vmem:[%s217 + $0xd68] sm:$0xff]
      %v934 = vld [vmem:[%s217 + $0xd70] sm:$0xff]
      %v935 = vld [vmem:[%s217 + $0xd78] sm:$0xff]
      %v936 = vld [vmem:[%s217 + $0xd80] sm:$0xff]
      %v937 = vld [vmem:[%s217 + $0xd88] sm:$0xff]
      %v938 = vld [vmem:[%s217 + $0xd90] sm:$0xff]
      %v939 = vld [vmem:[%s217 + $0xd98] sm:$0xff]
      %v940 = vld [vmem:[%s217 + $0xda0] sm:$0xff]
      %v941 = vld [vmem:[%s217 + $0xda8] sm:$0xff]
      %v942 = vld [vmem:[%s217 + $0xdb0] sm:$0xff]
      %v943 = vld [vmem:[%s217 + $0xdb8] sm:$0xff]
      %v944 = vld [vmem:[%s217 + $0xdc0] sm:$0xff]
      %v945 = vld [vmem:[%s217 + $0xdc8] sm:$0xff]
      %v946 = vld [vmem:[%s217 + $0xdd0] sm:$0xff]
      %v947 = vld [vmem:[%s217 + $0xdd8] sm:$0xff]
      %v948 = vld [vmem:[%s217 + $0xde0] sm:$0xff]
      %v949 = vld [vmem:[%s217 + $0xde8] sm:$0xff]
      %v950 = vld [vmem:[%s217 + $0xdf0] sm:$0xff]
      %v951 = vld [vmem:[%s217 + $0xdf8] sm:$0xff]
      %v952 = vld [vmem:[%s217 + $0xe00] sm:$0xff]
      %v953 = vld [vmem:[%s217 + $0xe08] sm:$0xff]
      %v954 = vld [vmem:[%s217 + $0xe10] sm:$0xff]
      %v955 = vld [vmem:[%s217 + $0xe18] sm:$0xff]
      %v956 = vld [vmem:[%s217 + $0xe20] sm:$0xff]
      %v957 = vld [vmem:[%s217 + $0xe28] sm:$0xff]
      %v958 = vld [vmem:[%s217 + $0xe30] sm:$0xff]
      %v959 = vld [vmem:[%s217 + $0xe38] sm:$0xff]
      %v960 = vld [vmem:[%s217 + $0xe40] sm:$0xff]
      %v961 = vld [vmem:[%s217 + $0xe48] sm:$0xff]
      %v962 = vld [vmem:[%s217 + $0xe50] sm:$0xff]
      %v963 = vld [vmem:[%s217 + $0xe58] sm:$0xff]
      %v964 = vld [vmem:[%s217 + $0xe60] sm:$0xff]
      %v965 = vld [vmem:[%s217 + $0xe68] sm:$0xff]
      %v966 = vld [vmem:[%s217 + $0xe70] sm:$0xff]
      %v967 = vld [vmem:[%s217 + $0xe78] sm:$0xff]
      %v968 = vld [vmem:[%s217 + $0xe80] sm:$0xff]
      %v969 = vld [vmem:[%s217 + $0xe88] sm:$0xff]
      %v970 = vld [vmem:[%s217 + $0xe90] sm:$0xff]
      %v971 = vld [vmem:[%s217 + $0xe98] sm:$0xff]
      %v972 = vld [vmem:[%s217 + $0xea0] sm:$0xff]
      %v973 = vld [vmem:[%s217 + $0xea8] sm:$0xff]
      %v974 = vld [vmem:[%s217 + $0xeb0] sm:$0xff]
      %v975 = vld [vmem:[%s217 + $0xeb8] sm:$0xff]
      %v976 = vld [vmem:[%s217 + $0xec0] sm:$0xff]
      %v977 = vld [vmem:[%s217 + $0xec8] sm:$0xff]
      %v978 = vld [vmem:[%s217 + $0xed0] sm:$0xff]
      %v979 = vld [vmem:[%s217 + $0xed8] sm:$0xff]
      %v980 = vld [vmem:[%s217 + $0xee0] sm:$0xff]
      %v981 = vld [vmem:[%s217 + $0xee8] sm:$0xff]
      %v982 = vld [vmem:[%s217 + $0xef0] sm:$0xff]
      %v983 = vld [vmem:[%s217 + $0xef8] sm:$0xff]
      %v984 = vld [vmem:[%s217 + $0xf00] sm:$0xff]
      %v985 = vld [vmem:[%s217 + $0xf08] sm:$0xff]
      %v986 = vld [vmem:[%s217 + $0xf10] sm:$0xff]
      %v987 = vld [vmem:[%s217 + $0xf18] sm:$0xff]
      %v988 = vld [vmem:[%s217 + $0xf20] sm:$0xff]
      %v989 = vld [vmem:[%s217 + $0xf28] sm:$0xff]
      %v990 = vld [vmem:[%s217 + $0xf30] sm:$0xff]
      %v991 = vld [vmem:[%s217 + $0xf38] sm:$0xff]
      %v992 = vld [vmem:[%s217 + $0xf40] sm:$0xff]
      %v993 = vld [vmem:[%s217 + $0xf48] sm:$0xff]
      %v994 = vld [vmem:[%s217 + $0xf50] sm:$0xff]
      %v995 = vld [vmem:[%s217 + $0xf58] sm:$0xff]
      %v996 = vld [vmem:[%s217 + $0xf60] sm:$0xff]
      %v997 = vld [vmem:[%s217 + $0xf68] sm:$0xff]
      %v998 = vld [vmem:[%s217 + $0xf70] sm:$0xff]
      %v999 = vld [vmem:[%s217 + $0xf78] sm:$0xff]
      %v1000 = vld [vmem:[%s217 + $0xf80] sm:$0xff]
      %v1001 = vld [vmem:[%s217 + $0xf88] sm:$0xff]
      %v1002 = vld [vmem:[%s217 + $0xf90] sm:$0xff]
      %v1003 = vld [vmem:[%s217 + $0xf98] sm:$0xff]
      %v1004 = vld [vmem:[%s217 + $0xfa0] sm:$0xff]
      %v1005 = vld [vmem:[%s217 + $0xfa8] sm:$0xff]
      %v1006 = vld [vmem:[%s217 + $0xfb0] sm:$0xff]
      %v1007 = vld [vmem:[%s217 + $0xfb8] sm:$0xff]
      %v1008 = vld [vmem:[%s217 + $0xfc0] sm:$0xff]
      %v1009 = vld [vmem:[%s217 + $0xfc8] sm:$0xff]
      %v1010 = vld [vmem:[%s217 + $0xfd0] sm:$0xff]
      %v1011 = vld [vmem:[%s217 + $0xfd8] sm:$0xff]
      %v1012 = vld [vmem:[%s217 + $0xfe0] sm:$0xff]
      %v1013 = vld [vmem:[%s217 + $0xfe8] sm:$0xff]
      %v1014 = vld [vmem:[%s217 + $0xff0] sm:$0xff]
      %v1015 = vld [vmem:[%s217 + $0xff8] sm:$0xff]
      %v1016 = vld [vmem:[%s217 + $0x1000] sm:$0xff]
      %v1017 = vld [vmem:[%s217 + $0x1008] sm:$0xff]
      %v1018 = vld [vmem:[%s217 + $0x1010] sm:$0xff]
      %v1019 = vld [vmem:[%s217 + $0x1018] sm:$0xff]
      %v1020 = vld [vmem:[%s217 + $0x1020] sm:$0xff]
      %v1021 = vld [vmem:[%s217 + $0x1028] sm:$0xff]
      %v1022 = vld [vmem:[%s217 + $0x1030] sm:$0xff]
      %v1023 = vld [vmem:[%s217 + $0x1038] sm:$0xff]
      %v1024 = vld [vmem:[%s217 + $0x1040] sm:$0xff]
      %v1025 = vld [vmem:[%s217 + $0x1048] sm:$0xff]
      %v1026 = vld [vmem:[%s217 + $0x1050] sm:$0xff]
      %v1027 = vld [vmem:[%s217 + $0x1058] sm:$0xff]
      %v1028 = vld [vmem:[%s217 + $0x1060] sm:$0xff]
      %v1029 = vld [vmem:[%s217 + $0x1068] sm:$0xff]
      %v1030 = vld [vmem:[%s217 + $0x1070] sm:$0xff]
      %v1031 = vld [vmem:[%s217 + $0x1078] sm:$0xff]
      %v1032 = vld [vmem:[%s217 + $0x1080] sm:$0xff]
      %v1033 = vld [vmem:[%s217 + $0x1088] sm:$0xff]
      %v1034 = vld [vmem:[%s217 + $0x1090] sm:$0xff]
      %v1035 = vld [vmem:[%s217 + $0x1098] sm:$0xff]
      %v1036 = vld [vmem:[%s217 + $0x10a0] sm:$0xff]
      %v1037 = vld [vmem:[%s217 + $0x10a8] sm:$0xff]
      %v1038 = vld [vmem:[%s217 + $0x10b0] sm:$0xff]
      %v1039 = vld [vmem:[%s217 + $0x10b8] sm:$0xff]
      %v1040 = vld [vmem:[%s217 + $0x10c0] sm:$0xff]
      %v1041 = vld [vmem:[%s217 + $0x10c8] sm:$0xff]
      %v1042 = vld [vmem:[%s217 + $0x10d0] sm:$0xff]
      %v1043 = vld [vmem:[%s217 + $0x10d8] sm:$0xff]
      %v1044 = vld [vmem:[%s217 + $0x10e0] sm:$0xff]
      %v1045 = vld [vmem:[%s217 + $0x10e8] sm:$0xff]
      %v1046 = vld [vmem:[%s217 + $0x10f0] sm:$0xff]
      %v1047 = vld [vmem:[%s217 + $0x10f8] sm:$0xff]
      %v1048 = vld [vmem:[%s217 + $0x1100] sm:$0xff]
      %v1049 = vld [vmem:[%s217 + $0x1108] sm:$0xff]
      %v1050 = vld [vmem:[%s217 + $0x1110] sm:$0xff]
      %v1051 = vld [vmem:[%s217 + $0x1118] sm:$0xff]
      %v1052 = vld [vmem:[%s217 + $0x1120] sm:$0xff]
      %v1053 = vld [vmem:[%s217 + $0x1128] sm:$0xff]
      %v1054 = vld [vmem:[%s217 + $0x1130] sm:$0xff]
      %v1055 = vld [vmem:[%s217 + $0x1138] sm:$0xff]
      %v1056 = vld [vmem:[%s217 + $0x1140] sm:$0xff]
      %v1057 = vld [vmem:[%s217 + $0x1148] sm:$0xff]
      %v1058 = vld [vmem:[%s217 + $0x1150] sm:$0xff]
      %v1059 = vld [vmem:[%s217 + $0x1158] sm:$0xff]
      %v1060 = vld [vmem:[%s217 + $0x1160] sm:$0xff]
      %v1061 = vld [vmem:[%s217 + $0x1168] sm:$0xff]
      %v1062 = vld [vmem:[%s217 + $0x1170] sm:$0xff]
      %v1063 = vld [vmem:[%s217 + $0x1178] sm:$0xff]
      %v1064 = vld [vmem:[%s217 + $0x1180] sm:$0xff]
      %v1065 = vld [vmem:[%s217 + $0x1188] sm:$0xff]
      %v1066 = vld [vmem:[%s217 + $0x1190] sm:$0xff]
      %v1067 = vld [vmem:[%s217 + $0x1198] sm:$0xff]
      %v1068 = vld [vmem:[%s217 + $0x11a0] sm:$0xff]
      %v1069 = vld [vmem:[%s217 + $0x11a8] sm:$0xff]
      %v1070 = vld [vmem:[%s217 + $0x11b0] sm:$0xff]
      %v1071 = vld [vmem:[%s217 + $0x11b8] sm:$0xff]
      %v1072 = vld [vmem:[%s217 + $0x11c0] sm:$0xff]
      %v1073 = vld [vmem:[%s217 + $0x11c8] sm:$0xff]
      %v1074 = vld [vmem:[%s217 + $0x11d0] sm:$0xff]
      %v1075 = vld [vmem:[%s217 + $0x11d8] sm:$0xff]
      %v1076 = vld [vmem:[%s217 + $0x11e0] sm:$0xff]
      %v1077 = vld [vmem:[%s217 + $0x11e8] sm:$0xff]
      %v1078 = vld [vmem:[%s217 + $0x11f0] sm:$0xff]
      %v1079 = vld [vmem:[%s217 + $0x11f8] sm:$0xff]
      %v1080 = vld [vmem:[%s217 + $0x1200] sm:$0xff]
      %v1081 = vld [vmem:[%s217 + $0x1208] sm:$0xff]
      %v1082 = vld [vmem:[%s217 + $0x1210] sm:$0xff]
      %v1083 = vld [vmem:[%s217 + $0x1218] sm:$0xff]
      %v1084 = vld [vmem:[%s217 + $0x1220] sm:$0xff]
      %v1085 = vld [vmem:[%s217 + $0x1228] sm:$0xff]
      %v1086 = vld [vmem:[%s217 + $0x1230] sm:$0xff]
      %v1087 = vld [vmem:[%s217 + $0x1238] sm:$0xff]
      %v1088 = vld [vmem:[%s217 + $0x1240] sm:$0xff]
      %v1089 = vld [vmem:[%s217 + $0x1248] sm:$0xff]
      %v1090 = vld [vmem:[%s217 + $0x1250] sm:$0xff]
      %v1091 = vld [vmem:[%s217 + $0x1258] sm:$0xff]
      %v1092 = vld [vmem:[%s217 + $0x1260] sm:$0xff]
      %v1093 = vld [vmem:[%s217 + $0x1268] sm:$0xff]
      %v1094 = vld [vmem:[%s217 + $0x1270] sm:$0xff]
      %v1095 = vld [vmem:[%s217 + $0x1278] sm:$0xff]
      %v1096 = vld [vmem:[%s217 + $0x1280] sm:$0xff]
      %v1097 = vld [vmem:[%s217 + $0x1288] sm:$0xff]
      %v1098 = vld [vmem:[%s217 + $0x1290] sm:$0xff]
      %v1099 = vld [vmem:[%s217 + $0x1298] sm:$0xff]
      %v1100 = vld [vmem:[%s217 + $0x12a0] sm:$0xff]
      %v1101 = vld [vmem:[%s217 + $0x12a8] sm:$0xff]
      %v1102 = vld [vmem:[%s217 + $0x12b0] sm:$0xff]
      %v1103 = vld [vmem:[%s217 + $0x12b8] sm:$0xff]
      %v1104 = vld [vmem:[%s217 + $0x12c0] sm:$0xff]
      %v1105 = vld [vmem:[%s217 + $0x12c8] sm:$0xff]
      %v1106 = vld [vmem:[%s217 + $0x12d0] sm:$0xff]
      %v1107 = vld [vmem:[%s217 + $0x12d8] sm:$0xff]
      %v1108 = vld [vmem:[%s217 + $0x12e0] sm:$0xff]
      %v1109 = vld [vmem:[%s217 + $0x12e8] sm:$0xff]
      %v1110 = vld [vmem:[%s217 + $0x12f0] sm:$0xff]
      %v1111 = vld [vmem:[%s217 + $0x12f8] sm:$0xff]
      %v1112 = vld [vmem:[%s217 + $0x1300] sm:$0xff]
      %v1113 = vld [vmem:[%s217 + $0x1308] sm:$0xff]
      %v1114 = vld [vmem:[%s217 + $0x1310] sm:$0xff]
      %v1115 = vld [vmem:[%s217 + $0x1318] sm:$0xff]
      %v1116 = vld [vmem:[%s217 + $0x1320] sm:$0xff]
      %v1117 = vld [vmem:[%s217 + $0x1328] sm:$0xff]
      %v1118 = vld [vmem:[%s217 + $0x1330] sm:$0xff]
      %v1119 = vld [vmem:[%s217 + $0x1338] sm:$0xff]
      %v1120 = vld [vmem:[%s217 + $0x1340] sm:$0xff]
      %v1121 = vld [vmem:[%s217 + $0x1348] sm:$0xff]
      %v1122 = vld [vmem:[%s217 + $0x1350] sm:$0xff]
      %v1123 = vld [vmem:[%s217 + $0x1358] sm:$0xff]
      %v1124 = vld [vmem:[%s217 + $0x1360] sm:$0xff]
      %v1125 = vld [vmem:[%s217 + $0x1368] sm:$0xff]
      %v1126 = vld [vmem:[%s217 + $0x1370] sm:$0xff]
      %v1127 = vld [vmem:[%s217 + $0x1378] sm:$0xff]
      %v1128 = vld [vmem:[%s217 + $0x1380] sm:$0xff]
      %v1129 = vld [vmem:[%s217 + $0x1388] sm:$0xff]
      %v1130 = vld [vmem:[%s217 + $0x1390] sm:$0xff]
      %v1131 = vld [vmem:[%s217 + $0x1398] sm:$0xff]
      %v1132 = vld [vmem:[%s217 + $0x13a0] sm:$0xff]
      %v1133 = vld [vmem:[%s217 + $0x13a8] sm:$0xff]
      %v1134 = vld [vmem:[%s217 + $0x13b0] sm:$0xff]
      %v1135 = vld [vmem:[%s217 + $0x13b8] sm:$0xff]
      %v1136 = vld [vmem:[%s217 + $0x13c0] sm:$0xff]
      %v1137 = vld [vmem:[%s217 + $0x13c8] sm:$0xff]
      %v1138 = vld [vmem:[%s217 + $0x13d0] sm:$0xff]
      %v1139 = vld [vmem:[%s217 + $0x13d8] sm:$0xff]
      %v1140 = vld [vmem:[%s217 + $0x13e0] sm:$0xff]
      %v1141 = vld [vmem:[%s217 + $0x13e8] sm:$0xff]
      %v1142 = vld [vmem:[%s217 + $0x13f0] sm:$0xff]
      %v1143 = vld [vmem:[%s217 + $0x13f8] sm:$0xff]
      %v1144 = vld [vmem:[%s217 + $0x1400] sm:$0xff]
      %v1145 = vld [vmem:[%s217 + $0x1408] sm:$0xff]
      %v1146 = vld [vmem:[%s217 + $0x1410] sm:$0xff]
      %v1147 = vld [vmem:[%s217 + $0x1418] sm:$0xff]
      %v1148 = vld [vmem:[%s217 + $0x1420] sm:$0xff]
      %v1149 = vld [vmem:[%s217 + $0x1428] sm:$0xff]
      %v1150 = vld [vmem:[%s217 + $0x1430] sm:$0xff]
      %v1151 = vld [vmem:[%s217 + $0x1438] sm:$0xff]
      %v1152 = vld [vmem:[%s217 + $0x1440] sm:$0xff]
      %v1153 = vld [vmem:[%s217 + $0x1448] sm:$0xff]
      %v1154 = vld [vmem:[%s217 + $0x1450] sm:$0xff]
      %v1155 = vld [vmem:[%s217 + $0x1458] sm:$0xff]
      %v1156 = vld [vmem:[%s217 + $0x1460] sm:$0xff]
      %v1157 = vld [vmem:[%s217 + $0x1468] sm:$0xff]
      %v1158 = vld [vmem:[%s217 + $0x1470] sm:$0xff]
      %v1159 = vld [vmem:[%s217 + $0x1478] sm:$0xff]
      %v1160 = vld [vmem:[%s217 + $0x1480] sm:$0xff]
      %v1161 = vld [vmem:[%s217 + $0x1488] sm:$0xff]
      %v1162 = vld [vmem:[%s217 + $0x1490] sm:$0xff]
      %v1163 = vld [vmem:[%s217 + $0x1498] sm:$0xff]
      %v1164 = vld [vmem:[%s217 + $0x14a0] sm:$0xff]
      %v1165 = vld [vmem:[%s217 + $0x14a8] sm:$0xff]
      %v1166 = vld [vmem:[%s217 + $0x14b0] sm:$0xff]
      %v1167 = vld [vmem:[%s217 + $0x14b8] sm:$0xff]
      %v1168 = vld [vmem:[%s217 + $0x14c0] sm:$0xff]
      %v1169 = vld [vmem:[%s217 + $0x14c8] sm:$0xff]
      %v1170 = vld [vmem:[%s217 + $0x14d0] sm:$0xff]
      %v1171 = vld [vmem:[%s217 + $0x14d8] sm:$0xff]
      %v1172 = vld [vmem:[%s217 + $0x14e0] sm:$0xff]
      %v1173 = vld [vmem:[%s217 + $0x14e8] sm:$0xff]
      %v1174 = vld [vmem:[%s217 + $0x14f0] sm:$0xff]
      %v1175 = vld [vmem:[%s217 + $0x14f8] sm:$0xff]
      %v1176 = vld [vmem:[%s217 + $0x1500] sm:$0xff]
      %v1177 = vld [vmem:[%s217 + $0x1508] sm:$0xff]
      %v1178 = vld [vmem:[%s217 + $0x1510] sm:$0xff]
      %v1179 = vld [vmem:[%s217 + $0x1518] sm:$0xff]
      %v1180 = vld [vmem:[%s217 + $0x1520] sm:$0xff]
      %v1181 = vld [vmem:[%s217 + $0x1528] sm:$0xff]
      %v1182 = vld [vmem:[%s217 + $0x1530] sm:$0xff]
      %v1183 = vld [vmem:[%s217 + $0x1538] sm:$0xff]
      %v1184 = vld [vmem:[%s217 + $0x1540] sm:$0xff]
      %v1185 = vld [vmem:[%s217 + $0x1548] sm:$0xff]
      %v1186 = vld [vmem:[%s217 + $0x1550] sm:$0xff]
      %v1187 = vld [vmem:[%s217 + $0x1558] sm:$0xff]
      %v1188 = vld [vmem:[%s217 + $0x1560] sm:$0xff]
      %v1189 = vld [vmem:[%s217 + $0x1568] sm:$0xff]
      %v1190 = vld [vmem:[%s217 + $0x1570] sm:$0xff]
      %v1191 = vld [vmem:[%s217 + $0x1578] sm:$0xff]
      %v1192 = vld [vmem:[%s217 + $0x1580] sm:$0xff]
      %v1193 = vld [vmem:[%s217 + $0x1588] sm:$0xff]
      %v1194 = vld [vmem:[%s217 + $0x1590] sm:$0xff]
      %v1195 = vld [vmem:[%s217 + $0x1598] sm:$0xff]
      %v1196 = vld [vmem:[%s217 + $0x15a0] sm:$0xff]
      %v1197 = vld [vmem:[%s217 + $0x15a8] sm:$0xff]
      %v1198 = vld [vmem:[%s217 + $0x15b0] sm:$0xff]
      %v1199 = vld [vmem:[%s217 + $0x15b8] sm:$0xff]
      %v1200 = vld [vmem:[%s217 + $0x15c0] sm:$0xff]
      %v1201 = vld [vmem:[%s217 + $0x15c8] sm:$0xff]
      %v1202 = vld [vmem:[%s217 + $0x15d0] sm:$0xff]
      %v1203 = vld [vmem:[%s217 + $0x15d8] sm:$0xff]
      %v1204 = vld [vmem:[%s217 + $0x15e0] sm:$0xff]
      %v1205 = vld [vmem:[%s217 + $0x15e8] sm:$0xff]
      %v1206 = vld [vmem:[%s217 + $0x15f0] sm:$0xff]
      %v1207 = vld [vmem:[%s217 + $0x15f8] sm:$0xff]
      %v1208 = vld [vmem:[%s217 + $0x1600] sm:$0xff]
      %v1209 = vld [vmem:[%s217 + $0x1608] sm:$0xff]
      %v1210 = vld [vmem:[%s217 + $0x1610] sm:$0xff]
      %v1211 = vld [vmem:[%s217 + $0x1618] sm:$0xff]
      %v1212 = vld [vmem:[%s217 + $0x1620] sm:$0xff]
      %v1213 = vld [vmem:[%s217 + $0x1628] sm:$0xff]
      %v1214 = vld [vmem:[%s217 + $0x1630] sm:$0xff]
      %v1215 = vld [vmem:[%s217 + $0x1638] sm:$0xff]
      %v1216 = vld [vmem:[%s217 + $0x1640] sm:$0xff]
      %v1217 = vld [vmem:[%s217 + $0x1648] sm:$0xff]
      %v1218 = vld [vmem:[%s217 + $0x1650] sm:$0xff]
      %v1219 = vld [vmem:[%s217 + $0x1658] sm:$0xff]
      %v1220 = vld [vmem:[%s217 + $0x1660] sm:$0xff]
      %v1221 = vld [vmem:[%s217 + $0x1668] sm:$0xff]
      %v1222 = vld [vmem:[%s217 + $0x1670] sm:$0xff]
      %v1223 = vld [vmem:[%s217 + $0x1678] sm:$0xff]
      %v1224 = vld [vmem:[%s217 + $0x1680] sm:$0xff]
      %v1225 = vld [vmem:[%s217 + $0x1688] sm:$0xff]
      %v1226 = vld [vmem:[%s217 + $0x1690] sm:$0xff]
      %v1227 = vld [vmem:[%s217 + $0x1698] sm:$0xff]
      %v1228 = vld [vmem:[%s217 + $0x16a0] sm:$0xff]
      %v1229 = vld [vmem:[%s217 + $0x16a8] sm:$0xff]
      %v1230 = vld [vmem:[%s217 + $0x16b0] sm:$0xff]
      %v1231 = vld [vmem:[%s217 + $0x16b8] sm:$0xff]
      %v1232 = vld [vmem:[%s217 + $0x16c0] sm:$0xff]
      %v1233 = vld [vmem:[%s217 + $0x16c8] sm:$0xff]
      %v1234 = vld [vmem:[%s217 + $0x16d0] sm:$0xff]
      %v1235 = vld [vmem:[%s217 + $0x16d8] sm:$0xff]
      %v1236 = vld [vmem:[%s217 + $0x16e0] sm:$0xff]
      %v1237 = vld [vmem:[%s217 + $0x16e8] sm:$0xff]
      %v1238 = vld [vmem:[%s217 + $0x16f0] sm:$0xff]
      %v1239 = vld [vmem:[%s217 + $0x16f8] sm:$0xff]
      %v1240 = vld [vmem:[%s217 + $0x1700] sm:$0xff]
      %v1241 = vld [vmem:[%s217 + $0x1708] sm:$0xff]
      %v1242 = vld [vmem:[%s217 + $0x1710] sm:$0xff]
      %v1243 = vld [vmem:[%s217 + $0x1718] sm:$0xff]
      %v1244 = vld [vmem:[%s217 + $0x1720] sm:$0xff]
      %v1245 = vld [vmem:[%s217 + $0x1728] sm:$0xff]
      %v1246 = vld [vmem:[%s217 + $0x1730] sm:$0xff]
      %v1247 = vld [vmem:[%s217 + $0x1738] sm:$0xff]
      %v1248 = vld [vmem:[%s217 + $0x1740] sm:$0xff]
      %v1249 = vld [vmem:[%s217 + $0x1748] sm:$0xff]
      %v1250 = vld [vmem:[%s217 + $0x1750] sm:$0xff]
      %v1251 = vld [vmem:[%s217 + $0x1758] sm:$0xff]
      %v1252 = vld [vmem:[%s217 + $0x1760] sm:$0xff]
      %v1253 = vld [vmem:[%s217 + $0x1768] sm:$0xff]
      %v1254 = vld [vmem:[%s217 + $0x1770] sm:$0xff]
      %v1255 = vld [vmem:[%s217 + $0x1778] sm:$0xff]
      %v1256 = vld [vmem:[%s217 + $0x1780] sm:$0xff]
      %v1257 = vld [vmem:[%s217 + $0x1788] sm:$0xff]
      %v1258 = vld [vmem:[%s217 + $0x1790] sm:$0xff]
      %v1259 = vld [vmem:[%s217 + $0x1798] sm:$0xff]
      %v1260 = vld [vmem:[%s217 + $0x17a0] sm:$0xff]
      %v1261 = vld [vmem:[%s217 + $0x17a8] sm:$0xff]
      %v1262 = vld [vmem:[%s217 + $0x17b0] sm:$0xff]
      %v1263 = vld [vmem:[%s217 + $0x17b8] sm:$0xff]
      %v1264 = vld [vmem:[%s217 + $0x17c0] sm:$0xff]
      %v1265 = vld [vmem:[%s217 + $0x17c8] sm:$0xff]
      %v1266 = vld [vmem:[%s217 + $0x17d0] sm:$0xff]
      %v1267 = vld [vmem:[%s217 + $0x17d8] sm:$0xff]
      %v1268 = vld [vmem:[%s217 + $0x17e0] sm:$0xff]
      %v1269 = vld [vmem:[%s217 + $0x17e8] sm:$0xff]
      %v1270 = vld [vmem:[%s217 + $0x17f0] sm:$0xff]
      %v1271 = vld [vmem:[%s217 + $0x17f8] sm:$0xff]
      %v1272 = vld [vmem:[%s217 + $0x1800] sm:$0xff]
      %v1273 = vld [vmem:[%s217 + $0x1808] sm:$0xff]
      %v1274 = vld [vmem:[%s217 + $0x1810] sm:$0xff]
      %v1275 = vld [vmem:[%s217 + $0x1818] sm:$0xff]
      %v1276 = vld [vmem:[%s217 + $0x1820] sm:$0xff]
      %v1277 = vld [vmem:[%s217 + $0x1828] sm:$0xff]
      %v1278 = vld [vmem:[%s217 + $0x1830] sm:$0xff]
      %v1279 = vld [vmem:[%s217 + $0x1838] sm:$0xff]
      %v1280 = vld [vmem:[%s217 + $0x1840] sm:$0xff]
      %v1281 = vld [vmem:[%s217 + $0x1848] sm:$0xff]
      %v1282 = vld [vmem:[%s217 + $0x1850] sm:$0xff]
      %v1283 = vld [vmem:[%s217 + $0x1858] sm:$0xff]
      %v1284 = vld [vmem:[%s217 + $0x1860] sm:$0xff]
      %v1285 = vld [vmem:[%s217 + $0x1868] sm:$0xff]
      %v1286 = vld [vmem:[%s217 + $0x1870] sm:$0xff]
      %v1287 = vld [vmem:[%s217 + $0x1878] sm:$0xff]
      %v1288 = vld [vmem:[%s217 + $0x1880] sm:$0xff]
      %v1289 = vld [vmem:[%s217 + $0x1888] sm:$0xff]
      %v1290 = vld [vmem:[%s217 + $0x1890] sm:$0xff]
      %v1291 = vld [vmem:[%s217 + $0x1898] sm:$0xff]
      %v1292 = vld [vmem:[%s217 + $0x18a0] sm:$0xff]
      %v1293 = vld [vmem:[%s217 + $0x18a8] sm:$0xff]
      %v1294 = vld [vmem:[%s217 + $0x18b0] sm:$0xff]
      %v1295 = vld [vmem:[%s217 + $0x18b8] sm:$0xff]
      %v1296 = vld [vmem:[%s217 + $0x18c0] sm:$0xff]
      %v1297 = vld [vmem:[%s217 + $0x18c8] sm:$0xff]
      %v1298 = vld [vmem:[%s217 + $0x18d0] sm:$0xff]
      %v1299 = vld [vmem:[%s217 + $0x18d8] sm:$0xff]
      %v1300 = vld [vmem:[%s217 + $0x18e0] sm:$0xff]
      %v1301 = vld [vmem:[%s217 + $0x18e8] sm:$0xff]
      %v1302 = vld [vmem:[%s217 + $0x18f0] sm:$0xff]
      %v1303 = vld [vmem:[%s217 + $0x18f8] sm:$0xff]
      %v1304 = vld [vmem:[%s217 + $0x1900] sm:$0xff]
      %v1305 = vld [vmem:[%s217 + $0x1908] sm:$0xff]
      %v1306 = vld [vmem:[%s217 + $0x1910] sm:$0xff]
      %v1307 = vld [vmem:[%s217 + $0x1918] sm:$0xff]
      %v1308 = vld [vmem:[%s217 + $0x1920] sm:$0xff]
      %v1309 = vld [vmem:[%s217 + $0x1928] sm:$0xff]
      %v1310 = vld [vmem:[%s217 + $0x1930] sm:$0xff]
      %v1311 = vld [vmem:[%s217 + $0x1938] sm:$0xff]
      %v1312 = vld [vmem:[%s217 + $0x1940] sm:$0xff]
      %v1313 = vld [vmem:[%s217 + $0x1948] sm:$0xff]
      %v1314 = vld [vmem:[%s217 + $0x1950] sm:$0xff]
      %v1315 = vld [vmem:[%s217 + $0x1958] sm:$0xff]
      %v1316 = vld [vmem:[%s217 + $0x1960] sm:$0xff]
      %v1317 = vld [vmem:[%s217 + $0x1968] sm:$0xff]
      %v1318 = vld [vmem:[%s217 + $0x1970] sm:$0xff]
      %v1319 = vld [vmem:[%s217 + $0x1978] sm:$0xff]
      %v1320 = vld [vmem:[%s217 + $0x1980] sm:$0xff]
      %v1321 = vld [vmem:[%s217 + $0x1988] sm:$0xff]
      %v1322 = vld [vmem:[%s217 + $0x1990] sm:$0xff]
      %v1323 = vld [vmem:[%s217 + $0x1998] sm:$0xff]
      %v1324 = vld [vmem:[%s217 + $0x19a0] sm:$0xff]
      %v1325 = vld [vmem:[%s217 + $0x19a8] sm:$0xff]
      %v1326 = vld [vmem:[%s217 + $0x19b0] sm:$0xff]
      %v1327 = vld [vmem:[%s217 + $0x19b8] sm:$0xff]
      %v1328 = vld [vmem:[%s217 + $0x19c0] sm:$0xff]
      %v1329 = vld [vmem:[%s217 + $0x19c8] sm:$0xff]
      %v1330 = vld [vmem:[%s217 + $0x19d0] sm:$0xff]
      %v1331 = vld [vmem:[%s217 + $0x19d8] sm:$0xff]
      %v1332 = vld [vmem:[%s217 + $0x19e0] sm:$0xff]
      %v1333 = vld [vmem:[%s217 + $0x19e8] sm:$0xff]
      %v1334 = vld [vmem:[%s217 + $0x19f0] sm:$0xff]
      %v1335 = vld [vmem:[%s217 + $0x19f8] sm:$0xff]
      %v1336 = vld [vmem:[%s217 + $0x1a00] sm:$0xff]
      %v1337 = vld [vmem:[%s217 + $0x1a08] sm:$0xff]
      %v1338 = vld [vmem:[%s217 + $0x1a10] sm:$0xff]
      %v1339 = vld [vmem:[%s217 + $0x1a18] sm:$0xff]
      %v1340 = vld [vmem:[%s217 + $0x1a20] sm:$0xff]
      %v1341 = vld [vmem:[%s217 + $0x1a28] sm:$0xff]
      %v1342 = vld [vmem:[%s217 + $0x1a30] sm:$0xff]
      %v1343 = vld [vmem:[%s217 + $0x1a38] sm:$0xff]
      %v1344 = vld [vmem:[%s217 + $0x1a40] sm:$0xff]
      %v1345 = vld [vmem:[%s217 + $0x1a48] sm:$0xff]
      %v1346 = vld [vmem:[%s217 + $0x1a50] sm:$0xff]
      %v1347 = vld [vmem:[%s217 + $0x1a58] sm:$0xff]
      %v1348 = vld [vmem:[%s217 + $0x1a60] sm:$0xff]
      %v1349 = vld [vmem:[%s217 + $0x1a68] sm:$0xff]
      %v1350 = vld [vmem:[%s217 + $0x1a70] sm:$0xff]
      %v1351 = vld [vmem:[%s217 + $0x1a78] sm:$0xff]
      %v1352 = vld [vmem:[%s217 + $0x1a80] sm:$0xff]
      %v1353 = vld [vmem:[%s217 + $0x1a88] sm:$0xff]
      %v1354 = vld [vmem:[%s217 + $0x1a90] sm:$0xff]
      %v1355 = vld [vmem:[%s217 + $0x1a98] sm:$0xff]
      %v1356 = vld [vmem:[%s217 + $0x1aa0] sm:$0xff]
      %v1357 = vld [vmem:[%s217 + $0x1aa8] sm:$0xff]
      %v1358 = vld [vmem:[%s217 + $0x1ab0] sm:$0xff]
      %v1359 = vld [vmem:[%s217 + $0x1ab8] sm:$0xff]
      %v1360 = vld [vmem:[%s217 + $0x1ac0] sm:$0xff]
      %v1361 = vld [vmem:[%s217 + $0x1ac8] sm:$0xff]
      %v1362 = vld [vmem:[%s217 + $0x1ad0] sm:$0xff]
      %v1363 = vld [vmem:[%s217 + $0x1ad8] sm:$0xff]
      %v1364 = vld [vmem:[%s217 + $0x1ae0] sm:$0xff]
      %v1365 = vld [vmem:[%s217 + $0x1ae8] sm:$0xff]
      %v1366 = vld [vmem:[%s217 + $0x1af0] sm:$0xff]
      %v1367 = vld [vmem:[%s217 + $0x1af8] sm:$0xff]
      %v1368 = vld [vmem:[%s217 + $0x1b00] sm:$0xff]
      %v1369 = vld [vmem:[%s217 + $0x1b08] sm:$0xff]
      %v1370 = vld [vmem:[%s217 + $0x1b10] sm:$0xff]
      %v1371 = vld [vmem:[%s217 + $0x1b18] sm:$0xff]
      %v1372 = vld [vmem:[%s217 + $0x1b20] sm:$0xff]
      %v1373 = vld [vmem:[%s217 + $0x1b28] sm:$0xff]
      %v1374 = vld [vmem:[%s217 + $0x1b30] sm:$0xff]
      %v1375 = vld [vmem:[%s217 + $0x1b38] sm:$0xff]
      %v1376 = vld [vmem:[%s217 + $0x1b40] sm:$0xff]
      %v1377 = vld [vmem:[%s217 + $0x1b48] sm:$0xff]
      %v1378 = vld [vmem:[%s217 + $0x1b50] sm:$0xff]
      %v1379 = vld [vmem:[%s217 + $0x1b58] sm:$0xff]
      %v1380 = vld [vmem:[%s217 + $0x1b60] sm:$0xff]
      %v1381 = vld [vmem:[%s217 + $0x1b68] sm:$0xff]
      %v1382 = vld [vmem:[%s217 + $0x1b70] sm:$0xff]
      %v1383 = vld [vmem:[%s217 + $0x1b78] sm:$0xff]
      %v1384 = vld [vmem:[%s217 + $0x1b80] sm:$0xff]
      %v1385 = vld [vmem:[%s217 + $0x1b88] sm:$0xff]
      %v1386 = vld [vmem:[%s217 + $0x1b90] sm:$0xff]
      %v1387 = vld [vmem:[%s217 + $0x1b98] sm:$0xff]
      %v1388 = vld [vmem:[%s217 + $0x1ba0] sm:$0xff]
      %v1389 = vld [vmem:[%s217 + $0x1ba8] sm:$0xff]
      %v1390 = vld [vmem:[%s217 + $0x1bb0] sm:$0xff]
      %v1391 = vld [vmem:[%s217 + $0x1bb8] sm:$0xff]
      %v1392 = vld [vmem:[%s217 + $0x1bc0] sm:$0xff]
      %v1393 = vld [vmem:[%s217 + $0x1bc8] sm:$0xff]
      %v1394 = vld [vmem:[%s217 + $0x1bd0] sm:$0xff]
      %v1395 = vld [vmem:[%s217 + $0x1bd8] sm:$0xff]
      %v1396 = vld [vmem:[%s217 + $0x1be0] sm:$0xff]
      %v1397 = vld [vmem:[%s217 + $0x1be8] sm:$0xff]
      %v1398 = vld [vmem:[%s217 + $0x1bf0] sm:$0xff]
      %v1399 = vld [vmem:[%s217 + $0x1bf8] sm:$0xff]
      %v1400 = vld [vmem:[%s217 + $0x1c00] sm:$0xff]
      %v1401 = vld [vmem:[%s217 + $0x1c08] sm:$0xff]
      %v1402 = vld [vmem:[%s217 + $0x1c10] sm:$0xff]
      %v1403 = vld [vmem:[%s217 + $0x1c18] sm:$0xff]
      %v1404 = vld [vmem:[%s217 + $0x1c20] sm:$0xff]
      %v1405 = vld [vmem:[%s217 + $0x1c28] sm:$0xff]
      %v1406 = vld [vmem:[%s217 + $0x1c30] sm:$0xff]
      %v1407 = vld [vmem:[%s217 + $0x1c38] sm:$0xff]
      %v1408 = vld [vmem:[%s217 + $0x1c40] sm:$0xff]
      %v1409 = vld [vmem:[%s217 + $0x1c48] sm:$0xff]
      %v1410 = vld [vmem:[%s217 + $0x1c50] sm:$0xff]
      %v1411 = vld [vmem:[%s217 + $0x1c58] sm:$0xff]
      %v1412 = vld [vmem:[%s217 + $0x1c60] sm:$0xff]
      %v1413 = vld [vmem:[%s217 + $0x1c68] sm:$0xff]
      %v1414 = vld [vmem:[%s217 + $0x1c70] sm:$0xff]
      %v1415 = vld [vmem:[%s217 + $0x1c78] sm:$0xff]
      %v1416 = vld [vmem:[%s217 + $0x1c80] sm:$0xff]
      %v1417 = vld [vmem:[%s217 + $0x1c88] sm:$0xff]
      %v1418 = vld [vmem:[%s217 + $0x1c90] sm:$0xff]
      %v1419 = vld [vmem:[%s217 + $0x1c98] sm:$0xff]
      %v1420 = vld [vmem:[%s217 + $0x1ca0] sm:$0xff]
      %v1421 = vld [vmem:[%s217 + $0x1ca8] sm:$0xff]
      %v1422 = vld [vmem:[%s217 + $0x1cb0] sm:$0xff]
      %v1423 = vld [vmem:[%s217 + $0x1cb8] sm:$0xff]
      %v1424 = vld [vmem:[%s217 + $0x1cc0] sm:$0xff]
      %v1425 = vld [vmem:[%s217 + $0x1cc8] sm:$0xff]
      %v1426 = vld [vmem:[%s217 + $0x1cd0] sm:$0xff]
      %v1427 = vld [vmem:[%s217 + $0x1cd8] sm:$0xff]
      %v1428 = vld [vmem:[%s217 + $0x1ce0] sm:$0xff]
      %v1429 = vld [vmem:[%s217 + $0x1ce8] sm:$0xff]
      %v1430 = vld [vmem:[%s217 + $0x1cf0] sm:$0xff]
      %v1431 = vld [vmem:[%s217 + $0x1cf8] sm:$0xff]
      %v1432 = vld [vmem:[%s217 + $0x1d00] sm:$0xff]
      %v1433 = vld [vmem:[%s217 + $0x1d08] sm:$0xff]
      %v1434 = vld [vmem:[%s217 + $0x1d10] sm:$0xff]
      %v1435 = vld [vmem:[%s217 + $0x1d18] sm:$0xff]
      %v1436 = vld [vmem:[%s217 + $0x1d20] sm:$0xff]
      %v1437 = vld [vmem:[%s217 + $0x1d28] sm:$0xff]
      %v1438 = vld [vmem:[%s217 + $0x1d30] sm:$0xff]
      %v1439 = vld [vmem:[%s217 + $0x1d38] sm:$0xff]
      %v1440 = vld [vmem:[%s217 + $0x1d40] sm:$0xff]
      %v1441 = vld [vmem:[%s217 + $0x1d48] sm:$0xff]
      %v1442 = vld [vmem:[%s217 + $0x1d50] sm:$0xff]
      %v1443 = vld [vmem:[%s217 + $0x1d58] sm:$0xff]
      %v1444 = vld [vmem:[%s217 + $0x1d60] sm:$0xff]
      %v1445 = vld [vmem:[%s217 + $0x1d68] sm:$0xff]
      %v1446 = vld [vmem:[%s217 + $0x1d70] sm:$0xff]
      %v1447 = vld [vmem:[%s217 + $0x1d78] sm:$0xff]
      %v1448 = vld [vmem:[%s217 + $0x1d80] sm:$0xff]
      %v1449 = vld [vmem:[%s217 + $0x1d88] sm:$0xff]
      %v1450 = vld [vmem:[%s217 + $0x1d90] sm:$0xff]
      %v1451 = vld [vmem:[%s217 + $0x1d98] sm:$0xff]
      %v1452 = vld [vmem:[%s217 + $0x1da0] sm:$0xff]
      %v1453 = vld [vmem:[%s217 + $0x1da8] sm:$0xff]
      %v1454 = vld [vmem:[%s217 + $0x1db0] sm:$0xff]
      %v1455 = vld [vmem:[%s217 + $0x1db8] sm:$0xff]
      %v1456 = vld [vmem:[%s217 + $0x1dc0] sm:$0xff]
      %v1457 = vld [vmem:[%s217 + $0x1dc8] sm:$0xff]
      %v1458 = vld [vmem:[%s217 + $0x1dd0] sm:$0xff]
      %v1459 = vld [vmem:[%s217 + $0x1dd8] sm:$0xff]
      %v1460 = vld [vmem:[%s217 + $0x1de0] sm:$0xff]
      %v1461 = vld [vmem:[%s217 + $0x1de8] sm:$0xff]
      %v1462 = vld [vmem:[%s217 + $0x1df0] sm:$0xff]
      %v1463 = vld [vmem:[%s217 + $0x1df8] sm:$0xff]
      %v1464 = vld [vmem:[%s217 + $0x1e00] sm:$0xff]
      %v1465 = vld [vmem:[%s217 + $0x1e08] sm:$0xff]
      %v1466 = vld [vmem:[%s217 + $0x1e10] sm:$0xff]
      %v1467 = vld [vmem:[%s217 + $0x1e18] sm:$0xff]
      %v1468 = vld [vmem:[%s217 + $0x1e20] sm:$0xff]
      %v1469 = vld [vmem:[%s217 + $0x1e28] sm:$0xff]
      %v1470 = vld [vmem:[%s217 + $0x1e30] sm:$0xff]
      %v1471 = vld [vmem:[%s217 + $0x1e38] sm:$0xff]
      %v1472 = vld [vmem:[%s217 + $0x1e40] sm:$0xff]
      %v1473 = vld [vmem:[%s217 + $0x1e48] sm:$0xff]
      %v1474 = vld [vmem:[%s217 + $0x1e50] sm:$0xff]
      %v1475 = vld [vmem:[%s217 + $0x1e58] sm:$0xff]
      %v1476 = vld [vmem:[%s217 + $0x1e60] sm:$0xff]
      %v1477 = vld [vmem:[%s217 + $0x1e68] sm:$0xff]
      %v1478 = vld [vmem:[%s217 + $0x1e70] sm:$0xff]
      %v1479 = vld [vmem:[%s217 + $0x1e78] sm:$0xff]
      %v1480 = vld [vmem:[%s217 + $0x1e80] sm:$0xff]
      %v1481 = vld [vmem:[%s217 + $0x1e88] sm:$0xff]
      %v1482 = vld [vmem:[%s217 + $0x1e90] sm:$0xff]
      %v1483 = vld [vmem:[%s217 + $0x1e98] sm:$0xff]
      %v1484 = vld [vmem:[%s217 + $0x1ea0] sm:$0xff]
      %v1485 = vld [vmem:[%s217 + $0x1ea8] sm:$0xff]
      %v1486 = vld [vmem:[%s217 + $0x1eb0] sm:$0xff]
      %v1487 = vld [vmem:[%s217 + $0x1eb8] sm:$0xff]
      %v1488 = vld [vmem:[%s217 + $0x1ec0] sm:$0xff]
      %v1489 = vld [vmem:[%s217 + $0x1ec8] sm:$0xff]
      %v1490 = vld [vmem:[%s217 + $0x1ed0] sm:$0xff]
      %v1491 = vld [vmem:[%s217 + $0x1ed8] sm:$0xff]
      %v1492 = vld [vmem:[%s217 + $0x1ee0] sm:$0xff]
      %v1493 = vld [vmem:[%s217 + $0x1ee8] sm:$0xff]
      %v1494 = vld [vmem:[%s217 + $0x1ef0] sm:$0xff]
      %v1495 = vld [vmem:[%s217 + $0x1ef8] sm:$0xff]
      %v1496 = vld [vmem:[%s217 + $0x1f00] sm:$0xff]
      %v1497 = vld [vmem:[%s217 + $0x1f08] sm:$0xff]
      %v1498 = vld [vmem:[%s217 + $0x1f10] sm:$0xff]
      %v1499 = vld [vmem:[%s217 + $0x1f18] sm:$0xff]
      %v1500 = vld [vmem:[%s217 + $0x1f20] sm:$0xff]
      %v1501 = vld [vmem:[%s217 + $0x1f28] sm:$0xff]
      %v1502 = vld [vmem:[%s217 + $0x1f30] sm:$0xff]
      %v1503 = vld [vmem:[%s217 + $0x1f38] sm:$0xff]
      %v1504 = vld [vmem:[%s217 + $0x1f40] sm:$0xff]
      %v1505 = vld [vmem:[%s217 + $0x1f48] sm:$0xff]
      %v1506 = vld [vmem:[%s217 + $0x1f50] sm:$0xff]
      %v1507 = vld [vmem:[%s217 + $0x1f58] sm:$0xff]
      %v1508 = vld [vmem:[%s217 + $0x1f60] sm:$0xff]
      %v1509 = vld [vmem:[%s217 + $0x1f68] sm:$0xff]
      %v1510 = vld [vmem:[%s217 + $0x1f70] sm:$0xff]
      %v1511 = vld [vmem:[%s217 + $0x1f78] sm:$0xff]
      %v1512 = vld [vmem:[%s217 + $0x1f80] sm:$0xff]
      %v1513 = vld [vmem:[%s217 + $0x1f88] sm:$0xff]
      %v1514 = vld [vmem:[%s217 + $0x1f90] sm:$0xff]
      %v1515 = vld [vmem:[%s217 + $0x1f98] sm:$0xff]
      %v1516 = vld [vmem:[%s217 + $0x1fa0] sm:$0xff]
      %v1517 = vld [vmem:[%s217 + $0x1fa8] sm:$0xff]
      %v1518 = vld [vmem:[%s217 + $0x1fb0] sm:$0xff]
      %v1519 = vld [vmem:[%s217 + $0x1fb8] sm:$0xff]
      %v1520 = vld [vmem:[%s217 + $0x1fc0] sm:$0xff]
      %v1521 = vld [vmem:[%s217 + $0x1fc8] sm:$0xff]
      %v1522 = vld [vmem:[%s217 + $0x1fd0] sm:$0xff]
      %v1523 = vld [vmem:[%s217 + $0x1fd8] sm:$0xff]
      %v1524 = vld [vmem:[%s217 + $0x1fe0] sm:$0xff]
      %v1525 = vld [vmem:[%s217 + $0x1fe8] sm:$0xff]
      %v1526 = vld [vmem:[%s217 + $0x1ff0] sm:$0xff]
      %v1527 = vld [vmem:[%s217 + $0x1ff8] sm:$0xff]
      %v1528 = vld [vmem:[%s217 + $0x2000] sm:$0xff]
      %v1529 = vld [vmem:[%s217 + $0x2008] sm:$0xff]
      %v1530 = vld [vmem:[%s217 + $0x2010] sm:$0xff]
      %v1531 = vld [vmem:[%s217 + $0x2018] sm:$0xff]
      %v1532 = vld [vmem:[%s217 + $0x2020] sm:$0xff]
      %v1533 = vld [vmem:[%s217 + $0x2028] sm:$0xff]
      %v1534 = vld [vmem:[%s217 + $0x2030] sm:$0xff]
      %v1535 = vld [vmem:[%s217 + $0x2038] sm:$0xff]
      %v1536 = vld [vmem:[%s217 + $0x2040] sm:$0xff]
      %v1537 = vld [vmem:[%s217 + $0x2048] sm:$0xff]
      %v1538 = vld [vmem:[%s217 + $0x2050] sm:$0xff]
      %v1539 = vld [vmem:[%s217 + $0x2058] sm:$0xff]
      %v1540 = vld [vmem:[%s217 + $0x2060] sm:$0xff]
      %v1541 = vld [vmem:[%s217 + $0x2068] sm:$0xff]
      %v1542 = vld [vmem:[%s217 + $0x2070] sm:$0xff]
      %v1543 = vld [vmem:[%s217 + $0x2078] sm:$0xff]
      %v1544 = vld [vmem:[%s217 + $0x2080] sm:$0xff]
      %v1545 = vld [vmem:[%s217 + $0x2088] sm:$0xff]
      %v1546 = vld [vmem:[%s217 + $0x2090] sm:$0xff]
      %v1547 = vld [vmem:[%s217 + $0x2098] sm:$0xff]
      %v1548 = vld [vmem:[%s217 + $0x20a0] sm:$0xff]
      %v1549 = vld [vmem:[%s217 + $0x20a8] sm:$0xff]
      %v1550 = vld [vmem:[%s217 + $0x20b0] sm:$0xff]
      %v1551 = vld [vmem:[%s217 + $0x20b8] sm:$0xff]
      %v1552 = vld [vmem:[%s217 + $0x20c0] sm:$0xff]
      %v1553 = vld [vmem:[%s217 + $0x20c8] sm:$0xff]
      %v1554 = vld [vmem:[%s217 + $0x20d0] sm:$0xff]
      %v1555 = vld [vmem:[%s217 + $0x20d8] sm:$0xff]
      %v1556 = vld [vmem:[%s217 + $0x20e0] sm:$0xff]
      %v1557 = vld [vmem:[%s217 + $0x20e8] sm:$0xff]
      %v1558 = vld [vmem:[%s217 + $0x20f0] sm:$0xff]
      %v1559 = vld [vmem:[%s217 + $0x20f8] sm:$0xff]
      %v1560 = vld [vmem:[%s217 + $0x2100] sm:$0xff]
      %v1561 = vld [vmem:[%s217 + $0x2108] sm:$0xff]
      %v1562 = vld [vmem:[%s217 + $0x2110] sm:$0xff]
      %v1563 = vld [vmem:[%s217 + $0x2118] sm:$0xff]
      %v1564 = vld [vmem:[%s217 + $0x2120] sm:$0xff]
      %v1565 = vld [vmem:[%s217 + $0x2128] sm:$0xff]
      %v1566 = vld [vmem:[%s217 + $0x2130] sm:$0xff]
      %v1567 = vld [vmem:[%s217 + $0x2138] sm:$0xff]
      %v1568 = vld [vmem:[%s217 + $0x2140] sm:$0xff]
      %v1569 = vld [vmem:[%s217 + $0x2148] sm:$0xff]
      %v1570 = vld [vmem:[%s217 + $0x2150] sm:$0xff]
      %v1571 = vld [vmem:[%s217 + $0x2158] sm:$0xff]
      %v1572 = vld [vmem:[%s217 + $0x2160] sm:$0xff]
      %v1573 = vld [vmem:[%s217 + $0x2168] sm:$0xff]
      %v1574 = vld [vmem:[%s217 + $0x2170] sm:$0xff]
      %v1575 = vld [vmem:[%s217 + $0x2178] sm:$0xff]
      %v1576 = vld [vmem:[%s217 + $0x2180] sm:$0xff]
      %v1577 = vld [vmem:[%s217 + $0x2188] sm:$0xff]
      %v1578 = vld [vmem:[%s217 + $0x2190] sm:$0xff]
      %v1579 = vld [vmem:[%s217 + $0x2198] sm:$0xff]
      %v1580 = vld [vmem:[%s217 + $0x21a0] sm:$0xff]
      %v1581 = vld [vmem:[%s217 + $0x21a8] sm:$0xff]
      %v1582 = vld [vmem:[%s217 + $0x21b0] sm:$0xff]
      %v1583 = vld [vmem:[%s217 + $0x21b8] sm:$0xff]
      %v1584 = vld [vmem:[%s217 + $0x21c0] sm:$0xff]
      %v1585 = vld [vmem:[%s217 + $0x21c8] sm:$0xff]
      %v1586 = vld [vmem:[%s217 + $0x21d0] sm:$0xff]
      %v1587 = vld [vmem:[%s217 + $0x21d8] sm:$0xff]
      %v1588 = vld [vmem:[%s217 + $0x21e0] sm:$0xff]
      %v1589 = vld [vmem:[%s217 + $0x21e8] sm:$0xff]
      %v1590 = vld [vmem:[%s217 + $0x21f0] sm:$0xff]
      %v1591 = vld [vmem:[%s217 + $0x21f8] sm:$0xff]
      %v1592 = vld [vmem:[%s217 + $0x2200] sm:$0xff]
      %v1593 = vld [vmem:[%s217 + $0x2208] sm:$0xff]
      %v1594 = vld [vmem:[%s217 + $0x2210] sm:$0xff]
      %v1595 = vld [vmem:[%s217 + $0x2218] sm:$0xff]
      %v1596 = vld [vmem:[%s217 + $0x2220] sm:$0xff]
      %v1597 = vld [vmem:[%s217 + $0x2228] sm:$0xff]
      %v1598 = vld [vmem:[%s217 + $0x2230] sm:$0xff]
      %v1599 = vld [vmem:[%s217 + $0x2238] sm:$0xff]
      %v1600 = vld [vmem:[%s217 + $0x2240] sm:$0xff]
      %v1601 = vld [vmem:[%s217 + $0x2248] sm:$0xff]
      %v1602 = vld [vmem:[%s217 + $0x2250] sm:$0xff]
      %v1603 = vld [vmem:[%s217 + $0x2258] sm:$0xff]
      %v1604 = vld [vmem:[%s217 + $0x2260] sm:$0xff]
      %v1605 = vld [vmem:[%s217 + $0x2268] sm:$0xff]
      %v1606 = vld [vmem:[%s217 + $0x2270] sm:$0xff]
      %v1607 = vld [vmem:[%s217 + $0x2278] sm:$0xff]
      %v1608 = vld [vmem:[%s217 + $0x2280] sm:$0xff]
      %v1609 = vld [vmem:[%s217 + $0x2288] sm:$0xff]
      %v1610 = vld [vmem:[%s217 + $0x2290] sm:$0xff]
      %v1611 = vld [vmem:[%s217 + $0x2298] sm:$0xff]
      %v1612 = vld [vmem:[%s217 + $0x22a0] sm:$0xff]
      %v1613 = vld [vmem:[%s217 + $0x22a8] sm:$0xff]
      %v1614 = vld [vmem:[%s217 + $0x22b0] sm:$0xff]
      %v1615 = vld [vmem:[%s217 + $0x22b8] sm:$0xff]
      %v1616 = vld [vmem:[%s217 + $0x22c0] sm:$0xff]
      %v1617 = vld [vmem:[%s217 + $0x22c8] sm:$0xff]
      %v1618 = vld [vmem:[%s217 + $0x22d0] sm:$0xff]
      %v1619 = vld [vmem:[%s217 + $0x22d8] sm:$0xff]
      %v1620 = vld [vmem:[%s217 + $0x22e0] sm:$0xff]
      %v1621 = vld [vmem:[%s217 + $0x22e8] sm:$0xff]
      %v1622 = vld [vmem:[%s217 + $0x22f0] sm:$0xff]
      %v1623 = vld [vmem:[%s217 + $0x22f8] sm:$0xff]
      %v1624 = vld [vmem:[%s217 + $0x2300] sm:$0xff]
      %v1625 = vld [vmem:[%s217 + $0x2308] sm:$0xff]
      %v1626 = vld [vmem:[%s217 + $0x2310] sm:$0xff]
      %v1627 = vld [vmem:[%s217 + $0x2318] sm:$0xff]
      %v1628 = vld [vmem:[%s217 + $0x2320] sm:$0xff]
      %v1629 = vld [vmem:[%s217 + $0x2328] sm:$0xff]
      %v1630 = vld [vmem:[%s217 + $0x2330] sm:$0xff]
      %v1631 = vld [vmem:[%s217 + $0x2338] sm:$0xff]
      %v1632 = vld [vmem:[%s217 + $0x2340] sm:$0xff]
      %v1633 = vld [vmem:[%s217 + $0x2348] sm:$0xff]
      %v1634 = vld [vmem:[%s217 + $0x2350] sm:$0xff]
      %v1635 = vld [vmem:[%s217 + $0x2358] sm:$0xff]
      %v1636 = vld [vmem:[%s217 + $0x2360] sm:$0xff]
      %v1637 = vld [vmem:[%s217 + $0x2368] sm:$0xff]
      %v1638 = vld [vmem:[%s217 + $0x2370] sm:$0xff]
      %v1639 = vld [vmem:[%s217 + $0x2378] sm:$0xff]
      %v1640 = vld [vmem:[%s217 + $0x2380] sm:$0xff]
      %v1641 = vld [vmem:[%s217 + $0x2388] sm:$0xff]
      %v1642 = vld [vmem:[%s217 + $0x2390] sm:$0xff]
      %v1643 = vld [vmem:[%s217 + $0x2398] sm:$0xff]
      %v1644 = vld [vmem:[%s217 + $0x23a0] sm:$0xff]
      %v1645 = vld [vmem:[%s217 + $0x23a8] sm:$0xff]
      %v1646 = vld [vmem:[%s217 + $0x23b0] sm:$0xff]
      %v1647 = vld [vmem:[%s217 + $0x23b8] sm:$0xff]
      %v1648 = vld [vmem:[%s217 + $0x23c0] sm:$0xff]
      %v1649 = vld [vmem:[%s217 + $0x23c8] sm:$0xff]
      %v1650 = vld [vmem:[%s217 + $0x23d0] sm:$0xff]
      %v1651 = vld [vmem:[%s217 + $0x23d8] sm:$0xff]
      %v1652 = vld [vmem:[%s217 + $0x23e0] sm:$0xff]
      %v1653 = vld [vmem:[%s217 + $0x23e8] sm:$0xff]
      %v1654 = vld [vmem:[%s217 + $0x23f0] sm:$0xff]
      %v1655 = vld [vmem:[%s217 + $0x23f8] sm:$0xff]
      %v1656 = vld [vmem:[%s221] sm:$0x3]
      %v1658 = vperm.slane %v1656, 0
      %v1659 = vperm.slane %v1656, 1
      %v2814 = vunpack.c.l.b16 %v504
      %v2815 = vunpack.c.h.b16 %v504
      %v2816 = vunpack.c.l.b16 %v505
      %v2817 = vunpack.c.h.b16 %v505
      %v2818 = vunpack.c.l.b16 %v506
      %v2819 = vunpack.c.h.b16 %v506
      %v2820 = vunpack.c.l.b16 %v507
      %v2821 = vunpack.c.h.b16 %v507
      %v2822 = vunpack.c.l.b16 %v508
      %v2823 = vunpack.c.h.b16 %v508
      %v2824 = vunpack.c.l.b16 %v509
      %v2825 = vunpack.c.h.b16 %v509
      %v2826 = vunpack.c.l.b16 %v510
      %v2827 = vunpack.c.h.b16 %v510
      %v2828 = vunpack.c.l.b16 %v511
      %v2829 = vunpack.c.h.b16 %v511
      %v2830 = vunpack.c.l.b16 %v512
      %v2831 = vunpack.c.h.b16 %v512
      %v2832 = vunpack.c.l.b16 %v513
      %v2833 = vunpack.c.h.b16 %v513
      %v2834 = vunpack.c.l.b16 %v514
      %v2835 = vunpack.c.h.b16 %v514
      %v2836 = vunpack.c.l.b16 %v515
      %v2837 = vunpack.c.h.b16 %v515
      %v2838 = vunpack.c.l.b16 %v516
      %v2839 = vunpack.c.h.b16 %v516
      %v2840 = vunpack.c.l.b16 %v517
      %v2841 = vunpack.c.h.b16 %v517
      %v2842 = vunpack.c.l.b16 %v518
      %v2843 = vunpack.c.h.b16 %v518
      %v2844 = vunpack.c.l.b16 %v519
      %v2845 = vunpack.c.h.b16 %v519
      %v2846 = vunpack.c.l.b16 %v520
      %v2847 = vunpack.c.h.b16 %v520
      %v2848 = vunpack.c.l.b16 %v521
      %v2849 = vunpack.c.h.b16 %v521
      %v2850 = vunpack.c.l.b16 %v522
      %v2851 = vunpack.c.h.b16 %v522
      %v2852 = vunpack.c.l.b16 %v523
      %v2853 = vunpack.c.h.b16 %v523
      %v2854 = vunpack.c.l.b16 %v524
      %v2855 = vunpack.c.h.b16 %v524
      %v2856 = vunpack.c.l.b16 %v525
      %v2857 = vunpack.c.h.b16 %v525
      %v2858 = vunpack.c.l.b16 %v526
      %v2859 = vunpack.c.h.b16 %v526
      %v2860 = vunpack.c.l.b16 %v527
      %v2861 = vunpack.c.h.b16 %v527
      %v2862 = vunpack.c.l.b16 %v528
      %v2863 = vunpack.c.h.b16 %v528
      %v2864 = vunpack.c.l.b16 %v529
      %v2865 = vunpack.c.h.b16 %v529
      %v2866 = vunpack.c.l.b16 %v530
      %v2867 = vunpack.c.h.b16 %v530
      %v2868 = vunpack.c.l.b16 %v531
      %v2869 = vunpack.c.h.b16 %v531
      %v2870 = vunpack.c.l.b16 %v532
      %v2871 = vunpack.c.h.b16 %v532
      %v2872 = vunpack.c.l.b16 %v533
      %v2873 = vunpack.c.h.b16 %v533
      %v2874 = vunpack.c.l.b16 %v534
      %v2875 = vunpack.c.h.b16 %v534
      %v2876 = vunpack.c.l.b16 %v535
      %v2877 = vunpack.c.h.b16 %v535
      %v2878 = vunpack.c.l.b16 %v536
      %v2879 = vunpack.c.h.b16 %v536
      %v2880 = vunpack.c.l.b16 %v537
      %v2881 = vunpack.c.h.b16 %v537
      %v2882 = vunpack.c.l.b16 %v538
      %v2883 = vunpack.c.h.b16 %v538
      %v2884 = vunpack.c.l.b16 %v539
      %v2885 = vunpack.c.h.b16 %v539
      %v2886 = vunpack.c.l.b16 %v540
      %v2887 = vunpack.c.h.b16 %v540
      %v2888 = vunpack.c.l.b16 %v541
      %v2889 = vunpack.c.h.b16 %v541
      %v2890 = vunpack.c.l.b16 %v542
      %v2891 = vunpack.c.h.b16 %v542
      %v2892 = vunpack.c.l.b16 %v543
      %v2893 = vunpack.c.h.b16 %v543
      %v2894 = vunpack.c.l.b16 %v544
      %v2895 = vunpack.c.h.b16 %v544
      %v2896 = vunpack.c.l.b16 %v545
      %v2897 = vunpack.c.h.b16 %v545
      %v2898 = vunpack.c.l.b16 %v546
      %v2899 = vunpack.c.h.b16 %v546
      %v2900 = vunpack.c.l.b16 %v547
      %v2901 = vunpack.c.h.b16 %v547
      %v2902 = vunpack.c.l.b16 %v548
      %v2903 = vunpack.c.h.b16 %v548
      %v2904 = vunpack.c.l.b16 %v549
      %v2905 = vunpack.c.h.b16 %v549
      %v2906 = vunpack.c.l.b16 %v550
      %v2907 = vunpack.c.h.b16 %v550
      %v2908 = vunpack.c.l.b16 %v551
      %v2909 = vunpack.c.h.b16 %v551
      %v2910 = vunpack.c.l.b16 %v552
      %v2911 = vunpack.c.h.b16 %v552
      %v2912 = vunpack.c.l.b16 %v553
      %v2913 = vunpack.c.h.b16 %v553
      %v2914 = vunpack.c.l.b16 %v554
      %v2915 = vunpack.c.h.b16 %v554
      %v2916 = vunpack.c.l.b16 %v555
      %v2917 = vunpack.c.h.b16 %v555
      %v2918 = vunpack.c.l.b16 %v556
      %v2919 = vunpack.c.h.b16 %v556
      %v2920 = vunpack.c.l.b16 %v557
      %v2921 = vunpack.c.h.b16 %v557
      %v2922 = vunpack.c.l.b16 %v558
      %v2923 = vunpack.c.h.b16 %v558
      %v2924 = vunpack.c.l.b16 %v559
      %v2925 = vunpack.c.h.b16 %v559
      %v2926 = vunpack.c.l.b16 %v560
      %v2927 = vunpack.c.h.b16 %v560
      %v2928 = vunpack.c.l.b16 %v561
      %v2929 = vunpack.c.h.b16 %v561
      %v2930 = vunpack.c.l.b16 %v562
      %v2931 = vunpack.c.h.b16 %v562
      %v2932 = vunpack.c.l.b16 %v563
      %v2933 = vunpack.c.h.b16 %v563
      %v2934 = vunpack.c.l.b16 %v564
      %v2935 = vunpack.c.h.b16 %v564
      %v2936 = vunpack.c.l.b16 %v565
      %v2937 = vunpack.c.h.b16 %v565
      %v2938 = vunpack.c.l.b16 %v566
      %v2939 = vunpack.c.h.b16 %v566
      %v2940 = vunpack.c.l.b16 %v567
      %v2941 = vunpack.c.h.b16 %v567
      %v2942 = vunpack.c.l.b16 %v568
      %v2943 = vunpack.c.h.b16 %v568
      %v2944 = vunpack.c.l.b16 %v569
      %v2945 = vunpack.c.h.b16 %v569
      %v2946 = vunpack.c.l.b16 %v570
      %v2947 = vunpack.c.h.b16 %v570
      %v2948 = vunpack.c.l.b16 %v571
      %v2949 = vunpack.c.h.b16 %v571
      %v2950 = vunpack.c.l.b16 %v572
      %v2951 = vunpack.c.h.b16 %v572
      %v2952 = vunpack.c.l.b16 %v573
      %v2953 = vunpack.c.h.b16 %v573
      %v2954 = vunpack.c.l.b16 %v574
      %v2955 = vunpack.c.h.b16 %v574
      %v2956 = vunpack.c.l.b16 %v575
      %v2957 = vunpack.c.h.b16 %v575
      %v2958 = vunpack.c.l.b16 %v576
      %v2959 = vunpack.c.h.b16 %v576
      %v2960 = vunpack.c.l.b16 %v577
      %v2961 = vunpack.c.h.b16 %v577
      %v2962 = vunpack.c.l.b16 %v578
      %v2963 = vunpack.c.h.b16 %v578
      %v2964 = vunpack.c.l.b16 %v579
      %v2965 = vunpack.c.h.b16 %v579
      %v2966 = vunpack.c.l.b16 %v580
      %v2967 = vunpack.c.h.b16 %v580
      %v2968 = vunpack.c.l.b16 %v581
      %v2969 = vunpack.c.h.b16 %v581
      %v2970 = vunpack.c.l.b16 %v582
      %v2971 = vunpack.c.h.b16 %v582
      %v2972 = vunpack.c.l.b16 %v583
      %v2973 = vunpack.c.h.b16 %v583
      %v2974 = vunpack.c.l.b16 %v584
      %v2975 = vunpack.c.h.b16 %v584
      %v2976 = vunpack.c.l.b16 %v585
      %v2977 = vunpack.c.h.b16 %v585
      %v2978 = vunpack.c.l.b16 %v586
      %v2979 = vunpack.c.h.b16 %v586
      %v2980 = vunpack.c.l.b16 %v587
      %v2981 = vunpack.c.h.b16 %v587
      %v2982 = vunpack.c.l.b16 %v588
      %v2983 = vunpack.c.h.b16 %v588
      %v2984 = vunpack.c.l.b16 %v589
      %v2985 = vunpack.c.h.b16 %v589
      %v2986 = vunpack.c.l.b16 %v590
      %v2987 = vunpack.c.h.b16 %v590
      %v2988 = vunpack.c.l.b16 %v591
      %v2989 = vunpack.c.h.b16 %v591
      %v2990 = vunpack.c.l.b16 %v592
      %v2991 = vunpack.c.h.b16 %v592
      %v2992 = vunpack.c.l.b16 %v593
      %v2993 = vunpack.c.h.b16 %v593
      %v2994 = vunpack.c.l.b16 %v594
      %v2995 = vunpack.c.h.b16 %v594
      %v2996 = vunpack.c.l.b16 %v595
      %v2997 = vunpack.c.h.b16 %v595
      %v2998 = vunpack.c.l.b16 %v596
      %v2999 = vunpack.c.h.b16 %v596
      %v3000 = vunpack.c.l.b16 %v597
      %v3001 = vunpack.c.h.b16 %v597
      %v3002 = vunpack.c.l.b16 %v598
      %v3003 = vunpack.c.h.b16 %v598
      %v3004 = vunpack.c.l.b16 %v599
      %v3005 = vunpack.c.h.b16 %v599
      %v3006 = vunpack.c.l.b16 %v600
      %v3007 = vunpack.c.h.b16 %v600
      %v3008 = vunpack.c.l.b16 %v601
      %v3009 = vunpack.c.h.b16 %v601
      %v3010 = vunpack.c.l.b16 %v602
      %v3011 = vunpack.c.h.b16 %v602
      %v3012 = vunpack.c.l.b16 %v603
      %v3013 = vunpack.c.h.b16 %v603
      %v3014 = vunpack.c.l.b16 %v604
      %v3015 = vunpack.c.h.b16 %v604
      %v3016 = vunpack.c.l.b16 %v605
      %v3017 = vunpack.c.h.b16 %v605
      %v3018 = vunpack.c.l.b16 %v606
      %v3019 = vunpack.c.h.b16 %v606
      %v3020 = vunpack.c.l.b16 %v607
      %v3021 = vunpack.c.h.b16 %v607
      %v3022 = vunpack.c.l.b16 %v608
      %v3023 = vunpack.c.h.b16 %v608
      %v3024 = vunpack.c.l.b16 %v609
      %v3025 = vunpack.c.h.b16 %v609
      %v3026 = vunpack.c.l.b16 %v610
      %v3027 = vunpack.c.h.b16 %v610
      %v3028 = vunpack.c.l.b16 %v611
      %v3029 = vunpack.c.h.b16 %v611
      %v3030 = vunpack.c.l.b16 %v612
      %v3031 = vunpack.c.h.b16 %v612
      %v3032 = vunpack.c.l.b16 %v613
      %v3033 = vunpack.c.h.b16 %v613
      %v3034 = vunpack.c.l.b16 %v614
      %v3035 = vunpack.c.h.b16 %v614
      %v3036 = vunpack.c.l.b16 %v615
      %v3037 = vunpack.c.h.b16 %v615
      %v3038 = vunpack.c.l.b16 %v616
      %v3039 = vunpack.c.h.b16 %v616
      %v3040 = vunpack.c.l.b16 %v617
      %v3041 = vunpack.c.h.b16 %v617
      %v3042 = vunpack.c.l.b16 %v618
      %v3043 = vunpack.c.h.b16 %v618
      %v3044 = vunpack.c.l.b16 %v619
      %v3045 = vunpack.c.h.b16 %v619
      %v3046 = vunpack.c.l.b16 %v620
      %v3047 = vunpack.c.h.b16 %v620
      %v3048 = vunpack.c.l.b16 %v621
      %v3049 = vunpack.c.h.b16 %v621
      %v3050 = vunpack.c.l.b16 %v622
      %v3051 = vunpack.c.h.b16 %v622
      %v3052 = vunpack.c.l.b16 %v623
      %v3053 = vunpack.c.h.b16 %v623
      %v3054 = vunpack.c.l.b16 %v624
      %v3055 = vunpack.c.h.b16 %v624
      %v3056 = vunpack.c.l.b16 %v625
      %v3057 = vunpack.c.h.b16 %v625
      %v3058 = vunpack.c.l.b16 %v626
      %v3059 = vunpack.c.h.b16 %v626
      %v3060 = vunpack.c.l.b16 %v627
      %v3061 = vunpack.c.h.b16 %v627
      %v3062 = vunpack.c.l.b16 %v628
      %v3063 = vunpack.c.h.b16 %v628
      %v3064 = vunpack.c.l.b16 %v629
      %v3065 = vunpack.c.h.b16 %v629
      %v3066 = vunpack.c.l.b16 %v630
      %v3067 = vunpack.c.h.b16 %v630
      %v3068 = vunpack.c.l.b16 %v631
      %v3069 = vunpack.c.h.b16 %v631
      %v3070 = vunpack.c.l.b16 %v632
      %v3071 = vunpack.c.h.b16 %v632
      %v3072 = vunpack.c.l.b16 %v633
      %v3073 = vunpack.c.h.b16 %v633
      %v3074 = vunpack.c.l.b16 %v634
      %v3075 = vunpack.c.h.b16 %v634
      %v3076 = vunpack.c.l.b16 %v635
      %v3077 = vunpack.c.h.b16 %v635
      %v3078 = vunpack.c.l.b16 %v636
      %v3079 = vunpack.c.h.b16 %v636
      %v3080 = vunpack.c.l.b16 %v637
      %v3081 = vunpack.c.h.b16 %v637
      %v3082 = vunpack.c.l.b16 %v638
      %v3083 = vunpack.c.h.b16 %v638
      %v3084 = vunpack.c.l.b16 %v639
      %v3085 = vunpack.c.h.b16 %v639
      %v3086 = vunpack.c.l.b16 %v640
      %v3087 = vunpack.c.h.b16 %v640
      %v3088 = vunpack.c.l.b16 %v641
      %v3089 = vunpack.c.h.b16 %v641
      %v3090 = vunpack.c.l.b16 %v642
      %v3091 = vunpack.c.h.b16 %v642
      %v3092 = vunpack.c.l.b16 %v643
      %v3093 = vunpack.c.h.b16 %v643
      %v3094 = vunpack.c.l.b16 %v644
      %v3095 = vunpack.c.h.b16 %v644
      %v3096 = vunpack.c.l.b16 %v645
      %v3097 = vunpack.c.h.b16 %v645
      %v3098 = vunpack.c.l.b16 %v646
      %v3099 = vunpack.c.h.b16 %v646
      %v3100 = vunpack.c.l.b16 %v647
      %v3101 = vunpack.c.h.b16 %v647
      %v3102 = vunpack.c.l.b16 %v648
      %v3103 = vunpack.c.h.b16 %v648
      %v3104 = vunpack.c.l.b16 %v649
      %v3105 = vunpack.c.h.b16 %v649
      %v3106 = vunpack.c.l.b16 %v650
      %v3107 = vunpack.c.h.b16 %v650
      %v3108 = vunpack.c.l.b16 %v651
      %v3109 = vunpack.c.h.b16 %v651
      %v3110 = vunpack.c.l.b16 %v652
      %v3111 = vunpack.c.h.b16 %v652
      %v3112 = vunpack.c.l.b16 %v653
      %v3113 = vunpack.c.h.b16 %v653
      %v3114 = vunpack.c.l.b16 %v654
      %v3115 = vunpack.c.h.b16 %v654
      %v3116 = vunpack.c.l.b16 %v655
      %v3117 = vunpack.c.h.b16 %v655
      %v3118 = vunpack.c.l.b16 %v656
      %v3119 = vunpack.c.h.b16 %v656
      %v3120 = vunpack.c.l.b16 %v657
      %v3121 = vunpack.c.h.b16 %v657
      %v3122 = vunpack.c.l.b16 %v658
      %v3123 = vunpack.c.h.b16 %v658
      %v3124 = vunpack.c.l.b16 %v659
      %v3125 = vunpack.c.h.b16 %v659
      %v3126 = vunpack.c.l.b16 %v660
      %v3127 = vunpack.c.h.b16 %v660
      %v3128 = vunpack.c.l.b16 %v661
      %v3129 = vunpack.c.h.b16 %v661
      %v3130 = vunpack.c.l.b16 %v662
      %v3131 = vunpack.c.h.b16 %v662
      %v3132 = vunpack.c.l.b16 %v663
      %v3133 = vunpack.c.h.b16 %v663
      %v3134 = vunpack.c.l.b16 %v664
      %v3135 = vunpack.c.h.b16 %v664
      %v3136 = vunpack.c.l.b16 %v665
      %v3137 = vunpack.c.h.b16 %v665
      %v3138 = vunpack.c.l.b16 %v666
      %v3139 = vunpack.c.h.b16 %v666
      %v3140 = vunpack.c.l.b16 %v667
      %v3141 = vunpack.c.h.b16 %v667
      %v3142 = vunpack.c.l.b16 %v668
      %v3143 = vunpack.c.h.b16 %v668
      %v3144 = vunpack.c.l.b16 %v669
      %v3145 = vunpack.c.h.b16 %v669
      %v3146 = vunpack.c.l.b16 %v670
      %v3147 = vunpack.c.h.b16 %v670
      %v3148 = vunpack.c.l.b16 %v671
      %v3149 = vunpack.c.h.b16 %v671
      %v3150 = vunpack.c.l.b16 %v672
      %v3151 = vunpack.c.h.b16 %v672
      %v3152 = vunpack.c.l.b16 %v673
      %v3153 = vunpack.c.h.b16 %v673
      %v3154 = vunpack.c.l.b16 %v674
      %v3155 = vunpack.c.h.b16 %v674
      %v3156 = vunpack.c.l.b16 %v675
      %v3157 = vunpack.c.h.b16 %v675
      %v3158 = vunpack.c.l.b16 %v676
      %v3159 = vunpack.c.h.b16 %v676
      %v3160 = vunpack.c.l.b16 %v677
      %v3161 = vunpack.c.h.b16 %v677
      %v3162 = vunpack.c.l.b16 %v678
      %v3163 = vunpack.c.h.b16 %v678
      %v3164 = vunpack.c.l.b16 %v679
      %v3165 = vunpack.c.h.b16 %v679
      %v3166 = vunpack.c.l.b16 %v680
      %v3167 = vunpack.c.h.b16 %v680
      %v3168 = vunpack.c.l.b16 %v681
      %v3169 = vunpack.c.h.b16 %v681
      %v3170 = vunpack.c.l.b16 %v682
      %v3171 = vunpack.c.h.b16 %v682
      %v3172 = vunpack.c.l.b16 %v683
      %v3173 = vunpack.c.h.b16 %v683
      %v3174 = vunpack.c.l.b16 %v684
      %v3175 = vunpack.c.h.b16 %v684
      %v3176 = vunpack.c.l.b16 %v685
      %v3177 = vunpack.c.h.b16 %v685
      %v3178 = vunpack.c.l.b16 %v686
      %v3179 = vunpack.c.h.b16 %v686
      %v3180 = vunpack.c.l.b16 %v687
      %v3181 = vunpack.c.h.b16 %v687
      %v3182 = vunpack.c.l.b16 %v688
      %v3183 = vunpack.c.h.b16 %v688
      %v3184 = vunpack.c.l.b16 %v689
      %v3185 = vunpack.c.h.b16 %v689
      %v3186 = vunpack.c.l.b16 %v690
      %v3187 = vunpack.c.h.b16 %v690
      %v3188 = vunpack.c.l.b16 %v691
      %v3189 = vunpack.c.h.b16 %v691
      %v3190 = vunpack.c.l.b16 %v692
      %v3191 = vunpack.c.h.b16 %v692
      %v3192 = vunpack.c.l.b16 %v693
      %v3193 = vunpack.c.h.b16 %v693
      %v3194 = vunpack.c.l.b16 %v694
      %v3195 = vunpack.c.h.b16 %v694
      %v3196 = vunpack.c.l.b16 %v695
      %v3197 = vunpack.c.h.b16 %v695
      %v3198 = vunpack.c.l.b16 %v696
      %v3199 = vunpack.c.h.b16 %v696
      %v3200 = vunpack.c.l.b16 %v697
      %v3201 = vunpack.c.h.b16 %v697
      %v3202 = vunpack.c.l.b16 %v698
      %v3203 = vunpack.c.h.b16 %v698
      %v3204 = vunpack.c.l.b16 %v699
      %v3205 = vunpack.c.h.b16 %v699
      %v3206 = vunpack.c.l.b16 %v700
      %v3207 = vunpack.c.h.b16 %v700
      %v3208 = vunpack.c.l.b16 %v701
      %v3209 = vunpack.c.h.b16 %v701
      %v3210 = vunpack.c.l.b16 %v702
      %v3211 = vunpack.c.h.b16 %v702
      %v3212 = vunpack.c.l.b16 %v703
      %v3213 = vunpack.c.h.b16 %v703
      %v3214 = vunpack.c.l.b16 %v704
      %v3215 = vunpack.c.h.b16 %v704
      %v3216 = vunpack.c.l.b16 %v705
      %v3217 = vunpack.c.h.b16 %v705
      %v3218 = vunpack.c.l.b16 %v706
      %v3219 = vunpack.c.h.b16 %v706
      %v3220 = vunpack.c.l.b16 %v707
      %v3221 = vunpack.c.h.b16 %v707
      %v3222 = vunpack.c.l.b16 %v708
      %v3223 = vunpack.c.h.b16 %v708
      %v3224 = vunpack.c.l.b16 %v709
      %v3225 = vunpack.c.h.b16 %v709
      %v3226 = vunpack.c.l.b16 %v710
      %v3227 = vunpack.c.h.b16 %v710
      %v3228 = vunpack.c.l.b16 %v711
      %v3229 = vunpack.c.h.b16 %v711
      %v3230 = vunpack.c.l.b16 %v712
      %v3231 = vunpack.c.h.b16 %v712
      %v3232 = vunpack.c.l.b16 %v713
      %v3233 = vunpack.c.h.b16 %v713
      %v3234 = vunpack.c.l.b16 %v714
      %v3235 = vunpack.c.h.b16 %v714
      %v3236 = vunpack.c.l.b16 %v715
      %v3237 = vunpack.c.h.b16 %v715
      %v3238 = vunpack.c.l.b16 %v716
      %v3239 = vunpack.c.h.b16 %v716
      %v3240 = vunpack.c.l.b16 %v717
      %v3241 = vunpack.c.h.b16 %v717
      %v3242 = vunpack.c.l.b16 %v718
      %v3243 = vunpack.c.h.b16 %v718
      %v3244 = vunpack.c.l.b16 %v719
      %v3245 = vunpack.c.h.b16 %v719
      %v3246 = vunpack.c.l.b16 %v720
      %v3247 = vunpack.c.h.b16 %v720
      %v3248 = vunpack.c.l.b16 %v721
      %v3249 = vunpack.c.h.b16 %v721
      %v3250 = vunpack.c.l.b16 %v722
      %v3251 = vunpack.c.h.b16 %v722
      %v3252 = vunpack.c.l.b16 %v723
      %v3253 = vunpack.c.h.b16 %v723
      %v3254 = vunpack.c.l.b16 %v724
      %v3255 = vunpack.c.h.b16 %v724
      %v3256 = vunpack.c.l.b16 %v725
      %v3257 = vunpack.c.h.b16 %v725
      %v3258 = vunpack.c.l.b16 %v726
      %v3259 = vunpack.c.h.b16 %v726
      %v3260 = vunpack.c.l.b16 %v727
      %v3261 = vunpack.c.h.b16 %v727
      %v3262 = vunpack.c.l.b16 %v728
      %v3263 = vunpack.c.h.b16 %v728
      %v3264 = vunpack.c.l.b16 %v729
      %v3265 = vunpack.c.h.b16 %v729
      %v3266 = vunpack.c.l.b16 %v730
      %v3267 = vunpack.c.h.b16 %v730
      %v3268 = vunpack.c.l.b16 %v731
      %v3269 = vunpack.c.h.b16 %v731
      %v3270 = vunpack.c.l.b16 %v732
      %v3271 = vunpack.c.h.b16 %v732
      %v3272 = vunpack.c.l.b16 %v733
      %v3273 = vunpack.c.h.b16 %v733
      %v3274 = vunpack.c.l.b16 %v734
      %v3275 = vunpack.c.h.b16 %v734
      %v3276 = vunpack.c.l.b16 %v735
      %v3277 = vunpack.c.h.b16 %v735
      %v3278 = vunpack.c.l.b16 %v736
      %v3279 = vunpack.c.h.b16 %v736
      %v3280 = vunpack.c.l.b16 %v737
      %v3281 = vunpack.c.h.b16 %v737
      %v3282 = vunpack.c.l.b16 %v738
      %v3283 = vunpack.c.h.b16 %v738
      %v3284 = vunpack.c.l.b16 %v739
      %v3285 = vunpack.c.h.b16 %v739
      %v3286 = vunpack.c.l.b16 %v740
      %v3287 = vunpack.c.h.b16 %v740
      %v3288 = vunpack.c.l.b16 %v741
      %v3289 = vunpack.c.h.b16 %v741
      %v3290 = vunpack.c.l.b16 %v742
      %v3291 = vunpack.c.h.b16 %v742
      %v3292 = vunpack.c.l.b16 %v743
      %v3293 = vunpack.c.h.b16 %v743
      %v3294 = vunpack.c.l.b16 %v744
      %v3295 = vunpack.c.h.b16 %v744
      %v3296 = vunpack.c.l.b16 %v745
      %v3297 = vunpack.c.h.b16 %v745
      %v3298 = vunpack.c.l.b16 %v746
      %v3299 = vunpack.c.h.b16 %v746
      %v3300 = vunpack.c.l.b16 %v747
      %v3301 = vunpack.c.h.b16 %v747
      %v3302 = vunpack.c.l.b16 %v748
      %v3303 = vunpack.c.h.b16 %v748
      %v3304 = vunpack.c.l.b16 %v749
      %v3305 = vunpack.c.h.b16 %v749
      %v3306 = vunpack.c.l.b16 %v750
      %v3307 = vunpack.c.h.b16 %v750
      %v3308 = vunpack.c.l.b16 %v751
      %v3309 = vunpack.c.h.b16 %v751
      %v3310 = vunpack.c.l.b16 %v752
      %v3311 = vunpack.c.h.b16 %v752
      %v3312 = vunpack.c.l.b16 %v753
      %v3313 = vunpack.c.h.b16 %v753
      %v3314 = vunpack.c.l.b16 %v754
      %v3315 = vunpack.c.h.b16 %v754
      %v3316 = vunpack.c.l.b16 %v755
      %v3317 = vunpack.c.h.b16 %v755
      %v3318 = vunpack.c.l.b16 %v756
      %v3319 = vunpack.c.h.b16 %v756
      %v3320 = vunpack.c.l.b16 %v757
      %v3321 = vunpack.c.h.b16 %v757
      %v3322 = vunpack.c.l.b16 %v758
      %v3323 = vunpack.c.h.b16 %v758
      %v3324 = vunpack.c.l.b16 %v759
      %v3325 = vunpack.c.h.b16 %v759
      %v3326 = vunpack.c.l.b16 %v760
      %v3327 = vunpack.c.h.b16 %v760
      %v3328 = vunpack.c.l.b16 %v761
      %v3329 = vunpack.c.h.b16 %v761
      %v3330 = vunpack.c.l.b16 %v762
      %v3331 = vunpack.c.h.b16 %v762
      %v3332 = vunpack.c.l.b16 %v763
      %v3333 = vunpack.c.h.b16 %v763
      %v3334 = vunpack.c.l.b16 %v764
      %v3335 = vunpack.c.h.b16 %v764
      %v3336 = vunpack.c.l.b16 %v765
      %v3337 = vunpack.c.h.b16 %v765
      %v3338 = vunpack.c.l.b16 %v766
      %v3339 = vunpack.c.h.b16 %v766
      %v3340 = vunpack.c.l.b16 %v767
      %v3341 = vunpack.c.h.b16 %v767
      %v3342 = vunpack.c.l.b16 %v768
      %v3343 = vunpack.c.h.b16 %v768
      %v3344 = vunpack.c.l.b16 %v769
      %v3345 = vunpack.c.h.b16 %v769
      %v3346 = vunpack.c.l.b16 %v770
      %v3347 = vunpack.c.h.b16 %v770
      %v3348 = vunpack.c.l.b16 %v771
      %v3349 = vunpack.c.h.b16 %v771
      %v3350 = vunpack.c.l.b16 %v772
      %v3351 = vunpack.c.h.b16 %v772
      %v3352 = vunpack.c.l.b16 %v773
      %v3353 = vunpack.c.h.b16 %v773
      %v3354 = vunpack.c.l.b16 %v774
      %v3355 = vunpack.c.h.b16 %v774
      %v3356 = vunpack.c.l.b16 %v775
      %v3357 = vunpack.c.h.b16 %v775
      %v3358 = vunpack.c.l.b16 %v776
      %v3359 = vunpack.c.h.b16 %v776
      %v3360 = vunpack.c.l.b16 %v777
      %v3361 = vunpack.c.h.b16 %v777
      %v3362 = vunpack.c.l.b16 %v778
      %v3363 = vunpack.c.h.b16 %v778
      %v3364 = vunpack.c.l.b16 %v779
      %v3365 = vunpack.c.h.b16 %v779
      %v3366 = vunpack.c.l.b16 %v780
      %v3367 = vunpack.c.h.b16 %v780
      %v3368 = vunpack.c.l.b16 %v781
      %v3369 = vunpack.c.h.b16 %v781
      %v3370 = vunpack.c.l.b16 %v782
      %v3371 = vunpack.c.h.b16 %v782
      %v3372 = vunpack.c.l.b16 %v783
      %v3373 = vunpack.c.h.b16 %v783
      %v3374 = vunpack.c.l.b16 %v784
      %v3375 = vunpack.c.h.b16 %v784
      %v3376 = vunpack.c.l.b16 %v785
      %v3377 = vunpack.c.h.b16 %v785
      %v3378 = vunpack.c.l.b16 %v786
      %v3379 = vunpack.c.h.b16 %v786
      %v3380 = vunpack.c.l.b16 %v787
      %v3381 = vunpack.c.h.b16 %v787
      %v3382 = vunpack.c.l.b16 %v788
      %v3383 = vunpack.c.h.b16 %v788
      %v3384 = vunpack.c.l.b16 %v789
      %v3385 = vunpack.c.h.b16 %v789
      %v3386 = vunpack.c.l.b16 %v790
      %v3387 = vunpack.c.h.b16 %v790
      %v3388 = vunpack.c.l.b16 %v791
      %v3389 = vunpack.c.h.b16 %v791
      %v3390 = vunpack.c.l.b16 %v792
      %v3391 = vunpack.c.h.b16 %v792
      %v3392 = vunpack.c.l.b16 %v793
      %v3393 = vunpack.c.h.b16 %v793
      %v3394 = vunpack.c.l.b16 %v794
      %v3395 = vunpack.c.h.b16 %v794
      %v3396 = vunpack.c.l.b16 %v795
      %v3397 = vunpack.c.h.b16 %v795
      %v3398 = vunpack.c.l.b16 %v796
      %v3399 = vunpack.c.h.b16 %v796
      %v3400 = vunpack.c.l.b16 %v797
      %v3401 = vunpack.c.h.b16 %v797
      %v3402 = vunpack.c.l.b16 %v798
      %v3403 = vunpack.c.h.b16 %v798
      %v3404 = vunpack.c.l.b16 %v799
      %v3405 = vunpack.c.h.b16 %v799
      %v3406 = vunpack.c.l.b16 %v800
      %v3407 = vunpack.c.h.b16 %v800
      %v3408 = vunpack.c.l.b16 %v801
      %v3409 = vunpack.c.h.b16 %v801
      %v3410 = vunpack.c.l.b16 %v802
      %v3411 = vunpack.c.h.b16 %v802
      %v3412 = vunpack.c.l.b16 %v803
      %v3413 = vunpack.c.h.b16 %v803
      %v3414 = vunpack.c.l.b16 %v804
      %v3415 = vunpack.c.h.b16 %v804
      %v3416 = vunpack.c.l.b16 %v805
      %v3417 = vunpack.c.h.b16 %v805
      %v3418 = vunpack.c.l.b16 %v806
      %v3419 = vunpack.c.h.b16 %v806
      %v3420 = vunpack.c.l.b16 %v807
      %v3421 = vunpack.c.h.b16 %v807
      %v3422 = vunpack.c.l.b16 %v808
      %v3423 = vunpack.c.h.b16 %v808
      %v3424 = vunpack.c.l.b16 %v809
      %v3425 = vunpack.c.h.b16 %v809
      %v3426 = vunpack.c.l.b16 %v810
      %v3427 = vunpack.c.h.b16 %v810
      %v3428 = vunpack.c.l.b16 %v811
      %v3429 = vunpack.c.h.b16 %v811
      %v3430 = vunpack.c.l.b16 %v812
      %v3431 = vunpack.c.h.b16 %v812
      %v3432 = vunpack.c.l.b16 %v813
      %v3433 = vunpack.c.h.b16 %v813
      %v3434 = vunpack.c.l.b16 %v814
      %v3435 = vunpack.c.h.b16 %v814
      %v3436 = vunpack.c.l.b16 %v815
      %v3437 = vunpack.c.h.b16 %v815
      %v3438 = vunpack.c.l.b16 %v816
      %v3439 = vunpack.c.h.b16 %v816
      %v3440 = vunpack.c.l.b16 %v817
      %v3441 = vunpack.c.h.b16 %v817
      %v3442 = vunpack.c.l.b16 %v818
      %v3443 = vunpack.c.h.b16 %v818
      %v3444 = vunpack.c.l.b16 %v819
      %v3445 = vunpack.c.h.b16 %v819
      %v3446 = vunpack.c.l.b16 %v820
      %v3447 = vunpack.c.h.b16 %v820
      %v3448 = vunpack.c.l.b16 %v821
      %v3449 = vunpack.c.h.b16 %v821
      %v3450 = vunpack.c.l.b16 %v822
      %v3451 = vunpack.c.h.b16 %v822
      %v3452 = vunpack.c.l.b16 %v823
      %v3453 = vunpack.c.h.b16 %v823
      %v3454 = vunpack.c.l.b16 %v824
      %v3455 = vunpack.c.h.b16 %v824
      %v3456 = vunpack.c.l.b16 %v825
      %v3457 = vunpack.c.h.b16 %v825
      %v3458 = vunpack.c.l.b16 %v826
      %v3459 = vunpack.c.h.b16 %v826
      %v3460 = vunpack.c.l.b16 %v827
      %v3461 = vunpack.c.h.b16 %v827
      %v3462 = vunpack.c.l.b16 %v828
      %v3463 = vunpack.c.h.b16 %v828
      %v3464 = vunpack.c.l.b16 %v829
      %v3465 = vunpack.c.h.b16 %v829
      %v3466 = vunpack.c.l.b16 %v830
      %v3467 = vunpack.c.h.b16 %v830
      %v3468 = vunpack.c.l.b16 %v831
      %v3469 = vunpack.c.h.b16 %v831
      %v3470 = vunpack.c.l.b16 %v832
      %v3471 = vunpack.c.h.b16 %v832
      %v3472 = vunpack.c.l.b16 %v833
      %v3473 = vunpack.c.h.b16 %v833
      %v3474 = vunpack.c.l.b16 %v834
      %v3475 = vunpack.c.h.b16 %v834
      %v3476 = vunpack.c.l.b16 %v835
      %v3477 = vunpack.c.h.b16 %v835
      %v3478 = vunpack.c.l.b16 %v836
      %v3479 = vunpack.c.h.b16 %v836
      %v3480 = vunpack.c.l.b16 %v837
      %v3481 = vunpack.c.h.b16 %v837
      %v3482 = vunpack.c.l.b16 %v838
      %v3483 = vunpack.c.h.b16 %v838
      %v3484 = vunpack.c.l.b16 %v839
      %v3485 = vunpack.c.h.b16 %v839
      %v3486 = vunpack.c.l.b16 %v840
      %v3487 = vunpack.c.h.b16 %v840
      %v3488 = vunpack.c.l.b16 %v841
      %v3489 = vunpack.c.h.b16 %v841
      %v3490 = vunpack.c.l.b16 %v842
      %v3491 = vunpack.c.h.b16 %v842
      %v3492 = vunpack.c.l.b16 %v843
      %v3493 = vunpack.c.h.b16 %v843
      %v3494 = vunpack.c.l.b16 %v844
      %v3495 = vunpack.c.h.b16 %v844
      %v3496 = vunpack.c.l.b16 %v845
      %v3497 = vunpack.c.h.b16 %v845
      %v3498 = vunpack.c.l.b16 %v846
      %v3499 = vunpack.c.h.b16 %v846
      %v3500 = vunpack.c.l.b16 %v847
      %v3501 = vunpack.c.h.b16 %v847
      %v3502 = vunpack.c.l.b16 %v848
      %v3503 = vunpack.c.h.b16 %v848
      %v3504 = vunpack.c.l.b16 %v849
      %v3505 = vunpack.c.h.b16 %v849
      %v3506 = vunpack.c.l.b16 %v850
      %v3507 = vunpack.c.h.b16 %v850
      %v3508 = vunpack.c.l.b16 %v851
      %v3509 = vunpack.c.h.b16 %v851
      %v3510 = vunpack.c.l.b16 %v852
      %v3511 = vunpack.c.h.b16 %v852
      %v3512 = vunpack.c.l.b16 %v853
      %v3513 = vunpack.c.h.b16 %v853
      %v3514 = vunpack.c.l.b16 %v854
      %v3515 = vunpack.c.h.b16 %v854
      %v3516 = vunpack.c.l.b16 %v855
      %v3517 = vunpack.c.h.b16 %v855
      %v3518 = vunpack.c.l.b16 %v856
      %v3519 = vunpack.c.h.b16 %v856
      %v3520 = vunpack.c.l.b16 %v857
      %v3521 = vunpack.c.h.b16 %v857
      %v3522 = vunpack.c.l.b16 %v858
      %v3523 = vunpack.c.h.b16 %v858
      %v3524 = vunpack.c.l.b16 %v859
      %v3525 = vunpack.c.h.b16 %v859
      %v3526 = vunpack.c.l.b16 %v860
      %v3527 = vunpack.c.h.b16 %v860
      %v3528 = vunpack.c.l.b16 %v861
      %v3529 = vunpack.c.h.b16 %v861
      %v3530 = vunpack.c.l.b16 %v862
      %v3531 = vunpack.c.h.b16 %v862
      %v3532 = vunpack.c.l.b16 %v863
      %v3533 = vunpack.c.h.b16 %v863
      %v3534 = vunpack.c.l.b16 %v864
      %v3535 = vunpack.c.h.b16 %v864
      %v3536 = vunpack.c.l.b16 %v865
      %v3537 = vunpack.c.h.b16 %v865
      %v3538 = vunpack.c.l.b16 %v866
      %v3539 = vunpack.c.h.b16 %v866
      %v3540 = vunpack.c.l.b16 %v867
      %v3541 = vunpack.c.h.b16 %v867
      %v3542 = vunpack.c.l.b16 %v868
      %v3543 = vunpack.c.h.b16 %v868
      %v3544 = vunpack.c.l.b16 %v869
      %v3545 = vunpack.c.h.b16 %v869
      %v3546 = vunpack.c.l.b16 %v870
      %v3547 = vunpack.c.h.b16 %v870
      %v3548 = vunpack.c.l.b16 %v871
      %v3549 = vunpack.c.h.b16 %v871
      %v3550 = vunpack.c.l.b16 %v872
      %v3551 = vunpack.c.h.b16 %v872
      %v3552 = vunpack.c.l.b16 %v873
      %v3553 = vunpack.c.h.b16 %v873
      %v3554 = vunpack.c.l.b16 %v874
      %v3555 = vunpack.c.h.b16 %v874
      %v3556 = vunpack.c.l.b16 %v875
      %v3557 = vunpack.c.h.b16 %v875
      %v3558 = vunpack.c.l.b16 %v876
      %v3559 = vunpack.c.h.b16 %v876
      %v3560 = vunpack.c.l.b16 %v877
      %v3561 = vunpack.c.h.b16 %v877
      %v3562 = vunpack.c.l.b16 %v878
      %v3563 = vunpack.c.h.b16 %v878
      %v3564 = vunpack.c.l.b16 %v879
      %v3565 = vunpack.c.h.b16 %v879
      %v3566 = vunpack.c.l.b16 %v880
      %v3567 = vunpack.c.h.b16 %v880
      %v3568 = vunpack.c.l.b16 %v881
      %v3569 = vunpack.c.h.b16 %v881
      %v3570 = vunpack.c.l.b16 %v882
      %v3571 = vunpack.c.h.b16 %v882
      %v3572 = vunpack.c.l.b16 %v883
      %v3573 = vunpack.c.h.b16 %v883
      %v3574 = vunpack.c.l.b16 %v884
      %v3575 = vunpack.c.h.b16 %v884
      %v3576 = vunpack.c.l.b16 %v885
      %v3577 = vunpack.c.h.b16 %v885
      %v3578 = vunpack.c.l.b16 %v886
      %v3579 = vunpack.c.h.b16 %v886
      %v3580 = vunpack.c.l.b16 %v887
      %v3581 = vunpack.c.h.b16 %v887
      %v3582 = vunpack.c.l.b16 %v888
      %v3583 = vunpack.c.h.b16 %v888
      %v3584 = vunpack.c.l.b16 %v889
      %v3585 = vunpack.c.h.b16 %v889
      %v3586 = vunpack.c.l.b16 %v890
      %v3587 = vunpack.c.h.b16 %v890
      %v3588 = vunpack.c.l.b16 %v891
      %v3589 = vunpack.c.h.b16 %v891
      %v3590 = vunpack.c.l.b16 %v892
      %v3591 = vunpack.c.h.b16 %v892
      %v3592 = vunpack.c.l.b16 %v893
      %v3593 = vunpack.c.h.b16 %v893
      %v3594 = vunpack.c.l.b16 %v894
      %v3595 = vunpack.c.h.b16 %v894
      %v3596 = vunpack.c.l.b16 %v895
      %v3597 = vunpack.c.h.b16 %v895
      %v3598 = vunpack.c.l.b16 %v896
      %v3599 = vunpack.c.h.b16 %v896
      %v3600 = vunpack.c.l.b16 %v897
      %v3601 = vunpack.c.h.b16 %v897
      %v3602 = vunpack.c.l.b16 %v898
      %v3603 = vunpack.c.h.b16 %v898
      %v3604 = vunpack.c.l.b16 %v899
      %v3605 = vunpack.c.h.b16 %v899
      %v3606 = vunpack.c.l.b16 %v900
      %v3607 = vunpack.c.h.b16 %v900
      %v3608 = vunpack.c.l.b16 %v901
      %v3609 = vunpack.c.h.b16 %v901
      %v3610 = vunpack.c.l.b16 %v902
      %v3611 = vunpack.c.h.b16 %v902
      %v3612 = vunpack.c.l.b16 %v903
      %v3613 = vunpack.c.h.b16 %v903
      %v3614 = vunpack.c.l.b16 %v904
      %v3615 = vunpack.c.h.b16 %v904
      %v3616 = vunpack.c.l.b16 %v905
      %v3617 = vunpack.c.h.b16 %v905
      %v3618 = vunpack.c.l.b16 %v906
      %v3619 = vunpack.c.h.b16 %v906
      %v3620 = vunpack.c.l.b16 %v907
      %v3621 = vunpack.c.h.b16 %v907
      %v3622 = vunpack.c.l.b16 %v908
      %v3623 = vunpack.c.h.b16 %v908
      %v3624 = vunpack.c.l.b16 %v909
      %v3625 = vunpack.c.h.b16 %v909
      %v3626 = vunpack.c.l.b16 %v910
      %v3627 = vunpack.c.h.b16 %v910
      %v3628 = vunpack.c.l.b16 %v911
      %v3629 = vunpack.c.h.b16 %v911
      %v3630 = vunpack.c.l.b16 %v912
      %v3631 = vunpack.c.h.b16 %v912
      %v3632 = vunpack.c.l.b16 %v913
      %v3633 = vunpack.c.h.b16 %v913
      %v3634 = vunpack.c.l.b16 %v914
      %v3635 = vunpack.c.h.b16 %v914
      %v3636 = vunpack.c.l.b16 %v915
      %v3637 = vunpack.c.h.b16 %v915
      %v3638 = vunpack.c.l.b16 %v916
      %v3639 = vunpack.c.h.b16 %v916
      %v3640 = vunpack.c.l.b16 %v917
      %v3641 = vunpack.c.h.b16 %v917
      %v3642 = vunpack.c.l.b16 %v918
      %v3643 = vunpack.c.h.b16 %v918
      %v3644 = vunpack.c.l.b16 %v919
      %v3645 = vunpack.c.h.b16 %v919
      %v3646 = vunpack.c.l.b16 %v920
      %v3647 = vunpack.c.h.b16 %v920
      %v3648 = vunpack.c.l.b16 %v921
      %v3649 = vunpack.c.h.b16 %v921
      %v3650 = vunpack.c.l.b16 %v922
      %v3651 = vunpack.c.h.b16 %v922
      %v3652 = vunpack.c.l.b16 %v923
      %v3653 = vunpack.c.h.b16 %v923
      %v3654 = vunpack.c.l.b16 %v924
      %v3655 = vunpack.c.h.b16 %v924
      %v3656 = vunpack.c.l.b16 %v925
      %v3657 = vunpack.c.h.b16 %v925
      %v3658 = vunpack.c.l.b16 %v926
      %v3659 = vunpack.c.h.b16 %v926
      %v3660 = vunpack.c.l.b16 %v927
      %v3661 = vunpack.c.h.b16 %v927
      %v3662 = vunpack.c.l.b16 %v928
      %v3663 = vunpack.c.h.b16 %v928
      %v3664 = vunpack.c.l.b16 %v929
      %v3665 = vunpack.c.h.b16 %v929
      %v3666 = vunpack.c.l.b16 %v930
      %v3667 = vunpack.c.h.b16 %v930
      %v3668 = vunpack.c.l.b16 %v931
      %v3669 = vunpack.c.h.b16 %v931
      %v3670 = vunpack.c.l.b16 %v932
      %v3671 = vunpack.c.h.b16 %v932
      %v3672 = vunpack.c.l.b16 %v933
      %v3673 = vunpack.c.h.b16 %v933
      %v3674 = vunpack.c.l.b16 %v934
      %v3675 = vunpack.c.h.b16 %v934
      %v3676 = vunpack.c.l.b16 %v935
      %v3677 = vunpack.c.h.b16 %v935
      %v3678 = vunpack.c.l.b16 %v936
      %v3679 = vunpack.c.h.b16 %v936
      %v3680 = vunpack.c.l.b16 %v937
      %v3681 = vunpack.c.h.b16 %v937
      %v3682 = vunpack.c.l.b16 %v938
      %v3683 = vunpack.c.h.b16 %v938
      %v3684 = vunpack.c.l.b16 %v939
      %v3685 = vunpack.c.h.b16 %v939
      %v3686 = vunpack.c.l.b16 %v940
      %v3687 = vunpack.c.h.b16 %v940
      %v3688 = vunpack.c.l.b16 %v941
      %v3689 = vunpack.c.h.b16 %v941
      %v3690 = vunpack.c.l.b16 %v942
      %v3691 = vunpack.c.h.b16 %v942
      %v3692 = vunpack.c.l.b16 %v943
      %v3693 = vunpack.c.h.b16 %v943
      %v3694 = vunpack.c.l.b16 %v944
      %v3695 = vunpack.c.h.b16 %v944
      %v3696 = vunpack.c.l.b16 %v945
      %v3697 = vunpack.c.h.b16 %v945
      %v3698 = vunpack.c.l.b16 %v946
      %v3699 = vunpack.c.h.b16 %v946
      %v3700 = vunpack.c.l.b16 %v947
      %v3701 = vunpack.c.h.b16 %v947
      %v3702 = vunpack.c.l.b16 %v948
      %v3703 = vunpack.c.h.b16 %v948
      %v3704 = vunpack.c.l.b16 %v949
      %v3705 = vunpack.c.h.b16 %v949
      %v3706 = vunpack.c.l.b16 %v950
      %v3707 = vunpack.c.h.b16 %v950
      %v3708 = vunpack.c.l.b16 %v951
      %v3709 = vunpack.c.h.b16 %v951
      %v3710 = vunpack.c.l.b16 %v952
      %v3711 = vunpack.c.h.b16 %v952
      %v3712 = vunpack.c.l.b16 %v953
      %v3713 = vunpack.c.h.b16 %v953
      %v3714 = vunpack.c.l.b16 %v954
      %v3715 = vunpack.c.h.b16 %v954
      %v3716 = vunpack.c.l.b16 %v955
      %v3717 = vunpack.c.h.b16 %v955
      %v3718 = vunpack.c.l.b16 %v956
      %v3719 = vunpack.c.h.b16 %v956
      %v3720 = vunpack.c.l.b16 %v957
      %v3721 = vunpack.c.h.b16 %v957
      %v3722 = vunpack.c.l.b16 %v958
      %v3723 = vunpack.c.h.b16 %v958
      %v3724 = vunpack.c.l.b16 %v959
      %v3725 = vunpack.c.h.b16 %v959
      %v3726 = vunpack.c.l.b16 %v960
      %v3727 = vunpack.c.h.b16 %v960
      %v3728 = vunpack.c.l.b16 %v961
      %v3729 = vunpack.c.h.b16 %v961
      %v3730 = vunpack.c.l.b16 %v962
      %v3731 = vunpack.c.h.b16 %v962
      %v3732 = vunpack.c.l.b16 %v963
      %v3733 = vunpack.c.h.b16 %v963
      %v3734 = vunpack.c.l.b16 %v964
      %v3735 = vunpack.c.h.b16 %v964
      %v3736 = vunpack.c.l.b16 %v965
      %v3737 = vunpack.c.h.b16 %v965
      %v3738 = vunpack.c.l.b16 %v966
      %v3739 = vunpack.c.h.b16 %v966
      %v3740 = vunpack.c.l.b16 %v967
      %v3741 = vunpack.c.h.b16 %v967
      %v3742 = vunpack.c.l.b16 %v968
      %v3743 = vunpack.c.h.b16 %v968
      %v3744 = vunpack.c.l.b16 %v969
      %v3745 = vunpack.c.h.b16 %v969
      %v3746 = vunpack.c.l.b16 %v970
      %v3747 = vunpack.c.h.b16 %v970
      %v3748 = vunpack.c.l.b16 %v971
      %v3749 = vunpack.c.h.b16 %v971
      %v3750 = vunpack.c.l.b16 %v972
      %v3751 = vunpack.c.h.b16 %v972
      %v3752 = vunpack.c.l.b16 %v973
      %v3753 = vunpack.c.h.b16 %v973
      %v3754 = vunpack.c.l.b16 %v974
      %v3755 = vunpack.c.h.b16 %v974
      %v3756 = vunpack.c.l.b16 %v975
      %v3757 = vunpack.c.h.b16 %v975
      %v3758 = vunpack.c.l.b16 %v976
      %v3759 = vunpack.c.h.b16 %v976
      %v3760 = vunpack.c.l.b16 %v977
      %v3761 = vunpack.c.h.b16 %v977
      %v3762 = vunpack.c.l.b16 %v978
      %v3763 = vunpack.c.h.b16 %v978
      %v3764 = vunpack.c.l.b16 %v979
      %v3765 = vunpack.c.h.b16 %v979
      %v3766 = vunpack.c.l.b16 %v980
      %v3767 = vunpack.c.h.b16 %v980
      %v3768 = vunpack.c.l.b16 %v981
      %v3769 = vunpack.c.h.b16 %v981
      %v3770 = vunpack.c.l.b16 %v982
      %v3771 = vunpack.c.h.b16 %v982
      %v3772 = vunpack.c.l.b16 %v983
      %v3773 = vunpack.c.h.b16 %v983
      %v3774 = vunpack.c.l.b16 %v984
      %v3775 = vunpack.c.h.b16 %v984
      %v3776 = vunpack.c.l.b16 %v985
      %v3777 = vunpack.c.h.b16 %v985
      %v3778 = vunpack.c.l.b16 %v986
      %v3779 = vunpack.c.h.b16 %v986
      %v3780 = vunpack.c.l.b16 %v987
      %v3781 = vunpack.c.h.b16 %v987
      %v3782 = vunpack.c.l.b16 %v988
      %v3783 = vunpack.c.h.b16 %v988
      %v3784 = vunpack.c.l.b16 %v989
      %v3785 = vunpack.c.h.b16 %v989
      %v3786 = vunpack.c.l.b16 %v990
      %v3787 = vunpack.c.h.b16 %v990
      %v3788 = vunpack.c.l.b16 %v991
      %v3789 = vunpack.c.h.b16 %v991
      %v3790 = vunpack.c.l.b16 %v992
      %v3791 = vunpack.c.h.b16 %v992
      %v3792 = vunpack.c.l.b16 %v993
      %v3793 = vunpack.c.h.b16 %v993
      %v3794 = vunpack.c.l.b16 %v994
      %v3795 = vunpack.c.h.b16 %v994
      %v3796 = vunpack.c.l.b16 %v995
      %v3797 = vunpack.c.h.b16 %v995
      %v3798 = vunpack.c.l.b16 %v996
      %v3799 = vunpack.c.h.b16 %v996
      %v3800 = vunpack.c.l.b16 %v997
      %v3801 = vunpack.c.h.b16 %v997
      %v3802 = vunpack.c.l.b16 %v998
      %v3803 = vunpack.c.h.b16 %v998
      %v3804 = vunpack.c.l.b16 %v999
      %v3805 = vunpack.c.h.b16 %v999
      %v3806 = vunpack.c.l.b16 %v1000
      %v3807 = vunpack.c.h.b16 %v1000
      %v3808 = vunpack.c.l.b16 %v1001
      %v3809 = vunpack.c.h.b16 %v1001
      %v3810 = vunpack.c.l.b16 %v1002
      %v3811 = vunpack.c.h.b16 %v1002
      %v3812 = vunpack.c.l.b16 %v1003
      %v3813 = vunpack.c.h.b16 %v1003
      %v3814 = vunpack.c.l.b16 %v1004
      %v3815 = vunpack.c.h.b16 %v1004
      %v3816 = vunpack.c.l.b16 %v1005
      %v3817 = vunpack.c.h.b16 %v1005
      %v3818 = vunpack.c.l.b16 %v1006
      %v3819 = vunpack.c.h.b16 %v1006
      %v3820 = vunpack.c.l.b16 %v1007
      %v3821 = vunpack.c.h.b16 %v1007
      %v3822 = vunpack.c.l.b16 %v1008
      %v3823 = vunpack.c.h.b16 %v1008
      %v3824 = vunpack.c.l.b16 %v1009
      %v3825 = vunpack.c.h.b16 %v1009
      %v3826 = vunpack.c.l.b16 %v1010
      %v3827 = vunpack.c.h.b16 %v1010
      %v3828 = vunpack.c.l.b16 %v1011
      %v3829 = vunpack.c.h.b16 %v1011
      %v3830 = vunpack.c.l.b16 %v1012
      %v3831 = vunpack.c.h.b16 %v1012
      %v3832 = vunpack.c.l.b16 %v1013
      %v3833 = vunpack.c.h.b16 %v1013
      %v3834 = vunpack.c.l.b16 %v1014
      %v3835 = vunpack.c.h.b16 %v1014
      %v3836 = vunpack.c.l.b16 %v1015
      %v3837 = vunpack.c.h.b16 %v1015
      %v3838 = vunpack.c.l.b16 %v1016
      %v3839 = vunpack.c.h.b16 %v1016
      %v3840 = vunpack.c.l.b16 %v1017
      %v3841 = vunpack.c.h.b16 %v1017
      %v3842 = vunpack.c.l.b16 %v1018
      %v3843 = vunpack.c.h.b16 %v1018
      %v3844 = vunpack.c.l.b16 %v1019
      %v3845 = vunpack.c.h.b16 %v1019
      %v3846 = vunpack.c.l.b16 %v1020
      %v3847 = vunpack.c.h.b16 %v1020
      %v3848 = vunpack.c.l.b16 %v1021
      %v3849 = vunpack.c.h.b16 %v1021
      %v3850 = vunpack.c.l.b16 %v1022
      %v3851 = vunpack.c.h.b16 %v1022
      %v3852 = vunpack.c.l.b16 %v1023
      %v3853 = vunpack.c.h.b16 %v1023
      %v3854 = vunpack.c.l.b16 %v1024
      %v3855 = vunpack.c.h.b16 %v1024
      %v3856 = vunpack.c.l.b16 %v1025
      %v3857 = vunpack.c.h.b16 %v1025
      %v3858 = vunpack.c.l.b16 %v1026
      %v3859 = vunpack.c.h.b16 %v1026
      %v3860 = vunpack.c.l.b16 %v1027
      %v3861 = vunpack.c.h.b16 %v1027
      %v3862 = vunpack.c.l.b16 %v1028
      %v3863 = vunpack.c.h.b16 %v1028
      %v3864 = vunpack.c.l.b16 %v1029
      %v3865 = vunpack.c.h.b16 %v1029
      %v3866 = vunpack.c.l.b16 %v1030
      %v3867 = vunpack.c.h.b16 %v1030
      %v3868 = vunpack.c.l.b16 %v1031
      %v3869 = vunpack.c.h.b16 %v1031
      %v3870 = vunpack.c.l.b16 %v1032
      %v3871 = vunpack.c.h.b16 %v1032
      %v3872 = vunpack.c.l.b16 %v1033
      %v3873 = vunpack.c.h.b16 %v1033
      %v3874 = vunpack.c.l.b16 %v1034
      %v3875 = vunpack.c.h.b16 %v1034
      %v3876 = vunpack.c.l.b16 %v1035
      %v3877 = vunpack.c.h.b16 %v1035
      %v3878 = vunpack.c.l.b16 %v1036
      %v3879 = vunpack.c.h.b16 %v1036
      %v3880 = vunpack.c.l.b16 %v1037
      %v3881 = vunpack.c.h.b16 %v1037
      %v3882 = vunpack.c.l.b16 %v1038
      %v3883 = vunpack.c.h.b16 %v1038
      %v3884 = vunpack.c.l.b16 %v1039
      %v3885 = vunpack.c.h.b16 %v1039
      %v3886 = vunpack.c.l.b16 %v1040
      %v3887 = vunpack.c.h.b16 %v1040
      %v3888 = vunpack.c.l.b16 %v1041
      %v3889 = vunpack.c.h.b16 %v1041
      %v3890 = vunpack.c.l.b16 %v1042
      %v3891 = vunpack.c.h.b16 %v1042
      %v3892 = vunpack.c.l.b16 %v1043
      %v3893 = vunpack.c.h.b16 %v1043
      %v3894 = vunpack.c.l.b16 %v1044
      %v3895 = vunpack.c.h.b16 %v1044
      %v3896 = vunpack.c.l.b16 %v1045
      %v3897 = vunpack.c.h.b16 %v1045
      %v3898 = vunpack.c.l.b16 %v1046
      %v3899 = vunpack.c.h.b16 %v1046
      %v3900 = vunpack.c.l.b16 %v1047
      %v3901 = vunpack.c.h.b16 %v1047
      %v3902 = vunpack.c.l.b16 %v1048
      %v3903 = vunpack.c.h.b16 %v1048
      %v3904 = vunpack.c.l.b16 %v1049
      %v3905 = vunpack.c.h.b16 %v1049
      %v3906 = vunpack.c.l.b16 %v1050
      %v3907 = vunpack.c.h.b16 %v1050
      %v3908 = vunpack.c.l.b16 %v1051
      %v3909 = vunpack.c.h.b16 %v1051
      %v3910 = vunpack.c.l.b16 %v1052
      %v3911 = vunpack.c.h.b16 %v1052
      %v3912 = vunpack.c.l.b16 %v1053
      %v3913 = vunpack.c.h.b16 %v1053
      %v3914 = vunpack.c.l.b16 %v1054
      %v3915 = vunpack.c.h.b16 %v1054
      %v3916 = vunpack.c.l.b16 %v1055
      %v3917 = vunpack.c.h.b16 %v1055
      %v3918 = vunpack.c.l.b16 %v1056
      %v3919 = vunpack.c.h.b16 %v1056
      %v3920 = vunpack.c.l.b16 %v1057
      %v3921 = vunpack.c.h.b16 %v1057
      %v3922 = vunpack.c.l.b16 %v1058
      %v3923 = vunpack.c.h.b16 %v1058
      %v3924 = vunpack.c.l.b16 %v1059
      %v3925 = vunpack.c.h.b16 %v1059
      %v3926 = vunpack.c.l.b16 %v1060
      %v3927 = vunpack.c.h.b16 %v1060
      %v3928 = vunpack.c.l.b16 %v1061
      %v3929 = vunpack.c.h.b16 %v1061
      %v3930 = vunpack.c.l.b16 %v1062
      %v3931 = vunpack.c.h.b16 %v1062
      %v3932 = vunpack.c.l.b16 %v1063
      %v3933 = vunpack.c.h.b16 %v1063
      %v3934 = vunpack.c.l.b16 %v1064
      %v3935 = vunpack.c.h.b16 %v1064
      %v3936 = vunpack.c.l.b16 %v1065
      %v3937 = vunpack.c.h.b16 %v1065
      %v3938 = vunpack.c.l.b16 %v1066
      %v3939 = vunpack.c.h.b16 %v1066
      %v3940 = vunpack.c.l.b16 %v1067
      %v3941 = vunpack.c.h.b16 %v1067
      %v3942 = vunpack.c.l.b16 %v1068
      %v3943 = vunpack.c.h.b16 %v1068
      %v3944 = vunpack.c.l.b16 %v1069
      %v3945 = vunpack.c.h.b16 %v1069
      %v3946 = vunpack.c.l.b16 %v1070
      %v3947 = vunpack.c.h.b16 %v1070
      %v3948 = vunpack.c.l.b16 %v1071
      %v3949 = vunpack.c.h.b16 %v1071
      %v3950 = vunpack.c.l.b16 %v1072
      %v3951 = vunpack.c.h.b16 %v1072
      %v3952 = vunpack.c.l.b16 %v1073
      %v3953 = vunpack.c.h.b16 %v1073
      %v3954 = vunpack.c.l.b16 %v1074
      %v3955 = vunpack.c.h.b16 %v1074
      %v3956 = vunpack.c.l.b16 %v1075
      %v3957 = vunpack.c.h.b16 %v1075
      %v3958 = vunpack.c.l.b16 %v1076
      %v3959 = vunpack.c.h.b16 %v1076
      %v3960 = vunpack.c.l.b16 %v1077
      %v3961 = vunpack.c.h.b16 %v1077
      %v3962 = vunpack.c.l.b16 %v1078
      %v3963 = vunpack.c.h.b16 %v1078
      %v3964 = vunpack.c.l.b16 %v1079
      %v3965 = vunpack.c.h.b16 %v1079
      %v3966 = vunpack.c.l.b16 %v1080
      %v3967 = vunpack.c.h.b16 %v1080
      %v3968 = vunpack.c.l.b16 %v1081
      %v3969 = vunpack.c.h.b16 %v1081
      %v3970 = vunpack.c.l.b16 %v1082
      %v3971 = vunpack.c.h.b16 %v1082
      %v3972 = vunpack.c.l.b16 %v1083
      %v3973 = vunpack.c.h.b16 %v1083
      %v3974 = vunpack.c.l.b16 %v1084
      %v3975 = vunpack.c.h.b16 %v1084
      %v3976 = vunpack.c.l.b16 %v1085
      %v3977 = vunpack.c.h.b16 %v1085
      %v3978 = vunpack.c.l.b16 %v1086
      %v3979 = vunpack.c.h.b16 %v1086
      %v3980 = vunpack.c.l.b16 %v1087
      %v3981 = vunpack.c.h.b16 %v1087
      %v3982 = vunpack.c.l.b16 %v1088
      %v3983 = vunpack.c.h.b16 %v1088
      %v3984 = vunpack.c.l.b16 %v1089
      %v3985 = vunpack.c.h.b16 %v1089
      %v3986 = vunpack.c.l.b16 %v1090
      %v3987 = vunpack.c.h.b16 %v1090
      %v3988 = vunpack.c.l.b16 %v1091
      %v3989 = vunpack.c.h.b16 %v1091
      %v3990 = vunpack.c.l.b16 %v1092
      %v3991 = vunpack.c.h.b16 %v1092
      %v3992 = vunpack.c.l.b16 %v1093
      %v3993 = vunpack.c.h.b16 %v1093
      %v3994 = vunpack.c.l.b16 %v1094
      %v3995 = vunpack.c.h.b16 %v1094
      %v3996 = vunpack.c.l.b16 %v1095
      %v3997 = vunpack.c.h.b16 %v1095
      %v3998 = vunpack.c.l.b16 %v1096
      %v3999 = vunpack.c.h.b16 %v1096
      %v4000 = vunpack.c.l.b16 %v1097
      %v4001 = vunpack.c.h.b16 %v1097
      %v4002 = vunpack.c.l.b16 %v1098
      %v4003 = vunpack.c.h.b16 %v1098
      %v4004 = vunpack.c.l.b16 %v1099
      %v4005 = vunpack.c.h.b16 %v1099
      %v4006 = vunpack.c.l.b16 %v1100
      %v4007 = vunpack.c.h.b16 %v1100
      %v4008 = vunpack.c.l.b16 %v1101
      %v4009 = vunpack.c.h.b16 %v1101
      %v4010 = vunpack.c.l.b16 %v1102
      %v4011 = vunpack.c.h.b16 %v1102
      %v4012 = vunpack.c.l.b16 %v1103
      %v4013 = vunpack.c.h.b16 %v1103
      %v4014 = vunpack.c.l.b16 %v1104
      %v4015 = vunpack.c.h.b16 %v1104
      %v4016 = vunpack.c.l.b16 %v1105
      %v4017 = vunpack.c.h.b16 %v1105
      %v4018 = vunpack.c.l.b16 %v1106
      %v4019 = vunpack.c.h.b16 %v1106
      %v4020 = vunpack.c.l.b16 %v1107
      %v4021 = vunpack.c.h.b16 %v1107
      %v4022 = vunpack.c.l.b16 %v1108
      %v4023 = vunpack.c.h.b16 %v1108
      %v4024 = vunpack.c.l.b16 %v1109
      %v4025 = vunpack.c.h.b16 %v1109
      %v4026 = vunpack.c.l.b16 %v1110
      %v4027 = vunpack.c.h.b16 %v1110
      %v4028 = vunpack.c.l.b16 %v1111
      %v4029 = vunpack.c.h.b16 %v1111
      %v4030 = vunpack.c.l.b16 %v1112
      %v4031 = vunpack.c.h.b16 %v1112
      %v4032 = vunpack.c.l.b16 %v1113
      %v4033 = vunpack.c.h.b16 %v1113
      %v4034 = vunpack.c.l.b16 %v1114
      %v4035 = vunpack.c.h.b16 %v1114
      %v4036 = vunpack.c.l.b16 %v1115
      %v4037 = vunpack.c.h.b16 %v1115
      %v4038 = vunpack.c.l.b16 %v1116
      %v4039 = vunpack.c.h.b16 %v1116
      %v4040 = vunpack.c.l.b16 %v1117
      %v4041 = vunpack.c.h.b16 %v1117
      %v4042 = vunpack.c.l.b16 %v1118
      %v4043 = vunpack.c.h.b16 %v1118
      %v4044 = vunpack.c.l.b16 %v1119
      %v4045 = vunpack.c.h.b16 %v1119
      %v4046 = vunpack.c.l.b16 %v1120
      %v4047 = vunpack.c.h.b16 %v1120
      %v4048 = vunpack.c.l.b16 %v1121
      %v4049 = vunpack.c.h.b16 %v1121
      %v4050 = vunpack.c.l.b16 %v1122
      %v4051 = vunpack.c.h.b16 %v1122
      %v4052 = vunpack.c.l.b16 %v1123
      %v4053 = vunpack.c.h.b16 %v1123
      %v4054 = vunpack.c.l.b16 %v1124
      %v4055 = vunpack.c.h.b16 %v1124
      %v4056 = vunpack.c.l.b16 %v1125
      %v4057 = vunpack.c.h.b16 %v1125
      %v4058 = vunpack.c.l.b16 %v1126
      %v4059 = vunpack.c.h.b16 %v1126
      %v4060 = vunpack.c.l.b16 %v1127
      %v4061 = vunpack.c.h.b16 %v1127
      %v4062 = vunpack.c.l.b16 %v1128
      %v4063 = vunpack.c.h.b16 %v1128
      %v4064 = vunpack.c.l.b16 %v1129
      %v4065 = vunpack.c.h.b16 %v1129
      %v4066 = vunpack.c.l.b16 %v1130
      %v4067 = vunpack.c.h.b16 %v1130
      %v4068 = vunpack.c.l.b16 %v1131
      %v4069 = vunpack.c.h.b16 %v1131
      %v4070 = vunpack.c.l.b16 %v1132
      %v4071 = vunpack.c.h.b16 %v1132
      %v4072 = vunpack.c.l.b16 %v1133
      %v4073 = vunpack.c.h.b16 %v1133
      %v4074 = vunpack.c.l.b16 %v1134
      %v4075 = vunpack.c.h.b16 %v1134
      %v4076 = vunpack.c.l.b16 %v1135
      %v4077 = vunpack.c.h.b16 %v1135
      %v4078 = vunpack.c.l.b16 %v1136
      %v4079 = vunpack.c.h.b16 %v1136
      %v4080 = vunpack.c.l.b16 %v1137
      %v4081 = vunpack.c.h.b16 %v1137
      %v4082 = vunpack.c.l.b16 %v1138
      %v4083 = vunpack.c.h.b16 %v1138
      %v4084 = vunpack.c.l.b16 %v1139
      %v4085 = vunpack.c.h.b16 %v1139
      %v4086 = vunpack.c.l.b16 %v1140
      %v4087 = vunpack.c.h.b16 %v1140
      %v4088 = vunpack.c.l.b16 %v1141
      %v4089 = vunpack.c.h.b16 %v1141
      %v4090 = vunpack.c.l.b16 %v1142
      %v4091 = vunpack.c.h.b16 %v1142
      %v4092 = vunpack.c.l.b16 %v1143
      %v4093 = vunpack.c.h.b16 %v1143
      %v4094 = vunpack.c.l.b16 %v1144
      %v4095 = vunpack.c.h.b16 %v1144
      %v4096 = vunpack.c.l.b16 %v1145
      %v4097 = vunpack.c.h.b16 %v1145
      %v4098 = vunpack.c.l.b16 %v1146
      %v4099 = vunpack.c.h.b16 %v1146
      %v4100 = vunpack.c.l.b16 %v1147
      %v4101 = vunpack.c.h.b16 %v1147
      %v4102 = vunpack.c.l.b16 %v1148
      %v4103 = vunpack.c.h.b16 %v1148
      %v4104 = vunpack.c.l.b16 %v1149
      %v4105 = vunpack.c.h.b16 %v1149
      %v4106 = vunpack.c.l.b16 %v1150
      %v4107 = vunpack.c.h.b16 %v1150
      %v4108 = vunpack.c.l.b16 %v1151
      %v4109 = vunpack.c.h.b16 %v1151
      %v4110 = vunpack.c.l.b16 %v1152
      %v4111 = vunpack.c.h.b16 %v1152
      %v4112 = vunpack.c.l.b16 %v1153
      %v4113 = vunpack.c.h.b16 %v1153
      %v4114 = vunpack.c.l.b16 %v1154
      %v4115 = vunpack.c.h.b16 %v1154
      %v4116 = vunpack.c.l.b16 %v1155
      %v4117 = vunpack.c.h.b16 %v1155
      %v4118 = vunpack.c.l.b16 %v1156
      %v4119 = vunpack.c.h.b16 %v1156
      %v4120 = vunpack.c.l.b16 %v1157
      %v4121 = vunpack.c.h.b16 %v1157
      %v4122 = vunpack.c.l.b16 %v1158
      %v4123 = vunpack.c.h.b16 %v1158
      %v4124 = vunpack.c.l.b16 %v1159
      %v4125 = vunpack.c.h.b16 %v1159
      %v4126 = vunpack.c.l.b16 %v1160
      %v4127 = vunpack.c.h.b16 %v1160
      %v4128 = vunpack.c.l.b16 %v1161
      %v4129 = vunpack.c.h.b16 %v1161
      %v4130 = vunpack.c.l.b16 %v1162
      %v4131 = vunpack.c.h.b16 %v1162
      %v4132 = vunpack.c.l.b16 %v1163
      %v4133 = vunpack.c.h.b16 %v1163
      %v4134 = vunpack.c.l.b16 %v1164
      %v4135 = vunpack.c.h.b16 %v1164
      %v4136 = vunpack.c.l.b16 %v1165
      %v4137 = vunpack.c.h.b16 %v1165
      %v4138 = vunpack.c.l.b16 %v1166
      %v4139 = vunpack.c.h.b16 %v1166
      %v4140 = vunpack.c.l.b16 %v1167
      %v4141 = vunpack.c.h.b16 %v1167
      %v4142 = vunpack.c.l.b16 %v1168
      %v4143 = vunpack.c.h.b16 %v1168
      %v4144 = vunpack.c.l.b16 %v1169
      %v4145 = vunpack.c.h.b16 %v1169
      %v4146 = vunpack.c.l.b16 %v1170
      %v4147 = vunpack.c.h.b16 %v1170
      %v4148 = vunpack.c.l.b16 %v1171
      %v4149 = vunpack.c.h.b16 %v1171
      %v4150 = vunpack.c.l.b16 %v1172
      %v4151 = vunpack.c.h.b16 %v1172
      %v4152 = vunpack.c.l.b16 %v1173
      %v4153 = vunpack.c.h.b16 %v1173
      %v4154 = vunpack.c.l.b16 %v1174
      %v4155 = vunpack.c.h.b16 %v1174
      %v4156 = vunpack.c.l.b16 %v1175
      %v4157 = vunpack.c.h.b16 %v1175
      %v4158 = vunpack.c.l.b16 %v1176
      %v4159 = vunpack.c.h.b16 %v1176
      %v4160 = vunpack.c.l.b16 %v1177
      %v4161 = vunpack.c.h.b16 %v1177
      %v4162 = vunpack.c.l.b16 %v1178
      %v4163 = vunpack.c.h.b16 %v1178
      %v4164 = vunpack.c.l.b16 %v1179
      %v4165 = vunpack.c.h.b16 %v1179
      %v4166 = vunpack.c.l.b16 %v1180
      %v4167 = vunpack.c.h.b16 %v1180
      %v4168 = vunpack.c.l.b16 %v1181
      %v4169 = vunpack.c.h.b16 %v1181
      %v4170 = vunpack.c.l.b16 %v1182
      %v4171 = vunpack.c.h.b16 %v1182
      %v4172 = vunpack.c.l.b16 %v1183
      %v4173 = vunpack.c.h.b16 %v1183
      %v4174 = vunpack.c.l.b16 %v1184
      %v4175 = vunpack.c.h.b16 %v1184
      %v4176 = vunpack.c.l.b16 %v1185
      %v4177 = vunpack.c.h.b16 %v1185
      %v4178 = vunpack.c.l.b16 %v1186
      %v4179 = vunpack.c.h.b16 %v1186
      %v4180 = vunpack.c.l.b16 %v1187
      %v4181 = vunpack.c.h.b16 %v1187
      %v4182 = vunpack.c.l.b16 %v1188
      %v4183 = vunpack.c.h.b16 %v1188
      %v4184 = vunpack.c.l.b16 %v1189
      %v4185 = vunpack.c.h.b16 %v1189
      %v4186 = vunpack.c.l.b16 %v1190
      %v4187 = vunpack.c.h.b16 %v1190
      %v4188 = vunpack.c.l.b16 %v1191
      %v4189 = vunpack.c.h.b16 %v1191
      %v4190 = vunpack.c.l.b16 %v1192
      %v4191 = vunpack.c.h.b16 %v1192
      %v4192 = vunpack.c.l.b16 %v1193
      %v4193 = vunpack.c.h.b16 %v1193
      %v4194 = vunpack.c.l.b16 %v1194
      %v4195 = vunpack.c.h.b16 %v1194
      %v4196 = vunpack.c.l.b16 %v1195
      %v4197 = vunpack.c.h.b16 %v1195
      %v4198 = vunpack.c.l.b16 %v1196
      %v4199 = vunpack.c.h.b16 %v1196
      %v4200 = vunpack.c.l.b16 %v1197
      %v4201 = vunpack.c.h.b16 %v1197
      %v4202 = vunpack.c.l.b16 %v1198
      %v4203 = vunpack.c.h.b16 %v1198
      %v4204 = vunpack.c.l.b16 %v1199
      %v4205 = vunpack.c.h.b16 %v1199
      %v4206 = vunpack.c.l.b16 %v1200
      %v4207 = vunpack.c.h.b16 %v1200
      %v4208 = vunpack.c.l.b16 %v1201
      %v4209 = vunpack.c.h.b16 %v1201
      %v4210 = vunpack.c.l.b16 %v1202
      %v4211 = vunpack.c.h.b16 %v1202
      %v4212 = vunpack.c.l.b16 %v1203
      %v4213 = vunpack.c.h.b16 %v1203
      %v4214 = vunpack.c.l.b16 %v1204
      %v4215 = vunpack.c.h.b16 %v1204
      %v4216 = vunpack.c.l.b16 %v1205
      %v4217 = vunpack.c.h.b16 %v1205
      %v4218 = vunpack.c.l.b16 %v1206
      %v4219 = vunpack.c.h.b16 %v1206
      %v4220 = vunpack.c.l.b16 %v1207
      %v4221 = vunpack.c.h.b16 %v1207
      %v4222 = vunpack.c.l.b16 %v1208
      %v4223 = vunpack.c.h.b16 %v1208
      %v4224 = vunpack.c.l.b16 %v1209
      %v4225 = vunpack.c.h.b16 %v1209
      %v4226 = vunpack.c.l.b16 %v1210
      %v4227 = vunpack.c.h.b16 %v1210
      %v4228 = vunpack.c.l.b16 %v1211
      %v4229 = vunpack.c.h.b16 %v1211
      %v4230 = vunpack.c.l.b16 %v1212
      %v4231 = vunpack.c.h.b16 %v1212
      %v4232 = vunpack.c.l.b16 %v1213
      %v4233 = vunpack.c.h.b16 %v1213
      %v4234 = vunpack.c.l.b16 %v1214
      %v4235 = vunpack.c.h.b16 %v1214
      %v4236 = vunpack.c.l.b16 %v1215
      %v4237 = vunpack.c.h.b16 %v1215
      %v4238 = vunpack.c.l.b16 %v1216
      %v4239 = vunpack.c.h.b16 %v1216
      %v4240 = vunpack.c.l.b16 %v1217
      %v4241 = vunpack.c.h.b16 %v1217
      %v4242 = vunpack.c.l.b16 %v1218
      %v4243 = vunpack.c.h.b16 %v1218
      %v4244 = vunpack.c.l.b16 %v1219
      %v4245 = vunpack.c.h.b16 %v1219
      %v4246 = vunpack.c.l.b16 %v1220
      %v4247 = vunpack.c.h.b16 %v1220
      %v4248 = vunpack.c.l.b16 %v1221
      %v4249 = vunpack.c.h.b16 %v1221
      %v4250 = vunpack.c.l.b16 %v1222
      %v4251 = vunpack.c.h.b16 %v1222
      %v4252 = vunpack.c.l.b16 %v1223
      %v4253 = vunpack.c.h.b16 %v1223
      %v4254 = vunpack.c.l.b16 %v1224
      %v4255 = vunpack.c.h.b16 %v1224
      %v4256 = vunpack.c.l.b16 %v1225
      %v4257 = vunpack.c.h.b16 %v1225
      %v4258 = vunpack.c.l.b16 %v1226
      %v4259 = vunpack.c.h.b16 %v1226
      %v4260 = vunpack.c.l.b16 %v1227
      %v4261 = vunpack.c.h.b16 %v1227
      %v4262 = vunpack.c.l.b16 %v1228
      %v4263 = vunpack.c.h.b16 %v1228
      %v4264 = vunpack.c.l.b16 %v1229
      %v4265 = vunpack.c.h.b16 %v1229
      %v4266 = vunpack.c.l.b16 %v1230
      %v4267 = vunpack.c.h.b16 %v1230
      %v4268 = vunpack.c.l.b16 %v1231
      %v4269 = vunpack.c.h.b16 %v1231
      %v4270 = vunpack.c.l.b16 %v1232
      %v4271 = vunpack.c.h.b16 %v1232
      %v4272 = vunpack.c.l.b16 %v1233
      %v4273 = vunpack.c.h.b16 %v1233
      %v4274 = vunpack.c.l.b16 %v1234
      %v4275 = vunpack.c.h.b16 %v1234
      %v4276 = vunpack.c.l.b16 %v1235
      %v4277 = vunpack.c.h.b16 %v1235
      %v4278 = vunpack.c.l.b16 %v1236
      %v4279 = vunpack.c.h.b16 %v1236
      %v4280 = vunpack.c.l.b16 %v1237
      %v4281 = vunpack.c.h.b16 %v1237
      %v4282 = vunpack.c.l.b16 %v1238
      %v4283 = vunpack.c.h.b16 %v1238
      %v4284 = vunpack.c.l.b16 %v1239
      %v4285 = vunpack.c.h.b16 %v1239
      %v4286 = vunpack.c.l.b16 %v1240
      %v4287 = vunpack.c.h.b16 %v1240
      %v4288 = vunpack.c.l.b16 %v1241
      %v4289 = vunpack.c.h.b16 %v1241
      %v4290 = vunpack.c.l.b16 %v1242
      %v4291 = vunpack.c.h.b16 %v1242
      %v4292 = vunpack.c.l.b16 %v1243
      %v4293 = vunpack.c.h.b16 %v1243
      %v4294 = vunpack.c.l.b16 %v1244
      %v4295 = vunpack.c.h.b16 %v1244
      %v4296 = vunpack.c.l.b16 %v1245
      %v4297 = vunpack.c.h.b16 %v1245
      %v4298 = vunpack.c.l.b16 %v1246
      %v4299 = vunpack.c.h.b16 %v1246
      %v4300 = vunpack.c.l.b16 %v1247
      %v4301 = vunpack.c.h.b16 %v1247
      %v4302 = vunpack.c.l.b16 %v1248
      %v4303 = vunpack.c.h.b16 %v1248
      %v4304 = vunpack.c.l.b16 %v1249
      %v4305 = vunpack.c.h.b16 %v1249
      %v4306 = vunpack.c.l.b16 %v1250
      %v4307 = vunpack.c.h.b16 %v1250
      %v4308 = vunpack.c.l.b16 %v1251
      %v4309 = vunpack.c.h.b16 %v1251
      %v4310 = vunpack.c.l.b16 %v1252
      %v4311 = vunpack.c.h.b16 %v1252
      %v4312 = vunpack.c.l.b16 %v1253
      %v4313 = vunpack.c.h.b16 %v1253
      %v4314 = vunpack.c.l.b16 %v1254
      %v4315 = vunpack.c.h.b16 %v1254
      %v4316 = vunpack.c.l.b16 %v1255
      %v4317 = vunpack.c.h.b16 %v1255
      %v4318 = vunpack.c.l.b16 %v1256
      %v4319 = vunpack.c.h.b16 %v1256
      %v4320 = vunpack.c.l.b16 %v1257
      %v4321 = vunpack.c.h.b16 %v1257
      %v4322 = vunpack.c.l.b16 %v1258
      %v4323 = vunpack.c.h.b16 %v1258
      %v4324 = vunpack.c.l.b16 %v1259
      %v4325 = vunpack.c.h.b16 %v1259
      %v4326 = vunpack.c.l.b16 %v1260
      %v4327 = vunpack.c.h.b16 %v1260
      %v4328 = vunpack.c.l.b16 %v1261
      %v4329 = vunpack.c.h.b16 %v1261
      %v4330 = vunpack.c.l.b16 %v1262
      %v4331 = vunpack.c.h.b16 %v1262
      %v4332 = vunpack.c.l.b16 %v1263
      %v4333 = vunpack.c.h.b16 %v1263
      %v4334 = vunpack.c.l.b16 %v1264
      %v4335 = vunpack.c.h.b16 %v1264
      %v4336 = vunpack.c.l.b16 %v1265
      %v4337 = vunpack.c.h.b16 %v1265
      %v4338 = vunpack.c.l.b16 %v1266
      %v4339 = vunpack.c.h.b16 %v1266
      %v4340 = vunpack.c.l.b16 %v1267
      %v4341 = vunpack.c.h.b16 %v1267
      %v4342 = vunpack.c.l.b16 %v1268
      %v4343 = vunpack.c.h.b16 %v1268
      %v4344 = vunpack.c.l.b16 %v1269
      %v4345 = vunpack.c.h.b16 %v1269
      %v4346 = vunpack.c.l.b16 %v1270
      %v4347 = vunpack.c.h.b16 %v1270
      %v4348 = vunpack.c.l.b16 %v1271
      %v4349 = vunpack.c.h.b16 %v1271
      %v4350 = vunpack.c.l.b16 %v1272
      %v4351 = vunpack.c.h.b16 %v1272
      %v4352 = vunpack.c.l.b16 %v1273
      %v4353 = vunpack.c.h.b16 %v1273
      %v4354 = vunpack.c.l.b16 %v1274
      %v4355 = vunpack.c.h.b16 %v1274
      %v4356 = vunpack.c.l.b16 %v1275
      %v4357 = vunpack.c.h.b16 %v1275
      %v4358 = vunpack.c.l.b16 %v1276
      %v4359 = vunpack.c.h.b16 %v1276
      %v4360 = vunpack.c.l.b16 %v1277
      %v4361 = vunpack.c.h.b16 %v1277
      %v4362 = vunpack.c.l.b16 %v1278
      %v4363 = vunpack.c.h.b16 %v1278
      %v4364 = vunpack.c.l.b16 %v1279
      %v4365 = vunpack.c.h.b16 %v1279
      %v4366 = vunpack.c.l.b16 %v1280
      %v4367 = vunpack.c.h.b16 %v1280
      %v4368 = vunpack.c.l.b16 %v1281
      %v4369 = vunpack.c.h.b16 %v1281
      %v4370 = vunpack.c.l.b16 %v1282
      %v4371 = vunpack.c.h.b16 %v1282
      %v4372 = vunpack.c.l.b16 %v1283
      %v4373 = vunpack.c.h.b16 %v1283
      %v4374 = vunpack.c.l.b16 %v1284
      %v4375 = vunpack.c.h.b16 %v1284
      %v4376 = vunpack.c.l.b16 %v1285
      %v4377 = vunpack.c.h.b16 %v1285
      %v4378 = vunpack.c.l.b16 %v1286
      %v4379 = vunpack.c.h.b16 %v1286
      %v4380 = vunpack.c.l.b16 %v1287
      %v4381 = vunpack.c.h.b16 %v1287
      %v4382 = vunpack.c.l.b16 %v1288
      %v4383 = vunpack.c.h.b16 %v1288
      %v4384 = vunpack.c.l.b16 %v1289
      %v4385 = vunpack.c.h.b16 %v1289
      %v4386 = vunpack.c.l.b16 %v1290
      %v4387 = vunpack.c.h.b16 %v1290
      %v4388 = vunpack.c.l.b16 %v1291
      %v4389 = vunpack.c.h.b16 %v1291
      %v4390 = vunpack.c.l.b16 %v1292
      %v4391 = vunpack.c.h.b16 %v1292
      %v4392 = vunpack.c.l.b16 %v1293
      %v4393 = vunpack.c.h.b16 %v1293
      %v4394 = vunpack.c.l.b16 %v1294
      %v4395 = vunpack.c.h.b16 %v1294
      %v4396 = vunpack.c.l.b16 %v1295
      %v4397 = vunpack.c.h.b16 %v1295
      %v4398 = vunpack.c.l.b16 %v1296
      %v4399 = vunpack.c.h.b16 %v1296
      %v4400 = vunpack.c.l.b16 %v1297
      %v4401 = vunpack.c.h.b16 %v1297
      %v4402 = vunpack.c.l.b16 %v1298
      %v4403 = vunpack.c.h.b16 %v1298
      %v4404 = vunpack.c.l.b16 %v1299
      %v4405 = vunpack.c.h.b16 %v1299
      %v4406 = vunpack.c.l.b16 %v1300
      %v4407 = vunpack.c.h.b16 %v1300
      %v4408 = vunpack.c.l.b16 %v1301
      %v4409 = vunpack.c.h.b16 %v1301
      %v4410 = vunpack.c.l.b16 %v1302
      %v4411 = vunpack.c.h.b16 %v1302
      %v4412 = vunpack.c.l.b16 %v1303
      %v4413 = vunpack.c.h.b16 %v1303
      %v4414 = vunpack.c.l.b16 %v1304
      %v4415 = vunpack.c.h.b16 %v1304
      %v4416 = vunpack.c.l.b16 %v1305
      %v4417 = vunpack.c.h.b16 %v1305
      %v4418 = vunpack.c.l.b16 %v1306
      %v4419 = vunpack.c.h.b16 %v1306
      %v4420 = vunpack.c.l.b16 %v1307
      %v4421 = vunpack.c.h.b16 %v1307
      %v4422 = vunpack.c.l.b16 %v1308
      %v4423 = vunpack.c.h.b16 %v1308
      %v4424 = vunpack.c.l.b16 %v1309
      %v4425 = vunpack.c.h.b16 %v1309
      %v4426 = vunpack.c.l.b16 %v1310
      %v4427 = vunpack.c.h.b16 %v1310
      %v4428 = vunpack.c.l.b16 %v1311
      %v4429 = vunpack.c.h.b16 %v1311
      %v4430 = vunpack.c.l.b16 %v1312
      %v4431 = vunpack.c.h.b16 %v1312
      %v4432 = vunpack.c.l.b16 %v1313
      %v4433 = vunpack.c.h.b16 %v1313
      %v4434 = vunpack.c.l.b16 %v1314
      %v4435 = vunpack.c.h.b16 %v1314
      %v4436 = vunpack.c.l.b16 %v1315
      %v4437 = vunpack.c.h.b16 %v1315
      %v4438 = vunpack.c.l.b16 %v1316
      %v4439 = vunpack.c.h.b16 %v1316
      %v4440 = vunpack.c.l.b16 %v1317
      %v4441 = vunpack.c.h.b16 %v1317
      %v4442 = vunpack.c.l.b16 %v1318
      %v4443 = vunpack.c.h.b16 %v1318
      %v4444 = vunpack.c.l.b16 %v1319
      %v4445 = vunpack.c.h.b16 %v1319
      %v4446 = vunpack.c.l.b16 %v1320
      %v4447 = vunpack.c.h.b16 %v1320
      %v4448 = vunpack.c.l.b16 %v1321
      %v4449 = vunpack.c.h.b16 %v1321
      %v4450 = vunpack.c.l.b16 %v1322
      %v4451 = vunpack.c.h.b16 %v1322
      %v4452 = vunpack.c.l.b16 %v1323
      %v4453 = vunpack.c.h.b16 %v1323
      %v4454 = vunpack.c.l.b16 %v1324
      %v4455 = vunpack.c.h.b16 %v1324
      %v4456 = vunpack.c.l.b16 %v1325
      %v4457 = vunpack.c.h.b16 %v1325
      %v4458 = vunpack.c.l.b16 %v1326
      %v4459 = vunpack.c.h.b16 %v1326
      %v4460 = vunpack.c.l.b16 %v1327
      %v4461 = vunpack.c.h.b16 %v1327
      %v4462 = vunpack.c.l.b16 %v1328
      %v4463 = vunpack.c.h.b16 %v1328
      %v4464 = vunpack.c.l.b16 %v1329
      %v4465 = vunpack.c.h.b16 %v1329
      %v4466 = vunpack.c.l.b16 %v1330
      %v4467 = vunpack.c.h.b16 %v1330
      %v4468 = vunpack.c.l.b16 %v1331
      %v4469 = vunpack.c.h.b16 %v1331
      %v4470 = vunpack.c.l.b16 %v1332
      %v4471 = vunpack.c.h.b16 %v1332
      %v4472 = vunpack.c.l.b16 %v1333
      %v4473 = vunpack.c.h.b16 %v1333
      %v4474 = vunpack.c.l.b16 %v1334
      %v4475 = vunpack.c.h.b16 %v1334
      %v4476 = vunpack.c.l.b16 %v1335
      %v4477 = vunpack.c.h.b16 %v1335
      %v4478 = vunpack.c.l.b16 %v1336
      %v4479 = vunpack.c.h.b16 %v1336
      %v4480 = vunpack.c.l.b16 %v1337
      %v4481 = vunpack.c.h.b16 %v1337
      %v4482 = vunpack.c.l.b16 %v1338
      %v4483 = vunpack.c.h.b16 %v1338
      %v4484 = vunpack.c.l.b16 %v1339
      %v4485 = vunpack.c.h.b16 %v1339
      %v4486 = vunpack.c.l.b16 %v1340
      %v4487 = vunpack.c.h.b16 %v1340
      %v4488 = vunpack.c.l.b16 %v1341
      %v4489 = vunpack.c.h.b16 %v1341
      %v4490 = vunpack.c.l.b16 %v1342
      %v4491 = vunpack.c.h.b16 %v1342
      %v4492 = vunpack.c.l.b16 %v1343
      %v4493 = vunpack.c.h.b16 %v1343
      %v4494 = vunpack.c.l.b16 %v1344
      %v4495 = vunpack.c.h.b16 %v1344
      %v4496 = vunpack.c.l.b16 %v1345
      %v4497 = vunpack.c.h.b16 %v1345
      %v4498 = vunpack.c.l.b16 %v1346
      %v4499 = vunpack.c.h.b16 %v1346
      %v4500 = vunpack.c.l.b16 %v1347
      %v4501 = vunpack.c.h.b16 %v1347
      %v4502 = vunpack.c.l.b16 %v1348
      %v4503 = vunpack.c.h.b16 %v1348
      %v4504 = vunpack.c.l.b16 %v1349
      %v4505 = vunpack.c.h.b16 %v1349
      %v4506 = vunpack.c.l.b16 %v1350
      %v4507 = vunpack.c.h.b16 %v1350
      %v4508 = vunpack.c.l.b16 %v1351
      %v4509 = vunpack.c.h.b16 %v1351
      %v4510 = vunpack.c.l.b16 %v1352
      %v4511 = vunpack.c.h.b16 %v1352
      %v4512 = vunpack.c.l.b16 %v1353
      %v4513 = vunpack.c.h.b16 %v1353
      %v4514 = vunpack.c.l.b16 %v1354
      %v4515 = vunpack.c.h.b16 %v1354
      %v4516 = vunpack.c.l.b16 %v1355
      %v4517 = vunpack.c.h.b16 %v1355
      %v4518 = vunpack.c.l.b16 %v1356
      %v4519 = vunpack.c.h.b16 %v1356
      %v4520 = vunpack.c.l.b16 %v1357
      %v4521 = vunpack.c.h.b16 %v1357
      %v4522 = vunpack.c.l.b16 %v1358
      %v4523 = vunpack.c.h.b16 %v1358
      %v4524 = vunpack.c.l.b16 %v1359
      %v4525 = vunpack.c.h.b16 %v1359
      %v4526 = vunpack.c.l.b16 %v1360
      %v4527 = vunpack.c.h.b16 %v1360
      %v4528 = vunpack.c.l.b16 %v1361
      %v4529 = vunpack.c.h.b16 %v1361
      %v4530 = vunpack.c.l.b16 %v1362
      %v4531 = vunpack.c.h.b16 %v1362
      %v4532 = vunpack.c.l.b16 %v1363
      %v4533 = vunpack.c.h.b16 %v1363
      %v4534 = vunpack.c.l.b16 %v1364
      %v4535 = vunpack.c.h.b16 %v1364
      %v4536 = vunpack.c.l.b16 %v1365
      %v4537 = vunpack.c.h.b16 %v1365
      %v4538 = vunpack.c.l.b16 %v1366
      %v4539 = vunpack.c.h.b16 %v1366
      %v4540 = vunpack.c.l.b16 %v1367
      %v4541 = vunpack.c.h.b16 %v1367
      %v4542 = vunpack.c.l.b16 %v1368
      %v4543 = vunpack.c.h.b16 %v1368
      %v4544 = vunpack.c.l.b16 %v1369
      %v4545 = vunpack.c.h.b16 %v1369
      %v4546 = vunpack.c.l.b16 %v1370
      %v4547 = vunpack.c.h.b16 %v1370
      %v4548 = vunpack.c.l.b16 %v1371
      %v4549 = vunpack.c.h.b16 %v1371
      %v4550 = vunpack.c.l.b16 %v1372
      %v4551 = vunpack.c.h.b16 %v1372
      %v4552 = vunpack.c.l.b16 %v1373
      %v4553 = vunpack.c.h.b16 %v1373
      %v4554 = vunpack.c.l.b16 %v1374
      %v4555 = vunpack.c.h.b16 %v1374
      %v4556 = vunpack.c.l.b16 %v1375
      %v4557 = vunpack.c.h.b16 %v1375
      %v4558 = vunpack.c.l.b16 %v1376
      %v4559 = vunpack.c.h.b16 %v1376
      %v4560 = vunpack.c.l.b16 %v1377
      %v4561 = vunpack.c.h.b16 %v1377
      %v4562 = vunpack.c.l.b16 %v1378
      %v4563 = vunpack.c.h.b16 %v1378
      %v4564 = vunpack.c.l.b16 %v1379
      %v4565 = vunpack.c.h.b16 %v1379
      %v4566 = vunpack.c.l.b16 %v1380
      %v4567 = vunpack.c.h.b16 %v1380
      %v4568 = vunpack.c.l.b16 %v1381
      %v4569 = vunpack.c.h.b16 %v1381
      %v4570 = vunpack.c.l.b16 %v1382
      %v4571 = vunpack.c.h.b16 %v1382
      %v4572 = vunpack.c.l.b16 %v1383
      %v4573 = vunpack.c.h.b16 %v1383
      %v4574 = vunpack.c.l.b16 %v1384
      %v4575 = vunpack.c.h.b16 %v1384
      %v4576 = vunpack.c.l.b16 %v1385
      %v4577 = vunpack.c.h.b16 %v1385
      %v4578 = vunpack.c.l.b16 %v1386
      %v4579 = vunpack.c.h.b16 %v1386
      %v4580 = vunpack.c.l.b16 %v1387
      %v4581 = vunpack.c.h.b16 %v1387
      %v4582 = vunpack.c.l.b16 %v1388
      %v4583 = vunpack.c.h.b16 %v1388
      %v4584 = vunpack.c.l.b16 %v1389
      %v4585 = vunpack.c.h.b16 %v1389
      %v4586 = vunpack.c.l.b16 %v1390
      %v4587 = vunpack.c.h.b16 %v1390
      %v4588 = vunpack.c.l.b16 %v1391
      %v4589 = vunpack.c.h.b16 %v1391
      %v4590 = vunpack.c.l.b16 %v1392
      %v4591 = vunpack.c.h.b16 %v1392
      %v4592 = vunpack.c.l.b16 %v1393
      %v4593 = vunpack.c.h.b16 %v1393
      %v4594 = vunpack.c.l.b16 %v1394
      %v4595 = vunpack.c.h.b16 %v1394
      %v4596 = vunpack.c.l.b16 %v1395
      %v4597 = vunpack.c.h.b16 %v1395
      %v4598 = vunpack.c.l.b16 %v1396
      %v4599 = vunpack.c.h.b16 %v1396
      %v4600 = vunpack.c.l.b16 %v1397
      %v4601 = vunpack.c.h.b16 %v1397
      %v4602 = vunpack.c.l.b16 %v1398
      %v4603 = vunpack.c.h.b16 %v1398
      %v4604 = vunpack.c.l.b16 %v1399
      %v4605 = vunpack.c.h.b16 %v1399
      %v4606 = vunpack.c.l.b16 %v1400
      %v4607 = vunpack.c.h.b16 %v1400
      %v4608 = vunpack.c.l.b16 %v1401
      %v4609 = vunpack.c.h.b16 %v1401
      %v4610 = vunpack.c.l.b16 %v1402
      %v4611 = vunpack.c.h.b16 %v1402
      %v4612 = vunpack.c.l.b16 %v1403
      %v4613 = vunpack.c.h.b16 %v1403
      %v4614 = vunpack.c.l.b16 %v1404
      %v4615 = vunpack.c.h.b16 %v1404
      %v4616 = vunpack.c.l.b16 %v1405
      %v4617 = vunpack.c.h.b16 %v1405
      %v4618 = vunpack.c.l.b16 %v1406
      %v4619 = vunpack.c.h.b16 %v1406
      %v4620 = vunpack.c.l.b16 %v1407
      %v4621 = vunpack.c.h.b16 %v1407
      %v4622 = vunpack.c.l.b16 %v1408
      %v4623 = vunpack.c.h.b16 %v1408
      %v4624 = vunpack.c.l.b16 %v1409
      %v4625 = vunpack.c.h.b16 %v1409
      %v4626 = vunpack.c.l.b16 %v1410
      %v4627 = vunpack.c.h.b16 %v1410
      %v4628 = vunpack.c.l.b16 %v1411
      %v4629 = vunpack.c.h.b16 %v1411
      %v4630 = vunpack.c.l.b16 %v1412
      %v4631 = vunpack.c.h.b16 %v1412
      %v4632 = vunpack.c.l.b16 %v1413
      %v4633 = vunpack.c.h.b16 %v1413
      %v4634 = vunpack.c.l.b16 %v1414
      %v4635 = vunpack.c.h.b16 %v1414
      %v4636 = vunpack.c.l.b16 %v1415
      %v4637 = vunpack.c.h.b16 %v1415
      %v4638 = vunpack.c.l.b16 %v1416
      %v4639 = vunpack.c.h.b16 %v1416
      %v4640 = vunpack.c.l.b16 %v1417
      %v4641 = vunpack.c.h.b16 %v1417
      %v4642 = vunpack.c.l.b16 %v1418
      %v4643 = vunpack.c.h.b16 %v1418
      %v4644 = vunpack.c.l.b16 %v1419
      %v4645 = vunpack.c.h.b16 %v1419
      %v4646 = vunpack.c.l.b16 %v1420
      %v4647 = vunpack.c.h.b16 %v1420
      %v4648 = vunpack.c.l.b16 %v1421
      %v4649 = vunpack.c.h.b16 %v1421
      %v4650 = vunpack.c.l.b16 %v1422
      %v4651 = vunpack.c.h.b16 %v1422
      %v4652 = vunpack.c.l.b16 %v1423
      %v4653 = vunpack.c.h.b16 %v1423
      %v4654 = vunpack.c.l.b16 %v1424
      %v4655 = vunpack.c.h.b16 %v1424
      %v4656 = vunpack.c.l.b16 %v1425
      %v4657 = vunpack.c.h.b16 %v1425
      %v4658 = vunpack.c.l.b16 %v1426
      %v4659 = vunpack.c.h.b16 %v1426
      %v4660 = vunpack.c.l.b16 %v1427
      %v4661 = vunpack.c.h.b16 %v1427
      %v4662 = vunpack.c.l.b16 %v1428
      %v4663 = vunpack.c.h.b16 %v1428
      %v4664 = vunpack.c.l.b16 %v1429
      %v4665 = vunpack.c.h.b16 %v1429
      %v4666 = vunpack.c.l.b16 %v1430
      %v4667 = vunpack.c.h.b16 %v1430
      %v4668 = vunpack.c.l.b16 %v1431
      %v4669 = vunpack.c.h.b16 %v1431
      %v4670 = vunpack.c.l.b16 %v1432
      %v4671 = vunpack.c.h.b16 %v1432
      %v4672 = vunpack.c.l.b16 %v1433
      %v4673 = vunpack.c.h.b16 %v1433
      %v4674 = vunpack.c.l.b16 %v1434
      %v4675 = vunpack.c.h.b16 %v1434
      %v4676 = vunpack.c.l.b16 %v1435
      %v4677 = vunpack.c.h.b16 %v1435
      %v4678 = vunpack.c.l.b16 %v1436
      %v4679 = vunpack.c.h.b16 %v1436
      %v4680 = vunpack.c.l.b16 %v1437
      %v4681 = vunpack.c.h.b16 %v1437
      %v4682 = vunpack.c.l.b16 %v1438
      %v4683 = vunpack.c.h.b16 %v1438
      %v4684 = vunpack.c.l.b16 %v1439
      %v4685 = vunpack.c.h.b16 %v1439
      %v4686 = vunpack.c.l.b16 %v1440
      %v4687 = vunpack.c.h.b16 %v1440
      %v4688 = vunpack.c.l.b16 %v1441
      %v4689 = vunpack.c.h.b16 %v1441
      %v4690 = vunpack.c.l.b16 %v1442
      %v4691 = vunpack.c.h.b16 %v1442
      %v4692 = vunpack.c.l.b16 %v1443
      %v4693 = vunpack.c.h.b16 %v1443
      %v4694 = vunpack.c.l.b16 %v1444
      %v4695 = vunpack.c.h.b16 %v1444
      %v4696 = vunpack.c.l.b16 %v1445
      %v4697 = vunpack.c.h.b16 %v1445
      %v4698 = vunpack.c.l.b16 %v1446
      %v4699 = vunpack.c.h.b16 %v1446
      %v4700 = vunpack.c.l.b16 %v1447
      %v4701 = vunpack.c.h.b16 %v1447
      %v4702 = vunpack.c.l.b16 %v1448
      %v4703 = vunpack.c.h.b16 %v1448
      %v4704 = vunpack.c.l.b16 %v1449
      %v4705 = vunpack.c.h.b16 %v1449
      %v4706 = vunpack.c.l.b16 %v1450
      %v4707 = vunpack.c.h.b16 %v1450
      %v4708 = vunpack.c.l.b16 %v1451
      %v4709 = vunpack.c.h.b16 %v1451
      %v4710 = vunpack.c.l.b16 %v1452
      %v4711 = vunpack.c.h.b16 %v1452
      %v4712 = vunpack.c.l.b16 %v1453
      %v4713 = vunpack.c.h.b16 %v1453
      %v4714 = vunpack.c.l.b16 %v1454
      %v4715 = vunpack.c.h.b16 %v1454
      %v4716 = vunpack.c.l.b16 %v1455
      %v4717 = vunpack.c.h.b16 %v1455
      %v4718 = vunpack.c.l.b16 %v1456
      %v4719 = vunpack.c.h.b16 %v1456
      %v4720 = vunpack.c.l.b16 %v1457
      %v4721 = vunpack.c.h.b16 %v1457
      %v4722 = vunpack.c.l.b16 %v1458
      %v4723 = vunpack.c.h.b16 %v1458
      %v4724 = vunpack.c.l.b16 %v1459
      %v4725 = vunpack.c.h.b16 %v1459
      %v4726 = vunpack.c.l.b16 %v1460
      %v4727 = vunpack.c.h.b16 %v1460
      %v4728 = vunpack.c.l.b16 %v1461
      %v4729 = vunpack.c.h.b16 %v1461
      %v4730 = vunpack.c.l.b16 %v1462
      %v4731 = vunpack.c.h.b16 %v1462
      %v4732 = vunpack.c.l.b16 %v1463
      %v4733 = vunpack.c.h.b16 %v1463
      %v4734 = vunpack.c.l.b16 %v1464
      %v4735 = vunpack.c.h.b16 %v1464
      %v4736 = vunpack.c.l.b16 %v1465
      %v4737 = vunpack.c.h.b16 %v1465
      %v4738 = vunpack.c.l.b16 %v1466
      %v4739 = vunpack.c.h.b16 %v1466
      %v4740 = vunpack.c.l.b16 %v1467
      %v4741 = vunpack.c.h.b16 %v1467
      %v4742 = vunpack.c.l.b16 %v1468
      %v4743 = vunpack.c.h.b16 %v1468
      %v4744 = vunpack.c.l.b16 %v1469
      %v4745 = vunpack.c.h.b16 %v1469
      %v4746 = vunpack.c.l.b16 %v1470
      %v4747 = vunpack.c.h.b16 %v1470
      %v4748 = vunpack.c.l.b16 %v1471
      %v4749 = vunpack.c.h.b16 %v1471
      %v4750 = vunpack.c.l.b16 %v1472
      %v4751 = vunpack.c.h.b16 %v1472
      %v4752 = vunpack.c.l.b16 %v1473
      %v4753 = vunpack.c.h.b16 %v1473
      %v4754 = vunpack.c.l.b16 %v1474
      %v4755 = vunpack.c.h.b16 %v1474
      %v4756 = vunpack.c.l.b16 %v1475
      %v4757 = vunpack.c.h.b16 %v1475
      %v4758 = vunpack.c.l.b16 %v1476
      %v4759 = vunpack.c.h.b16 %v1476
      %v4760 = vunpack.c.l.b16 %v1477
      %v4761 = vunpack.c.h.b16 %v1477
      %v4762 = vunpack.c.l.b16 %v1478
      %v4763 = vunpack.c.h.b16 %v1478
      %v4764 = vunpack.c.l.b16 %v1479
      %v4765 = vunpack.c.h.b16 %v1479
      %v4766 = vunpack.c.l.b16 %v1480
      %v4767 = vunpack.c.h.b16 %v1480
      %v4768 = vunpack.c.l.b16 %v1481
      %v4769 = vunpack.c.h.b16 %v1481
      %v4770 = vunpack.c.l.b16 %v1482
      %v4771 = vunpack.c.h.b16 %v1482
      %v4772 = vunpack.c.l.b16 %v1483
      %v4773 = vunpack.c.h.b16 %v1483
      %v4774 = vunpack.c.l.b16 %v1484
      %v4775 = vunpack.c.h.b16 %v1484
      %v4776 = vunpack.c.l.b16 %v1485
      %v4777 = vunpack.c.h.b16 %v1485
      %v4778 = vunpack.c.l.b16 %v1486
      %v4779 = vunpack.c.h.b16 %v1486
      %v4780 = vunpack.c.l.b16 %v1487
      %v4781 = vunpack.c.h.b16 %v1487
      %v4782 = vunpack.c.l.b16 %v1488
      %v4783 = vunpack.c.h.b16 %v1488
      %v4784 = vunpack.c.l.b16 %v1489
      %v4785 = vunpack.c.h.b16 %v1489
      %v4786 = vunpack.c.l.b16 %v1490
      %v4787 = vunpack.c.h.b16 %v1490
      %v4788 = vunpack.c.l.b16 %v1491
      %v4789 = vunpack.c.h.b16 %v1491
      %v4790 = vunpack.c.l.b16 %v1492
      %v4791 = vunpack.c.h.b16 %v1492
      %v4792 = vunpack.c.l.b16 %v1493
      %v4793 = vunpack.c.h.b16 %v1493
      %v4794 = vunpack.c.l.b16 %v1494
      %v4795 = vunpack.c.h.b16 %v1494
      %v4796 = vunpack.c.l.b16 %v1495
      %v4797 = vunpack.c.h.b16 %v1495
      %v4798 = vunpack.c.l.b16 %v1496
      %v4799 = vunpack.c.h.b16 %v1496
      %v4800 = vunpack.c.l.b16 %v1497
      %v4801 = vunpack.c.h.b16 %v1497
      %v4802 = vunpack.c.l.b16 %v1498
      %v4803 = vunpack.c.h.b16 %v1498
      %v4804 = vunpack.c.l.b16 %v1499
      %v4805 = vunpack.c.h.b16 %v1499
      %v4806 = vunpack.c.l.b16 %v1500
      %v4807 = vunpack.c.h.b16 %v1500
      %v4808 = vunpack.c.l.b16 %v1501
      %v4809 = vunpack.c.h.b16 %v1501
      %v4810 = vunpack.c.l.b16 %v1502
      %v4811 = vunpack.c.h.b16 %v1502
      %v4812 = vunpack.c.l.b16 %v1503
      %v4813 = vunpack.c.h.b16 %v1503
      %v4814 = vunpack.c.l.b16 %v1504
      %v4815 = vunpack.c.h.b16 %v1504
      %v4816 = vunpack.c.l.b16 %v1505
      %v4817 = vunpack.c.h.b16 %v1505
      %v4818 = vunpack.c.l.b16 %v1506
      %v4819 = vunpack.c.h.b16 %v1506
      %v4820 = vunpack.c.l.b16 %v1507
      %v4821 = vunpack.c.h.b16 %v1507
      %v4822 = vunpack.c.l.b16 %v1508
      %v4823 = vunpack.c.h.b16 %v1508
      %v4824 = vunpack.c.l.b16 %v1509
      %v4825 = vunpack.c.h.b16 %v1509
      %v4826 = vunpack.c.l.b16 %v1510
      %v4827 = vunpack.c.h.b16 %v1510
      %v4828 = vunpack.c.l.b16 %v1511
      %v4829 = vunpack.c.h.b16 %v1511
      %v4830 = vunpack.c.l.b16 %v1512
      %v4831 = vunpack.c.h.b16 %v1512
      %v4832 = vunpack.c.l.b16 %v1513
      %v4833 = vunpack.c.h.b16 %v1513
      %v4834 = vunpack.c.l.b16 %v1514
      %v4835 = vunpack.c.h.b16 %v1514
      %v4836 = vunpack.c.l.b16 %v1515
      %v4837 = vunpack.c.h.b16 %v1515
      %v4838 = vunpack.c.l.b16 %v1516
      %v4839 = vunpack.c.h.b16 %v1516
      %v4840 = vunpack.c.l.b16 %v1517
      %v4841 = vunpack.c.h.b16 %v1517
      %v4842 = vunpack.c.l.b16 %v1518
      %v4843 = vunpack.c.h.b16 %v1518
      %v4844 = vunpack.c.l.b16 %v1519
      %v4845 = vunpack.c.h.b16 %v1519
      %v4846 = vunpack.c.l.b16 %v1520
      %v4847 = vunpack.c.h.b16 %v1520
      %v4848 = vunpack.c.l.b16 %v1521
      %v4849 = vunpack.c.h.b16 %v1521
      %v4850 = vunpack.c.l.b16 %v1522
      %v4851 = vunpack.c.h.b16 %v1522
      %v4852 = vunpack.c.l.b16 %v1523
      %v4853 = vunpack.c.h.b16 %v1523
      %v4854 = vunpack.c.l.b16 %v1524
      %v4855 = vunpack.c.h.b16 %v1524
      %v4856 = vunpack.c.l.b16 %v1525
      %v4857 = vunpack.c.h.b16 %v1525
      %v4858 = vunpack.c.l.b16 %v1526
      %v4859 = vunpack.c.h.b16 %v1526
      %v4860 = vunpack.c.l.b16 %v1527
      %v4861 = vunpack.c.h.b16 %v1527
      %v4862 = vunpack.c.l.b16 %v1528
      %v4863 = vunpack.c.h.b16 %v1528
      %v4864 = vunpack.c.l.b16 %v1529
      %v4865 = vunpack.c.h.b16 %v1529
      %v4866 = vunpack.c.l.b16 %v1530
      %v4867 = vunpack.c.h.b16 %v1530
      %v4868 = vunpack.c.l.b16 %v1531
      %v4869 = vunpack.c.h.b16 %v1531
      %v4870 = vunpack.c.l.b16 %v1532
      %v4871 = vunpack.c.h.b16 %v1532
      %v4872 = vunpack.c.l.b16 %v1533
      %v4873 = vunpack.c.h.b16 %v1533
      %v4874 = vunpack.c.l.b16 %v1534
      %v4875 = vunpack.c.h.b16 %v1534
      %v4876 = vunpack.c.l.b16 %v1535
      %v4877 = vunpack.c.h.b16 %v1535
      %v4878 = vunpack.c.l.b16 %v1536
      %v4879 = vunpack.c.h.b16 %v1536
      %v4880 = vunpack.c.l.b16 %v1537
      %v4881 = vunpack.c.h.b16 %v1537
      %v4882 = vunpack.c.l.b16 %v1538
      %v4883 = vunpack.c.h.b16 %v1538
      %v4884 = vunpack.c.l.b16 %v1539
      %v4885 = vunpack.c.h.b16 %v1539
      %v4886 = vunpack.c.l.b16 %v1540
      %v4887 = vunpack.c.h.b16 %v1540
      %v4888 = vunpack.c.l.b16 %v1541
      %v4889 = vunpack.c.h.b16 %v1541
      %v4890 = vunpack.c.l.b16 %v1542
      %v4891 = vunpack.c.h.b16 %v1542
      %v4892 = vunpack.c.l.b16 %v1543
      %v4893 = vunpack.c.h.b16 %v1543
      %v4894 = vunpack.c.l.b16 %v1544
      %v4895 = vunpack.c.h.b16 %v1544
      %v4896 = vunpack.c.l.b16 %v1545
      %v4897 = vunpack.c.h.b16 %v1545
      %v4898 = vunpack.c.l.b16 %v1546
      %v4899 = vunpack.c.h.b16 %v1546
      %v4900 = vunpack.c.l.b16 %v1547
      %v4901 = vunpack.c.h.b16 %v1547
      %v4902 = vunpack.c.l.b16 %v1548
      %v4903 = vunpack.c.h.b16 %v1548
      %v4904 = vunpack.c.l.b16 %v1549
      %v4905 = vunpack.c.h.b16 %v1549
      %v4906 = vunpack.c.l.b16 %v1550
      %v4907 = vunpack.c.h.b16 %v1550
      %v4908 = vunpack.c.l.b16 %v1551
      %v4909 = vunpack.c.h.b16 %v1551
      %v4910 = vunpack.c.l.b16 %v1552
      %v4911 = vunpack.c.h.b16 %v1552
      %v4912 = vunpack.c.l.b16 %v1553
      %v4913 = vunpack.c.h.b16 %v1553
      %v4914 = vunpack.c.l.b16 %v1554
      %v4915 = vunpack.c.h.b16 %v1554
      %v4916 = vunpack.c.l.b16 %v1555
      %v4917 = vunpack.c.h.b16 %v1555
      %v4918 = vunpack.c.l.b16 %v1556
      %v4919 = vunpack.c.h.b16 %v1556
      %v4920 = vunpack.c.l.b16 %v1557
      %v4921 = vunpack.c.h.b16 %v1557
      %v4922 = vunpack.c.l.b16 %v1558
      %v4923 = vunpack.c.h.b16 %v1558
      %v4924 = vunpack.c.l.b16 %v1559
      %v4925 = vunpack.c.h.b16 %v1559
      %v4926 = vunpack.c.l.b16 %v1560
      %v4927 = vunpack.c.h.b16 %v1560
      %v4928 = vunpack.c.l.b16 %v1561
      %v4929 = vunpack.c.h.b16 %v1561
      %v4930 = vunpack.c.l.b16 %v1562
      %v4931 = vunpack.c.h.b16 %v1562
      %v4932 = vunpack.c.l.b16 %v1563
      %v4933 = vunpack.c.h.b16 %v1563
      %v4934 = vunpack.c.l.b16 %v1564
      %v4935 = vunpack.c.h.b16 %v1564
      %v4936 = vunpack.c.l.b16 %v1565
      %v4937 = vunpack.c.h.b16 %v1565
      %v4938 = vunpack.c.l.b16 %v1566
      %v4939 = vunpack.c.h.b16 %v1566
      %v4940 = vunpack.c.l.b16 %v1567
      %v4941 = vunpack.c.h.b16 %v1567
      %v4942 = vunpack.c.l.b16 %v1568
      %v4943 = vunpack.c.h.b16 %v1568
      %v4944 = vunpack.c.l.b16 %v1569
      %v4945 = vunpack.c.h.b16 %v1569
      %v4946 = vunpack.c.l.b16 %v1570
      %v4947 = vunpack.c.h.b16 %v1570
      %v4948 = vunpack.c.l.b16 %v1571
      %v4949 = vunpack.c.h.b16 %v1571
      %v4950 = vunpack.c.l.b16 %v1572
      %v4951 = vunpack.c.h.b16 %v1572
      %v4952 = vunpack.c.l.b16 %v1573
      %v4953 = vunpack.c.h.b16 %v1573
      %v4954 = vunpack.c.l.b16 %v1574
      %v4955 = vunpack.c.h.b16 %v1574
      %v4956 = vunpack.c.l.b16 %v1575
      %v4957 = vunpack.c.h.b16 %v1575
      %v4958 = vunpack.c.l.b16 %v1576
      %v4959 = vunpack.c.h.b16 %v1576
      %v4960 = vunpack.c.l.b16 %v1577
      %v4961 = vunpack.c.h.b16 %v1577
      %v4962 = vunpack.c.l.b16 %v1578
      %v4963 = vunpack.c.h.b16 %v1578
      %v4964 = vunpack.c.l.b16 %v1579
      %v4965 = vunpack.c.h.b16 %v1579
      %v4966 = vunpack.c.l.b16 %v1580
      %v4967 = vunpack.c.h.b16 %v1580
      %v4968 = vunpack.c.l.b16 %v1581
      %v4969 = vunpack.c.h.b16 %v1581
      %v4970 = vunpack.c.l.b16 %v1582
      %v4971 = vunpack.c.h.b16 %v1582
      %v4972 = vunpack.c.l.b16 %v1583
      %v4973 = vunpack.c.h.b16 %v1583
      %v4974 = vunpack.c.l.b16 %v1584
      %v4975 = vunpack.c.h.b16 %v1584
      %v4976 = vunpack.c.l.b16 %v1585
      %v4977 = vunpack.c.h.b16 %v1585
      %v4978 = vunpack.c.l.b16 %v1586
      %v4979 = vunpack.c.h.b16 %v1586
      %v4980 = vunpack.c.l.b16 %v1587
      %v4981 = vunpack.c.h.b16 %v1587
      %v4982 = vunpack.c.l.b16 %v1588
      %v4983 = vunpack.c.h.b16 %v1588
      %v4984 = vunpack.c.l.b16 %v1589
      %v4985 = vunpack.c.h.b16 %v1589
      %v4986 = vunpack.c.l.b16 %v1590
      %v4987 = vunpack.c.h.b16 %v1590
      %v4988 = vunpack.c.l.b16 %v1591
      %v4989 = vunpack.c.h.b16 %v1591
      %v4990 = vunpack.c.l.b16 %v1592
      %v4991 = vunpack.c.h.b16 %v1592
      %v4992 = vunpack.c.l.b16 %v1593
      %v4993 = vunpack.c.h.b16 %v1593
      %v4994 = vunpack.c.l.b16 %v1594
      %v4995 = vunpack.c.h.b16 %v1594
      %v4996 = vunpack.c.l.b16 %v1595
      %v4997 = vunpack.c.h.b16 %v1595
      %v4998 = vunpack.c.l.b16 %v1596
      %v4999 = vunpack.c.h.b16 %v1596
      %v5000 = vunpack.c.l.b16 %v1597
      %v5001 = vunpack.c.h.b16 %v1597
      %v5002 = vunpack.c.l.b16 %v1598
      %v5003 = vunpack.c.h.b16 %v1598
      %v5004 = vunpack.c.l.b16 %v1599
      %v5005 = vunpack.c.h.b16 %v1599
      %v5006 = vunpack.c.l.b16 %v1600
      %v5007 = vunpack.c.h.b16 %v1600
      %v5008 = vunpack.c.l.b16 %v1601
      %v5009 = vunpack.c.h.b16 %v1601
      %v5010 = vunpack.c.l.b16 %v1602
      %v5011 = vunpack.c.h.b16 %v1602
      %v5012 = vunpack.c.l.b16 %v1603
      %v5013 = vunpack.c.h.b16 %v1603
      %v5014 = vunpack.c.l.b16 %v1604
      %v5015 = vunpack.c.h.b16 %v1604
      %v5016 = vunpack.c.l.b16 %v1605
      %v5017 = vunpack.c.h.b16 %v1605
      %v5018 = vunpack.c.l.b16 %v1606
      %v5019 = vunpack.c.h.b16 %v1606
      %v5020 = vunpack.c.l.b16 %v1607
      %v5021 = vunpack.c.h.b16 %v1607
      %v5022 = vunpack.c.l.b16 %v1608
      %v5023 = vunpack.c.h.b16 %v1608
      %v5024 = vunpack.c.l.b16 %v1609
      %v5025 = vunpack.c.h.b16 %v1609
      %v5026 = vunpack.c.l.b16 %v1610
      %v5027 = vunpack.c.h.b16 %v1610
      %v5028 = vunpack.c.l.b16 %v1611
      %v5029 = vunpack.c.h.b16 %v1611
      %v5030 = vunpack.c.l.b16 %v1612
      %v5031 = vunpack.c.h.b16 %v1612
      %v5032 = vunpack.c.l.b16 %v1613
      %v5033 = vunpack.c.h.b16 %v1613
      %v5034 = vunpack.c.l.b16 %v1614
      %v5035 = vunpack.c.h.b16 %v1614
      %v5036 = vunpack.c.l.b16 %v1615
      %v5037 = vunpack.c.h.b16 %v1615
      %v5038 = vunpack.c.l.b16 %v1616
      %v5039 = vunpack.c.h.b16 %v1616
      %v5040 = vunpack.c.l.b16 %v1617
      %v5041 = vunpack.c.h.b16 %v1617
      %v5042 = vunpack.c.l.b16 %v1618
      %v5043 = vunpack.c.h.b16 %v1618
      %v5044 = vunpack.c.l.b16 %v1619
      %v5045 = vunpack.c.h.b16 %v1619
      %v5046 = vunpack.c.l.b16 %v1620
      %v5047 = vunpack.c.h.b16 %v1620
      %v5048 = vunpack.c.l.b16 %v1621
      %v5049 = vunpack.c.h.b16 %v1621
      %v5050 = vunpack.c.l.b16 %v1622
      %v5051 = vunpack.c.h.b16 %v1622
      %v5052 = vunpack.c.l.b16 %v1623
      %v5053 = vunpack.c.h.b16 %v1623
      %v5054 = vunpack.c.l.b16 %v1624
      %v5055 = vunpack.c.h.b16 %v1624
      %v5056 = vunpack.c.l.b16 %v1625
      %v5057 = vunpack.c.h.b16 %v1625
      %v5058 = vunpack.c.l.b16 %v1626
      %v5059 = vunpack.c.h.b16 %v1626
      %v5060 = vunpack.c.l.b16 %v1627
      %v5061 = vunpack.c.h.b16 %v1627
      %v5062 = vunpack.c.l.b16 %v1628
      %v5063 = vunpack.c.h.b16 %v1628
      %v5064 = vunpack.c.l.b16 %v1629
      %v5065 = vunpack.c.h.b16 %v1629
      %v5066 = vunpack.c.l.b16 %v1630
      %v5067 = vunpack.c.h.b16 %v1630
      %v5068 = vunpack.c.l.b16 %v1631
      %v5069 = vunpack.c.h.b16 %v1631
      %v5070 = vunpack.c.l.b16 %v1632
      %v5071 = vunpack.c.h.b16 %v1632
      %v5072 = vunpack.c.l.b16 %v1633
      %v5073 = vunpack.c.h.b16 %v1633
      %v5074 = vunpack.c.l.b16 %v1634
      %v5075 = vunpack.c.h.b16 %v1634
      %v5076 = vunpack.c.l.b16 %v1635
      %v5077 = vunpack.c.h.b16 %v1635
      %v5078 = vunpack.c.l.b16 %v1636
      %v5079 = vunpack.c.h.b16 %v1636
      %v5080 = vunpack.c.l.b16 %v1637
      %v5081 = vunpack.c.h.b16 %v1637
      %v5082 = vunpack.c.l.b16 %v1638
      %v5083 = vunpack.c.h.b16 %v1638
      %v5084 = vunpack.c.l.b16 %v1639
      %v5085 = vunpack.c.h.b16 %v1639
      %v5086 = vunpack.c.l.b16 %v1640
      %v5087 = vunpack.c.h.b16 %v1640
      %v5088 = vunpack.c.l.b16 %v1641
      %v5089 = vunpack.c.h.b16 %v1641
      %v5090 = vunpack.c.l.b16 %v1642
      %v5091 = vunpack.c.h.b16 %v1642
      %v5092 = vunpack.c.l.b16 %v1643
      %v5093 = vunpack.c.h.b16 %v1643
      %v5094 = vunpack.c.l.b16 %v1644
      %v5095 = vunpack.c.h.b16 %v1644
      %v5096 = vunpack.c.l.b16 %v1645
      %v5097 = vunpack.c.h.b16 %v1645
      %v5098 = vunpack.c.l.b16 %v1646
      %v5099 = vunpack.c.h.b16 %v1646
      %v5100 = vunpack.c.l.b16 %v1647
      %v5101 = vunpack.c.h.b16 %v1647
      %v5102 = vunpack.c.l.b16 %v1648
      %v5103 = vunpack.c.h.b16 %v1648
      %v5104 = vunpack.c.l.b16 %v1649
      %v5105 = vunpack.c.h.b16 %v1649
      %v5106 = vunpack.c.l.b16 %v1650
      %v5107 = vunpack.c.h.b16 %v1650
      %v5108 = vunpack.c.l.b16 %v1651
      %v5109 = vunpack.c.h.b16 %v1651
      %v5110 = vunpack.c.l.b16 %v1652
      %v5111 = vunpack.c.h.b16 %v1652
      %v5112 = vunpack.c.l.b16 %v1653
      %v5113 = vunpack.c.h.b16 %v1653
      %v5114 = vunpack.c.l.b16 %v1654
      %v5115 = vunpack.c.h.b16 %v1654
      %v5116 = vunpack.c.l.b16 %v1655
      %v5117 = vunpack.c.h.b16 %v1655
      %v5118 = vpack.c.b16 %v2816, %v2814
      %v5119 = vpack.c.b16 %v2817, %v2815
      %v5120 = vpack.c.b16 %v2820, %v2818
      %v5121 = vpack.c.b16 %v2821, %v2819
      %v5122 = vpack.c.b16 %v2824, %v2822
      %v5123 = vpack.c.b16 %v2825, %v2823
      %v5124 = vpack.c.b16 %v2828, %v2826
      %v5125 = vpack.c.b16 %v2829, %v2827
      %v5126 = vpack.c.b16 %v2832, %v2830
      %v5127 = vpack.c.b16 %v2833, %v2831
      %v5128 = vpack.c.b16 %v2836, %v2834
      %v5129 = vpack.c.b16 %v2837, %v2835
      %v5130 = vpack.c.b16 %v2840, %v2838
      %v5131 = vpack.c.b16 %v2841, %v2839
      %v5132 = vpack.c.b16 %v2844, %v2842
      %v5133 = vpack.c.b16 %v2845, %v2843
      %v5134 = vpack.c.b16 %v2848, %v2846
      %v5135 = vpack.c.b16 %v2849, %v2847
      %v5136 = vpack.c.b16 %v2852, %v2850
      %v5137 = vpack.c.b16 %v2853, %v2851
      %v5138 = vpack.c.b16 %v2856, %v2854
      %v5139 = vpack.c.b16 %v2857, %v2855
      %v5140 = vpack.c.b16 %v2860, %v2858
      %v5141 = vpack.c.b16 %v2861, %v2859
      %v5142 = vpack.c.b16 %v2864, %v2862
      %v5143 = vpack.c.b16 %v2865, %v2863
      %v5144 = vpack.c.b16 %v2868, %v2866
      %v5145 = vpack.c.b16 %v2869, %v2867
      %v5146 = vpack.c.b16 %v2872, %v2870
      %v5147 = vpack.c.b16 %v2873, %v2871
      %v5148 = vpack.c.b16 %v2876, %v2874
      %v5149 = vpack.c.b16 %v2877, %v2875
      %v5150 = vpack.c.b16 %v2880, %v2878
      %v5151 = vpack.c.b16 %v2881, %v2879
      %v5152 = vpack.c.b16 %v2884, %v2882
      %v5153 = vpack.c.b16 %v2885, %v2883
      %v5154 = vpack.c.b16 %v2888, %v2886
      %v5155 = vpack.c.b16 %v2889, %v2887
      %v5156 = vpack.c.b16 %v2892, %v2890
      %v5157 = vpack.c.b16 %v2893, %v2891
      %v5158 = vpack.c.b16 %v2896, %v2894
      %v5159 = vpack.c.b16 %v2897, %v2895
      %v5160 = vpack.c.b16 %v2900, %v2898
      %v5161 = vpack.c.b16 %v2901, %v2899
      %v5162 = vpack.c.b16 %v2904, %v2902
      %v5163 = vpack.c.b16 %v2905, %v2903
      %v5164 = vpack.c.b16 %v2908, %v2906
      %v5165 = vpack.c.b16 %v2909, %v2907
      %v5166 = vpack.c.b16 %v2912, %v2910
      %v5167 = vpack.c.b16 %v2913, %v2911
      %v5168 = vpack.c.b16 %v2916, %v2914
      %v5169 = vpack.c.b16 %v2917, %v2915
      %v5170 = vpack.c.b16 %v2920, %v2918
      %v5171 = vpack.c.b16 %v2921, %v2919
      %v5172 = vpack.c.b16 %v2924, %v2922
      %v5173 = vpack.c.b16 %v2925, %v2923
      %v5174 = vpack.c.b16 %v2928, %v2926
      %v5175 = vpack.c.b16 %v2929, %v2927
      %v5176 = vpack.c.b16 %v2932, %v2930
      %v5177 = vpack.c.b16 %v2933, %v2931
      %v5178 = vpack.c.b16 %v2936, %v2934
      %v5179 = vpack.c.b16 %v2937, %v2935
      %v5180 = vpack.c.b16 %v2940, %v2938
      %v5181 = vpack.c.b16 %v2941, %v2939
      %v5182 = vpack.c.b16 %v2944, %v2942
      %v5183 = vpack.c.b16 %v2945, %v2943
      %v5184 = vpack.c.b16 %v2948, %v2946
      %v5185 = vpack.c.b16 %v2949, %v2947
      %v5186 = vpack.c.b16 %v2952, %v2950
      %v5187 = vpack.c.b16 %v2953, %v2951
      %v5188 = vpack.c.b16 %v2956, %v2954
      %v5189 = vpack.c.b16 %v2957, %v2955
      %v5190 = vpack.c.b16 %v2960, %v2958
      %v5191 = vpack.c.b16 %v2961, %v2959
      %v5192 = vpack.c.b16 %v2964, %v2962
      %v5193 = vpack.c.b16 %v2965, %v2963
      %v5194 = vpack.c.b16 %v2968, %v2966
      %v5195 = vpack.c.b16 %v2969, %v2967
      %v5196 = vpack.c.b16 %v2972, %v2970
      %v5197 = vpack.c.b16 %v2973, %v2971
      %v5198 = vpack.c.b16 %v2976, %v2974
      %v5199 = vpack.c.b16 %v2977, %v2975
      %v5200 = vpack.c.b16 %v2980, %v2978
      %v5201 = vpack.c.b16 %v2981, %v2979
      %v5202 = vpack.c.b16 %v2984, %v2982
      %v5203 = vpack.c.b16 %v2985, %v2983
      %v5204 = vpack.c.b16 %v2988, %v2986
      %v5205 = vpack.c.b16 %v2989, %v2987
      %v5206 = vpack.c.b16 %v2992, %v2990
      %v5207 = vpack.c.b16 %v2993, %v2991
      %v5208 = vpack.c.b16 %v2996, %v2994
      %v5209 = vpack.c.b16 %v2997, %v2995
      %v5210 = vpack.c.b16 %v3000, %v2998
      %v5211 = vpack.c.b16 %v3001, %v2999
      %v5212 = vpack.c.b16 %v3004, %v3002
      %v5213 = vpack.c.b16 %v3005, %v3003
      %v5214 = vpack.c.b16 %v3008, %v3006
      %v5215 = vpack.c.b16 %v3009, %v3007
      %v5216 = vpack.c.b16 %v3012, %v3010
      %v5217 = vpack.c.b16 %v3013, %v3011
      %v5218 = vpack.c.b16 %v3016, %v3014
      %v5219 = vpack.c.b16 %v3017, %v3015
      %v5220 = vpack.c.b16 %v3020, %v3018
      %v5221 = vpack.c.b16 %v3021, %v3019
      %v5222 = vpack.c.b16 %v3024, %v3022
      %v5223 = vpack.c.b16 %v3025, %v3023
      %v5224 = vpack.c.b16 %v3028, %v3026
      %v5225 = vpack.c.b16 %v3029, %v3027
      %v5226 = vpack.c.b16 %v3032, %v3030
      %v5227 = vpack.c.b16 %v3033, %v3031
      %v5228 = vpack.c.b16 %v3036, %v3034
      %v5229 = vpack.c.b16 %v3037, %v3035
      %v5230 = vpack.c.b16 %v3040, %v3038
      %v5231 = vpack.c.b16 %v3041, %v3039
      %v5232 = vpack.c.b16 %v3044, %v3042
      %v5233 = vpack.c.b16 %v3045, %v3043
      %v5234 = vpack.c.b16 %v3048, %v3046
      %v5235 = vpack.c.b16 %v3049, %v3047
      %v5236 = vpack.c.b16 %v3052, %v3050
      %v5237 = vpack.c.b16 %v3053, %v3051
      %v5238 = vpack.c.b16 %v3056, %v3054
      %v5239 = vpack.c.b16 %v3057, %v3055
      %v5240 = vpack.c.b16 %v3060, %v3058
      %v5241 = vpack.c.b16 %v3061, %v3059
      %v5242 = vpack.c.b16 %v3064, %v3062
      %v5243 = vpack.c.b16 %v3065, %v3063
      %v5244 = vpack.c.b16 %v3068, %v3066
      %v5245 = vpack.c.b16 %v3069, %v3067
      %v5246 = vpack.c.b16 %v3072, %v3070
      %v5247 = vpack.c.b16 %v3073, %v3071
      %v5248 = vpack.c.b16 %v3076, %v3074
      %v5249 = vpack.c.b16 %v3077, %v3075
      %v5250 = vpack.c.b16 %v3080, %v3078
      %v5251 = vpack.c.b16 %v3081, %v3079
      %v5252 = vpack.c.b16 %v3084, %v3082
      %v5253 = vpack.c.b16 %v3085, %v3083
      %v5254 = vpack.c.b16 %v3088, %v3086
      %v5255 = vpack.c.b16 %v3089, %v3087
      %v5256 = vpack.c.b16 %v3092, %v3090
      %v5257 = vpack.c.b16 %v3093, %v3091
      %v5258 = vpack.c.b16 %v3096, %v3094
      %v5259 = vpack.c.b16 %v3097, %v3095
      %v5260 = vpack.c.b16 %v3100, %v3098
      %v5261 = vpack.c.b16 %v3101, %v3099
      %v5262 = vpack.c.b16 %v3104, %v3102
      %v5263 = vpack.c.b16 %v3105, %v3103
      %v5264 = vpack.c.b16 %v3108, %v3106
      %v5265 = vpack.c.b16 %v3109, %v3107
      %v5266 = vpack.c.b16 %v3112, %v3110
      %v5267 = vpack.c.b16 %v3113, %v3111
      %v5268 = vpack.c.b16 %v3116, %v3114
      %v5269 = vpack.c.b16 %v3117, %v3115
      %v5270 = vpack.c.b16 %v3120, %v3118
      %v5271 = vpack.c.b16 %v3121, %v3119
      %v5272 = vpack.c.b16 %v3124, %v3122
      %v5273 = vpack.c.b16 %v3125, %v3123
      %v5274 = vpack.c.b16 %v3128, %v3126
      %v5275 = vpack.c.b16 %v3129, %v3127
      %v5276 = vpack.c.b16 %v3132, %v3130
      %v5277 = vpack.c.b16 %v3133, %v3131
      %v5278 = vpack.c.b16 %v3136, %v3134
      %v5279 = vpack.c.b16 %v3137, %v3135
      %v5280 = vpack.c.b16 %v3140, %v3138
      %v5281 = vpack.c.b16 %v3141, %v3139
      %v5282 = vpack.c.b16 %v3144, %v3142
      %v5283 = vpack.c.b16 %v3145, %v3143
      %v5284 = vpack.c.b16 %v3148, %v3146
      %v5285 = vpack.c.b16 %v3149, %v3147
      %v5286 = vpack.c.b16 %v3152, %v3150
      %v5287 = vpack.c.b16 %v3153, %v3151
      %v5288 = vpack.c.b16 %v3156, %v3154
      %v5289 = vpack.c.b16 %v3157, %v3155
      %v5290 = vpack.c.b16 %v3160, %v3158
      %v5291 = vpack.c.b16 %v3161, %v3159
      %v5292 = vpack.c.b16 %v3164, %v3162
      %v5293 = vpack.c.b16 %v3165, %v3163
      %v5294 = vpack.c.b16 %v3168, %v3166
      %v5295 = vpack.c.b16 %v3169, %v3167
      %v5296 = vpack.c.b16 %v3172, %v3170
      %v5297 = vpack.c.b16 %v3173, %v3171
      %v5298 = vpack.c.b16 %v3176, %v3174
      %v5299 = vpack.c.b16 %v3177, %v3175
      %v5300 = vpack.c.b16 %v3180, %v3178
      %v5301 = vpack.c.b16 %v3181, %v3179
      %v5302 = vpack.c.b16 %v3184, %v3182
      %v5303 = vpack.c.b16 %v3185, %v3183
      %v5304 = vpack.c.b16 %v3188, %v3186
      %v5305 = vpack.c.b16 %v3189, %v3187
      %v5306 = vpack.c.b16 %v3192, %v3190
      %v5307 = vpack.c.b16 %v3193, %v3191
      %v5308 = vpack.c.b16 %v3196, %v3194
      %v5309 = vpack.c.b16 %v3197, %v3195
      %v5310 = vpack.c.b16 %v3200, %v3198
      %v5311 = vpack.c.b16 %v3201, %v3199
      %v5312 = vpack.c.b16 %v3204, %v3202
      %v5313 = vpack.c.b16 %v3205, %v3203
      %v5314 = vpack.c.b16 %v3208, %v3206
      %v5315 = vpack.c.b16 %v3209, %v3207
      %v5316 = vpack.c.b16 %v3212, %v3210
      %v5317 = vpack.c.b16 %v3213, %v3211
      %v5318 = vpack.c.b16 %v3216, %v3214
      %v5319 = vpack.c.b16 %v3217, %v3215
      %v5320 = vpack.c.b16 %v3220, %v3218
      %v5321 = vpack.c.b16 %v3221, %v3219
      %v5322 = vpack.c.b16 %v3224, %v3222
      %v5323 = vpack.c.b16 %v3225, %v3223
      %v5324 = vpack.c.b16 %v3228, %v3226
      %v5325 = vpack.c.b16 %v3229, %v3227
      %v5326 = vpack.c.b16 %v3232, %v3230
      %v5327 = vpack.c.b16 %v3233, %v3231
      %v5328 = vpack.c.b16 %v3236, %v3234
      %v5329 = vpack.c.b16 %v3237, %v3235
      %v5330 = vpack.c.b16 %v3240, %v3238
      %v5331 = vpack.c.b16 %v3241, %v3239
      %v5332 = vpack.c.b16 %v3244, %v3242
      %v5333 = vpack.c.b16 %v3245, %v3243
      %v5334 = vpack.c.b16 %v3248, %v3246
      %v5335 = vpack.c.b16 %v3249, %v3247
      %v5336 = vpack.c.b16 %v3252, %v3250
      %v5337 = vpack.c.b16 %v3253, %v3251
      %v5338 = vpack.c.b16 %v3256, %v3254
      %v5339 = vpack.c.b16 %v3257, %v3255
      %v5340 = vpack.c.b16 %v3260, %v3258
      %v5341 = vpack.c.b16 %v3261, %v3259
      %v5342 = vpack.c.b16 %v3264, %v3262
      %v5343 = vpack.c.b16 %v3265, %v3263
      %v5344 = vpack.c.b16 %v3268, %v3266
      %v5345 = vpack.c.b16 %v3269, %v3267
      %v5346 = vpack.c.b16 %v3272, %v3270
      %v5347 = vpack.c.b16 %v3273, %v3271
      %v5348 = vpack.c.b16 %v3276, %v3274
      %v5349 = vpack.c.b16 %v3277, %v3275
      %v5350 = vpack.c.b16 %v3280, %v3278
      %v5351 = vpack.c.b16 %v3281, %v3279
      %v5352 = vpack.c.b16 %v3284, %v3282
      %v5353 = vpack.c.b16 %v3285, %v3283
      %v5354 = vpack.c.b16 %v3288, %v3286
      %v5355 = vpack.c.b16 %v3289, %v3287
      %v5356 = vpack.c.b16 %v3292, %v3290
      %v5357 = vpack.c.b16 %v3293, %v3291
      %v5358 = vpack.c.b16 %v3296, %v3294
      %v5359 = vpack.c.b16 %v3297, %v3295
      %v5360 = vpack.c.b16 %v3300, %v3298
      %v5361 = vpack.c.b16 %v3301, %v3299
      %v5362 = vpack.c.b16 %v3304, %v3302
      %v5363 = vpack.c.b16 %v3305, %v3303
      %v5364 = vpack.c.b16 %v3308, %v3306
      %v5365 = vpack.c.b16 %v3309, %v3307
      %v5366 = vpack.c.b16 %v3312, %v3310
      %v5367 = vpack.c.b16 %v3313, %v3311
      %v5368 = vpack.c.b16 %v3316, %v3314
      %v5369 = vpack.c.b16 %v3317, %v3315
      %v5370 = vpack.c.b16 %v3320, %v3318
      %v5371 = vpack.c.b16 %v3321, %v3319
      %v5372 = vpack.c.b16 %v3324, %v3322
      %v5373 = vpack.c.b16 %v3325, %v3323
      %v5374 = vpack.c.b16 %v3328, %v3326
      %v5375 = vpack.c.b16 %v3329, %v3327
      %v5376 = vpack.c.b16 %v3332, %v3330
      %v5377 = vpack.c.b16 %v3333, %v3331
      %v5378 = vpack.c.b16 %v3336, %v3334
      %v5379 = vpack.c.b16 %v3337, %v3335
      %v5380 = vpack.c.b16 %v3340, %v3338
      %v5381 = vpack.c.b16 %v3341, %v3339
      %v5382 = vpack.c.b16 %v3344, %v3342
      %v5383 = vpack.c.b16 %v3345, %v3343
      %v5384 = vpack.c.b16 %v3348, %v3346
      %v5385 = vpack.c.b16 %v3349, %v3347
      %v5386 = vpack.c.b16 %v3352, %v3350
      %v5387 = vpack.c.b16 %v3353, %v3351
      %v5388 = vpack.c.b16 %v3356, %v3354
      %v5389 = vpack.c.b16 %v3357, %v3355
      %v5390 = vpack.c.b16 %v3360, %v3358
      %v5391 = vpack.c.b16 %v3361, %v3359
      %v5392 = vpack.c.b16 %v3364, %v3362
      %v5393 = vpack.c.b16 %v3365, %v3363
      %v5394 = vpack.c.b16 %v3368, %v3366
      %v5395 = vpack.c.b16 %v3369, %v3367
      %v5396 = vpack.c.b16 %v3372, %v3370
      %v5397 = vpack.c.b16 %v3373, %v3371
      %v5398 = vpack.c.b16 %v3376, %v3374
      %v5399 = vpack.c.b16 %v3377, %v3375
      %v5400 = vpack.c.b16 %v3380, %v3378
      %v5401 = vpack.c.b16 %v3381, %v3379
      %v5402 = vpack.c.b16 %v3384, %v3382
      %v5403 = vpack.c.b16 %v3385, %v3383
      %v5404 = vpack.c.b16 %v3388, %v3386
      %v5405 = vpack.c.b16 %v3389, %v3387
      %v5406 = vpack.c.b16 %v3392, %v3390
      %v5407 = vpack.c.b16 %v3393, %v3391
      %v5408 = vpack.c.b16 %v3396, %v3394
      %v5409 = vpack.c.b16 %v3397, %v3395
      %v5410 = vpack.c.b16 %v3400, %v3398
      %v5411 = vpack.c.b16 %v3401, %v3399
      %v5412 = vpack.c.b16 %v3404, %v3402
      %v5413 = vpack.c.b16 %v3405, %v3403
      %v5414 = vpack.c.b16 %v3408, %v3406
      %v5415 = vpack.c.b16 %v3409, %v3407
      %v5416 = vpack.c.b16 %v3412, %v3410
      %v5417 = vpack.c.b16 %v3413, %v3411
      %v5418 = vpack.c.b16 %v3416, %v3414
      %v5419 = vpack.c.b16 %v3417, %v3415
      %v5420 = vpack.c.b16 %v3420, %v3418
      %v5421 = vpack.c.b16 %v3421, %v3419
      %v5422 = vpack.c.b16 %v3424, %v3422
      %v5423 = vpack.c.b16 %v3425, %v3423
      %v5424 = vpack.c.b16 %v3428, %v3426
      %v5425 = vpack.c.b16 %v3429, %v3427
      %v5426 = vpack.c.b16 %v3432, %v3430
      %v5427 = vpack.c.b16 %v3433, %v3431
      %v5428 = vpack.c.b16 %v3436, %v3434
      %v5429 = vpack.c.b16 %v3437, %v3435
      %v5430 = vpack.c.b16 %v3440, %v3438
      %v5431 = vpack.c.b16 %v3441, %v3439
      %v5432 = vpack.c.b16 %v3444, %v3442
      %v5433 = vpack.c.b16 %v3445, %v3443
      %v5434 = vpack.c.b16 %v3448, %v3446
      %v5435 = vpack.c.b16 %v3449, %v3447
      %v5436 = vpack.c.b16 %v3452, %v3450
      %v5437 = vpack.c.b16 %v3453, %v3451
      %v5438 = vpack.c.b16 %v3456, %v3454
      %v5439 = vpack.c.b16 %v3457, %v3455
      %v5440 = vpack.c.b16 %v3460, %v3458
      %v5441 = vpack.c.b16 %v3461, %v3459
      %v5442 = vpack.c.b16 %v3464, %v3462
      %v5443 = vpack.c.b16 %v3465, %v3463
      %v5444 = vpack.c.b16 %v3468, %v3466
      %v5445 = vpack.c.b16 %v3469, %v3467
      %v5446 = vpack.c.b16 %v3472, %v3470
      %v5447 = vpack.c.b16 %v3473, %v3471
      %v5448 = vpack.c.b16 %v3476, %v3474
      %v5449 = vpack.c.b16 %v3477, %v3475
      %v5450 = vpack.c.b16 %v3480, %v3478
      %v5451 = vpack.c.b16 %v3481, %v3479
      %v5452 = vpack.c.b16 %v3484, %v3482
      %v5453 = vpack.c.b16 %v3485, %v3483
      %v5454 = vpack.c.b16 %v3488, %v3486
      %v5455 = vpack.c.b16 %v3489, %v3487
      %v5456 = vpack.c.b16 %v3492, %v3490
      %v5457 = vpack.c.b16 %v3493, %v3491
      %v5458 = vpack.c.b16 %v3496, %v3494
      %v5459 = vpack.c.b16 %v3497, %v3495
      %v5460 = vpack.c.b16 %v3500, %v3498
      %v5461 = vpack.c.b16 %v3501, %v3499
      %v5462 = vpack.c.b16 %v3504, %v3502
      %v5463 = vpack.c.b16 %v3505, %v3503
      %v5464 = vpack.c.b16 %v3508, %v3506
      %v5465 = vpack.c.b16 %v3509, %v3507
      %v5466 = vpack.c.b16 %v3512, %v3510
      %v5467 = vpack.c.b16 %v3513, %v3511
      %v5468 = vpack.c.b16 %v3516, %v3514
      %v5469 = vpack.c.b16 %v3517, %v3515
      %v5470 = vpack.c.b16 %v3520, %v3518
      %v5471 = vpack.c.b16 %v3521, %v3519
      %v5472 = vpack.c.b16 %v3524, %v3522
      %v5473 = vpack.c.b16 %v3525, %v3523
      %v5474 = vpack.c.b16 %v3528, %v3526
      %v5475 = vpack.c.b16 %v3529, %v3527
      %v5476 = vpack.c.b16 %v3532, %v3530
      %v5477 = vpack.c.b16 %v3533, %v3531
      %v5478 = vpack.c.b16 %v3536, %v3534
      %v5479 = vpack.c.b16 %v3537, %v3535
      %v5480 = vpack.c.b16 %v3540, %v3538
      %v5481 = vpack.c.b16 %v3541, %v3539
      %v5482 = vpack.c.b16 %v3544, %v3542
      %v5483 = vpack.c.b16 %v3545, %v3543
      %v5484 = vpack.c.b16 %v3548, %v3546
      %v5485 = vpack.c.b16 %v3549, %v3547
      %v5486 = vpack.c.b16 %v3552, %v3550
      %v5487 = vpack.c.b16 %v3553, %v3551
      %v5488 = vpack.c.b16 %v3556, %v3554
      %v5489 = vpack.c.b16 %v3557, %v3555
      %v5490 = vpack.c.b16 %v3560, %v3558
      %v5491 = vpack.c.b16 %v3561, %v3559
      %v5492 = vpack.c.b16 %v3564, %v3562
      %v5493 = vpack.c.b16 %v3565, %v3563
      %v5494 = vpack.c.b16 %v3568, %v3566
      %v5495 = vpack.c.b16 %v3569, %v3567
      %v5496 = vpack.c.b16 %v3572, %v3570
      %v5497 = vpack.c.b16 %v3573, %v3571
      %v5498 = vpack.c.b16 %v3576, %v3574
      %v5499 = vpack.c.b16 %v3577, %v3575
      %v5500 = vpack.c.b16 %v3580, %v3578
      %v5501 = vpack.c.b16 %v3581, %v3579
      %v5502 = vpack.c.b16 %v3584, %v3582
      %v5503 = vpack.c.b16 %v3585, %v3583
      %v5504 = vpack.c.b16 %v3588, %v3586
      %v5505 = vpack.c.b16 %v3589, %v3587
      %v5506 = vpack.c.b16 %v3592, %v3590
      %v5507 = vpack.c.b16 %v3593, %v3591
      %v5508 = vpack.c.b16 %v3596, %v3594
      %v5509 = vpack.c.b16 %v3597, %v3595
      %v5510 = vpack.c.b16 %v3600, %v3598
      %v5511 = vpack.c.b16 %v3601, %v3599
      %v5512 = vpack.c.b16 %v3604, %v3602
      %v5513 = vpack.c.b16 %v3605, %v3603
      %v5514 = vpack.c.b16 %v3608, %v3606
      %v5515 = vpack.c.b16 %v3609, %v3607
      %v5516 = vpack.c.b16 %v3612, %v3610
      %v5517 = vpack.c.b16 %v3613, %v3611
      %v5518 = vpack.c.b16 %v3616, %v3614
      %v5519 = vpack.c.b16 %v3617, %v3615
      %v5520 = vpack.c.b16 %v3620, %v3618
      %v5521 = vpack.c.b16 %v3621, %v3619
      %v5522 = vpack.c.b16 %v3624, %v3622
      %v5523 = vpack.c.b16 %v3625, %v3623
      %v5524 = vpack.c.b16 %v3628, %v3626
      %v5525 = vpack.c.b16 %v3629, %v3627
      %v5526 = vpack.c.b16 %v3632, %v3630
      %v5527 = vpack.c.b16 %v3633, %v3631
      %v5528 = vpack.c.b16 %v3636, %v3634
      %v5529 = vpack.c.b16 %v3637, %v3635
      %v5530 = vpack.c.b16 %v3640, %v3638
      %v5531 = vpack.c.b16 %v3641, %v3639
      %v5532 = vpack.c.b16 %v3644, %v3642
      %v5533 = vpack.c.b16 %v3645, %v3643
      %v5534 = vpack.c.b16 %v3648, %v3646
      %v5535 = vpack.c.b16 %v3649, %v3647
      %v5536 = vpack.c.b16 %v3652, %v3650
      %v5537 = vpack.c.b16 %v3653, %v3651
      %v5538 = vpack.c.b16 %v3656, %v3654
      %v5539 = vpack.c.b16 %v3657, %v3655
      %v5540 = vpack.c.b16 %v3660, %v3658
      %v5541 = vpack.c.b16 %v3661, %v3659
      %v5542 = vpack.c.b16 %v3664, %v3662
      %v5543 = vpack.c.b16 %v3665, %v3663
      %v5544 = vpack.c.b16 %v3668, %v3666
      %v5545 = vpack.c.b16 %v3669, %v3667
      %v5546 = vpack.c.b16 %v3672, %v3670
      %v5547 = vpack.c.b16 %v3673, %v3671
      %v5548 = vpack.c.b16 %v3676, %v3674
      %v5549 = vpack.c.b16 %v3677, %v3675
      %v5550 = vpack.c.b16 %v3680, %v3678
      %v5551 = vpack.c.b16 %v3681, %v3679
      %v5552 = vpack.c.b16 %v3684, %v3682
      %v5553 = vpack.c.b16 %v3685, %v3683
      %v5554 = vpack.c.b16 %v3688, %v3686
      %v5555 = vpack.c.b16 %v3689, %v3687
      %v5556 = vpack.c.b16 %v3692, %v3690
      %v5557 = vpack.c.b16 %v3693, %v3691
      %v5558 = vpack.c.b16 %v3696, %v3694
      %v5559 = vpack.c.b16 %v3697, %v3695
      %v5560 = vpack.c.b16 %v3700, %v3698
      %v5561 = vpack.c.b16 %v3701, %v3699
      %v5562 = vpack.c.b16 %v3704, %v3702
      %v5563 = vpack.c.b16 %v3705, %v3703
      %v5564 = vpack.c.b16 %v3708, %v3706
      %v5565 = vpack.c.b16 %v3709, %v3707
      %v5566 = vpack.c.b16 %v3712, %v3710
      %v5567 = vpack.c.b16 %v3713, %v3711
      %v5568 = vpack.c.b16 %v3716, %v3714
      %v5569 = vpack.c.b16 %v3717, %v3715
      %v5570 = vpack.c.b16 %v3720, %v3718
      %v5571 = vpack.c.b16 %v3721, %v3719
      %v5572 = vpack.c.b16 %v3724, %v3722
      %v5573 = vpack.c.b16 %v3725, %v3723
      %v5574 = vpack.c.b16 %v3728, %v3726
      %v5575 = vpack.c.b16 %v3729, %v3727
      %v5576 = vpack.c.b16 %v3732, %v3730
      %v5577 = vpack.c.b16 %v3733, %v3731
      %v5578 = vpack.c.b16 %v3736, %v3734
      %v5579 = vpack.c.b16 %v3737, %v3735
      %v5580 = vpack.c.b16 %v3740, %v3738
      %v5581 = vpack.c.b16 %v3741, %v3739
      %v5582 = vpack.c.b16 %v3744, %v3742
      %v5583 = vpack.c.b16 %v3745, %v3743
      %v5584 = vpack.c.b16 %v3748, %v3746
      %v5585 = vpack.c.b16 %v3749, %v3747
      %v5586 = vpack.c.b16 %v3752, %v3750
      %v5587 = vpack.c.b16 %v3753, %v3751
      %v5588 = vpack.c.b16 %v3756, %v3754
      %v5589 = vpack.c.b16 %v3757, %v3755
      %v5590 = vpack.c.b16 %v3760, %v3758
      %v5591 = vpack.c.b16 %v3761, %v3759
      %v5592 = vpack.c.b16 %v3764, %v3762
      %v5593 = vpack.c.b16 %v3765, %v3763
      %v5594 = vpack.c.b16 %v3768, %v3766
      %v5595 = vpack.c.b16 %v3769, %v3767
      %v5596 = vpack.c.b16 %v3772, %v3770
      %v5597 = vpack.c.b16 %v3773, %v3771
      %v5598 = vpack.c.b16 %v3776, %v3774
      %v5599 = vpack.c.b16 %v3777, %v3775
      %v5600 = vpack.c.b16 %v3780, %v3778
      %v5601 = vpack.c.b16 %v3781, %v3779
      %v5602 = vpack.c.b16 %v3784, %v3782
      %v5603 = vpack.c.b16 %v3785, %v3783
      %v5604 = vpack.c.b16 %v3788, %v3786
      %v5605 = vpack.c.b16 %v3789, %v3787
      %v5606 = vpack.c.b16 %v3792, %v3790
      %v5607 = vpack.c.b16 %v3793, %v3791
      %v5608 = vpack.c.b16 %v3796, %v3794
      %v5609 = vpack.c.b16 %v3797, %v3795
      %v5610 = vpack.c.b16 %v3800, %v3798
      %v5611 = vpack.c.b16 %v3801, %v3799
      %v5612 = vpack.c.b16 %v3804, %v3802
      %v5613 = vpack.c.b16 %v3805, %v3803
      %v5614 = vpack.c.b16 %v3808, %v3806
      %v5615 = vpack.c.b16 %v3809, %v3807
      %v5616 = vpack.c.b16 %v3812, %v3810
      %v5617 = vpack.c.b16 %v3813, %v3811
      %v5618 = vpack.c.b16 %v3816, %v3814
      %v5619 = vpack.c.b16 %v3817, %v3815
      %v5620 = vpack.c.b16 %v3820, %v3818
      %v5621 = vpack.c.b16 %v3821, %v3819
      %v5622 = vpack.c.b16 %v3824, %v3822
      %v5623 = vpack.c.b16 %v3825, %v3823
      %v5624 = vpack.c.b16 %v3828, %v3826
      %v5625 = vpack.c.b16 %v3829, %v3827
      %v5626 = vpack.c.b16 %v3832, %v3830
      %v5627 = vpack.c.b16 %v3833, %v3831
      %v5628 = vpack.c.b16 %v3836, %v3834
      %v5629 = vpack.c.b16 %v3837, %v3835
      %v5630 = vpack.c.b16 %v3840, %v3838
      %v5631 = vpack.c.b16 %v3841, %v3839
      %v5632 = vpack.c.b16 %v3844, %v3842
      %v5633 = vpack.c.b16 %v3845, %v3843
      %v5634 = vpack.c.b16 %v3848, %v3846
      %v5635 = vpack.c.b16 %v3849, %v3847
      %v5636 = vpack.c.b16 %v3852, %v3850
      %v5637 = vpack.c.b16 %v3853, %v3851
      %v5638 = vpack.c.b16 %v3856, %v3854
      %v5639 = vpack.c.b16 %v3857, %v3855
      %v5640 = vpack.c.b16 %v3860, %v3858
      %v5641 = vpack.c.b16 %v3861, %v3859
      %v5642 = vpack.c.b16 %v3864, %v3862
      %v5643 = vpack.c.b16 %v3865, %v3863
      %v5644 = vpack.c.b16 %v3868, %v3866
      %v5645 = vpack.c.b16 %v3869, %v3867
      %v5646 = vpack.c.b16 %v3872, %v3870
      %v5647 = vpack.c.b16 %v3873, %v3871
      %v5648 = vpack.c.b16 %v3876, %v3874
      %v5649 = vpack.c.b16 %v3877, %v3875
      %v5650 = vpack.c.b16 %v3880, %v3878
      %v5651 = vpack.c.b16 %v3881, %v3879
      %v5652 = vpack.c.b16 %v3884, %v3882
      %v5653 = vpack.c.b16 %v3885, %v3883
      %v5654 = vpack.c.b16 %v3888, %v3886
      %v5655 = vpack.c.b16 %v3889, %v3887
      %v5656 = vpack.c.b16 %v3892, %v3890
      %v5657 = vpack.c.b16 %v3893, %v3891
      %v5658 = vpack.c.b16 %v3896, %v3894
      %v5659 = vpack.c.b16 %v3897, %v3895
      %v5660 = vpack.c.b16 %v3900, %v3898
      %v5661 = vpack.c.b16 %v3901, %v3899
      %v5662 = vpack.c.b16 %v3904, %v3902
      %v5663 = vpack.c.b16 %v3905, %v3903
      %v5664 = vpack.c.b16 %v3908, %v3906
      %v5665 = vpack.c.b16 %v3909, %v3907
      %v5666 = vpack.c.b16 %v3912, %v3910
      %v5667 = vpack.c.b16 %v3913, %v3911
      %v5668 = vpack.c.b16 %v3916, %v3914
      %v5669 = vpack.c.b16 %v3917, %v3915
      %v5670 = vpack.c.b16 %v3920, %v3918
      %v5671 = vpack.c.b16 %v3921, %v3919
      %v5672 = vpack.c.b16 %v3924, %v3922
      %v5673 = vpack.c.b16 %v3925, %v3923
      %v5674 = vpack.c.b16 %v3928, %v3926
      %v5675 = vpack.c.b16 %v3929, %v3927
      %v5676 = vpack.c.b16 %v3932, %v3930
      %v5677 = vpack.c.b16 %v3933, %v3931
      %v5678 = vpack.c.b16 %v3936, %v3934
      %v5679 = vpack.c.b16 %v3937, %v3935
      %v5680 = vpack.c.b16 %v3940, %v3938
      %v5681 = vpack.c.b16 %v3941, %v3939
      %v5682 = vpack.c.b16 %v3944, %v3942
      %v5683 = vpack.c.b16 %v3945, %v3943
      %v5684 = vpack.c.b16 %v3948, %v3946
      %v5685 = vpack.c.b16 %v3949, %v3947
      %v5686 = vpack.c.b16 %v3952, %v3950
      %v5687 = vpack.c.b16 %v3953, %v3951
      %v5688 = vpack.c.b16 %v3956, %v3954
      %v5689 = vpack.c.b16 %v3957, %v3955
      %v5690 = vpack.c.b16 %v3960, %v3958
      %v5691 = vpack.c.b16 %v3961, %v3959
      %v5692 = vpack.c.b16 %v3964, %v3962
      %v5693 = vpack.c.b16 %v3965, %v3963
      %v5694 = vpack.c.b16 %v3968, %v3966
      %v5695 = vpack.c.b16 %v3969, %v3967
      %v5696 = vpack.c.b16 %v3972, %v3970
      %v5697 = vpack.c.b16 %v3973, %v3971
      %v5698 = vpack.c.b16 %v3976, %v3974
      %v5699 = vpack.c.b16 %v3977, %v3975
      %v5700 = vpack.c.b16 %v3980, %v3978
      %v5701 = vpack.c.b16 %v3981, %v3979
      %v5702 = vpack.c.b16 %v3984, %v3982
      %v5703 = vpack.c.b16 %v3985, %v3983
      %v5704 = vpack.c.b16 %v3988, %v3986
      %v5705 = vpack.c.b16 %v3989, %v3987
      %v5706 = vpack.c.b16 %v3992, %v3990
      %v5707 = vpack.c.b16 %v3993, %v3991
      %v5708 = vpack.c.b16 %v3996, %v3994
      %v5709 = vpack.c.b16 %v3997, %v3995
      %v5710 = vpack.c.b16 %v4000, %v3998
      %v5711 = vpack.c.b16 %v4001, %v3999
      %v5712 = vpack.c.b16 %v4004, %v4002
      %v5713 = vpack.c.b16 %v4005, %v4003
      %v5714 = vpack.c.b16 %v4008, %v4006
      %v5715 = vpack.c.b16 %v4009, %v4007
      %v5716 = vpack.c.b16 %v4012, %v4010
      %v5717 = vpack.c.b16 %v4013, %v4011
      %v5718 = vpack.c.b16 %v4016, %v4014
      %v5719 = vpack.c.b16 %v4017, %v4015
      %v5720 = vpack.c.b16 %v4020, %v4018
      %v5721 = vpack.c.b16 %v4021, %v4019
      %v5722 = vpack.c.b16 %v4024, %v4022
      %v5723 = vpack.c.b16 %v4025, %v4023
      %v5724 = vpack.c.b16 %v4028, %v4026
      %v5725 = vpack.c.b16 %v4029, %v4027
      %v5726 = vpack.c.b16 %v4032, %v4030
      %v5727 = vpack.c.b16 %v4033, %v4031
      %v5728 = vpack.c.b16 %v4036, %v4034
      %v5729 = vpack.c.b16 %v4037, %v4035
      %v5730 = vpack.c.b16 %v4040, %v4038
      %v5731 = vpack.c.b16 %v4041, %v4039
      %v5732 = vpack.c.b16 %v4044, %v4042
      %v5733 = vpack.c.b16 %v4045, %v4043
      %v5734 = vpack.c.b16 %v4048, %v4046
      %v5735 = vpack.c.b16 %v4049, %v4047
      %v5736 = vpack.c.b16 %v4052, %v4050
      %v5737 = vpack.c.b16 %v4053, %v4051
      %v5738 = vpack.c.b16 %v4056, %v4054
      %v5739 = vpack.c.b16 %v4057, %v4055
      %v5740 = vpack.c.b16 %v4060, %v4058
      %v5741 = vpack.c.b16 %v4061, %v4059
      %v5742 = vpack.c.b16 %v4064, %v4062
      %v5743 = vpack.c.b16 %v4065, %v4063
      %v5744 = vpack.c.b16 %v4068, %v4066
      %v5745 = vpack.c.b16 %v4069, %v4067
      %v5746 = vpack.c.b16 %v4072, %v4070
      %v5747 = vpack.c.b16 %v4073, %v4071
      %v5748 = vpack.c.b16 %v4076, %v4074
      %v5749 = vpack.c.b16 %v4077, %v4075
      %v5750 = vpack.c.b16 %v4080, %v4078
      %v5751 = vpack.c.b16 %v4081, %v4079
      %v5752 = vpack.c.b16 %v4084, %v4082
      %v5753 = vpack.c.b16 %v4085, %v4083
      %v5754 = vpack.c.b16 %v4088, %v4086
      %v5755 = vpack.c.b16 %v4089, %v4087
      %v5756 = vpack.c.b16 %v4092, %v4090
      %v5757 = vpack.c.b16 %v4093, %v4091
      %v5758 = vpack.c.b16 %v4096, %v4094
      %v5759 = vpack.c.b16 %v4097, %v4095
      %v5760 = vpack.c.b16 %v4100, %v4098
      %v5761 = vpack.c.b16 %v4101, %v4099
      %v5762 = vpack.c.b16 %v4104, %v4102
      %v5763 = vpack.c.b16 %v4105, %v4103
      %v5764 = vpack.c.b16 %v4108, %v4106
      %v5765 = vpack.c.b16 %v4109, %v4107
      %v5766 = vpack.c.b16 %v4112, %v4110
      %v5767 = vpack.c.b16 %v4113, %v4111
      %v5768 = vpack.c.b16 %v4116, %v4114
      %v5769 = vpack.c.b16 %v4117, %v4115
      %v5770 = vpack.c.b16 %v4120, %v4118
      %v5771 = vpack.c.b16 %v4121, %v4119
      %v5772 = vpack.c.b16 %v4124, %v4122
      %v5773 = vpack.c.b16 %v4125, %v4123
      %v5774 = vpack.c.b16 %v4128, %v4126
      %v5775 = vpack.c.b16 %v4129, %v4127
      %v5776 = vpack.c.b16 %v4132, %v4130
      %v5777 = vpack.c.b16 %v4133, %v4131
      %v5778 = vpack.c.b16 %v4136, %v4134
      %v5779 = vpack.c.b16 %v4137, %v4135
      %v5780 = vpack.c.b16 %v4140, %v4138
      %v5781 = vpack.c.b16 %v4141, %v4139
      %v5782 = vpack.c.b16 %v4144, %v4142
      %v5783 = vpack.c.b16 %v4145, %v4143
      %v5784 = vpack.c.b16 %v4148, %v4146
      %v5785 = vpack.c.b16 %v4149, %v4147
      %v5786 = vpack.c.b16 %v4152, %v4150
      %v5787 = vpack.c.b16 %v4153, %v4151
      %v5788 = vpack.c.b16 %v4156, %v4154
      %v5789 = vpack.c.b16 %v4157, %v4155
      %v5790 = vpack.c.b16 %v4160, %v4158
      %v5791 = vpack.c.b16 %v4161, %v4159
      %v5792 = vpack.c.b16 %v4164, %v4162
      %v5793 = vpack.c.b16 %v4165, %v4163
      %v5794 = vpack.c.b16 %v4168, %v4166
      %v5795 = vpack.c.b16 %v4169, %v4167
      %v5796 = vpack.c.b16 %v4172, %v4170
      %v5797 = vpack.c.b16 %v4173, %v4171
      %v5798 = vpack.c.b16 %v4176, %v4174
      %v5799 = vpack.c.b16 %v4177, %v4175
      %v5800 = vpack.c.b16 %v4180, %v4178
      %v5801 = vpack.c.b16 %v4181, %v4179
      %v5802 = vpack.c.b16 %v4184, %v4182
      %v5803 = vpack.c.b16 %v4185, %v4183
      %v5804 = vpack.c.b16 %v4188, %v4186
      %v5805 = vpack.c.b16 %v4189, %v4187
      %v5806 = vpack.c.b16 %v4192, %v4190
      %v5807 = vpack.c.b16 %v4193, %v4191
      %v5808 = vpack.c.b16 %v4196, %v4194
      %v5809 = vpack.c.b16 %v4197, %v4195
      %v5810 = vpack.c.b16 %v4200, %v4198
      %v5811 = vpack.c.b16 %v4201, %v4199
      %v5812 = vpack.c.b16 %v4204, %v4202
      %v5813 = vpack.c.b16 %v4205, %v4203
      %v5814 = vpack.c.b16 %v4208, %v4206
      %v5815 = vpack.c.b16 %v4209, %v4207
      %v5816 = vpack.c.b16 %v4212, %v4210
      %v5817 = vpack.c.b16 %v4213, %v4211
      %v5818 = vpack.c.b16 %v4216, %v4214
      %v5819 = vpack.c.b16 %v4217, %v4215
      %v5820 = vpack.c.b16 %v4220, %v4218
      %v5821 = vpack.c.b16 %v4221, %v4219
      %v5822 = vpack.c.b16 %v4224, %v4222
      %v5823 = vpack.c.b16 %v4225, %v4223
      %v5824 = vpack.c.b16 %v4228, %v4226
      %v5825 = vpack.c.b16 %v4229, %v4227
      %v5826 = vpack.c.b16 %v4232, %v4230
      %v5827 = vpack.c.b16 %v4233, %v4231
      %v5828 = vpack.c.b16 %v4236, %v4234
      %v5829 = vpack.c.b16 %v4237, %v4235
      %v5830 = vpack.c.b16 %v4240, %v4238
      %v5831 = vpack.c.b16 %v4241, %v4239
      %v5832 = vpack.c.b16 %v4244, %v4242
      %v5833 = vpack.c.b16 %v4245, %v4243
      %v5834 = vpack.c.b16 %v4248, %v4246
      %v5835 = vpack.c.b16 %v4249, %v4247
      %v5836 = vpack.c.b16 %v4252, %v4250
      %v5837 = vpack.c.b16 %v4253, %v4251
      %v5838 = vpack.c.b16 %v4256, %v4254
      %v5839 = vpack.c.b16 %v4257, %v4255
      %v5840 = vpack.c.b16 %v4260, %v4258
      %v5841 = vpack.c.b16 %v4261, %v4259
      %v5842 = vpack.c.b16 %v4264, %v4262
      %v5843 = vpack.c.b16 %v4265, %v4263
      %v5844 = vpack.c.b16 %v4268, %v4266
      %v5845 = vpack.c.b16 %v4269, %v4267
      %v5846 = vpack.c.b16 %v4272, %v4270
      %v5847 = vpack.c.b16 %v4273, %v4271
      %v5848 = vpack.c.b16 %v4276, %v4274
      %v5849 = vpack.c.b16 %v4277, %v4275
      %v5850 = vpack.c.b16 %v4280, %v4278
      %v5851 = vpack.c.b16 %v4281, %v4279
      %v5852 = vpack.c.b16 %v4284, %v4282
      %v5853 = vpack.c.b16 %v4285, %v4283
      %v5854 = vpack.c.b16 %v4288, %v4286
      %v5855 = vpack.c.b16 %v4289, %v4287
      %v5856 = vpack.c.b16 %v4292, %v4290
      %v5857 = vpack.c.b16 %v4293, %v4291
      %v5858 = vpack.c.b16 %v4296, %v4294
      %v5859 = vpack.c.b16 %v4297, %v4295
      %v5860 = vpack.c.b16 %v4300, %v4298
      %v5861 = vpack.c.b16 %v4301, %v4299
      %v5862 = vpack.c.b16 %v4304, %v4302
      %v5863 = vpack.c.b16 %v4305, %v4303
      %v5864 = vpack.c.b16 %v4308, %v4306
      %v5865 = vpack.c.b16 %v4309, %v4307
      %v5866 = vpack.c.b16 %v4312, %v4310
      %v5867 = vpack.c.b16 %v4313, %v4311
      %v5868 = vpack.c.b16 %v4316, %v4314
      %v5869 = vpack.c.b16 %v4317, %v4315
      %v5870 = vpack.c.b16 %v4320, %v4318
      %v5871 = vpack.c.b16 %v4321, %v4319
      %v5872 = vpack.c.b16 %v4324, %v4322
      %v5873 = vpack.c.b16 %v4325, %v4323
      %v5874 = vpack.c.b16 %v4328, %v4326
      %v5875 = vpack.c.b16 %v4329, %v4327
      %v5876 = vpack.c.b16 %v4332, %v4330
      %v5877 = vpack.c.b16 %v4333, %v4331
      %v5878 = vpack.c.b16 %v4336, %v4334
      %v5879 = vpack.c.b16 %v4337, %v4335
      %v5880 = vpack.c.b16 %v4340, %v4338
      %v5881 = vpack.c.b16 %v4341, %v4339
      %v5882 = vpack.c.b16 %v4344, %v4342
      %v5883 = vpack.c.b16 %v4345, %v4343
      %v5884 = vpack.c.b16 %v4348, %v4346
      %v5885 = vpack.c.b16 %v4349, %v4347
      %v5886 = vpack.c.b16 %v4352, %v4350
      %v5887 = vpack.c.b16 %v4353, %v4351
      %v5888 = vpack.c.b16 %v4356, %v4354
      %v5889 = vpack.c.b16 %v4357, %v4355
      %v5890 = vpack.c.b16 %v4360, %v4358
      %v5891 = vpack.c.b16 %v4361, %v4359
      %v5892 = vpack.c.b16 %v4364, %v4362
      %v5893 = vpack.c.b16 %v4365, %v4363
      %v5894 = vpack.c.b16 %v4368, %v4366
      %v5895 = vpack.c.b16 %v4369, %v4367
      %v5896 = vpack.c.b16 %v4372, %v4370
      %v5897 = vpack.c.b16 %v4373, %v4371
      %v5898 = vpack.c.b16 %v4376, %v4374
      %v5899 = vpack.c.b16 %v4377, %v4375
      %v5900 = vpack.c.b16 %v4380, %v4378
      %v5901 = vpack.c.b16 %v4381, %v4379
      %v5902 = vpack.c.b16 %v4384, %v4382
      %v5903 = vpack.c.b16 %v4385, %v4383
      %v5904 = vpack.c.b16 %v4388, %v4386
      %v5905 = vpack.c.b16 %v4389, %v4387
      %v5906 = vpack.c.b16 %v4392, %v4390
      %v5907 = vpack.c.b16 %v4393, %v4391
      %v5908 = vpack.c.b16 %v4396, %v4394
      %v5909 = vpack.c.b16 %v4397, %v4395
      %v5910 = vpack.c.b16 %v4400, %v4398
      %v5911 = vpack.c.b16 %v4401, %v4399
      %v5912 = vpack.c.b16 %v4404, %v4402
      %v5913 = vpack.c.b16 %v4405, %v4403
      %v5914 = vpack.c.b16 %v4408, %v4406
      %v5915 = vpack.c.b16 %v4409, %v4407
      %v5916 = vpack.c.b16 %v4412, %v4410
      %v5917 = vpack.c.b16 %v4413, %v4411
      %v5918 = vpack.c.b16 %v4416, %v4414
      %v5919 = vpack.c.b16 %v4417, %v4415
      %v5920 = vpack.c.b16 %v4420, %v4418
      %v5921 = vpack.c.b16 %v4421, %v4419
      %v5922 = vpack.c.b16 %v4424, %v4422
      %v5923 = vpack.c.b16 %v4425, %v4423
      %v5924 = vpack.c.b16 %v4428, %v4426
      %v5925 = vpack.c.b16 %v4429, %v4427
      %v5926 = vpack.c.b16 %v4432, %v4430
      %v5927 = vpack.c.b16 %v4433, %v4431
      %v5928 = vpack.c.b16 %v4436, %v4434
      %v5929 = vpack.c.b16 %v4437, %v4435
      %v5930 = vpack.c.b16 %v4440, %v4438
      %v5931 = vpack.c.b16 %v4441, %v4439
      %v5932 = vpack.c.b16 %v4444, %v4442
      %v5933 = vpack.c.b16 %v4445, %v4443
      %v5934 = vpack.c.b16 %v4448, %v4446
      %v5935 = vpack.c.b16 %v4449, %v4447
      %v5936 = vpack.c.b16 %v4452, %v4450
      %v5937 = vpack.c.b16 %v4453, %v4451
      %v5938 = vpack.c.b16 %v4456, %v4454
      %v5939 = vpack.c.b16 %v4457, %v4455
      %v5940 = vpack.c.b16 %v4460, %v4458
      %v5941 = vpack.c.b16 %v4461, %v4459
      %v5942 = vpack.c.b16 %v4464, %v4462
      %v5943 = vpack.c.b16 %v4465, %v4463
      %v5944 = vpack.c.b16 %v4468, %v4466
      %v5945 = vpack.c.b16 %v4469, %v4467
      %v5946 = vpack.c.b16 %v4472, %v4470
      %v5947 = vpack.c.b16 %v4473, %v4471
      %v5948 = vpack.c.b16 %v4476, %v4474
      %v5949 = vpack.c.b16 %v4477, %v4475
      %v5950 = vpack.c.b16 %v4480, %v4478
      %v5951 = vpack.c.b16 %v4481, %v4479
      %v5952 = vpack.c.b16 %v4484, %v4482
      %v5953 = vpack.c.b16 %v4485, %v4483
      %v5954 = vpack.c.b16 %v4488, %v4486
      %v5955 = vpack.c.b16 %v4489, %v4487
      %v5956 = vpack.c.b16 %v4492, %v4490
      %v5957 = vpack.c.b16 %v4493, %v4491
      %v5958 = vpack.c.b16 %v4496, %v4494
      %v5959 = vpack.c.b16 %v4497, %v4495
      %v5960 = vpack.c.b16 %v4500, %v4498
      %v5961 = vpack.c.b16 %v4501, %v4499
      %v5962 = vpack.c.b16 %v4504, %v4502
      %v5963 = vpack.c.b16 %v4505, %v4503
      %v5964 = vpack.c.b16 %v4508, %v4506
      %v5965 = vpack.c.b16 %v4509, %v4507
      %v5966 = vpack.c.b16 %v4512, %v4510
      %v5967 = vpack.c.b16 %v4513, %v4511
      %v5968 = vpack.c.b16 %v4516, %v4514
      %v5969 = vpack.c.b16 %v4517, %v4515
      %v5970 = vpack.c.b16 %v4520, %v4518
      %v5971 = vpack.c.b16 %v4521, %v4519
      %v5972 = vpack.c.b16 %v4524, %v4522
      %v5973 = vpack.c.b16 %v4525, %v4523
      %v5974 = vpack.c.b16 %v4528, %v4526
      %v5975 = vpack.c.b16 %v4529, %v4527
      %v5976 = vpack.c.b16 %v4532, %v4530
      %v5977 = vpack.c.b16 %v4533, %v4531
      %v5978 = vpack.c.b16 %v4536, %v4534
      %v5979 = vpack.c.b16 %v4537, %v4535
      %v5980 = vpack.c.b16 %v4540, %v4538
      %v5981 = vpack.c.b16 %v4541, %v4539
      %v5982 = vpack.c.b16 %v4544, %v4542
      %v5983 = vpack.c.b16 %v4545, %v4543
      %v5984 = vpack.c.b16 %v4548, %v4546
      %v5985 = vpack.c.b16 %v4549, %v4547
      %v5986 = vpack.c.b16 %v4552, %v4550
      %v5987 = vpack.c.b16 %v4553, %v4551
      %v5988 = vpack.c.b16 %v4556, %v4554
      %v5989 = vpack.c.b16 %v4557, %v4555
      %v5990 = vpack.c.b16 %v4560, %v4558
      %v5991 = vpack.c.b16 %v4561, %v4559
      %v5992 = vpack.c.b16 %v4564, %v4562
      %v5993 = vpack.c.b16 %v4565, %v4563
      %v5994 = vpack.c.b16 %v4568, %v4566
      %v5995 = vpack.c.b16 %v4569, %v4567
      %v5996 = vpack.c.b16 %v4572, %v4570
      %v5997 = vpack.c.b16 %v4573, %v4571
      %v5998 = vpack.c.b16 %v4576, %v4574
      %v5999 = vpack.c.b16 %v4577, %v4575
      %v6000 = vpack.c.b16 %v4580, %v4578
      %v6001 = vpack.c.b16 %v4581, %v4579
      %v6002 = vpack.c.b16 %v4584, %v4582
      %v6003 = vpack.c.b16 %v4585, %v4583
      %v6004 = vpack.c.b16 %v4588, %v4586
      %v6005 = vpack.c.b16 %v4589, %v4587
      %v6006 = vpack.c.b16 %v4592, %v4590
      %v6007 = vpack.c.b16 %v4593, %v4591
      %v6008 = vpack.c.b16 %v4596, %v4594
      %v6009 = vpack.c.b16 %v4597, %v4595
      %v6010 = vpack.c.b16 %v4600, %v4598
      %v6011 = vpack.c.b16 %v4601, %v4599
      %v6012 = vpack.c.b16 %v4604, %v4602
      %v6013 = vpack.c.b16 %v4605, %v4603
      %v6014 = vpack.c.b16 %v4608, %v4606
      %v6015 = vpack.c.b16 %v4609, %v4607
      %v6016 = vpack.c.b16 %v4612, %v4610
      %v6017 = vpack.c.b16 %v4613, %v4611
      %v6018 = vpack.c.b16 %v4616, %v4614
      %v6019 = vpack.c.b16 %v4617, %v4615
      %v6020 = vpack.c.b16 %v4620, %v4618
      %v6021 = vpack.c.b16 %v4621, %v4619
      %v6022 = vpack.c.b16 %v4624, %v4622
      %v6023 = vpack.c.b16 %v4625, %v4623
      %v6024 = vpack.c.b16 %v4628, %v4626
      %v6025 = vpack.c.b16 %v4629, %v4627
      %v6026 = vpack.c.b16 %v4632, %v4630
      %v6027 = vpack.c.b16 %v4633, %v4631
      %v6028 = vpack.c.b16 %v4636, %v4634
      %v6029 = vpack.c.b16 %v4637, %v4635
      %v6030 = vpack.c.b16 %v4640, %v4638
      %v6031 = vpack.c.b16 %v4641, %v4639
      %v6032 = vpack.c.b16 %v4644, %v4642
      %v6033 = vpack.c.b16 %v4645, %v4643
      %v6034 = vpack.c.b16 %v4648, %v4646
      %v6035 = vpack.c.b16 %v4649, %v4647
      %v6036 = vpack.c.b16 %v4652, %v4650
      %v6037 = vpack.c.b16 %v4653, %v4651
      %v6038 = vpack.c.b16 %v4656, %v4654
      %v6039 = vpack.c.b16 %v4657, %v4655
      %v6040 = vpack.c.b16 %v4660, %v4658
      %v6041 = vpack.c.b16 %v4661, %v4659
      %v6042 = vpack.c.b16 %v4664, %v4662
      %v6043 = vpack.c.b16 %v4665, %v4663
      %v6044 = vpack.c.b16 %v4668, %v4666
      %v6045 = vpack.c.b16 %v4669, %v4667
      %v6046 = vpack.c.b16 %v4672, %v4670
      %v6047 = vpack.c.b16 %v4673, %v4671
      %v6048 = vpack.c.b16 %v4676, %v4674
      %v6049 = vpack.c.b16 %v4677, %v4675
      %v6050 = vpack.c.b16 %v4680, %v4678
      %v6051 = vpack.c.b16 %v4681, %v4679
      %v6052 = vpack.c.b16 %v4684, %v4682
      %v6053 = vpack.c.b16 %v4685, %v4683
      %v6054 = vpack.c.b16 %v4688, %v4686
      %v6055 = vpack.c.b16 %v4689, %v4687
      %v6056 = vpack.c.b16 %v4692, %v4690
      %v6057 = vpack.c.b16 %v4693, %v4691
      %v6058 = vpack.c.b16 %v4696, %v4694
      %v6059 = vpack.c.b16 %v4697, %v4695
      %v6060 = vpack.c.b16 %v4700, %v4698
      %v6061 = vpack.c.b16 %v4701, %v4699
      %v6062 = vpack.c.b16 %v4704, %v4702
      %v6063 = vpack.c.b16 %v4705, %v4703
      %v6064 = vpack.c.b16 %v4708, %v4706
      %v6065 = vpack.c.b16 %v4709, %v4707
      %v6066 = vpack.c.b16 %v4712, %v4710
      %v6067 = vpack.c.b16 %v4713, %v4711
      %v6068 = vpack.c.b16 %v4716, %v4714
      %v6069 = vpack.c.b16 %v4717, %v4715
      %v6070 = vpack.c.b16 %v4720, %v4718
      %v6071 = vpack.c.b16 %v4721, %v4719
      %v6072 = vpack.c.b16 %v4724, %v4722
      %v6073 = vpack.c.b16 %v4725, %v4723
      %v6074 = vpack.c.b16 %v4728, %v4726
      %v6075 = vpack.c.b16 %v4729, %v4727
      %v6076 = vpack.c.b16 %v4732, %v4730
      %v6077 = vpack.c.b16 %v4733, %v4731
      %v6078 = vpack.c.b16 %v4736, %v4734
      %v6079 = vpack.c.b16 %v4737, %v4735
      %v6080 = vpack.c.b16 %v4740, %v4738
      %v6081 = vpack.c.b16 %v4741, %v4739
      %v6082 = vpack.c.b16 %v4744, %v4742
      %v6083 = vpack.c.b16 %v4745, %v4743
      %v6084 = vpack.c.b16 %v4748, %v4746
      %v6085 = vpack.c.b16 %v4749, %v4747
      %v6086 = vpack.c.b16 %v4752, %v4750
      %v6087 = vpack.c.b16 %v4753, %v4751
      %v6088 = vpack.c.b16 %v4756, %v4754
      %v6089 = vpack.c.b16 %v4757, %v4755
      %v6090 = vpack.c.b16 %v4760, %v4758
      %v6091 = vpack.c.b16 %v4761, %v4759
      %v6092 = vpack.c.b16 %v4764, %v4762
      %v6093 = vpack.c.b16 %v4765, %v4763
      %v6094 = vpack.c.b16 %v4768, %v4766
      %v6095 = vpack.c.b16 %v4769, %v4767
      %v6096 = vpack.c.b16 %v4772, %v4770
      %v6097 = vpack.c.b16 %v4773, %v4771
      %v6098 = vpack.c.b16 %v4776, %v4774
      %v6099 = vpack.c.b16 %v4777, %v4775
      %v6100 = vpack.c.b16 %v4780, %v4778
      %v6101 = vpack.c.b16 %v4781, %v4779
      %v6102 = vpack.c.b16 %v4784, %v4782
      %v6103 = vpack.c.b16 %v4785, %v4783
      %v6104 = vpack.c.b16 %v4788, %v4786
      %v6105 = vpack.c.b16 %v4789, %v4787
      %v6106 = vpack.c.b16 %v4792, %v4790
      %v6107 = vpack.c.b16 %v4793, %v4791
      %v6108 = vpack.c.b16 %v4796, %v4794
      %v6109 = vpack.c.b16 %v4797, %v4795
      %v6110 = vpack.c.b16 %v4800, %v4798
      %v6111 = vpack.c.b16 %v4801, %v4799
      %v6112 = vpack.c.b16 %v4804, %v4802
      %v6113 = vpack.c.b16 %v4805, %v4803
      %v6114 = vpack.c.b16 %v4808, %v4806
      %v6115 = vpack.c.b16 %v4809, %v4807
      %v6116 = vpack.c.b16 %v4812, %v4810
      %v6117 = vpack.c.b16 %v4813, %v4811
      %v6118 = vpack.c.b16 %v4816, %v4814
      %v6119 = vpack.c.b16 %v4817, %v4815
      %v6120 = vpack.c.b16 %v4820, %v4818
      %v6121 = vpack.c.b16 %v4821, %v4819
      %v6122 = vpack.c.b16 %v4824, %v4822
      %v6123 = vpack.c.b16 %v4825, %v4823
      %v6124 = vpack.c.b16 %v4828, %v4826
      %v6125 = vpack.c.b16 %v4829, %v4827
      %v6126 = vpack.c.b16 %v4832, %v4830
      %v6127 = vpack.c.b16 %v4833, %v4831
      %v6128 = vpack.c.b16 %v4836, %v4834
      %v6129 = vpack.c.b16 %v4837, %v4835
      %v6130 = vpack.c.b16 %v4840, %v4838
      %v6131 = vpack.c.b16 %v4841, %v4839
      %v6132 = vpack.c.b16 %v4844, %v4842
      %v6133 = vpack.c.b16 %v4845, %v4843
      %v6134 = vpack.c.b16 %v4848, %v4846
      %v6135 = vpack.c.b16 %v4849, %v4847
      %v6136 = vpack.c.b16 %v4852, %v4850
      %v6137 = vpack.c.b16 %v4853, %v4851
      %v6138 = vpack.c.b16 %v4856, %v4854
      %v6139 = vpack.c.b16 %v4857, %v4855
      %v6140 = vpack.c.b16 %v4860, %v4858
      %v6141 = vpack.c.b16 %v4861, %v4859
      %v6142 = vpack.c.b16 %v4864, %v4862
      %v6143 = vpack.c.b16 %v4865, %v4863
      %v6144 = vpack.c.b16 %v4868, %v4866
      %v6145 = vpack.c.b16 %v4869, %v4867
      %v6146 = vpack.c.b16 %v4872, %v4870
      %v6147 = vpack.c.b16 %v4873, %v4871
      %v6148 = vpack.c.b16 %v4876, %v4874
      %v6149 = vpack.c.b16 %v4877, %v4875
      %v6150 = vpack.c.b16 %v4880, %v4878
      %v6151 = vpack.c.b16 %v4881, %v4879
      %v6152 = vpack.c.b16 %v4884, %v4882
      %v6153 = vpack.c.b16 %v4885, %v4883
      %v6154 = vpack.c.b16 %v4888, %v4886
      %v6155 = vpack.c.b16 %v4889, %v4887
      %v6156 = vpack.c.b16 %v4892, %v4890
      %v6157 = vpack.c.b16 %v4893, %v4891
      %v6158 = vpack.c.b16 %v4896, %v4894
      %v6159 = vpack.c.b16 %v4897, %v4895
      %v6160 = vpack.c.b16 %v4900, %v4898
      %v6161 = vpack.c.b16 %v4901, %v4899
      %v6162 = vpack.c.b16 %v4904, %v4902
      %v6163 = vpack.c.b16 %v4905, %v4903
      %v6164 = vpack.c.b16 %v4908, %v4906
      %v6165 = vpack.c.b16 %v4909, %v4907
      %v6166 = vpack.c.b16 %v4912, %v4910
      %v6167 = vpack.c.b16 %v4913, %v4911
      %v6168 = vpack.c.b16 %v4916, %v4914
      %v6169 = vpack.c.b16 %v4917, %v4915
      %v6170 = vpack.c.b16 %v4920, %v4918
      %v6171 = vpack.c.b16 %v4921, %v4919
      %v6172 = vpack.c.b16 %v4924, %v4922
      %v6173 = vpack.c.b16 %v4925, %v4923
      %v6174 = vpack.c.b16 %v4928, %v4926
      %v6175 = vpack.c.b16 %v4929, %v4927
      %v6176 = vpack.c.b16 %v4932, %v4930
      %v6177 = vpack.c.b16 %v4933, %v4931
      %v6178 = vpack.c.b16 %v4936, %v4934
      %v6179 = vpack.c.b16 %v4937, %v4935
      %v6180 = vpack.c.b16 %v4940, %v4938
      %v6181 = vpack.c.b16 %v4941, %v4939
      %v6182 = vpack.c.b16 %v4944, %v4942
      %v6183 = vpack.c.b16 %v4945, %v4943
      %v6184 = vpack.c.b16 %v4948, %v4946
      %v6185 = vpack.c.b16 %v4949, %v4947
      %v6186 = vpack.c.b16 %v4952, %v4950
      %v6187 = vpack.c.b16 %v4953, %v4951
      %v6188 = vpack.c.b16 %v4956, %v4954
      %v6189 = vpack.c.b16 %v4957, %v4955
      %v6190 = vpack.c.b16 %v4960, %v4958
      %v6191 = vpack.c.b16 %v4961, %v4959
      %v6192 = vpack.c.b16 %v4964, %v4962
      %v6193 = vpack.c.b16 %v4965, %v4963
      %v6194 = vpack.c.b16 %v4968, %v4966
      %v6195 = vpack.c.b16 %v4969, %v4967
      %v6196 = vpack.c.b16 %v4972, %v4970
      %v6197 = vpack.c.b16 %v4973, %v4971
      %v6198 = vpack.c.b16 %v4976, %v4974
      %v6199 = vpack.c.b16 %v4977, %v4975
      %v6200 = vpack.c.b16 %v4980, %v4978
      %v6201 = vpack.c.b16 %v4981, %v4979
      %v6202 = vpack.c.b16 %v4984, %v4982
      %v6203 = vpack.c.b16 %v4985, %v4983
      %v6204 = vpack.c.b16 %v4988, %v4986
      %v6205 = vpack.c.b16 %v4989, %v4987
      %v6206 = vpack.c.b16 %v4992, %v4990
      %v6207 = vpack.c.b16 %v4993, %v4991
      %v6208 = vpack.c.b16 %v4996, %v4994
      %v6209 = vpack.c.b16 %v4997, %v4995
      %v6210 = vpack.c.b16 %v5000, %v4998
      %v6211 = vpack.c.b16 %v5001, %v4999
      %v6212 = vpack.c.b16 %v5004, %v5002
      %v6213 = vpack.c.b16 %v5005, %v5003
      %v6214 = vpack.c.b16 %v5008, %v5006
      %v6215 = vpack.c.b16 %v5009, %v5007
      %v6216 = vpack.c.b16 %v5012, %v5010
      %v6217 = vpack.c.b16 %v5013, %v5011
      %v6218 = vpack.c.b16 %v5016, %v5014
      %v6219 = vpack.c.b16 %v5017, %v5015
      %v6220 = vpack.c.b16 %v5020, %v5018
      %v6221 = vpack.c.b16 %v5021, %v5019
      %v6222 = vpack.c.b16 %v5024, %v5022
      %v6223 = vpack.c.b16 %v5025, %v5023
      %v6224 = vpack.c.b16 %v5028, %v5026
      %v6225 = vpack.c.b16 %v5029, %v5027
      %v6226 = vpack.c.b16 %v5032, %v5030
      %v6227 = vpack.c.b16 %v5033, %v5031
      %v6228 = vpack.c.b16 %v5036, %v5034
      %v6229 = vpack.c.b16 %v5037, %v5035
      %v6230 = vpack.c.b16 %v5040, %v5038
      %v6231 = vpack.c.b16 %v5041, %v5039
      %v6232 = vpack.c.b16 %v5044, %v5042
      %v6233 = vpack.c.b16 %v5045, %v5043
      %v6234 = vpack.c.b16 %v5048, %v5046
      %v6235 = vpack.c.b16 %v5049, %v5047
      %v6236 = vpack.c.b16 %v5052, %v5050
      %v6237 = vpack.c.b16 %v5053, %v5051
      %v6238 = vpack.c.b16 %v5056, %v5054
      %v6239 = vpack.c.b16 %v5057, %v5055
      %v6240 = vpack.c.b16 %v5060, %v5058
      %v6241 = vpack.c.b16 %v5061, %v5059
      %v6242 = vpack.c.b16 %v5064, %v5062
      %v6243 = vpack.c.b16 %v5065, %v5063
      %v6244 = vpack.c.b16 %v5068, %v5066
      %v6245 = vpack.c.b16 %v5069, %v5067
      %v6246 = vpack.c.b16 %v5072, %v5070
      %v6247 = vpack.c.b16 %v5073, %v5071
      %v6248 = vpack.c.b16 %v5076, %v5074
      %v6249 = vpack.c.b16 %v5077, %v5075
      %v6250 = vpack.c.b16 %v5080, %v5078
      %v6251 = vpack.c.b16 %v5081, %v5079
      %v6252 = vpack.c.b16 %v5084, %v5082
      %v6253 = vpack.c.b16 %v5085, %v5083
      %v6254 = vpack.c.b16 %v5088, %v5086
      %v6255 = vpack.c.b16 %v5089, %v5087
      %v6256 = vpack.c.b16 %v5092, %v5090
      %v6257 = vpack.c.b16 %v5093, %v5091
      %v6258 = vpack.c.b16 %v5096, %v5094
      %v6259 = vpack.c.b16 %v5097, %v5095
      %v6260 = vpack.c.b16 %v5100, %v5098
      %v6261 = vpack.c.b16 %v5101, %v5099
      %v6262 = vpack.c.b16 %v5104, %v5102
      %v6263 = vpack.c.b16 %v5105, %v5103
      %v6264 = vpack.c.b16 %v5108, %v5106
      %v6265 = vpack.c.b16 %v5109, %v5107
      %v6266 = vpack.c.b16 %v5112, %v5110
      %v6267 = vpack.c.b16 %v5113, %v5111
      %v6268 = vpack.c.b16 %v5116, %v5114
      %v6269 = vpack.c.b16 %v5117, %v5115
      %7422 = vmatpush.bf16.msra.mxu0 %v5132
      %7423 = vmatpush.bf16.msra.mxu0 %v5130
      %7424 = vmatpush.bf16.msra.mxu0 %v5128
      %7425 = vmatpush.bf16.msra.mxu0 %v5126
      %7426 = vmatpush.bf16.msra.mxu0 %v5124
      %7427 = vmatpush.bf16.msra.mxu0 %v5122
      %7428 = vmatpush.bf16.msra.mxu0 %v5120
      %7429 = vmatpush.bf16.msra.mxu0 %v5118
      %7430 = vmatmul.bf16.gmra.mxu0 %v432
      %v7431 = vpop.f32.mrf.mxu0
      %v7432 = vadd.f32 %v1658, %v7431
      %v7433 = vpop.f32.mrf.mxu0
      %7434 = vdwg.mxu0
      %7435 = vmatpush.bf16.msra.mxu0 %v5148
      %7436 = vmatpush.bf16.msra.mxu0 %v5146
      %7437 = vmatpush.bf16.msra.mxu0 %v5144
      %7438 = vmatpush.bf16.msra.mxu0 %v5142
      %7439 = vmatpush.bf16.msra.mxu0 %v5140
      %7440 = vmatpush.bf16.msra.mxu0 %v5138
      %7441 = vmatpush.bf16.msra.mxu0 %v5136
      %7442 = vmatpush.bf16.msra.mxu0 %v5134
      %7443 = vmatmul.bf16.gmra.mxu0 %v433
      %v7444 = vpop.f32.mrf.mxu0
      %v7445 = vadd.f32 %v7432, %v7444
      %v7446 = vpop.f32.mrf.mxu0
      %7447 = vdwg.mxu0
      %7448 = vmatpush.bf16.msra.mxu0 %v5164
      %7449 = vmatpush.bf16.msra.mxu0 %v5162
      %7450 = vmatpush.bf16.msra.mxu0 %v5160
      %7451 = vmatpush.bf16.msra.mxu0 %v5158
      %7452 = vmatpush.bf16.msra.mxu0 %v5156
      %7453 = vmatpush.bf16.msra.mxu0 %v5154
      %7454 = vmatpush.bf16.msra.mxu0 %v5152
      %7455 = vmatpush.bf16.msra.mxu0 %v5150
      %7456 = vmatmul.bf16.gmra.mxu0 %v434
      %v7457 = vpop.f32.mrf.mxu0
      %v7458 = vadd.f32 %v7445, %v7457
      %v7459 = vpop.f32.mrf.mxu0
      %7460 = vdwg.mxu0
      %7461 = vmatpush.bf16.msra.mxu0 %v5180
      %7462 = vmatpush.bf16.msra.mxu0 %v5178
      %7463 = vmatpush.bf16.msra.mxu0 %v5176
      %7464 = vmatpush.bf16.msra.mxu0 %v5174
      %7465 = vmatpush.bf16.msra.mxu0 %v5172
      %7466 = vmatpush.bf16.msra.mxu0 %v5170
      %7467 = vmatpush.bf16.msra.mxu0 %v5168
      %7468 = vmatpush.bf16.msra.mxu0 %v5166
      %7469 = vmatmul.bf16.gmra.mxu0 %v435
      %v7470 = vpop.f32.mrf.mxu0
      %v7471 = vadd.f32 %v7458, %v7470
      %v7472 = vpop.f32.mrf.mxu0
      %7473 = vdwg.mxu0
      %7474 = vmatpush.bf16.msra.mxu0 %v5196
      %7475 = vmatpush.bf16.msra.mxu0 %v5194
      %7476 = vmatpush.bf16.msra.mxu0 %v5192
      %7477 = vmatpush.bf16.msra.mxu0 %v5190
      %7478 = vmatpush.bf16.msra.mxu0 %v5188
      %7479 = vmatpush.bf16.msra.mxu0 %v5186
      %7480 = vmatpush.bf16.msra.mxu0 %v5184
      %7481 = vmatpush.bf16.msra.mxu0 %v5182
      %7482 = vmatmul.bf16.gmra.mxu0 %v436
      %v7483 = vpop.f32.mrf.mxu0
      %v7484 = vadd.f32 %v7471, %v7483
      %v7485 = vpop.f32.mrf.mxu0
      %7486 = vdwg.mxu0
      %7487 = vmatpush.bf16.msra.mxu0 %v5212
      %7488 = vmatpush.bf16.msra.mxu0 %v5210
      %7489 = vmatpush.bf16.msra.mxu0 %v5208
      %7490 = vmatpush.bf16.msra.mxu0 %v5206
      %7491 = vmatpush.bf16.msra.mxu0 %v5204
      %7492 = vmatpush.bf16.msra.mxu0 %v5202
      %7493 = vmatpush.bf16.msra.mxu0 %v5200
      %7494 = vmatpush.bf16.msra.mxu0 %v5198
      %7495 = vmatmul.bf16.gmra.mxu0 %v437
      %v7496 = vpop.f32.mrf.mxu0
      %v7497 = vadd.f32 %v7484, %v7496
      %v7498 = vpop.f32.mrf.mxu0
      %7499 = vdwg.mxu0
      %7500 = vmatpush.bf16.msra.mxu0 %v5228
      %7501 = vmatpush.bf16.msra.mxu0 %v5226
      %7502 = vmatpush.bf16.msra.mxu0 %v5224
      %7503 = vmatpush.bf16.msra.mxu0 %v5222
      %7504 = vmatpush.bf16.msra.mxu0 %v5220
      %7505 = vmatpush.bf16.msra.mxu0 %v5218
      %7506 = vmatpush.bf16.msra.mxu0 %v5216
      %7507 = vmatpush.bf16.msra.mxu0 %v5214
      %7508 = vmatmul.bf16.gmra.mxu0 %v438
      %v7509 = vpop.f32.mrf.mxu0
      %v7510 = vadd.f32 %v7497, %v7509
      %v7511 = vpop.f32.mrf.mxu0
      %7512 = vdwg.mxu0
      %7513 = vmatpush.bf16.msra.mxu0 %v5244
      %7514 = vmatpush.bf16.msra.mxu0 %v5242
      %7515 = vmatpush.bf16.msra.mxu0 %v5240
      %7516 = vmatpush.bf16.msra.mxu0 %v5238
      %7517 = vmatpush.bf16.msra.mxu0 %v5236
      %7518 = vmatpush.bf16.msra.mxu0 %v5234
      %7519 = vmatpush.bf16.msra.mxu0 %v5232
      %7520 = vmatpush.bf16.msra.mxu0 %v5230
      %7521 = vmatmul.bf16.gmra.mxu0 %v439
      %v7522 = vpop.f32.mrf.mxu0
      %v7523 = vadd.f32 %v7510, %v7522
      %v7524 = vpop.f32.mrf.mxu0
      %7525 = vdwg.mxu0
      %7526 = vmatpush.bf16.msra.mxu0 %v5260
      %7527 = vmatpush.bf16.msra.mxu0 %v5258
      %7528 = vmatpush.bf16.msra.mxu0 %v5256
      %7529 = vmatpush.bf16.msra.mxu0 %v5254
      %7530 = vmatpush.bf16.msra.mxu0 %v5252
      %7531 = vmatpush.bf16.msra.mxu0 %v5250
      %7532 = vmatpush.bf16.msra.mxu0 %v5248
      %7533 = vmatpush.bf16.msra.mxu0 %v5246
      %7534 = vmatmul.bf16.gmra.mxu0 %v440
      %v7535 = vpop.f32.mrf.mxu0
      %v7536 = vadd.f32 %v7523, %v7535
      %v7537 = vpop.f32.mrf.mxu0
      %7538 = vdwg.mxu0
      %7539 = vmatpush.bf16.msra.mxu0 %v5276
      %7540 = vmatpush.bf16.msra.mxu0 %v5274
      %7541 = vmatpush.bf16.msra.mxu0 %v5272
      %7542 = vmatpush.bf16.msra.mxu0 %v5270
      %7543 = vmatpush.bf16.msra.mxu0 %v5268
      %7544 = vmatpush.bf16.msra.mxu0 %v5266
      %7545 = vmatpush.bf16.msra.mxu0 %v5264
      %7546 = vmatpush.bf16.msra.mxu0 %v5262
      %7547 = vmatmul.bf16.gmra.mxu0 %v441
      %v7548 = vpop.f32.mrf.mxu0
      %v7549 = vadd.f32 %v7536, %v7548
      %v7550 = vpop.f32.mrf.mxu0
      %7551 = vdwg.mxu0
      %7552 = vmatpush.bf16.msra.mxu0 %v5292
      %7553 = vmatpush.bf16.msra.mxu0 %v5290
      %7554 = vmatpush.bf16.msra.mxu0 %v5288
      %7555 = vmatpush.bf16.msra.mxu0 %v5286
      %7556 = vmatpush.bf16.msra.mxu0 %v5284
      %7557 = vmatpush.bf16.msra.mxu0 %v5282
      %7558 = vmatpush.bf16.msra.mxu0 %v5280
      %7559 = vmatpush.bf16.msra.mxu0 %v5278
      %7560 = vmatmul.bf16.gmra.mxu0 %v442
      %v7561 = vpop.f32.mrf.mxu0
      %v7562 = vadd.f32 %v7549, %v7561
      %v7563 = vpop.f32.mrf.mxu0
      %7564 = vdwg.mxu0
      %7565 = vmatpush.bf16.msra.mxu0 %v5308
      %7566 = vmatpush.bf16.msra.mxu0 %v5306
      %7567 = vmatpush.bf16.msra.mxu0 %v5304
      %7568 = vmatpush.bf16.msra.mxu0 %v5302
      %7569 = vmatpush.bf16.msra.mxu0 %v5300
      %7570 = vmatpush.bf16.msra.mxu0 %v5298
      %7571 = vmatpush.bf16.msra.mxu0 %v5296
      %7572 = vmatpush.bf16.msra.mxu0 %v5294
      %7573 = vmatmul.bf16.gmra.mxu0 %v443
      %v7574 = vpop.f32.mrf.mxu0
      %v7575 = vadd.f32 %v7562, %v7574
      %v7576 = vpop.f32.mrf.mxu0
      %7577 = vdwg.mxu0
      %7578 = vmatpush.bf16.msra.mxu0 %v5324
      %7579 = vmatpush.bf16.msra.mxu0 %v5322
      %7580 = vmatpush.bf16.msra.mxu0 %v5320
      %7581 = vmatpush.bf16.msra.mxu0 %v5318
      %7582 = vmatpush.bf16.msra.mxu0 %v5316
      %7583 = vmatpush.bf16.msra.mxu0 %v5314
      %7584 = vmatpush.bf16.msra.mxu0 %v5312
      %7585 = vmatpush.bf16.msra.mxu0 %v5310
      %7586 = vmatmul.bf16.gmra.mxu0 %v444
      %v7587 = vpop.f32.mrf.mxu0
      %v7588 = vadd.f32 %v7575, %v7587
      %v7589 = vpop.f32.mrf.mxu0
      %7590 = vdwg.mxu0
      %7591 = vmatpush.bf16.msra.mxu0 %v5340
      %7592 = vmatpush.bf16.msra.mxu0 %v5338
      %7593 = vmatpush.bf16.msra.mxu0 %v5336
      %7594 = vmatpush.bf16.msra.mxu0 %v5334
      %7595 = vmatpush.bf16.msra.mxu0 %v5332
      %7596 = vmatpush.bf16.msra.mxu0 %v5330
      %7597 = vmatpush.bf16.msra.mxu0 %v5328
      %7598 = vmatpush.bf16.msra.mxu0 %v5326
      %7599 = vmatmul.bf16.gmra.mxu0 %v445
      %v7600 = vpop.f32.mrf.mxu0
      %v7601 = vadd.f32 %v7588, %v7600
      %v7602 = vpop.f32.mrf.mxu0
      %7603 = vdwg.mxu0
      %7604 = vmatpush.bf16.msra.mxu0 %v5356
      %7605 = vmatpush.bf16.msra.mxu0 %v5354
      %7606 = vmatpush.bf16.msra.mxu0 %v5352
      %7607 = vmatpush.bf16.msra.mxu0 %v5350
      %7608 = vmatpush.bf16.msra.mxu0 %v5348
      %7609 = vmatpush.bf16.msra.mxu0 %v5346
      %7610 = vmatpush.bf16.msra.mxu0 %v5344
      %7611 = vmatpush.bf16.msra.mxu0 %v5342
      %7612 = vmatmul.bf16.gmra.mxu0 %v446
      %v7613 = vpop.f32.mrf.mxu0
      %v7614 = vadd.f32 %v7601, %v7613
      %v7615 = vpop.f32.mrf.mxu0
      %7616 = vdwg.mxu0
      %7617 = vmatpush.bf16.msra.mxu0 %v5372
      %7618 = vmatpush.bf16.msra.mxu0 %v5370
      %7619 = vmatpush.bf16.msra.mxu0 %v5368
      %7620 = vmatpush.bf16.msra.mxu0 %v5366
      %7621 = vmatpush.bf16.msra.mxu0 %v5364
      %7622 = vmatpush.bf16.msra.mxu0 %v5362
      %7623 = vmatpush.bf16.msra.mxu0 %v5360
      %7624 = vmatpush.bf16.msra.mxu0 %v5358
      %7625 = vmatmul.bf16.gmra.mxu0 %v447
      %v7626 = vpop.f32.mrf.mxu0
      %v7627 = vadd.f32 %v7614, %v7626
      %v7628 = vpop.f32.mrf.mxu0
      %7629 = vdwg.mxu0
      %7630 = vmatpush.bf16.msra.mxu0 %v5388
      %7631 = vmatpush.bf16.msra.mxu0 %v5386
      %7632 = vmatpush.bf16.msra.mxu0 %v5384
      %7633 = vmatpush.bf16.msra.mxu0 %v5382
      %7634 = vmatpush.bf16.msra.mxu0 %v5380
      %7635 = vmatpush.bf16.msra.mxu0 %v5378
      %7636 = vmatpush.bf16.msra.mxu0 %v5376
      %7637 = vmatpush.bf16.msra.mxu0 %v5374
      %7638 = vmatmul.bf16.gmra.mxu0 %v448
      %v7639 = vpop.f32.mrf.mxu0
      %v7640 = vadd.f32 %v7627, %v7639
      %v7641 = vpop.f32.mrf.mxu0
      %7642 = vdwg.mxu0
      %7643 = vmatpush.bf16.msra.mxu0 %v5404
      %7644 = vmatpush.bf16.msra.mxu0 %v5402
      %7645 = vmatpush.bf16.msra.mxu0 %v5400
      %7646 = vmatpush.bf16.msra.mxu0 %v5398
      %7647 = vmatpush.bf16.msra.mxu0 %v5396
      %7648 = vmatpush.bf16.msra.mxu0 %v5394
      %7649 = vmatpush.bf16.msra.mxu0 %v5392
      %7650 = vmatpush.bf16.msra.mxu0 %v5390
      %7651 = vmatmul.bf16.gmra.mxu0 %v449
      %v7652 = vpop.f32.mrf.mxu0
      %v7653 = vadd.f32 %v7640, %v7652
      %v7654 = vpop.f32.mrf.mxu0
      %7655 = vdwg.mxu0
      %7656 = vmatpush.bf16.msra.mxu0 %v5420
      %7657 = vmatpush.bf16.msra.mxu0 %v5418
      %7658 = vmatpush.bf16.msra.mxu0 %v5416
      %7659 = vmatpush.bf16.msra.mxu0 %v5414
      %7660 = vmatpush.bf16.msra.mxu0 %v5412
      %7661 = vmatpush.bf16.msra.mxu0 %v5410
      %7662 = vmatpush.bf16.msra.mxu0 %v5408
      %7663 = vmatpush.bf16.msra.mxu0 %v5406
      %7664 = vmatmul.bf16.gmra.mxu0 %v450
      %v7665 = vpop.f32.mrf.mxu0
      %v7666 = vadd.f32 %v7653, %v7665
      %v7667 = vpop.f32.mrf.mxu0
      %7668 = vdwg.mxu0
      %7669 = vmatpush.bf16.msra.mxu0 %v5436
      %7670 = vmatpush.bf16.msra.mxu0 %v5434
      %7671 = vmatpush.bf16.msra.mxu0 %v5432
      %7672 = vmatpush.bf16.msra.mxu0 %v5430
      %7673 = vmatpush.bf16.msra.mxu0 %v5428
      %7674 = vmatpush.bf16.msra.mxu0 %v5426
      %7675 = vmatpush.bf16.msra.mxu0 %v5424
      %7676 = vmatpush.bf16.msra.mxu0 %v5422
      %7677 = vmatmul.bf16.gmra.mxu0 %v451
      %v7678 = vpop.f32.mrf.mxu0
      %v7679 = vadd.f32 %v7666, %v7678
      %v7680 = vpop.f32.mrf.mxu0
      %7681 = vdwg.mxu0
      %7682 = vmatpush.bf16.msra.mxu0 %v5452
      %7683 = vmatpush.bf16.msra.mxu0 %v5450
      %7684 = vmatpush.bf16.msra.mxu0 %v5448
      %7685 = vmatpush.bf16.msra.mxu0 %v5446
      %7686 = vmatpush.bf16.msra.mxu0 %v5444
      %7687 = vmatpush.bf16.msra.mxu0 %v5442
      %7688 = vmatpush.bf16.msra.mxu0 %v5440
      %7689 = vmatpush.bf16.msra.mxu0 %v5438
      %7690 = vmatmul.bf16.gmra.mxu0 %v452
      %v7691 = vpop.f32.mrf.mxu0
      %v7692 = vadd.f32 %v7679, %v7691
      %v7693 = vpop.f32.mrf.mxu0
      %7694 = vdwg.mxu0
      %7695 = vmatpush.bf16.msra.mxu0 %v5468
      %7696 = vmatpush.bf16.msra.mxu0 %v5466
      %7697 = vmatpush.bf16.msra.mxu0 %v5464
      %7698 = vmatpush.bf16.msra.mxu0 %v5462
      %7699 = vmatpush.bf16.msra.mxu0 %v5460
      %7700 = vmatpush.bf16.msra.mxu0 %v5458
      %7701 = vmatpush.bf16.msra.mxu0 %v5456
      %7702 = vmatpush.bf16.msra.mxu0 %v5454
      %7703 = vmatmul.bf16.gmra.mxu0 %v453
      %v7704 = vpop.f32.mrf.mxu0
      %v7705 = vadd.f32 %v7692, %v7704
      %v7706 = vpop.f32.mrf.mxu0
      %7707 = vdwg.mxu0
      %7708 = vmatpush.bf16.msra.mxu0 %v5484
      %7709 = vmatpush.bf16.msra.mxu0 %v5482
      %7710 = vmatpush.bf16.msra.mxu0 %v5480
      %7711 = vmatpush.bf16.msra.mxu0 %v5478
      %7712 = vmatpush.bf16.msra.mxu0 %v5476
      %7713 = vmatpush.bf16.msra.mxu0 %v5474
      %7714 = vmatpush.bf16.msra.mxu0 %v5472
      %7715 = vmatpush.bf16.msra.mxu0 %v5470
      %7716 = vmatmul.bf16.gmra.mxu0 %v454
      %v7717 = vpop.f32.mrf.mxu0
      %v7718 = vadd.f32 %v7705, %v7717
      %v7719 = vpop.f32.mrf.mxu0
      %7720 = vdwg.mxu0
      %7721 = vmatpush.bf16.msra.mxu0 %v5500
      %7722 = vmatpush.bf16.msra.mxu0 %v5498
      %7723 = vmatpush.bf16.msra.mxu0 %v5496
      %7724 = vmatpush.bf16.msra.mxu0 %v5494
      %7725 = vmatpush.bf16.msra.mxu0 %v5492
      %7726 = vmatpush.bf16.msra.mxu0 %v5490
      %7727 = vmatpush.bf16.msra.mxu0 %v5488
      %7728 = vmatpush.bf16.msra.mxu0 %v5486
      %7729 = vmatmul.bf16.gmra.mxu0 %v455
      %v7730 = vpop.f32.mrf.mxu0
      %v7731 = vadd.f32 %v7718, %v7730
      %v7732 = vpop.f32.mrf.mxu0
      %7733 = vdwg.mxu0
      %7734 = vmatpush.bf16.msra.mxu0 %v5516
      %7735 = vmatpush.bf16.msra.mxu0 %v5514
      %7736 = vmatpush.bf16.msra.mxu0 %v5512
      %7737 = vmatpush.bf16.msra.mxu0 %v5510
      %7738 = vmatpush.bf16.msra.mxu0 %v5508
      %7739 = vmatpush.bf16.msra.mxu0 %v5506
      %7740 = vmatpush.bf16.msra.mxu0 %v5504
      %7741 = vmatpush.bf16.msra.mxu0 %v5502
      %7742 = vmatmul.bf16.gmra.mxu0 %v456
      %v7743 = vpop.f32.mrf.mxu0
      %v7744 = vadd.f32 %v7731, %v7743
      %v7745 = vpop.f32.mrf.mxu0
      %7746 = vdwg.mxu0
      %7747 = vmatpush.bf16.msra.mxu0 %v5532
      %7748 = vmatpush.bf16.msra.mxu0 %v5530
      %7749 = vmatpush.bf16.msra.mxu0 %v5528
      %7750 = vmatpush.bf16.msra.mxu0 %v5526
      %7751 = vmatpush.bf16.msra.mxu0 %v5524
      %7752 = vmatpush.bf16.msra.mxu0 %v5522
      %7753 = vmatpush.bf16.msra.mxu0 %v5520
      %7754 = vmatpush.bf16.msra.mxu0 %v5518
      %7755 = vmatmul.bf16.gmra.mxu0 %v457
      %v7756 = vpop.f32.mrf.mxu0
      %v7757 = vadd.f32 %v7744, %v7756
      %v7758 = vpop.f32.mrf.mxu0
      %7759 = vdwg.mxu0
      %7760 = vmatpush.bf16.msra.mxu0 %v5548
      %7761 = vmatpush.bf16.msra.mxu0 %v5546
      %7762 = vmatpush.bf16.msra.mxu0 %v5544
      %7763 = vmatpush.bf16.msra.mxu0 %v5542
      %7764 = vmatpush.bf16.msra.mxu0 %v5540
      %7765 = vmatpush.bf16.msra.mxu0 %v5538
      %7766 = vmatpush.bf16.msra.mxu0 %v5536
      %7767 = vmatpush.bf16.msra.mxu0 %v5534
      %7768 = vmatmul.bf16.gmra.mxu0 %v458
      %v7769 = vpop.f32.mrf.mxu0
      %v7770 = vadd.f32 %v7757, %v7769
      %v7771 = vpop.f32.mrf.mxu0
      %7772 = vdwg.mxu0
      %7773 = vmatpush.bf16.msra.mxu0 %v5564
      %7774 = vmatpush.bf16.msra.mxu0 %v5562
      %7775 = vmatpush.bf16.msra.mxu0 %v5560
      %7776 = vmatpush.bf16.msra.mxu0 %v5558
      %7777 = vmatpush.bf16.msra.mxu0 %v5556
      %7778 = vmatpush.bf16.msra.mxu0 %v5554
      %7779 = vmatpush.bf16.msra.mxu0 %v5552
      %7780 = vmatpush.bf16.msra.mxu0 %v5550
      %7781 = vmatmul.bf16.gmra.mxu0 %v459
      %v7782 = vpop.f32.mrf.mxu0
      %v7783 = vadd.f32 %v7770, %v7782
      %v7784 = vpop.f32.mrf.mxu0
      %7785 = vdwg.mxu0
      %7786 = vmatpush.bf16.msra.mxu0 %v5580
      %7787 = vmatpush.bf16.msra.mxu0 %v5578
      %7788 = vmatpush.bf16.msra.mxu0 %v5576
      %7789 = vmatpush.bf16.msra.mxu0 %v5574
      %7790 = vmatpush.bf16.msra.mxu0 %v5572
      %7791 = vmatpush.bf16.msra.mxu0 %v5570
      %7792 = vmatpush.bf16.msra.mxu0 %v5568
      %7793 = vmatpush.bf16.msra.mxu0 %v5566
      %7794 = vmatmul.bf16.gmra.mxu0 %v460
      %v7795 = vpop.f32.mrf.mxu0
      %v7796 = vadd.f32 %v7783, %v7795
      %v7797 = vpop.f32.mrf.mxu0
      %7798 = vdwg.mxu0
      %7799 = vmatpush.bf16.msra.mxu0 %v5596
      %7800 = vmatpush.bf16.msra.mxu0 %v5594
      %7801 = vmatpush.bf16.msra.mxu0 %v5592
      %7802 = vmatpush.bf16.msra.mxu0 %v5590
      %7803 = vmatpush.bf16.msra.mxu0 %v5588
      %7804 = vmatpush.bf16.msra.mxu0 %v5586
      %7805 = vmatpush.bf16.msra.mxu0 %v5584
      %7806 = vmatpush.bf16.msra.mxu0 %v5582
      %7807 = vmatmul.bf16.gmra.mxu0 %v461
      %v7808 = vpop.f32.mrf.mxu0
      %v7809 = vadd.f32 %v7796, %v7808
      %v7810 = vpop.f32.mrf.mxu0
      %7811 = vdwg.mxu0
      %7812 = vmatpush.bf16.msra.mxu0 %v5612
      %7813 = vmatpush.bf16.msra.mxu0 %v5610
      %7814 = vmatpush.bf16.msra.mxu0 %v5608
      %7815 = vmatpush.bf16.msra.mxu0 %v5606
      %7816 = vmatpush.bf16.msra.mxu0 %v5604
      %7817 = vmatpush.bf16.msra.mxu0 %v5602
      %7818 = vmatpush.bf16.msra.mxu0 %v5600
      %7819 = vmatpush.bf16.msra.mxu0 %v5598
      %7820 = vmatmul.bf16.gmra.mxu0 %v462
      %v7821 = vpop.f32.mrf.mxu0
      %v7822 = vadd.f32 %v7809, %v7821
      %v7823 = vpop.f32.mrf.mxu0
      %7824 = vdwg.mxu0
      %7825 = vmatpush.bf16.msra.mxu0 %v5628
      %7826 = vmatpush.bf16.msra.mxu0 %v5626
      %7827 = vmatpush.bf16.msra.mxu0 %v5624
      %7828 = vmatpush.bf16.msra.mxu0 %v5622
      %7829 = vmatpush.bf16.msra.mxu0 %v5620
      %7830 = vmatpush.bf16.msra.mxu0 %v5618
      %7831 = vmatpush.bf16.msra.mxu0 %v5616
      %7832 = vmatpush.bf16.msra.mxu0 %v5614
      %7833 = vmatmul.bf16.gmra.mxu0 %v463
      %v7834 = vpop.f32.mrf.mxu0
      %v7835 = vadd.f32 %v7822, %v7834
      %v7836 = vpop.f32.mrf.mxu0
      %7837 = vdwg.mxu0
      %7838 = vmatpush.bf16.msra.mxu0 %v5644
      %7839 = vmatpush.bf16.msra.mxu0 %v5642
      %7840 = vmatpush.bf16.msra.mxu0 %v5640
      %7841 = vmatpush.bf16.msra.mxu0 %v5638
      %7842 = vmatpush.bf16.msra.mxu0 %v5636
      %7843 = vmatpush.bf16.msra.mxu0 %v5634
      %7844 = vmatpush.bf16.msra.mxu0 %v5632
      %7845 = vmatpush.bf16.msra.mxu0 %v5630
      %7846 = vmatmul.bf16.gmra.mxu0 %v464
      %v7847 = vpop.f32.mrf.mxu0
      %v7848 = vadd.f32 %v7835, %v7847
      %v7849 = vpop.f32.mrf.mxu0
      %7850 = vdwg.mxu0
      %7851 = vmatpush.bf16.msra.mxu0 %v5660
      %7852 = vmatpush.bf16.msra.mxu0 %v5658
      %7853 = vmatpush.bf16.msra.mxu0 %v5656
      %7854 = vmatpush.bf16.msra.mxu0 %v5654
      %7855 = vmatpush.bf16.msra.mxu0 %v5652
      %7856 = vmatpush.bf16.msra.mxu0 %v5650
      %7857 = vmatpush.bf16.msra.mxu0 %v5648
      %7858 = vmatpush.bf16.msra.mxu0 %v5646
      %7859 = vmatmul.bf16.gmra.mxu0 %v465
      %v7860 = vpop.f32.mrf.mxu0
      %v7861 = vadd.f32 %v7848, %v7860
      %v7862 = vpop.f32.mrf.mxu0
      %7863 = vdwg.mxu0
      %7864 = vmatpush.bf16.msra.mxu0 %v5676
      %7865 = vmatpush.bf16.msra.mxu0 %v5674
      %7866 = vmatpush.bf16.msra.mxu0 %v5672
      %7867 = vmatpush.bf16.msra.mxu0 %v5670
      %7868 = vmatpush.bf16.msra.mxu0 %v5668
      %7869 = vmatpush.bf16.msra.mxu0 %v5666
      %7870 = vmatpush.bf16.msra.mxu0 %v5664
      %7871 = vmatpush.bf16.msra.mxu0 %v5662
      %7872 = vmatmul.bf16.gmra.mxu0 %v466
      %v7873 = vpop.f32.mrf.mxu0
      %v7874 = vadd.f32 %v7861, %v7873
      %v7875 = vpop.f32.mrf.mxu0
      %7876 = vdwg.mxu0
      %7877 = vmatpush.bf16.msra.mxu0 %v5692
      %7878 = vmatpush.bf16.msra.mxu0 %v5690
      %7879 = vmatpush.bf16.msra.mxu0 %v5688
      %7880 = vmatpush.bf16.msra.mxu0 %v5686
      %7881 = vmatpush.bf16.msra.mxu0 %v5684
      %7882 = vmatpush.bf16.msra.mxu0 %v5682
      %7883 = vmatpush.bf16.msra.mxu0 %v5680
      %7884 = vmatpush.bf16.msra.mxu0 %v5678
      %7885 = vmatmul.bf16.gmra.mxu0 %v467
      %v7886 = vpop.f32.mrf.mxu0
      %v7887 = vadd.f32 %v7874, %v7886
      %v7888 = vpop.f32.mrf.mxu0
      %7889 = vdwg.mxu0
      %7890 = vmatpush.bf16.msra.mxu0 %v5708
      %7891 = vmatpush.bf16.msra.mxu0 %v5706
      %7892 = vmatpush.bf16.msra.mxu0 %v5704
      %7893 = vmatpush.bf16.msra.mxu0 %v5702
      %7894 = vmatpush.bf16.msra.mxu0 %v5700
      %7895 = vmatpush.bf16.msra.mxu0 %v5698
      %7896 = vmatpush.bf16.msra.mxu0 %v5696
      %7897 = vmatpush.bf16.msra.mxu0 %v5694
      %7898 = vmatmul.bf16.gmra.mxu0 %v468
      %v7899 = vpop.f32.mrf.mxu0
      %v7900 = vadd.f32 %v7887, %v7899
      %v7901 = vpop.f32.mrf.mxu0
      %7902 = vdwg.mxu0
      %7903 = vmatpush.bf16.msra.mxu0 %v5724
      %7904 = vmatpush.bf16.msra.mxu0 %v5722
      %7905 = vmatpush.bf16.msra.mxu0 %v5720
      %7906 = vmatpush.bf16.msra.mxu0 %v5718
      %7907 = vmatpush.bf16.msra.mxu0 %v5716
      %7908 = vmatpush.bf16.msra.mxu0 %v5714
      %7909 = vmatpush.bf16.msra.mxu0 %v5712
      %7910 = vmatpush.bf16.msra.mxu0 %v5710
      %7911 = vmatmul.bf16.gmra.mxu0 %v469
      %v7912 = vpop.f32.mrf.mxu0
      %v7913 = vadd.f32 %v7900, %v7912
      %v7914 = vpop.f32.mrf.mxu0
      %7915 = vdwg.mxu0
      %7916 = vmatpush.bf16.msra.mxu0 %v5740
      %7917 = vmatpush.bf16.msra.mxu0 %v5738
      %7918 = vmatpush.bf16.msra.mxu0 %v5736
      %7919 = vmatpush.bf16.msra.mxu0 %v5734
      %7920 = vmatpush.bf16.msra.mxu0 %v5732
      %7921 = vmatpush.bf16.msra.mxu0 %v5730
      %7922 = vmatpush.bf16.msra.mxu0 %v5728
      %7923 = vmatpush.bf16.msra.mxu0 %v5726
      %7924 = vmatmul.bf16.gmra.mxu0 %v470
      %v7925 = vpop.f32.mrf.mxu0
      %v7926 = vadd.f32 %v7913, %v7925
      %v7927 = vpop.f32.mrf.mxu0
      %7928 = vdwg.mxu0
      %7929 = vmatpush.bf16.msra.mxu0 %v5756
      %7930 = vmatpush.bf16.msra.mxu0 %v5754
      %7931 = vmatpush.bf16.msra.mxu0 %v5752
      %7932 = vmatpush.bf16.msra.mxu0 %v5750
      %7933 = vmatpush.bf16.msra.mxu0 %v5748
      %7934 = vmatpush.bf16.msra.mxu0 %v5746
      %7935 = vmatpush.bf16.msra.mxu0 %v5744
      %7936 = vmatpush.bf16.msra.mxu0 %v5742
      %7937 = vmatmul.bf16.gmra.mxu0 %v471
      %v7938 = vpop.f32.mrf.mxu0
      %v7939 = vadd.f32 %v7926, %v7938
      %v7940 = vpop.f32.mrf.mxu0
      %7941 = vdwg.mxu0
      %7942 = vmatpush.bf16.msra.mxu0 %v5772
      %7943 = vmatpush.bf16.msra.mxu0 %v5770
      %7944 = vmatpush.bf16.msra.mxu0 %v5768
      %7945 = vmatpush.bf16.msra.mxu0 %v5766
      %7946 = vmatpush.bf16.msra.mxu0 %v5764
      %7947 = vmatpush.bf16.msra.mxu0 %v5762
      %7948 = vmatpush.bf16.msra.mxu0 %v5760
      %7949 = vmatpush.bf16.msra.mxu0 %v5758
      %7950 = vmatmul.bf16.gmra.mxu0 %v472
      %v7951 = vpop.f32.mrf.mxu0
      %v7952 = vadd.f32 %v7939, %v7951
      %v7953 = vpop.f32.mrf.mxu0
      %7954 = vdwg.mxu0
      %7955 = vmatpush.bf16.msra.mxu0 %v5788
      %7956 = vmatpush.bf16.msra.mxu0 %v5786
      %7957 = vmatpush.bf16.msra.mxu0 %v5784
      %7958 = vmatpush.bf16.msra.mxu0 %v5782
      %7959 = vmatpush.bf16.msra.mxu0 %v5780
      %7960 = vmatpush.bf16.msra.mxu0 %v5778
      %7961 = vmatpush.bf16.msra.mxu0 %v5776
      %7962 = vmatpush.bf16.msra.mxu0 %v5774
      %7963 = vmatmul.bf16.gmra.mxu0 %v473
      %v7964 = vpop.f32.mrf.mxu0
      %v7965 = vadd.f32 %v7952, %v7964
      %v7966 = vpop.f32.mrf.mxu0
      %7967 = vdwg.mxu0
      %7968 = vmatpush.bf16.msra.mxu0 %v5804
      %7969 = vmatpush.bf16.msra.mxu0 %v5802
      %7970 = vmatpush.bf16.msra.mxu0 %v5800
      %7971 = vmatpush.bf16.msra.mxu0 %v5798
      %7972 = vmatpush.bf16.msra.mxu0 %v5796
      %7973 = vmatpush.bf16.msra.mxu0 %v5794
      %7974 = vmatpush.bf16.msra.mxu0 %v5792
      %7975 = vmatpush.bf16.msra.mxu0 %v5790
      %7976 = vmatmul.bf16.gmra.mxu0 %v474
      %v7977 = vpop.f32.mrf.mxu0
      %v7978 = vadd.f32 %v7965, %v7977
      %v7979 = vpop.f32.mrf.mxu0
      %7980 = vdwg.mxu0
      %7981 = vmatpush.bf16.msra.mxu0 %v5820
      %7982 = vmatpush.bf16.msra.mxu0 %v5818
      %7983 = vmatpush.bf16.msra.mxu0 %v5816
      %7984 = vmatpush.bf16.msra.mxu0 %v5814
      %7985 = vmatpush.bf16.msra.mxu0 %v5812
      %7986 = vmatpush.bf16.msra.mxu0 %v5810
      %7987 = vmatpush.bf16.msra.mxu0 %v5808
      %7988 = vmatpush.bf16.msra.mxu0 %v5806
      %7989 = vmatmul.bf16.gmra.mxu0 %v475
      %v7990 = vpop.f32.mrf.mxu0
      %v7991 = vadd.f32 %v7978, %v7990
      %v7992 = vpop.f32.mrf.mxu0
      %7993 = vdwg.mxu0
      %7994 = vmatpush.bf16.msra.mxu0 %v5836
      %7995 = vmatpush.bf16.msra.mxu0 %v5834
      %7996 = vmatpush.bf16.msra.mxu0 %v5832
      %7997 = vmatpush.bf16.msra.mxu0 %v5830
      %7998 = vmatpush.bf16.msra.mxu0 %v5828
      %7999 = vmatpush.bf16.msra.mxu0 %v5826
      %8000 = vmatpush.bf16.msra.mxu0 %v5824
      %8001 = vmatpush.bf16.msra.mxu0 %v5822
      %8002 = vmatmul.bf16.gmra.mxu0 %v476
      %v8003 = vpop.f32.mrf.mxu0
      %v8004 = vadd.f32 %v7991, %v8003
      %v8005 = vpop.f32.mrf.mxu0
      %8006 = vdwg.mxu0
      %8007 = vmatpush.bf16.msra.mxu0 %v5852
      %8008 = vmatpush.bf16.msra.mxu0 %v5850
      %8009 = vmatpush.bf16.msra.mxu0 %v5848
      %8010 = vmatpush.bf16.msra.mxu0 %v5846
      %8011 = vmatpush.bf16.msra.mxu0 %v5844
      %8012 = vmatpush.bf16.msra.mxu0 %v5842
      %8013 = vmatpush.bf16.msra.mxu0 %v5840
      %8014 = vmatpush.bf16.msra.mxu0 %v5838
      %8015 = vmatmul.bf16.gmra.mxu0 %v477
      %v8016 = vpop.f32.mrf.mxu0
      %v8017 = vadd.f32 %v8004, %v8016
      %v8018 = vpop.f32.mrf.mxu0
      %8019 = vdwg.mxu0
      %8020 = vmatpush.bf16.msra.mxu0 %v5868
      %8021 = vmatpush.bf16.msra.mxu0 %v5866
      %8022 = vmatpush.bf16.msra.mxu0 %v5864
      %8023 = vmatpush.bf16.msra.mxu0 %v5862
      %8024 = vmatpush.bf16.msra.mxu0 %v5860
      %8025 = vmatpush.bf16.msra.mxu0 %v5858
      %8026 = vmatpush.bf16.msra.mxu0 %v5856
      %8027 = vmatpush.bf16.msra.mxu0 %v5854
      %8028 = vmatmul.bf16.gmra.mxu0 %v478
      %v8029 = vpop.f32.mrf.mxu0
      %v8030 = vadd.f32 %v8017, %v8029
      %v8031 = vpop.f32.mrf.mxu0
      %8032 = vdwg.mxu0
      %8033 = vmatpush.bf16.msra.mxu0 %v5884
      %8034 = vmatpush.bf16.msra.mxu0 %v5882
      %8035 = vmatpush.bf16.msra.mxu0 %v5880
      %8036 = vmatpush.bf16.msra.mxu0 %v5878
      %8037 = vmatpush.bf16.msra.mxu0 %v5876
      %8038 = vmatpush.bf16.msra.mxu0 %v5874
      %8039 = vmatpush.bf16.msra.mxu0 %v5872
      %8040 = vmatpush.bf16.msra.mxu0 %v5870
      %8041 = vmatmul.bf16.gmra.mxu0 %v479
      %v8042 = vpop.f32.mrf.mxu0
      %v8043 = vadd.f32 %v8030, %v8042
      %v8044 = vpop.f32.mrf.mxu0
      %8045 = vdwg.mxu0
      %8046 = vmatpush.bf16.msra.mxu0 %v5900
      %8047 = vmatpush.bf16.msra.mxu0 %v5898
      %8048 = vmatpush.bf16.msra.mxu0 %v5896
      %8049 = vmatpush.bf16.msra.mxu0 %v5894
      %8050 = vmatpush.bf16.msra.mxu0 %v5892
      %8051 = vmatpush.bf16.msra.mxu0 %v5890
      %8052 = vmatpush.bf16.msra.mxu0 %v5888
      %8053 = vmatpush.bf16.msra.mxu0 %v5886
      %8054 = vmatmul.bf16.gmra.mxu0 %v480
      %v8055 = vpop.f32.mrf.mxu0
      %v8056 = vadd.f32 %v8043, %v8055
      %v8057 = vpop.f32.mrf.mxu0
      %8058 = vdwg.mxu0
      %8059 = vmatpush.bf16.msra.mxu0 %v5916
      %8060 = vmatpush.bf16.msra.mxu0 %v5914
      %8061 = vmatpush.bf16.msra.mxu0 %v5912
      %8062 = vmatpush.bf16.msra.mxu0 %v5910
      %8063 = vmatpush.bf16.msra.mxu0 %v5908
      %8064 = vmatpush.bf16.msra.mxu0 %v5906
      %8065 = vmatpush.bf16.msra.mxu0 %v5904
      %8066 = vmatpush.bf16.msra.mxu0 %v5902
      %8067 = vmatmul.bf16.gmra.mxu0 %v481
      %v8068 = vpop.f32.mrf.mxu0
      %v8069 = vadd.f32 %v8056, %v8068
      %v8070 = vpop.f32.mrf.mxu0
      %8071 = vdwg.mxu0
      %8072 = vmatpush.bf16.msra.mxu0 %v5932
      %8073 = vmatpush.bf16.msra.mxu0 %v5930
      %8074 = vmatpush.bf16.msra.mxu0 %v5928
      %8075 = vmatpush.bf16.msra.mxu0 %v5926
      %8076 = vmatpush.bf16.msra.mxu0 %v5924
      %8077 = vmatpush.bf16.msra.mxu0 %v5922
      %8078 = vmatpush.bf16.msra.mxu0 %v5920
      %8079 = vmatpush.bf16.msra.mxu0 %v5918
      %8080 = vmatmul.bf16.gmra.mxu0 %v482
      %v8081 = vpop.f32.mrf.mxu0
      %v8082 = vadd.f32 %v8069, %v8081
      %v8083 = vpop.f32.mrf.mxu0
      %8084 = vdwg.mxu0
      %8085 = vmatpush.bf16.msra.mxu0 %v5948
      %8086 = vmatpush.bf16.msra.mxu0 %v5946
      %8087 = vmatpush.bf16.msra.mxu0 %v5944
      %8088 = vmatpush.bf16.msra.mxu0 %v5942
      %8089 = vmatpush.bf16.msra.mxu0 %v5940
      %8090 = vmatpush.bf16.msra.mxu0 %v5938
      %8091 = vmatpush.bf16.msra.mxu0 %v5936
      %8092 = vmatpush.bf16.msra.mxu0 %v5934
      %8093 = vmatmul.bf16.gmra.mxu0 %v483
      %v8094 = vpop.f32.mrf.mxu0
      %v8095 = vadd.f32 %v8082, %v8094
      %v8096 = vpop.f32.mrf.mxu0
      %8097 = vdwg.mxu0
      %8098 = vmatpush.bf16.msra.mxu0 %v5964
      %8099 = vmatpush.bf16.msra.mxu0 %v5962
      %8100 = vmatpush.bf16.msra.mxu0 %v5960
      %8101 = vmatpush.bf16.msra.mxu0 %v5958
      %8102 = vmatpush.bf16.msra.mxu0 %v5956
      %8103 = vmatpush.bf16.msra.mxu0 %v5954
      %8104 = vmatpush.bf16.msra.mxu0 %v5952
      %8105 = vmatpush.bf16.msra.mxu0 %v5950
      %8106 = vmatmul.bf16.gmra.mxu0 %v484
      %v8107 = vpop.f32.mrf.mxu0
      %v8108 = vadd.f32 %v8095, %v8107
      %v8109 = vpop.f32.mrf.mxu0
      %8110 = vdwg.mxu0
      %8111 = vmatpush.bf16.msra.mxu0 %v5980
      %8112 = vmatpush.bf16.msra.mxu0 %v5978
      %8113 = vmatpush.bf16.msra.mxu0 %v5976
      %8114 = vmatpush.bf16.msra.mxu0 %v5974
      %8115 = vmatpush.bf16.msra.mxu0 %v5972
      %8116 = vmatpush.bf16.msra.mxu0 %v5970
      %8117 = vmatpush.bf16.msra.mxu0 %v5968
      %8118 = vmatpush.bf16.msra.mxu0 %v5966
      %8119 = vmatmul.bf16.gmra.mxu0 %v485
      %v8120 = vpop.f32.mrf.mxu0
      %v8121 = vadd.f32 %v8108, %v8120
      %v8122 = vpop.f32.mrf.mxu0
      %8123 = vdwg.mxu0
      %8124 = vmatpush.bf16.msra.mxu0 %v5996
      %8125 = vmatpush.bf16.msra.mxu0 %v5994
      %8126 = vmatpush.bf16.msra.mxu0 %v5992
      %8127 = vmatpush.bf16.msra.mxu0 %v5990
      %8128 = vmatpush.bf16.msra.mxu0 %v5988
      %8129 = vmatpush.bf16.msra.mxu0 %v5986
      %8130 = vmatpush.bf16.msra.mxu0 %v5984
      %8131 = vmatpush.bf16.msra.mxu0 %v5982
      %8132 = vmatmul.bf16.gmra.mxu0 %v486
      %v8133 = vpop.f32.mrf.mxu0
      %v8134 = vadd.f32 %v8121, %v8133
      %v8135 = vpop.f32.mrf.mxu0
      %8136 = vdwg.mxu0
      %8137 = vmatpush.bf16.msra.mxu0 %v6012
      %8138 = vmatpush.bf16.msra.mxu0 %v6010
      %8139 = vmatpush.bf16.msra.mxu0 %v6008
      %8140 = vmatpush.bf16.msra.mxu0 %v6006
      %8141 = vmatpush.bf16.msra.mxu0 %v6004
      %8142 = vmatpush.bf16.msra.mxu0 %v6002
      %8143 = vmatpush.bf16.msra.mxu0 %v6000
      %8144 = vmatpush.bf16.msra.mxu0 %v5998
      %8145 = vmatmul.bf16.gmra.mxu0 %v487
      %v8146 = vpop.f32.mrf.mxu0
      %v8147 = vadd.f32 %v8134, %v8146
      %v8148 = vpop.f32.mrf.mxu0
      %8149 = vdwg.mxu0
      %8150 = vmatpush.bf16.msra.mxu0 %v6028
      %8151 = vmatpush.bf16.msra.mxu0 %v6026
      %8152 = vmatpush.bf16.msra.mxu0 %v6024
      %8153 = vmatpush.bf16.msra.mxu0 %v6022
      %8154 = vmatpush.bf16.msra.mxu0 %v6020
      %8155 = vmatpush.bf16.msra.mxu0 %v6018
      %8156 = vmatpush.bf16.msra.mxu0 %v6016
      %8157 = vmatpush.bf16.msra.mxu0 %v6014
      %8158 = vmatmul.bf16.gmra.mxu0 %v488
      %v8159 = vpop.f32.mrf.mxu0
      %v8160 = vadd.f32 %v8147, %v8159
      %v8161 = vpop.f32.mrf.mxu0
      %8162 = vdwg.mxu0
      %8163 = vmatpush.bf16.msra.mxu0 %v6044
      %8164 = vmatpush.bf16.msra.mxu0 %v6042
      %8165 = vmatpush.bf16.msra.mxu0 %v6040
      %8166 = vmatpush.bf16.msra.mxu0 %v6038
      %8167 = vmatpush.bf16.msra.mxu0 %v6036
      %8168 = vmatpush.bf16.msra.mxu0 %v6034
      %8169 = vmatpush.bf16.msra.mxu0 %v6032
      %8170 = vmatpush.bf16.msra.mxu0 %v6030
      %8171 = vmatmul.bf16.gmra.mxu0 %v489
      %v8172 = vpop.f32.mrf.mxu0
      %v8173 = vadd.f32 %v8160, %v8172
      %v8174 = vpop.f32.mrf.mxu0
      %8175 = vdwg.mxu0
      %8176 = vmatpush.bf16.msra.mxu0 %v6060
      %8177 = vmatpush.bf16.msra.mxu0 %v6058
      %8178 = vmatpush.bf16.msra.mxu0 %v6056
      %8179 = vmatpush.bf16.msra.mxu0 %v6054
      %8180 = vmatpush.bf16.msra.mxu0 %v6052
      %8181 = vmatpush.bf16.msra.mxu0 %v6050
      %8182 = vmatpush.bf16.msra.mxu0 %v6048
      %8183 = vmatpush.bf16.msra.mxu0 %v6046
      %8184 = vmatmul.bf16.gmra.mxu0 %v490
      %v8185 = vpop.f32.mrf.mxu0
      %v8186 = vadd.f32 %v8173, %v8185
      %v8187 = vpop.f32.mrf.mxu0
      %8188 = vdwg.mxu0
      %8189 = vmatpush.bf16.msra.mxu0 %v6076
      %8190 = vmatpush.bf16.msra.mxu0 %v6074
      %8191 = vmatpush.bf16.msra.mxu0 %v6072
      %8192 = vmatpush.bf16.msra.mxu0 %v6070
      %8193 = vmatpush.bf16.msra.mxu0 %v6068
      %8194 = vmatpush.bf16.msra.mxu0 %v6066
      %8195 = vmatpush.bf16.msra.mxu0 %v6064
      %8196 = vmatpush.bf16.msra.mxu0 %v6062
      %8197 = vmatmul.bf16.gmra.mxu0 %v491
      %v8198 = vpop.f32.mrf.mxu0
      %v8199 = vadd.f32 %v8186, %v8198
      %v8200 = vpop.f32.mrf.mxu0
      %8201 = vdwg.mxu0
      %8202 = vmatpush.bf16.msra.mxu0 %v6092
      %8203 = vmatpush.bf16.msra.mxu0 %v6090
      %8204 = vmatpush.bf16.msra.mxu0 %v6088
      %8205 = vmatpush.bf16.msra.mxu0 %v6086
      %8206 = vmatpush.bf16.msra.mxu0 %v6084
      %8207 = vmatpush.bf16.msra.mxu0 %v6082
      %8208 = vmatpush.bf16.msra.mxu0 %v6080
      %8209 = vmatpush.bf16.msra.mxu0 %v6078
      %8210 = vmatmul.bf16.gmra.mxu0 %v492
      %v8211 = vpop.f32.mrf.mxu0
      %v8212 = vadd.f32 %v8199, %v8211
      %v8213 = vpop.f32.mrf.mxu0
      %8214 = vdwg.mxu0
      %8215 = vmatpush.bf16.msra.mxu0 %v6108
      %8216 = vmatpush.bf16.msra.mxu0 %v6106
      %8217 = vmatpush.bf16.msra.mxu0 %v6104
      %8218 = vmatpush.bf16.msra.mxu0 %v6102
      %8219 = vmatpush.bf16.msra.mxu0 %v6100
      %8220 = vmatpush.bf16.msra.mxu0 %v6098
      %8221 = vmatpush.bf16.msra.mxu0 %v6096
      %8222 = vmatpush.bf16.msra.mxu0 %v6094
      %8223 = vmatmul.bf16.gmra.mxu0 %v493
      %v8224 = vpop.f32.mrf.mxu0
      %v8225 = vadd.f32 %v8212, %v8224
      %v8226 = vpop.f32.mrf.mxu0
      %8227 = vdwg.mxu0
      %8228 = vmatpush.bf16.msra.mxu0 %v6124
      %8229 = vmatpush.bf16.msra.mxu0 %v6122
      %8230 = vmatpush.bf16.msra.mxu0 %v6120
      %8231 = vmatpush.bf16.msra.mxu0 %v6118
      %8232 = vmatpush.bf16.msra.mxu0 %v6116
      %8233 = vmatpush.bf16.msra.mxu0 %v6114
      %8234 = vmatpush.bf16.msra.mxu0 %v6112
      %8235 = vmatpush.bf16.msra.mxu0 %v6110
      %8236 = vmatmul.bf16.gmra.mxu0 %v494
      %v8237 = vpop.f32.mrf.mxu0
      %v8238 = vadd.f32 %v8225, %v8237
      %v8239 = vpop.f32.mrf.mxu0
      %8240 = vdwg.mxu0
      %8241 = vmatpush.bf16.msra.mxu0 %v6140
      %8242 = vmatpush.bf16.msra.mxu0 %v6138
      %8243 = vmatpush.bf16.msra.mxu0 %v6136
      %8244 = vmatpush.bf16.msra.mxu0 %v6134
      %8245 = vmatpush.bf16.msra.mxu0 %v6132
      %8246 = vmatpush.bf16.msra.mxu0 %v6130
      %8247 = vmatpush.bf16.msra.mxu0 %v6128
      %8248 = vmatpush.bf16.msra.mxu0 %v6126
      %8249 = vmatmul.bf16.gmra.mxu0 %v495
      %v8250 = vpop.f32.mrf.mxu0
      %v8251 = vadd.f32 %v8238, %v8250
      %v8252 = vpop.f32.mrf.mxu0
      %8253 = vdwg.mxu0
      %8254 = vmatpush.bf16.msra.mxu0 %v6156
      %8255 = vmatpush.bf16.msra.mxu0 %v6154
      %8256 = vmatpush.bf16.msra.mxu0 %v6152
      %8257 = vmatpush.bf16.msra.mxu0 %v6150
      %8258 = vmatpush.bf16.msra.mxu0 %v6148
      %8259 = vmatpush.bf16.msra.mxu0 %v6146
      %8260 = vmatpush.bf16.msra.mxu0 %v6144
      %8261 = vmatpush.bf16.msra.mxu0 %v6142
      %8262 = vmatmul.bf16.gmra.mxu0 %v496
      %v8263 = vpop.f32.mrf.mxu0
      %v8264 = vadd.f32 %v8251, %v8263
      %v8265 = vpop.f32.mrf.mxu0
      %8266 = vdwg.mxu0
      %8267 = vmatpush.bf16.msra.mxu0 %v6172
      %8268 = vmatpush.bf16.msra.mxu0 %v6170
      %8269 = vmatpush.bf16.msra.mxu0 %v6168
      %8270 = vmatpush.bf16.msra.mxu0 %v6166
      %8271 = vmatpush.bf16.msra.mxu0 %v6164
      %8272 = vmatpush.bf16.msra.mxu0 %v6162
      %8273 = vmatpush.bf16.msra.mxu0 %v6160
      %8274 = vmatpush.bf16.msra.mxu0 %v6158
      %8275 = vmatmul.bf16.gmra.mxu0 %v497
      %v8276 = vpop.f32.mrf.mxu0
      %v8277 = vadd.f32 %v8264, %v8276
      %v8278 = vpop.f32.mrf.mxu0
      %8279 = vdwg.mxu0
      %8280 = vmatpush.bf16.msra.mxu0 %v6188
      %8281 = vmatpush.bf16.msra.mxu0 %v6186
      %8282 = vmatpush.bf16.msra.mxu0 %v6184
      %8283 = vmatpush.bf16.msra.mxu0 %v6182
      %8284 = vmatpush.bf16.msra.mxu0 %v6180
      %8285 = vmatpush.bf16.msra.mxu0 %v6178
      %8286 = vmatpush.bf16.msra.mxu0 %v6176
      %8287 = vmatpush.bf16.msra.mxu0 %v6174
      %8288 = vmatmul.bf16.gmra.mxu0 %v498
      %v8289 = vpop.f32.mrf.mxu0
      %v8290 = vadd.f32 %v8277, %v8289
      %v8291 = vpop.f32.mrf.mxu0
      %8292 = vdwg.mxu0
      %8293 = vmatpush.bf16.msra.mxu0 %v6204
      %8294 = vmatpush.bf16.msra.mxu0 %v6202
      %8295 = vmatpush.bf16.msra.mxu0 %v6200
      %8296 = vmatpush.bf16.msra.mxu0 %v6198
      %8297 = vmatpush.bf16.msra.mxu0 %v6196
      %8298 = vmatpush.bf16.msra.mxu0 %v6194
      %8299 = vmatpush.bf16.msra.mxu0 %v6192
      %8300 = vmatpush.bf16.msra.mxu0 %v6190
      %8301 = vmatmul.bf16.gmra.mxu0 %v499
      %v8302 = vpop.f32.mrf.mxu0
      %v8303 = vadd.f32 %v8290, %v8302
      %v8304 = vpop.f32.mrf.mxu0
      %8305 = vdwg.mxu0
      %8306 = vmatpush.bf16.msra.mxu0 %v6220
      %8307 = vmatpush.bf16.msra.mxu0 %v6218
      %8308 = vmatpush.bf16.msra.mxu0 %v6216
      %8309 = vmatpush.bf16.msra.mxu0 %v6214
      %8310 = vmatpush.bf16.msra.mxu0 %v6212
      %8311 = vmatpush.bf16.msra.mxu0 %v6210
      %8312 = vmatpush.bf16.msra.mxu0 %v6208
      %8313 = vmatpush.bf16.msra.mxu0 %v6206
      %8314 = vmatmul.bf16.gmra.mxu0 %v500
      %v8315 = vpop.f32.mrf.mxu0
      %v8316 = vadd.f32 %v8303, %v8315
      %v8317 = vpop.f32.mrf.mxu0
      %8318 = vdwg.mxu0
      %8319 = vmatpush.bf16.msra.mxu0 %v6236
      %8320 = vmatpush.bf16.msra.mxu0 %v6234
      %8321 = vmatpush.bf16.msra.mxu0 %v6232
      %8322 = vmatpush.bf16.msra.mxu0 %v6230
      %8323 = vmatpush.bf16.msra.mxu0 %v6228
      %8324 = vmatpush.bf16.msra.mxu0 %v6226
      %8325 = vmatpush.bf16.msra.mxu0 %v6224
      %8326 = vmatpush.bf16.msra.mxu0 %v6222
      %8327 = vmatmul.bf16.gmra.mxu0 %v501
      %v8328 = vpop.f32.mrf.mxu0
      %v8329 = vadd.f32 %v8316, %v8328
      %v8330 = vpop.f32.mrf.mxu0
      %8331 = vdwg.mxu0
      %8332 = vmatpush.bf16.msra.mxu0 %v6252
      %8333 = vmatpush.bf16.msra.mxu0 %v6250
      %8334 = vmatpush.bf16.msra.mxu0 %v6248
      %8335 = vmatpush.bf16.msra.mxu0 %v6246
      %8336 = vmatpush.bf16.msra.mxu0 %v6244
      %8337 = vmatpush.bf16.msra.mxu0 %v6242
      %8338 = vmatpush.bf16.msra.mxu0 %v6240
      %8339 = vmatpush.bf16.msra.mxu0 %v6238
      %8340 = vmatmul.bf16.gmra.mxu0 %v502
      %v8341 = vpop.f32.mrf.mxu0
      %v8342 = vadd.f32 %v8329, %v8341
      %v8343 = vpop.f32.mrf.mxu0
      %8344 = vdwg.mxu0
      %8345 = vmatpush.bf16.msra.mxu0 %v6268
      %8346 = vmatpush.bf16.msra.mxu0 %v6266
      %8347 = vmatpush.bf16.msra.mxu0 %v6264
      %8348 = vmatpush.bf16.msra.mxu0 %v6262
      %8349 = vmatpush.bf16.msra.mxu0 %v6260
      %8350 = vmatpush.bf16.msra.mxu0 %v6258
      %8351 = vmatpush.bf16.msra.mxu0 %v6256
      %8352 = vmatpush.bf16.msra.mxu0 %v6254
      %8353 = vmatmul.bf16.gmra.mxu0 %v503
      %v8354 = vpop.f32.mrf.mxu0
      %v8355 = vadd.f32 %v8342, %v8354
      %v8356 = vpop.f32.mrf.mxu0
      %8357 = vdwg.mxu0
      %8358 = vmatpush.bf16.msra.mxu0 %v5133
      %8359 = vmatpush.bf16.msra.mxu0 %v5131
      %8360 = vmatpush.bf16.msra.mxu0 %v5129
      %8361 = vmatpush.bf16.msra.mxu0 %v5127
      %8362 = vmatpush.bf16.msra.mxu0 %v5125
      %8363 = vmatpush.bf16.msra.mxu0 %v5123
      %8364 = vmatpush.bf16.msra.mxu0 %v5121
      %8365 = vmatpush.bf16.msra.mxu0 %v5119
      %8366 = vmatmul.bf16.gmra.mxu0 %v432
      %v8367 = vpop.f32.mrf.mxu0
      %v8368 = vadd.f32 %v1659, %v8367
      %v8369 = vpop.f32.mrf.mxu0
      %8370 = vdwg.mxu0
      %8371 = vmatpush.bf16.msra.mxu0 %v5149
      %8372 = vmatpush.bf16.msra.mxu0 %v5147
      %8373 = vmatpush.bf16.msra.mxu0 %v5145
      %8374 = vmatpush.bf16.msra.mxu0 %v5143
      %8375 = vmatpush.bf16.msra.mxu0 %v5141
      %8376 = vmatpush.bf16.msra.mxu0 %v5139
      %8377 = vmatpush.bf16.msra.mxu0 %v5137
      %8378 = vmatpush.bf16.msra.mxu0 %v5135
      %8379 = vmatmul.bf16.gmra.mxu0 %v433
      %v8380 = vpop.f32.mrf.mxu0
      %v8381 = vadd.f32 %v8368, %v8380
      %v8382 = vpop.f32.mrf.mxu0
      %8383 = vdwg.mxu0
      %8384 = vmatpush.bf16.msra.mxu0 %v5165
      %8385 = vmatpush.bf16.msra.mxu0 %v5163
      %8386 = vmatpush.bf16.msra.mxu0 %v5161
      %8387 = vmatpush.bf16.msra.mxu0 %v5159
      %8388 = vmatpush.bf16.msra.mxu0 %v5157
      %8389 = vmatpush.bf16.msra.mxu0 %v5155
      %8390 = vmatpush.bf16.msra.mxu0 %v5153
      %8391 = vmatpush.bf16.msra.mxu0 %v5151
      %8392 = vmatmul.bf16.gmra.mxu0 %v434
      %v8393 = vpop.f32.mrf.mxu0
      %v8394 = vadd.f32 %v8381, %v8393
      %v8395 = vpop.f32.mrf.mxu0
      %8396 = vdwg.mxu0
      %8397 = vmatpush.bf16.msra.mxu0 %v5181
      %8398 = vmatpush.bf16.msra.mxu0 %v5179
      %8399 = vmatpush.bf16.msra.mxu0 %v5177
      %8400 = vmatpush.bf16.msra.mxu0 %v5175
      %8401 = vmatpush.bf16.msra.mxu0 %v5173
      %8402 = vmatpush.bf16.msra.mxu0 %v5171
      %8403 = vmatpush.bf16.msra.mxu0 %v5169
      %8404 = vmatpush.bf16.msra.mxu0 %v5167
      %8405 = vmatmul.bf16.gmra.mxu0 %v435
      %v8406 = vpop.f32.mrf.mxu0
      %v8407 = vadd.f32 %v8394, %v8406
      %v8408 = vpop.f32.mrf.mxu0
      %8409 = vdwg.mxu0
      %8410 = vmatpush.bf16.msra.mxu0 %v5197
      %8411 = vmatpush.bf16.msra.mxu0 %v5195
      %8412 = vmatpush.bf16.msra.mxu0 %v5193
      %8413 = vmatpush.bf16.msra.mxu0 %v5191
      %8414 = vmatpush.bf16.msra.mxu0 %v5189
      %8415 = vmatpush.bf16.msra.mxu0 %v5187
      %8416 = vmatpush.bf16.msra.mxu0 %v5185
      %8417 = vmatpush.bf16.msra.mxu0 %v5183
      %8418 = vmatmul.bf16.gmra.mxu0 %v436
      %v8419 = vpop.f32.mrf.mxu0
      %v8420 = vadd.f32 %v8407, %v8419
      %v8421 = vpop.f32.mrf.mxu0
      %8422 = vdwg.mxu0
      %8423 = vmatpush.bf16.msra.mxu0 %v5213
      %8424 = vmatpush.bf16.msra.mxu0 %v5211
      %8425 = vmatpush.bf16.msra.mxu0 %v5209
      %8426 = vmatpush.bf16.msra.mxu0 %v5207
      %8427 = vmatpush.bf16.msra.mxu0 %v5205
      %8428 = vmatpush.bf16.msra.mxu0 %v5203
      %8429 = vmatpush.bf16.msra.mxu0 %v5201
      %8430 = vmatpush.bf16.msra.mxu0 %v5199
      %8431 = vmatmul.bf16.gmra.mxu0 %v437
      %v8432 = vpop.f32.mrf.mxu0
      %v8433 = vadd.f32 %v8420, %v8432
      %v8434 = vpop.f32.mrf.mxu0
      %8435 = vdwg.mxu0
      %8436 = vmatpush.bf16.msra.mxu0 %v5229
      %8437 = vmatpush.bf16.msra.mxu0 %v5227
      %8438 = vmatpush.bf16.msra.mxu0 %v5225
      %8439 = vmatpush.bf16.msra.mxu0 %v5223
      %8440 = vmatpush.bf16.msra.mxu0 %v5221
      %8441 = vmatpush.bf16.msra.mxu0 %v5219
      %8442 = vmatpush.bf16.msra.mxu0 %v5217
      %8443 = vmatpush.bf16.msra.mxu0 %v5215
      %8444 = vmatmul.bf16.gmra.mxu0 %v438
      %v8445 = vpop.f32.mrf.mxu0
      %v8446 = vadd.f32 %v8433, %v8445
      %v8447 = vpop.f32.mrf.mxu0
      %8448 = vdwg.mxu0
      %8449 = vmatpush.bf16.msra.mxu0 %v5245
      %8450 = vmatpush.bf16.msra.mxu0 %v5243
      %8451 = vmatpush.bf16.msra.mxu0 %v5241
      %8452 = vmatpush.bf16.msra.mxu0 %v5239
      %8453 = vmatpush.bf16.msra.mxu0 %v5237
      %8454 = vmatpush.bf16.msra.mxu0 %v5235
      %8455 = vmatpush.bf16.msra.mxu0 %v5233
      %8456 = vmatpush.bf16.msra.mxu0 %v5231
      %8457 = vmatmul.bf16.gmra.mxu0 %v439
      %v8458 = vpop.f32.mrf.mxu0
      %v8459 = vadd.f32 %v8446, %v8458
      %v8460 = vpop.f32.mrf.mxu0
      %8461 = vdwg.mxu0
      %8462 = vmatpush.bf16.msra.mxu0 %v5261
      %8463 = vmatpush.bf16.msra.mxu0 %v5259
      %8464 = vmatpush.bf16.msra.mxu0 %v5257
      %8465 = vmatpush.bf16.msra.mxu0 %v5255
      %8466 = vmatpush.bf16.msra.mxu0 %v5253
      %8467 = vmatpush.bf16.msra.mxu0 %v5251
      %8468 = vmatpush.bf16.msra.mxu0 %v5249
      %8469 = vmatpush.bf16.msra.mxu0 %v5247
      %8470 = vmatmul.bf16.gmra.mxu0 %v440
      %v8471 = vpop.f32.mrf.mxu0
      %v8472 = vadd.f32 %v8459, %v8471
      %v8473 = vpop.f32.mrf.mxu0
      %8474 = vdwg.mxu0
      %8475 = vmatpush.bf16.msra.mxu0 %v5277
      %8476 = vmatpush.bf16.msra.mxu0 %v5275
      %8477 = vmatpush.bf16.msra.mxu0 %v5273
      %8478 = vmatpush.bf16.msra.mxu0 %v5271
      %8479 = vmatpush.bf16.msra.mxu0 %v5269
      %8480 = vmatpush.bf16.msra.mxu0 %v5267
      %8481 = vmatpush.bf16.msra.mxu0 %v5265
      %8482 = vmatpush.bf16.msra.mxu0 %v5263
      %8483 = vmatmul.bf16.gmra.mxu0 %v441
      %v8484 = vpop.f32.mrf.mxu0
      %v8485 = vadd.f32 %v8472, %v8484
      %v8486 = vpop.f32.mrf.mxu0
      %8487 = vdwg.mxu0
      %8488 = vmatpush.bf16.msra.mxu0 %v5293
      %8489 = vmatpush.bf16.msra.mxu0 %v5291
      %8490 = vmatpush.bf16.msra.mxu0 %v5289
      %8491 = vmatpush.bf16.msra.mxu0 %v5287
      %8492 = vmatpush.bf16.msra.mxu0 %v5285
      %8493 = vmatpush.bf16.msra.mxu0 %v5283
      %8494 = vmatpush.bf16.msra.mxu0 %v5281
      %8495 = vmatpush.bf16.msra.mxu0 %v5279
      %8496 = vmatmul.bf16.gmra.mxu0 %v442
      %v8497 = vpop.f32.mrf.mxu0
      %v8498 = vadd.f32 %v8485, %v8497
      %v8499 = vpop.f32.mrf.mxu0
      %8500 = vdwg.mxu0
      %8501 = vmatpush.bf16.msra.mxu0 %v5309
      %8502 = vmatpush.bf16.msra.mxu0 %v5307
      %8503 = vmatpush.bf16.msra.mxu0 %v5305
      %8504 = vmatpush.bf16.msra.mxu0 %v5303
      %8505 = vmatpush.bf16.msra.mxu0 %v5301
      %8506 = vmatpush.bf16.msra.mxu0 %v5299
      %8507 = vmatpush.bf16.msra.mxu0 %v5297
      %8508 = vmatpush.bf16.msra.mxu0 %v5295
      %8509 = vmatmul.bf16.gmra.mxu0 %v443
      %v8510 = vpop.f32.mrf.mxu0
      %v8511 = vadd.f32 %v8498, %v8510
      %v8512 = vpop.f32.mrf.mxu0
      %8513 = vdwg.mxu0
      %8514 = vmatpush.bf16.msra.mxu0 %v5325
      %8515 = vmatpush.bf16.msra.mxu0 %v5323
      %8516 = vmatpush.bf16.msra.mxu0 %v5321
      %8517 = vmatpush.bf16.msra.mxu0 %v5319
      %8518 = vmatpush.bf16.msra.mxu0 %v5317
      %8519 = vmatpush.bf16.msra.mxu0 %v5315
      %8520 = vmatpush.bf16.msra.mxu0 %v5313
      %8521 = vmatpush.bf16.msra.mxu0 %v5311
      %8522 = vmatmul.bf16.gmra.mxu0 %v444
      %v8523 = vpop.f32.mrf.mxu0
      %v8524 = vadd.f32 %v8511, %v8523
      %v8525 = vpop.f32.mrf.mxu0
      %8526 = vdwg.mxu0
      %8527 = vmatpush.bf16.msra.mxu0 %v5341
      %8528 = vmatpush.bf16.msra.mxu0 %v5339
      %8529 = vmatpush.bf16.msra.mxu0 %v5337
      %8530 = vmatpush.bf16.msra.mxu0 %v5335
      %8531 = vmatpush.bf16.msra.mxu0 %v5333
      %8532 = vmatpush.bf16.msra.mxu0 %v5331
      %8533 = vmatpush.bf16.msra.mxu0 %v5329
      %8534 = vmatpush.bf16.msra.mxu0 %v5327
      %8535 = vmatmul.bf16.gmra.mxu0 %v445
      %v8536 = vpop.f32.mrf.mxu0
      %v8537 = vadd.f32 %v8524, %v8536
      %v8538 = vpop.f32.mrf.mxu0
      %8539 = vdwg.mxu0
      %8540 = vmatpush.bf16.msra.mxu0 %v5357
      %8541 = vmatpush.bf16.msra.mxu0 %v5355
      %8542 = vmatpush.bf16.msra.mxu0 %v5353
      %8543 = vmatpush.bf16.msra.mxu0 %v5351
      %8544 = vmatpush.bf16.msra.mxu0 %v5349
      %8545 = vmatpush.bf16.msra.mxu0 %v5347
      %8546 = vmatpush.bf16.msra.mxu0 %v5345
      %8547 = vmatpush.bf16.msra.mxu0 %v5343
      %8548 = vmatmul.bf16.gmra.mxu0 %v446
      %v8549 = vpop.f32.mrf.mxu0
      %v8550 = vadd.f32 %v8537, %v8549
      %v8551 = vpop.f32.mrf.mxu0
      %8552 = vdwg.mxu0
      %8553 = vmatpush.bf16.msra.mxu0 %v5373
      %8554 = vmatpush.bf16.msra.mxu0 %v5371
      %8555 = vmatpush.bf16.msra.mxu0 %v5369
      %8556 = vmatpush.bf16.msra.mxu0 %v5367
      %8557 = vmatpush.bf16.msra.mxu0 %v5365
      %8558 = vmatpush.bf16.msra.mxu0 %v5363
      %8559 = vmatpush.bf16.msra.mxu0 %v5361
      %8560 = vmatpush.bf16.msra.mxu0 %v5359
      %8561 = vmatmul.bf16.gmra.mxu0 %v447
      %v8562 = vpop.f32.mrf.mxu0
      %v8563 = vadd.f32 %v8550, %v8562
      %v8564 = vpop.f32.mrf.mxu0
      %8565 = vdwg.mxu0
      %8566 = vmatpush.bf16.msra.mxu0 %v5389
      %8567 = vmatpush.bf16.msra.mxu0 %v5387
      %8568 = vmatpush.bf16.msra.mxu0 %v5385
      %8569 = vmatpush.bf16.msra.mxu0 %v5383
      %8570 = vmatpush.bf16.msra.mxu0 %v5381
      %8571 = vmatpush.bf16.msra.mxu0 %v5379
      %8572 = vmatpush.bf16.msra.mxu0 %v5377
      %8573 = vmatpush.bf16.msra.mxu0 %v5375
      %8574 = vmatmul.bf16.gmra.mxu0 %v448
      %v8575 = vpop.f32.mrf.mxu0
      %v8576 = vadd.f32 %v8563, %v8575
      %v8577 = vpop.f32.mrf.mxu0
      %8578 = vdwg.mxu0
      %8579 = vmatpush.bf16.msra.mxu0 %v5405
      %8580 = vmatpush.bf16.msra.mxu0 %v5403
      %8581 = vmatpush.bf16.msra.mxu0 %v5401
      %8582 = vmatpush.bf16.msra.mxu0 %v5399
      %8583 = vmatpush.bf16.msra.mxu0 %v5397
      %8584 = vmatpush.bf16.msra.mxu0 %v5395
      %8585 = vmatpush.bf16.msra.mxu0 %v5393
      %8586 = vmatpush.bf16.msra.mxu0 %v5391
      %8587 = vmatmul.bf16.gmra.mxu0 %v449
      %v8588 = vpop.f32.mrf.mxu0
      %v8589 = vadd.f32 %v8576, %v8588
      %v8590 = vpop.f32.mrf.mxu0
      %8591 = vdwg.mxu0
      %8592 = vmatpush.bf16.msra.mxu0 %v5421
      %8593 = vmatpush.bf16.msra.mxu0 %v5419
      %8594 = vmatpush.bf16.msra.mxu0 %v5417
      %8595 = vmatpush.bf16.msra.mxu0 %v5415
      %8596 = vmatpush.bf16.msra.mxu0 %v5413
      %8597 = vmatpush.bf16.msra.mxu0 %v5411
      %8598 = vmatpush.bf16.msra.mxu0 %v5409
      %8599 = vmatpush.bf16.msra.mxu0 %v5407
      %8600 = vmatmul.bf16.gmra.mxu0 %v450
      %v8601 = vpop.f32.mrf.mxu0
      %v8602 = vadd.f32 %v8589, %v8601
      %v8603 = vpop.f32.mrf.mxu0
      %8604 = vdwg.mxu0
      %8605 = vmatpush.bf16.msra.mxu0 %v5437
      %8606 = vmatpush.bf16.msra.mxu0 %v5435
      %8607 = vmatpush.bf16.msra.mxu0 %v5433
      %8608 = vmatpush.bf16.msra.mxu0 %v5431
      %8609 = vmatpush.bf16.msra.mxu0 %v5429
      %8610 = vmatpush.bf16.msra.mxu0 %v5427
      %8611 = vmatpush.bf16.msra.mxu0 %v5425
      %8612 = vmatpush.bf16.msra.mxu0 %v5423
      %8613 = vmatmul.bf16.gmra.mxu0 %v451
      %v8614 = vpop.f32.mrf.mxu0
      %v8615 = vadd.f32 %v8602, %v8614
      %v8616 = vpop.f32.mrf.mxu0
      %8617 = vdwg.mxu0
      %8618 = vmatpush.bf16.msra.mxu0 %v5453
      %8619 = vmatpush.bf16.msra.mxu0 %v5451
      %8620 = vmatpush.bf16.msra.mxu0 %v5449
      %8621 = vmatpush.bf16.msra.mxu0 %v5447
      %8622 = vmatpush.bf16.msra.mxu0 %v5445
      %8623 = vmatpush.bf16.msra.mxu0 %v5443
      %8624 = vmatpush.bf16.msra.mxu0 %v5441
      %8625 = vmatpush.bf16.msra.mxu0 %v5439
      %8626 = vmatmul.bf16.gmra.mxu0 %v452
      %v8627 = vpop.f32.mrf.mxu0
      %v8628 = vadd.f32 %v8615, %v8627
      %v8629 = vpop.f32.mrf.mxu0
      %8630 = vdwg.mxu0
      %8631 = vmatpush.bf16.msra.mxu0 %v5469
      %8632 = vmatpush.bf16.msra.mxu0 %v5467
      %8633 = vmatpush.bf16.msra.mxu0 %v5465
      %8634 = vmatpush.bf16.msra.mxu0 %v5463
      %8635 = vmatpush.bf16.msra.mxu0 %v5461
      %8636 = vmatpush.bf16.msra.mxu0 %v5459
      %8637 = vmatpush.bf16.msra.mxu0 %v5457
      %8638 = vmatpush.bf16.msra.mxu0 %v5455
      %8639 = vmatmul.bf16.gmra.mxu0 %v453
      %v8640 = vpop.f32.mrf.mxu0
      %v8641 = vadd.f32 %v8628, %v8640
      %v8642 = vpop.f32.mrf.mxu0
      %8643 = vdwg.mxu0
      %8644 = vmatpush.bf16.msra.mxu0 %v5485
      %8645 = vmatpush.bf16.msra.mxu0 %v5483
      %8646 = vmatpush.bf16.msra.mxu0 %v5481
      %8647 = vmatpush.bf16.msra.mxu0 %v5479
      %8648 = vmatpush.bf16.msra.mxu0 %v5477
      %8649 = vmatpush.bf16.msra.mxu0 %v5475
      %8650 = vmatpush.bf16.msra.mxu0 %v5473
      %8651 = vmatpush.bf16.msra.mxu0 %v5471
      %8652 = vmatmul.bf16.gmra.mxu0 %v454
      %v8653 = vpop.f32.mrf.mxu0
      %v8654 = vadd.f32 %v8641, %v8653
      %v8655 = vpop.f32.mrf.mxu0
      %8656 = vdwg.mxu0
      %8657 = vmatpush.bf16.msra.mxu0 %v5501
      %8658 = vmatpush.bf16.msra.mxu0 %v5499
      %8659 = vmatpush.bf16.msra.mxu0 %v5497
      %8660 = vmatpush.bf16.msra.mxu0 %v5495
      %8661 = vmatpush.bf16.msra.mxu0 %v5493
      %8662 = vmatpush.bf16.msra.mxu0 %v5491
      %8663 = vmatpush.bf16.msra.mxu0 %v5489
      %8664 = vmatpush.bf16.msra.mxu0 %v5487
      %8665 = vmatmul.bf16.gmra.mxu0 %v455
      %v8666 = vpop.f32.mrf.mxu0
      %v8667 = vadd.f32 %v8654, %v8666
      %v8668 = vpop.f32.mrf.mxu0
      %8669 = vdwg.mxu0
      %8670 = vmatpush.bf16.msra.mxu0 %v5517
      %8671 = vmatpush.bf16.msra.mxu0 %v5515
      %8672 = vmatpush.bf16.msra.mxu0 %v5513
      %8673 = vmatpush.bf16.msra.mxu0 %v5511
      %8674 = vmatpush.bf16.msra.mxu0 %v5509
      %8675 = vmatpush.bf16.msra.mxu0 %v5507
      %8676 = vmatpush.bf16.msra.mxu0 %v5505
      %8677 = vmatpush.bf16.msra.mxu0 %v5503
      %8678 = vmatmul.bf16.gmra.mxu0 %v456
      %v8679 = vpop.f32.mrf.mxu0
      %v8680 = vadd.f32 %v8667, %v8679
      %v8681 = vpop.f32.mrf.mxu0
      %8682 = vdwg.mxu0
      %8683 = vmatpush.bf16.msra.mxu0 %v5533
      %8684 = vmatpush.bf16.msra.mxu0 %v5531
      %8685 = vmatpush.bf16.msra.mxu0 %v5529
      %8686 = vmatpush.bf16.msra.mxu0 %v5527
      %8687 = vmatpush.bf16.msra.mxu0 %v5525
      %8688 = vmatpush.bf16.msra.mxu0 %v5523
      %8689 = vmatpush.bf16.msra.mxu0 %v5521
      %8690 = vmatpush.bf16.msra.mxu0 %v5519
      %8691 = vmatmul.bf16.gmra.mxu0 %v457
      %v8692 = vpop.f32.mrf.mxu0
      %v8693 = vadd.f32 %v8680, %v8692
      %v8694 = vpop.f32.mrf.mxu0
      %8695 = vdwg.mxu0
      %8696 = vmatpush.bf16.msra.mxu0 %v5549
      %8697 = vmatpush.bf16.msra.mxu0 %v5547
      %8698 = vmatpush.bf16.msra.mxu0 %v5545
      %8699 = vmatpush.bf16.msra.mxu0 %v5543
      %8700 = vmatpush.bf16.msra.mxu0 %v5541
      %8701 = vmatpush.bf16.msra.mxu0 %v5539
      %8702 = vmatpush.bf16.msra.mxu0 %v5537
      %8703 = vmatpush.bf16.msra.mxu0 %v5535
      %8704 = vmatmul.bf16.gmra.mxu0 %v458
      %v8705 = vpop.f32.mrf.mxu0
      %v8706 = vadd.f32 %v8693, %v8705
      %v8707 = vpop.f32.mrf.mxu0
      %8708 = vdwg.mxu0
      %8709 = vmatpush.bf16.msra.mxu0 %v5565
      %8710 = vmatpush.bf16.msra.mxu0 %v5563
      %8711 = vmatpush.bf16.msra.mxu0 %v5561
      %8712 = vmatpush.bf16.msra.mxu0 %v5559
      %8713 = vmatpush.bf16.msra.mxu0 %v5557
      %8714 = vmatpush.bf16.msra.mxu0 %v5555
      %8715 = vmatpush.bf16.msra.mxu0 %v5553
      %8716 = vmatpush.bf16.msra.mxu0 %v5551
      %8717 = vmatmul.bf16.gmra.mxu0 %v459
      %v8718 = vpop.f32.mrf.mxu0
      %v8719 = vadd.f32 %v8706, %v8718
      %v8720 = vpop.f32.mrf.mxu0
      %8721 = vdwg.mxu0
      %8722 = vmatpush.bf16.msra.mxu0 %v5581
      %8723 = vmatpush.bf16.msra.mxu0 %v5579
      %8724 = vmatpush.bf16.msra.mxu0 %v5577
      %8725 = vmatpush.bf16.msra.mxu0 %v5575
      %8726 = vmatpush.bf16.msra.mxu0 %v5573
      %8727 = vmatpush.bf16.msra.mxu0 %v5571
      %8728 = vmatpush.bf16.msra.mxu0 %v5569
      %8729 = vmatpush.bf16.msra.mxu0 %v5567
      %8730 = vmatmul.bf16.gmra.mxu0 %v460
      %v8731 = vpop.f32.mrf.mxu0
      %v8732 = vadd.f32 %v8719, %v8731
      %v8733 = vpop.f32.mrf.mxu0
      %8734 = vdwg.mxu0
      %8735 = vmatpush.bf16.msra.mxu0 %v5597
      %8736 = vmatpush.bf16.msra.mxu0 %v5595
      %8737 = vmatpush.bf16.msra.mxu0 %v5593
      %8738 = vmatpush.bf16.msra.mxu0 %v5591
      %8739 = vmatpush.bf16.msra.mxu0 %v5589
      %8740 = vmatpush.bf16.msra.mxu0 %v5587
      %8741 = vmatpush.bf16.msra.mxu0 %v5585
      %8742 = vmatpush.bf16.msra.mxu0 %v5583
      %8743 = vmatmul.bf16.gmra.mxu0 %v461
      %v8744 = vpop.f32.mrf.mxu0
      %v8745 = vadd.f32 %v8732, %v8744
      %v8746 = vpop.f32.mrf.mxu0
      %8747 = vdwg.mxu0
      %8748 = vmatpush.bf16.msra.mxu0 %v5613
      %8749 = vmatpush.bf16.msra.mxu0 %v5611
      %8750 = vmatpush.bf16.msra.mxu0 %v5609
      %8751 = vmatpush.bf16.msra.mxu0 %v5607
      %8752 = vmatpush.bf16.msra.mxu0 %v5605
      %8753 = vmatpush.bf16.msra.mxu0 %v5603
      %8754 = vmatpush.bf16.msra.mxu0 %v5601
      %8755 = vmatpush.bf16.msra.mxu0 %v5599
      %8756 = vmatmul.bf16.gmra.mxu0 %v462
      %v8757 = vpop.f32.mrf.mxu0
      %v8758 = vadd.f32 %v8745, %v8757
      %v8759 = vpop.f32.mrf.mxu0
      %8760 = vdwg.mxu0
      %8761 = vmatpush.bf16.msra.mxu0 %v5629
      %8762 = vmatpush.bf16.msra.mxu0 %v5627
      %8763 = vmatpush.bf16.msra.mxu0 %v5625
      %8764 = vmatpush.bf16.msra.mxu0 %v5623
      %8765 = vmatpush.bf16.msra.mxu0 %v5621
      %8766 = vmatpush.bf16.msra.mxu0 %v5619
      %8767 = vmatpush.bf16.msra.mxu0 %v5617
      %8768 = vmatpush.bf16.msra.mxu0 %v5615
      %8769 = vmatmul.bf16.gmra.mxu0 %v463
      %v8770 = vpop.f32.mrf.mxu0
      %v8771 = vadd.f32 %v8758, %v8770
      %v8772 = vpop.f32.mrf.mxu0
      %8773 = vdwg.mxu0
      %8774 = vmatpush.bf16.msra.mxu0 %v5645
      %8775 = vmatpush.bf16.msra.mxu0 %v5643
      %8776 = vmatpush.bf16.msra.mxu0 %v5641
      %8777 = vmatpush.bf16.msra.mxu0 %v5639
      %8778 = vmatpush.bf16.msra.mxu0 %v5637
      %8779 = vmatpush.bf16.msra.mxu0 %v5635
      %8780 = vmatpush.bf16.msra.mxu0 %v5633
      %8781 = vmatpush.bf16.msra.mxu0 %v5631
      %8782 = vmatmul.bf16.gmra.mxu0 %v464
      %v8783 = vpop.f32.mrf.mxu0
      %v8784 = vadd.f32 %v8771, %v8783
      %v8785 = vpop.f32.mrf.mxu0
      %8786 = vdwg.mxu0
      %8787 = vmatpush.bf16.msra.mxu0 %v5661
      %8788 = vmatpush.bf16.msra.mxu0 %v5659
      %8789 = vmatpush.bf16.msra.mxu0 %v5657
      %8790 = vmatpush.bf16.msra.mxu0 %v5655
      %8791 = vmatpush.bf16.msra.mxu0 %v5653
      %8792 = vmatpush.bf16.msra.mxu0 %v5651
      %8793 = vmatpush.bf16.msra.mxu0 %v5649
      %8794 = vmatpush.bf16.msra.mxu0 %v5647
      %8795 = vmatmul.bf16.gmra.mxu0 %v465
      %v8796 = vpop.f32.mrf.mxu0
      %v8797 = vadd.f32 %v8784, %v8796
      %v8798 = vpop.f32.mrf.mxu0
      %8799 = vdwg.mxu0
      %8800 = vmatpush.bf16.msra.mxu0 %v5677
      %8801 = vmatpush.bf16.msra.mxu0 %v5675
      %8802 = vmatpush.bf16.msra.mxu0 %v5673
      %8803 = vmatpush.bf16.msra.mxu0 %v5671
      %8804 = vmatpush.bf16.msra.mxu0 %v5669
      %8805 = vmatpush.bf16.msra.mxu0 %v5667
      %8806 = vmatpush.bf16.msra.mxu0 %v5665
      %8807 = vmatpush.bf16.msra.mxu0 %v5663
      %8808 = vmatmul.bf16.gmra.mxu0 %v466
      %v8809 = vpop.f32.mrf.mxu0
      %v8810 = vadd.f32 %v8797, %v8809
      %v8811 = vpop.f32.mrf.mxu0
      %8812 = vdwg.mxu0
      %8813 = vmatpush.bf16.msra.mxu0 %v5693
      %8814 = vmatpush.bf16.msra.mxu0 %v5691
      %8815 = vmatpush.bf16.msra.mxu0 %v5689
      %8816 = vmatpush.bf16.msra.mxu0 %v5687
      %8817 = vmatpush.bf16.msra.mxu0 %v5685
      %8818 = vmatpush.bf16.msra.mxu0 %v5683
      %8819 = vmatpush.bf16.msra.mxu0 %v5681
      %8820 = vmatpush.bf16.msra.mxu0 %v5679
      %8821 = vmatmul.bf16.gmra.mxu0 %v467
      %v8822 = vpop.f32.mrf.mxu0
      %v8823 = vadd.f32 %v8810, %v8822
      %v8824 = vpop.f32.mrf.mxu0
      %8825 = vdwg.mxu0
      %8826 = vmatpush.bf16.msra.mxu0 %v5709
      %8827 = vmatpush.bf16.msra.mxu0 %v5707
      %8828 = vmatpush.bf16.msra.mxu0 %v5705
      %8829 = vmatpush.bf16.msra.mxu0 %v5703
      %8830 = vmatpush.bf16.msra.mxu0 %v5701
      %8831 = vmatpush.bf16.msra.mxu0 %v5699
      %8832 = vmatpush.bf16.msra.mxu0 %v5697
      %8833 = vmatpush.bf16.msra.mxu0 %v5695
      %8834 = vmatmul.bf16.gmra.mxu0 %v468
      %v8835 = vpop.f32.mrf.mxu0
      %v8836 = vadd.f32 %v8823, %v8835
      %v8837 = vpop.f32.mrf.mxu0
      %8838 = vdwg.mxu0
      %8839 = vmatpush.bf16.msra.mxu0 %v5725
      %8840 = vmatpush.bf16.msra.mxu0 %v5723
      %8841 = vmatpush.bf16.msra.mxu0 %v5721
      %8842 = vmatpush.bf16.msra.mxu0 %v5719
      %8843 = vmatpush.bf16.msra.mxu0 %v5717
      %8844 = vmatpush.bf16.msra.mxu0 %v5715
      %8845 = vmatpush.bf16.msra.mxu0 %v5713
      %8846 = vmatpush.bf16.msra.mxu0 %v5711
      %8847 = vmatmul.bf16.gmra.mxu0 %v469
      %v8848 = vpop.f32.mrf.mxu0
      %v8849 = vadd.f32 %v8836, %v8848
      %v8850 = vpop.f32.mrf.mxu0
      %8851 = vdwg.mxu0
      %8852 = vmatpush.bf16.msra.mxu0 %v5741
      %8853 = vmatpush.bf16.msra.mxu0 %v5739
      %8854 = vmatpush.bf16.msra.mxu0 %v5737
      %8855 = vmatpush.bf16.msra.mxu0 %v5735
      %8856 = vmatpush.bf16.msra.mxu0 %v5733
      %8857 = vmatpush.bf16.msra.mxu0 %v5731
      %8858 = vmatpush.bf16.msra.mxu0 %v5729
      %8859 = vmatpush.bf16.msra.mxu0 %v5727
      %8860 = vmatmul.bf16.gmra.mxu0 %v470
      %v8861 = vpop.f32.mrf.mxu0
      %v8862 = vadd.f32 %v8849, %v8861
      %v8863 = vpop.f32.mrf.mxu0
      %8864 = vdwg.mxu0
      %8865 = vmatpush.bf16.msra.mxu0 %v5757
      %8866 = vmatpush.bf16.msra.mxu0 %v5755
      %8867 = vmatpush.bf16.msra.mxu0 %v5753
      %8868 = vmatpush.bf16.msra.mxu0 %v5751
      %8869 = vmatpush.bf16.msra.mxu0 %v5749
      %8870 = vmatpush.bf16.msra.mxu0 %v5747
      %8871 = vmatpush.bf16.msra.mxu0 %v5745
      %8872 = vmatpush.bf16.msra.mxu0 %v5743
      %8873 = vmatmul.bf16.gmra.mxu0 %v471
      %v8874 = vpop.f32.mrf.mxu0
      %v8875 = vadd.f32 %v8862, %v8874
      %v8876 = vpop.f32.mrf.mxu0
      %8877 = vdwg.mxu0
      %8878 = vmatpush.bf16.msra.mxu0 %v5773
      %8879 = vmatpush.bf16.msra.mxu0 %v5771
      %8880 = vmatpush.bf16.msra.mxu0 %v5769
      %8881 = vmatpush.bf16.msra.mxu0 %v5767
      %8882 = vmatpush.bf16.msra.mxu0 %v5765
      %8883 = vmatpush.bf16.msra.mxu0 %v5763
      %8884 = vmatpush.bf16.msra.mxu0 %v5761
      %8885 = vmatpush.bf16.msra.mxu0 %v5759
      %8886 = vmatmul.bf16.gmra.mxu0 %v472
      %v8887 = vpop.f32.mrf.mxu0
      %v8888 = vadd.f32 %v8875, %v8887
      %v8889 = vpop.f32.mrf.mxu0
      %8890 = vdwg.mxu0
      %8891 = vmatpush.bf16.msra.mxu0 %v5789
      %8892 = vmatpush.bf16.msra.mxu0 %v5787
      %8893 = vmatpush.bf16.msra.mxu0 %v5785
      %8894 = vmatpush.bf16.msra.mxu0 %v5783
      %8895 = vmatpush.bf16.msra.mxu0 %v5781
      %8896 = vmatpush.bf16.msra.mxu0 %v5779
      %8897 = vmatpush.bf16.msra.mxu0 %v5777
      %8898 = vmatpush.bf16.msra.mxu0 %v5775
      %8899 = vmatmul.bf16.gmra.mxu0 %v473
      %v8900 = vpop.f32.mrf.mxu0
      %v8901 = vadd.f32 %v8888, %v8900
      %v8902 = vpop.f32.mrf.mxu0
      %8903 = vdwg.mxu0
      %8904 = vmatpush.bf16.msra.mxu0 %v5805
      %8905 = vmatpush.bf16.msra.mxu0 %v5803
      %8906 = vmatpush.bf16.msra.mxu0 %v5801
      %8907 = vmatpush.bf16.msra.mxu0 %v5799
      %8908 = vmatpush.bf16.msra.mxu0 %v5797
      %8909 = vmatpush.bf16.msra.mxu0 %v5795
      %8910 = vmatpush.bf16.msra.mxu0 %v5793
      %8911 = vmatpush.bf16.msra.mxu0 %v5791
      %8912 = vmatmul.bf16.gmra.mxu0 %v474
      %v8913 = vpop.f32.mrf.mxu0
      %v8914 = vadd.f32 %v8901, %v8913
      %v8915 = vpop.f32.mrf.mxu0
      %8916 = vdwg.mxu0
      %8917 = vmatpush.bf16.msra.mxu0 %v5821
      %8918 = vmatpush.bf16.msra.mxu0 %v5819
      %8919 = vmatpush.bf16.msra.mxu0 %v5817
      %8920 = vmatpush.bf16.msra.mxu0 %v5815
      %8921 = vmatpush.bf16.msra.mxu0 %v5813
      %8922 = vmatpush.bf16.msra.mxu0 %v5811
      %8923 = vmatpush.bf16.msra.mxu0 %v5809
      %8924 = vmatpush.bf16.msra.mxu0 %v5807
      %8925 = vmatmul.bf16.gmra.mxu0 %v475
      %v8926 = vpop.f32.mrf.mxu0
      %v8927 = vadd.f32 %v8914, %v8926
      %v8928 = vpop.f32.mrf.mxu0
      %8929 = vdwg.mxu0
      %8930 = vmatpush.bf16.msra.mxu0 %v5837
      %8931 = vmatpush.bf16.msra.mxu0 %v5835
      %8932 = vmatpush.bf16.msra.mxu0 %v5833
      %8933 = vmatpush.bf16.msra.mxu0 %v5831
      %8934 = vmatpush.bf16.msra.mxu0 %v5829
      %8935 = vmatpush.bf16.msra.mxu0 %v5827
      %8936 = vmatpush.bf16.msra.mxu0 %v5825
      %8937 = vmatpush.bf16.msra.mxu0 %v5823
      %8938 = vmatmul.bf16.gmra.mxu0 %v476
      %v8939 = vpop.f32.mrf.mxu0
      %v8940 = vadd.f32 %v8927, %v8939
      %v8941 = vpop.f32.mrf.mxu0
      %8942 = vdwg.mxu0
      %8943 = vmatpush.bf16.msra.mxu0 %v5853
      %8944 = vmatpush.bf16.msra.mxu0 %v5851
      %8945 = vmatpush.bf16.msra.mxu0 %v5849
      %8946 = vmatpush.bf16.msra.mxu0 %v5847
      %8947 = vmatpush.bf16.msra.mxu0 %v5845
      %8948 = vmatpush.bf16.msra.mxu0 %v5843
      %8949 = vmatpush.bf16.msra.mxu0 %v5841
      %8950 = vmatpush.bf16.msra.mxu0 %v5839
      %8951 = vmatmul.bf16.gmra.mxu0 %v477
      %v8952 = vpop.f32.mrf.mxu0
      %v8953 = vadd.f32 %v8940, %v8952
      %v8954 = vpop.f32.mrf.mxu0
      %8955 = vdwg.mxu0
      %8956 = vmatpush.bf16.msra.mxu0 %v5869
      %8957 = vmatpush.bf16.msra.mxu0 %v5867
      %8958 = vmatpush.bf16.msra.mxu0 %v5865
      %8959 = vmatpush.bf16.msra.mxu0 %v5863
      %8960 = vmatpush.bf16.msra.mxu0 %v5861
      %8961 = vmatpush.bf16.msra.mxu0 %v5859
      %8962 = vmatpush.bf16.msra.mxu0 %v5857
      %8963 = vmatpush.bf16.msra.mxu0 %v5855
      %8964 = vmatmul.bf16.gmra.mxu0 %v478
      %v8965 = vpop.f32.mrf.mxu0
      %v8966 = vadd.f32 %v8953, %v8965
      %v8967 = vpop.f32.mrf.mxu0
      %8968 = vdwg.mxu0
      %8969 = vmatpush.bf16.msra.mxu0 %v5885
      %8970 = vmatpush.bf16.msra.mxu0 %v5883
      %8971 = vmatpush.bf16.msra.mxu0 %v5881
      %8972 = vmatpush.bf16.msra.mxu0 %v5879
      %8973 = vmatpush.bf16.msra.mxu0 %v5877
      %8974 = vmatpush.bf16.msra.mxu0 %v5875
      %8975 = vmatpush.bf16.msra.mxu0 %v5873
      %8976 = vmatpush.bf16.msra.mxu0 %v5871
      %8977 = vmatmul.bf16.gmra.mxu0 %v479
      %v8978 = vpop.f32.mrf.mxu0
      %v8979 = vadd.f32 %v8966, %v8978
      %v8980 = vpop.f32.mrf.mxu0
      %8981 = vdwg.mxu0
      %8982 = vmatpush.bf16.msra.mxu0 %v5901
      %8983 = vmatpush.bf16.msra.mxu0 %v5899
      %8984 = vmatpush.bf16.msra.mxu0 %v5897
      %8985 = vmatpush.bf16.msra.mxu0 %v5895
      %8986 = vmatpush.bf16.msra.mxu0 %v5893
      %8987 = vmatpush.bf16.msra.mxu0 %v5891
      %8988 = vmatpush.bf16.msra.mxu0 %v5889
      %8989 = vmatpush.bf16.msra.mxu0 %v5887
      %8990 = vmatmul.bf16.gmra.mxu0 %v480
      %v8991 = vpop.f32.mrf.mxu0
      %v8992 = vadd.f32 %v8979, %v8991
      %v8993 = vpop.f32.mrf.mxu0
      %8994 = vdwg.mxu0
      %8995 = vmatpush.bf16.msra.mxu0 %v5917
      %8996 = vmatpush.bf16.msra.mxu0 %v5915
      %8997 = vmatpush.bf16.msra.mxu0 %v5913
      %8998 = vmatpush.bf16.msra.mxu0 %v5911
      %8999 = vmatpush.bf16.msra.mxu0 %v5909
      %9000 = vmatpush.bf16.msra.mxu0 %v5907
      %9001 = vmatpush.bf16.msra.mxu0 %v5905
      %9002 = vmatpush.bf16.msra.mxu0 %v5903
      %9003 = vmatmul.bf16.gmra.mxu0 %v481
      %v9004 = vpop.f32.mrf.mxu0
      %v9005 = vadd.f32 %v8992, %v9004
      %v9006 = vpop.f32.mrf.mxu0
      %9007 = vdwg.mxu0
      %9008 = vmatpush.bf16.msra.mxu0 %v5933
      %9009 = vmatpush.bf16.msra.mxu0 %v5931
      %9010 = vmatpush.bf16.msra.mxu0 %v5929
      %9011 = vmatpush.bf16.msra.mxu0 %v5927
      %9012 = vmatpush.bf16.msra.mxu0 %v5925
      %9013 = vmatpush.bf16.msra.mxu0 %v5923
      %9014 = vmatpush.bf16.msra.mxu0 %v5921
      %9015 = vmatpush.bf16.msra.mxu0 %v5919
      %9016 = vmatmul.bf16.gmra.mxu0 %v482
      %v9017 = vpop.f32.mrf.mxu0
      %v9018 = vadd.f32 %v9005, %v9017
      %v9019 = vpop.f32.mrf.mxu0
      %9020 = vdwg.mxu0
      %9021 = vmatpush.bf16.msra.mxu0 %v5949
      %9022 = vmatpush.bf16.msra.mxu0 %v5947
      %9023 = vmatpush.bf16.msra.mxu0 %v5945
      %9024 = vmatpush.bf16.msra.mxu0 %v5943
      %9025 = vmatpush.bf16.msra.mxu0 %v5941
      %9026 = vmatpush.bf16.msra.mxu0 %v5939
      %9027 = vmatpush.bf16.msra.mxu0 %v5937
      %9028 = vmatpush.bf16.msra.mxu0 %v5935
      %9029 = vmatmul.bf16.gmra.mxu0 %v483
      %v9030 = vpop.f32.mrf.mxu0
      %v9031 = vadd.f32 %v9018, %v9030
      %v9032 = vpop.f32.mrf.mxu0
      %9033 = vdwg.mxu0
      %9034 = vmatpush.bf16.msra.mxu0 %v5965
      %9035 = vmatpush.bf16.msra.mxu0 %v5963
      %9036 = vmatpush.bf16.msra.mxu0 %v5961
      %9037 = vmatpush.bf16.msra.mxu0 %v5959
      %9038 = vmatpush.bf16.msra.mxu0 %v5957
      %9039 = vmatpush.bf16.msra.mxu0 %v5955
      %9040 = vmatpush.bf16.msra.mxu0 %v5953
      %9041 = vmatpush.bf16.msra.mxu0 %v5951
      %9042 = vmatmul.bf16.gmra.mxu0 %v484
      %v9043 = vpop.f32.mrf.mxu0
      %v9044 = vadd.f32 %v9031, %v9043
      %v9045 = vpop.f32.mrf.mxu0
      %9046 = vdwg.mxu0
      %9047 = vmatpush.bf16.msra.mxu0 %v5981
      %9048 = vmatpush.bf16.msra.mxu0 %v5979
      %9049 = vmatpush.bf16.msra.mxu0 %v5977
      %9050 = vmatpush.bf16.msra.mxu0 %v5975
      %9051 = vmatpush.bf16.msra.mxu0 %v5973
      %9052 = vmatpush.bf16.msra.mxu0 %v5971
      %9053 = vmatpush.bf16.msra.mxu0 %v5969
      %9054 = vmatpush.bf16.msra.mxu0 %v5967
      %9055 = vmatmul.bf16.gmra.mxu0 %v485
      %v9056 = vpop.f32.mrf.mxu0
      %v9057 = vadd.f32 %v9044, %v9056
      %v9058 = vpop.f32.mrf.mxu0
      %9059 = vdwg.mxu0
      %9060 = vmatpush.bf16.msra.mxu0 %v5997
      %9061 = vmatpush.bf16.msra.mxu0 %v5995
      %9062 = vmatpush.bf16.msra.mxu0 %v5993
      %9063 = vmatpush.bf16.msra.mxu0 %v5991
      %9064 = vmatpush.bf16.msra.mxu0 %v5989
      %9065 = vmatpush.bf16.msra.mxu0 %v5987
      %9066 = vmatpush.bf16.msra.mxu0 %v5985
      %9067 = vmatpush.bf16.msra.mxu0 %v5983
      %9068 = vmatmul.bf16.gmra.mxu0 %v486
      %v9069 = vpop.f32.mrf.mxu0
      %v9070 = vadd.f32 %v9057, %v9069
      %v9071 = vpop.f32.mrf.mxu0
      %9072 = vdwg.mxu0
      %9073 = vmatpush.bf16.msra.mxu0 %v6013
      %9074 = vmatpush.bf16.msra.mxu0 %v6011
      %9075 = vmatpush.bf16.msra.mxu0 %v6009
      %9076 = vmatpush.bf16.msra.mxu0 %v6007
      %9077 = vmatpush.bf16.msra.mxu0 %v6005
      %9078 = vmatpush.bf16.msra.mxu0 %v6003
      %9079 = vmatpush.bf16.msra.mxu0 %v6001
      %9080 = vmatpush.bf16.msra.mxu0 %v5999
      %9081 = vmatmul.bf16.gmra.mxu0 %v487
      %v9082 = vpop.f32.mrf.mxu0
      %v9083 = vadd.f32 %v9070, %v9082
      %v9084 = vpop.f32.mrf.mxu0
      %9085 = vdwg.mxu0
      %9086 = vmatpush.bf16.msra.mxu0 %v6029
      %9087 = vmatpush.bf16.msra.mxu0 %v6027
      %9088 = vmatpush.bf16.msra.mxu0 %v6025
      %9089 = vmatpush.bf16.msra.mxu0 %v6023
      %9090 = vmatpush.bf16.msra.mxu0 %v6021
      %9091 = vmatpush.bf16.msra.mxu0 %v6019
      %9092 = vmatpush.bf16.msra.mxu0 %v6017
      %9093 = vmatpush.bf16.msra.mxu0 %v6015
      %9094 = vmatmul.bf16.gmra.mxu0 %v488
      %v9095 = vpop.f32.mrf.mxu0
      %v9096 = vadd.f32 %v9083, %v9095
      %v9097 = vpop.f32.mrf.mxu0
      %9098 = vdwg.mxu0
      %9099 = vmatpush.bf16.msra.mxu0 %v6045
      %9100 = vmatpush.bf16.msra.mxu0 %v6043
      %9101 = vmatpush.bf16.msra.mxu0 %v6041
      %9102 = vmatpush.bf16.msra.mxu0 %v6039
      %9103 = vmatpush.bf16.msra.mxu0 %v6037
      %9104 = vmatpush.bf16.msra.mxu0 %v6035
      %9105 = vmatpush.bf16.msra.mxu0 %v6033
      %9106 = vmatpush.bf16.msra.mxu0 %v6031
      %9107 = vmatmul.bf16.gmra.mxu0 %v489
      %v9108 = vpop.f32.mrf.mxu0
      %v9109 = vadd.f32 %v9096, %v9108
      %v9110 = vpop.f32.mrf.mxu0
      %9111 = vdwg.mxu0
      %9112 = vmatpush.bf16.msra.mxu0 %v6061
      %9113 = vmatpush.bf16.msra.mxu0 %v6059
      %9114 = vmatpush.bf16.msra.mxu0 %v6057
      %9115 = vmatpush.bf16.msra.mxu0 %v6055
      %9116 = vmatpush.bf16.msra.mxu0 %v6053
      %9117 = vmatpush.bf16.msra.mxu0 %v6051
      %9118 = vmatpush.bf16.msra.mxu0 %v6049
      %9119 = vmatpush.bf16.msra.mxu0 %v6047
      %9120 = vmatmul.bf16.gmra.mxu0 %v490
      %v9121 = vpop.f32.mrf.mxu0
      %v9122 = vadd.f32 %v9109, %v9121
      %v9123 = vpop.f32.mrf.mxu0
      %9124 = vdwg.mxu0
      %9125 = vmatpush.bf16.msra.mxu0 %v6077
      %9126 = vmatpush.bf16.msra.mxu0 %v6075
      %9127 = vmatpush.bf16.msra.mxu0 %v6073
      %9128 = vmatpush.bf16.msra.mxu0 %v6071
      %9129 = vmatpush.bf16.msra.mxu0 %v6069
      %9130 = vmatpush.bf16.msra.mxu0 %v6067
      %9131 = vmatpush.bf16.msra.mxu0 %v6065
      %9132 = vmatpush.bf16.msra.mxu0 %v6063
      %9133 = vmatmul.bf16.gmra.mxu0 %v491
      %v9134 = vpop.f32.mrf.mxu0
      %v9135 = vadd.f32 %v9122, %v9134
      %v9136 = vpop.f32.mrf.mxu0
      %9137 = vdwg.mxu0
      %9138 = vmatpush.bf16.msra.mxu0 %v6093
      %9139 = vmatpush.bf16.msra.mxu0 %v6091
      %9140 = vmatpush.bf16.msra.mxu0 %v6089
      %9141 = vmatpush.bf16.msra.mxu0 %v6087
      %9142 = vmatpush.bf16.msra.mxu0 %v6085
      %9143 = vmatpush.bf16.msra.mxu0 %v6083
      %9144 = vmatpush.bf16.msra.mxu0 %v6081
      %9145 = vmatpush.bf16.msra.mxu0 %v6079
      %9146 = vmatmul.bf16.gmra.mxu0 %v492
      %v9147 = vpop.f32.mrf.mxu0
      %v9148 = vadd.f32 %v9135, %v9147
      %v9149 = vpop.f32.mrf.mxu0
      %9150 = vdwg.mxu0
      %9151 = vmatpush.bf16.msra.mxu0 %v6109
      %9152 = vmatpush.bf16.msra.mxu0 %v6107
      %9153 = vmatpush.bf16.msra.mxu0 %v6105
      %9154 = vmatpush.bf16.msra.mxu0 %v6103
      %9155 = vmatpush.bf16.msra.mxu0 %v6101
      %9156 = vmatpush.bf16.msra.mxu0 %v6099
      %9157 = vmatpush.bf16.msra.mxu0 %v6097
      %9158 = vmatpush.bf16.msra.mxu0 %v6095
      %9159 = vmatmul.bf16.gmra.mxu0 %v493
      %v9160 = vpop.f32.mrf.mxu0
      %v9161 = vadd.f32 %v9148, %v9160
      %v9162 = vpop.f32.mrf.mxu0
      %9163 = vdwg.mxu0
      %9164 = vmatpush.bf16.msra.mxu0 %v6125
      %9165 = vmatpush.bf16.msra.mxu0 %v6123
      %9166 = vmatpush.bf16.msra.mxu0 %v6121
      %9167 = vmatpush.bf16.msra.mxu0 %v6119
      %9168 = vmatpush.bf16.msra.mxu0 %v6117
      %9169 = vmatpush.bf16.msra.mxu0 %v6115
      %9170 = vmatpush.bf16.msra.mxu0 %v6113
      %9171 = vmatpush.bf16.msra.mxu0 %v6111
      %9172 = vmatmul.bf16.gmra.mxu0 %v494
      %v9173 = vpop.f32.mrf.mxu0
      %v9174 = vadd.f32 %v9161, %v9173
      %v9175 = vpop.f32.mrf.mxu0
      %9176 = vdwg.mxu0
      %9177 = vmatpush.bf16.msra.mxu0 %v6141
      %9178 = vmatpush.bf16.msra.mxu0 %v6139
      %9179 = vmatpush.bf16.msra.mxu0 %v6137
      %9180 = vmatpush.bf16.msra.mxu0 %v6135
      %9181 = vmatpush.bf16.msra.mxu0 %v6133
      %9182 = vmatpush.bf16.msra.mxu0 %v6131
      %9183 = vmatpush.bf16.msra.mxu0 %v6129
      %9184 = vmatpush.bf16.msra.mxu0 %v6127
      %9185 = vmatmul.bf16.gmra.mxu0 %v495
      %v9186 = vpop.f32.mrf.mxu0
      %v9187 = vadd.f32 %v9174, %v9186
      %v9188 = vpop.f32.mrf.mxu0
      %9189 = vdwg.mxu0
      %9190 = vmatpush.bf16.msra.mxu0 %v6157
      %9191 = vmatpush.bf16.msra.mxu0 %v6155
      %9192 = vmatpush.bf16.msra.mxu0 %v6153
      %9193 = vmatpush.bf16.msra.mxu0 %v6151
      %9194 = vmatpush.bf16.msra.mxu0 %v6149
      %9195 = vmatpush.bf16.msra.mxu0 %v6147
      %9196 = vmatpush.bf16.msra.mxu0 %v6145
      %9197 = vmatpush.bf16.msra.mxu0 %v6143
      %9198 = vmatmul.bf16.gmra.mxu0 %v496
      %v9199 = vpop.f32.mrf.mxu0
      %v9200 = vadd.f32 %v9187, %v9199
      %v9201 = vpop.f32.mrf.mxu0
      %9202 = vdwg.mxu0
      %9203 = vmatpush.bf16.msra.mxu0 %v6173
      %9204 = vmatpush.bf16.msra.mxu0 %v6171
      %9205 = vmatpush.bf16.msra.mxu0 %v6169
      %9206 = vmatpush.bf16.msra.mxu0 %v6167
      %9207 = vmatpush.bf16.msra.mxu0 %v6165
      %9208 = vmatpush.bf16.msra.mxu0 %v6163
      %9209 = vmatpush.bf16.msra.mxu0 %v6161
      %9210 = vmatpush.bf16.msra.mxu0 %v6159
      %9211 = vmatmul.bf16.gmra.mxu0 %v497
      %v9212 = vpop.f32.mrf.mxu0
      %v9213 = vadd.f32 %v9200, %v9212
      %v9214 = vpop.f32.mrf.mxu0
      %9215 = vdwg.mxu0
      %9216 = vmatpush.bf16.msra.mxu0 %v6189
      %9217 = vmatpush.bf16.msra.mxu0 %v6187
      %9218 = vmatpush.bf16.msra.mxu0 %v6185
      %9219 = vmatpush.bf16.msra.mxu0 %v6183
      %9220 = vmatpush.bf16.msra.mxu0 %v6181
      %9221 = vmatpush.bf16.msra.mxu0 %v6179
      %9222 = vmatpush.bf16.msra.mxu0 %v6177
      %9223 = vmatpush.bf16.msra.mxu0 %v6175
      %9224 = vmatmul.bf16.gmra.mxu0 %v498
      %v9225 = vpop.f32.mrf.mxu0
      %v9226 = vadd.f32 %v9213, %v9225
      %v9227 = vpop.f32.mrf.mxu0
      %9228 = vdwg.mxu0
      %9229 = vmatpush.bf16.msra.mxu0 %v6205
      %9230 = vmatpush.bf16.msra.mxu0 %v6203
      %9231 = vmatpush.bf16.msra.mxu0 %v6201
      %9232 = vmatpush.bf16.msra.mxu0 %v6199
      %9233 = vmatpush.bf16.msra.mxu0 %v6197
      %9234 = vmatpush.bf16.msra.mxu0 %v6195
      %9235 = vmatpush.bf16.msra.mxu0 %v6193
      %9236 = vmatpush.bf16.msra.mxu0 %v6191
      %9237 = vmatmul.bf16.gmra.mxu0 %v499
      %v9238 = vpop.f32.mrf.mxu0
      %v9239 = vadd.f32 %v9226, %v9238
      %v9240 = vpop.f32.mrf.mxu0
      %9241 = vdwg.mxu0
      %9242 = vmatpush.bf16.msra.mxu0 %v6221
      %9243 = vmatpush.bf16.msra.mxu0 %v6219
      %9244 = vmatpush.bf16.msra.mxu0 %v6217
      %9245 = vmatpush.bf16.msra.mxu0 %v6215
      %9246 = vmatpush.bf16.msra.mxu0 %v6213
      %9247 = vmatpush.bf16.msra.mxu0 %v6211
      %9248 = vmatpush.bf16.msra.mxu0 %v6209
      %9249 = vmatpush.bf16.msra.mxu0 %v6207
      %9250 = vmatmul.bf16.gmra.mxu0 %v500
      %v9251 = vpop.f32.mrf.mxu0
      %v9252 = vadd.f32 %v9239, %v9251
      %v9253 = vpop.f32.mrf.mxu0
      %9254 = vdwg.mxu0
      %9255 = vmatpush.bf16.msra.mxu0 %v6237
      %9256 = vmatpush.bf16.msra.mxu0 %v6235
      %9257 = vmatpush.bf16.msra.mxu0 %v6233
      %9258 = vmatpush.bf16.msra.mxu0 %v6231
      %9259 = vmatpush.bf16.msra.mxu0 %v6229
      %9260 = vmatpush.bf16.msra.mxu0 %v6227
      %9261 = vmatpush.bf16.msra.mxu0 %v6225
      %9262 = vmatpush.bf16.msra.mxu0 %v6223
      %9263 = vmatmul.bf16.gmra.mxu0 %v501
      %v9264 = vpop.f32.mrf.mxu0
      %v9265 = vadd.f32 %v9252, %v9264
      %v9266 = vpop.f32.mrf.mxu0
      %9267 = vdwg.mxu0
      %9268 = vmatpush.bf16.msra.mxu0 %v6253
      %9269 = vmatpush.bf16.msra.mxu0 %v6251
      %9270 = vmatpush.bf16.msra.mxu0 %v6249
      %9271 = vmatpush.bf16.msra.mxu0 %v6247
      %9272 = vmatpush.bf16.msra.mxu0 %v6245
      %9273 = vmatpush.bf16.msra.mxu0 %v6243
      %9274 = vmatpush.bf16.msra.mxu0 %v6241
      %9275 = vmatpush.bf16.msra.mxu0 %v6239
      %9276 = vmatmul.bf16.gmra.mxu0 %v502
      %v9277 = vpop.f32.mrf.mxu0
      %v9278 = vadd.f32 %v9265, %v9277
      %v9279 = vpop.f32.mrf.mxu0
      %9280 = vdwg.mxu0
      %9281 = vmatpush.bf16.msra.mxu0 %v6269
      %9282 = vmatpush.bf16.msra.mxu0 %v6267
      %9283 = vmatpush.bf16.msra.mxu0 %v6265
      %9284 = vmatpush.bf16.msra.mxu0 %v6263
      %9285 = vmatpush.bf16.msra.mxu0 %v6261
      %9286 = vmatpush.bf16.msra.mxu0 %v6259
      %9287 = vmatpush.bf16.msra.mxu0 %v6257
      %9288 = vmatpush.bf16.msra.mxu0 %v6255
      %9289 = vmatmul.bf16.gmra.mxu0 %v503
      %v9290 = vpop.f32.mrf.mxu0
      %v9291 = vadd.f32 %v9278, %v9290
      %v9292 = vpop.f32.mrf.mxu0
      %9293 = vdwg.mxu0
      %v9294 = vtanh.pop %v8355
      %v9295 = vtanh.pop %v9291
      %v9298 = vrot.slane %v9295, 6
      %vm9299 = vcmask 1041408
      %v9300 = vsel %vm9299, %v9294, %v9298
      %9302 = vst [vmem:[%s231] sm:$0xf] %v9300
      %s9303 = smul.u32 2, %s19
      %p9304 = scmp.lt.s32.totalorder %s18, 0
      %s9305 = scalar_select %p9304, %s18, 0
      %p9306 = scmp.lt.s32.totalorder %s9303, 7
      %s9307 = scalar_select %p9306, %s9303, 7
      %s9308 = smul.addr %s9305, 8
      %s9309 = sadd.s32 %s9307, %s9308
      %s9310 = smul.addr %s9309, 2
      %s9311 = scalar_lea.vmem %s3, %s9310
      // Predicated region
      $region33: #{dqn_conv_forward.6} parent=31 // pred_check
        %p9312 = pneg %p124
      $region34: #{dqn_conv_forward.6} parent=31 // pred_check_branch
        %9314 = sbr.rel (%p9312) target = $region36
      $region35: #{dqn_conv_forward.6} parent=31 // pred_region
        %s9315 = smul.u32 2, %s19
      $region36: #{dqn_conv_forward.6} parent=31 // pred_fallthru
        _
    $region32: #{dqn_conv_forward.6} parent=5 // pred_fallthru
      _
    %p9316 = scmp.le.s32.totalorder 2, %s9
    // Predicated region
    $region37: #{dqn_conv_forward.6} parent=5 // pred_check
      %p9317 = pneg %p9316
    $region38: #{dqn_conv_forward.6} parent=5 // pred_check_branch
      %9319 = sbr.rel (%p9317) target = $region40
    $region39: #{dqn_conv_forward.6} parent=5 // pred_region
      %s9320 = ssub.s32 %s9, 2
      // Predicated region
      $region41: #{dqn_conv_forward.6} parent=39 // pred_check
        %p9321 = pneg %p130
      $region42: #{dqn_conv_forward.6} parent=39 // pred_check_branch
        %9323 = sbr.rel (%p9321) target = $region44
      $region43: #{dqn_conv_forward.6} parent=39 // pred_region
        %s9324 = smul.u32 2, %s21
        %p9325 = scmp.lt.s32.totalorder %s20, 0
        %s9326 = scalar_select %p9325, %s20, 0
        %p9327 = scmp.lt.s32.totalorder %s9324, 7
        %s9328 = scalar_select %p9327, %s9324, 7
        %s9329 = smul.addr %s9326, 8
        %s9330 = sadd.s32 %s9328, %s9329
        %s9331 = smul.addr %s9330, 2
        %s9332 = scalar_lea.vmem %s3, %s9331
      $region44: #{dqn_conv_forward.6} parent=39 // pred_fallthru
        _
    $region40: #{dqn_conv_forward.6} parent=5 // pred_fallthru
      _
  $region6: #{dqn_conv_forward.6} parent=0 // loop_footer
    %s13 = sadd.s32 1, %s9
  $region7: #{dqn_conv_forward.6} parent=0 // loop_footer_branch
    %8 = sbr.rel target = $region3
  $region8: #{dqn_conv_forward.6} parent=0 // loop_exit
    _

</llo_original>
